<compile_context>
chip_gen: v6e
topology: v6e:2x2x1
jax: 0.10.0
libtpu: 0.0.40
codegen_flags: <defaults>
</compile_context>

<pallas_src>
from typing import NamedTuple, List

import jax
import jax.numpy as jnp
from jax.experimental import pallas as pl
from jax.experimental.pallas import tpu as pltpu


LANE = 128
LEAKY_SLOPE = 0.01              # torch.nn.LeakyReLU() default negative_slope

_VMEM_LIMIT_CACHE = None


def _vmem_limit():
    """Generation-aware scoped-VMEM limit (v5e/v6e: 128 MiB phys, v7x: 64 MiB/TC)."""
    global _VMEM_LIMIT_CACHE
    if _VMEM_LIMIT_CACHE is None:
        try:
            cap = int(pltpu.get_tpu_info().vmem_capacity_bytes)
        except Exception:
            cap = 0
        if cap <= 0:
            cap = 64 * 1024 * 1024          # conservative fallback (v7x sized)
        _VMEM_LIMIT_CACHE = max(32 * 1024 * 1024,
                                min(cap * 3 // 4, 96 * 1024 * 1024))
    return _VMEM_LIMIT_CACHE


class ConvLayerParam(NamedTuple):
    in_channels: int
    out_channels: int
    kernel: int
    stride: int
    use_activation: bool
    bn: bool


def _round_up(x, m):
    return (x + m - 1) // m * m


def _leaky(y):
    return jnp.where(y > 0, y, LEAKY_SLOPE * y)


# ----------------------------------------------------------------------------
# Kernel 1: tiled matmul + bias + LeakyReLU + optional skip
#           (1x1 stride-1 convs and the im2col fallback for stride>1 layers)
# ----------------------------------------------------------------------------
def _make_mm_kernel(use_act, add_skip):
    def kernel(a_ref, w_ref, b_ref, *rest):
        if add_skip:
            skip_ref, o_ref, acc_ref = rest
        else:
            o_ref, acc_ref = rest

        @pl.when(pl.program_id(2) == 0)
        def _():
            acc_ref[...] = jnp.zeros_like(acc_ref)

        acc_ref[...] += jnp.dot(a_ref[...], w_ref[...],
                                preferred_element_type=jnp.float32)

        @pl.when(pl.program_id(2) == pl.num_programs(2) - 1)
        def _():
            y = acc_ref[...] + b_ref[...]
            if use_act:
                y = _leaky(y)
            if add_skip:
                y = y + skip_ref[...].astype(jnp.float32)
            o_ref[...] = y.astype(o_ref.dtype)

    return kernel


def _pick_k_tile(K):
    if K <= 1024:                       # bigger K tile per review (v6e)
        return K
    for t in (1024, 512, 256, 128):
        if K % t == 0:
            return t
    return K


def _pick_m_tile(M):
    if M <= 2048:                       # bigger M tile per review (v6e)
        return M
    for t in (2048, 1024, 512, 256, 128, 8):
        if M % t == 0:
            return t
    return M


def _pick_cout_tile(cout_p):
    for t in (256, 128):
        if cout_p % t == 0:
            return min(t, cout_p)
    return cout_p


def fused_matmul(a, w2d, bias, skip2d=None, use_act=True,
                 out_dtype=jnp.bfloat16):
    """a: (M, K) bf16, w2d: (K, Cout_p) bf16, bias: (1, Cout_p) f32."""
    M, K = a.shape
    cout_p = w2d.shape[1]
    tm = _pick_m_tile(M)
    tn = _pick_cout_tile(cout_p)
    tk = _pick_k_tile(K)
    grid = (M // tm, cout_p // tn, K // tk)

    in_specs = [
        pl.BlockSpec((tm, tk), lambda i, j, kk: (i, kk)),
        pl.BlockSpec((tk, tn), lambda i, j, kk: (kk, j)),
        pl.BlockSpec((1, tn), lambda i, j, kk: (0, j)),
    ]
    args = [a, w2d, bias]
    if skip2d is not None:
        in_specs.append(pl.BlockSpec((tm, tn), lambda i, j, kk: (i, j)))
        args.append(skip2d)

    bytes_accessed = (a.size * 2 + w2d.size * 2 + bias.size * 4
                      + M * cout_p * 2
                      + (skip2d.size * 2 if skip2d is not None else 0))

    return pl.pallas_call(
        _make_mm_kernel(use_act, skip2d is not None),
        out_shape=jax.ShapeDtypeStruct((M, cout_p), out_dtype),
        grid=grid,
        in_specs=in_specs,
        out_specs=pl.BlockSpec((tm, tn), lambda i, j, kk: (i, j)),
        scratch_shapes=[pltpu.VMEM((tm, tn), jnp.float32)],
        compiler_params=pltpu.CompilerParams(
            dimension_semantics=("parallel", "parallel", "arbitrary"),
            vmem_limit_bytes=_vmem_limit()),
        cost_estimate=pl.CostEstimate(
            flops=2 * M * K * cout_p, transcendentals=0,
            bytes_accessed=bytes_accessed),
    )(*args)


# ----------------------------------------------------------------------------
# Kernel 2: fully fused residual pair  (1x1 s1 -> 3x3 s1 "same" -> +skip)
#           - double-buffered manual DMA of the haloed input row window
#           - 1x1 squeeze + bias + act computed on the window (stays in VMEM)
#           - zero padding of the squeeze activation materialized in VMEM only
#           - single im2col tile per window, ONE large-K MXU dot for the 3x3
#           - lane-dense flat 2D output slab
# ----------------------------------------------------------------------------
def _make_pair_kernel(H, W, tr, R, k, cin_p, cmid_p, cout_p,
                      act1, act2, add_skip):
    assert k == 3, "fused pair kernel supports k=3 only"
    kk = k * k
    win_rows = tr + k - 1          # tr core rows + 1 halo row on each side

    def kernel(x_ref, w1_ref, b1_ref, w2_ref, b2_ref, o_ref,
               xbuf, sem, mid_ref, col_ref):
        n = pl.program_id(0)
        r = pl.program_id(1)

        # xbuf is a flat (2*win_rows, W, cin_p) double buffer.
        def copy_core(slot_, base_):
            return pltpu.make_async_copy(
                x_ref.at[pl.ds(base_, tr)],
                xbuf.at[pl.ds(slot_ * win_rows + 1, tr)],
                sem.at[slot_, 0])

        def copy_top(slot_, base_):
            return pltpu.make_async_copy(
                x_ref.at[pl.ds(base_ - 1, 1)],
                xbuf.at[pl.ds(slot_ * win_rows, 1)],
                sem.at[slot_, 1])

        def copy_bot(slot_, base_):
            return pltpu.make_async_copy(
                x_ref.at[pl.ds(base_ + tr, 1)],
                xbuf.at[pl.ds(slot_ * win_rows + tr + 1, 1)],
                sem.at[slot_, 2])

        # Prologue: fetch the first window of this image (runs on whichever
        # core owns this n, so it is megacore-safe).
        @pl.when(r == 0)
        def _():
            s0 = (n * R) & 1
            b0 = n * H
            copy_core(s0, b0).start()
            if R > 1:
                copy_bot(s0, b0).start()

        # Prefetch the next row tile's window while computing this one.
        @pl.when(r + 1 < R)
        def _():
            rn = r + 1
            sn = (n * R + rn) & 1
            bn = n * H + rn * tr
            copy_core(sn, bn).start()
            copy_top(sn, bn).start()          # rn >= 1 -> top row always exists

            @pl.when(rn < R - 1)
            def _():
                copy_bot(sn, bn).start()

        # Wait for this step's window (waits mirror the starts exactly).
        slot = (n * R + r) & 1
        base = n * H + r * tr
        copy_core(slot, base).wait()

        @pl.when(r > 0)
        def _():
            copy_top(slot, base).wait()

        @pl.when(r < R - 1)
        def _():
            copy_bot(slot, base).wait()

        # ---- 1x1 squeeze over the haloed window: one MXU dot --------------
        win = xbuf[pl.ds(slot * win_rows, win_rows)]       # (win_rows, W, cin_p)
        a = win.reshape(win_rows * W, cin_p)
        h = jnp.dot(a, w1_ref[...], preferred_element_type=jnp.float32)
        h = h + b1_ref[...]
        if act1:
            h = _leaky(h)
        h = h.astype(mid_ref.dtype).reshape(win_rows, W, cmid_p)

        # ---- assemble the zero-padded squeeze activation in VMEM ----------
        mid_ref[:, 1:W + 1, :] = h
        zcol = jnp.zeros((win_rows, 1, cmid_p), mid_ref.dtype)
        mid_ref[:, 0:1, :] = zcol                     # left "same" padding
        mid_ref[:, W + 1:W + 2, :] = zcol             # right "same" padding

        zrow = jnp.zeros((1, W + 2, cmid_p), mid_ref.dtype)

        @pl.when(r == 0)
        def _():
            mid_ref[0:1, :, :] = zrow                 # top image border

        @pl.when(r == R - 1)
        def _():
            mid_ref[tr + 1:tr + 2, :, :] = zrow       # bottom image border

        # ---- ONE im2col tile per window, then a single large-K MXU dot ----
        for t in range(kk):
            di, dj = t // k, t % k
            col_ref[:, t * cmid_p:(t + 1) * cmid_p] = (
                mid_ref[di:di + tr, dj:dj + W, :].reshape(tr * W, cmid_p))

        y = jnp.dot(col_ref[...], w2_ref[...],
                    preferred_element_type=jnp.float32)
        y = y + b2_ref[...]
        if act2:
            y = _leaky(y)
        if add_skip:
            # skip = the block input rows already sitting in the window
            y = y + win[1:tr + 1].reshape(tr * W, cin_p).astype(jnp.float32)
        o_ref[...] = y.astype(o_ref.dtype)            # lane-dense 2D slab

    return kernel


def _pair_vmem_bytes(tr, W, cin_p, cmid_p, cout_p, k=3):
    win = tr + k - 1
    return (2 * win * W * cin_p * 2                        # xbuf (x2 slots)
            + win * (W + 2) * cmid_p * 2                   # padded mid act
            + tr * W * k * k * cmid_p * 2                  # im2col tile
            + 2 * tr * W * cout_p * 2                      # out block (x2 bufs)
            + 2 * (cin_p * cmid_p + k * k * cmid_p * cout_p) * 2   # weights
            + 4 * (cmid_p + cout_p) * 4)                   # biases


def _pick_row_tile_fused(H, W, N, cin_p, cmid_p, cout_p, target_pixels=1024):
    divs = [d for d in range(1, H + 1) if H % d == 0]
    budget = int(_vmem_limit() * 0.6)
    fitting = [d for d in divs
               if _pair_vmem_bytes(d, W, cin_p, cmid_p, cout_p) <= budget]
    if fitting:
        divs = fitting
    if N == 1 and H > 1:
        # keep >= 2 row tiles so both v7x TensorCores get work
        smaller = [d for d in divs if d < H]
        if smaller:
            divs = smaller
    # TODO(synk): for prime H this can still degenerate to tr=1; padding H to
    #             a convenient multiple would avoid the tiny-tile grid.
    return min(divs, key=lambda d: (abs(d * W - target_pixels), -d))


def fused_residual_pair(x, w1, b1, w2, b2, *, k=3, act1=True, act2=True,
                        add_skip=True, out_dtype=jnp.bfloat16):
    """x: (N, H, W, Cin_p) bf16.
    w1: (Cin_p, Cmid_p) bf16, b1: (1, Cmid_p) f32       -- 1x1 layer (BN folded)
    w2: (k*k*Cmid_p, Cout_p) bf16, b2: (1, Cout_p) f32  -- 3x3 layer (BN folded)
    Computes leaky(x@w1+b1) -> 3x3 'same' conv -> +b2 -> leaky -> (+x)."""
    N, H, W, cin_p = x.shape
    cmid_p = w1.shape[1]
    cout_p = w2.shape[1]
    assert k == 3 and w2.shape[0] == k * k * cmid_p
    assert W % 8 == 0, "fused path requires sublane-aligned width"
    if add_skip:
        assert cout_p == cin_p

    tr = _pick_row_tile_fused(H, W, N, cin_p, cmid_p, cout_p)
    R = H // tr
    win_rows = tr + k - 1
    x_flat = x.reshape(N * H, W, cin_p)

    kernel = _make_pair_kernel(H, W, tr, R, k, cin_p, cmid_p, cout_p,
                               act1, act2, add_skip)

    flops = 2 * N * H * W * (cin_p * cmid_p + k * k * cmid_p * cout_p)
    bytes_accessed = (x.size * 2 + w1.size * 2 + w2.size * 2
                      + (b1.size + b2.size) * 4 + N * H * W * cout_p * 2)

    out = pl.pallas_call(
        kernel,
        out_shape=jax.ShapeDtypeStruct((N * H * W, cout_p), out_dtype),
        grid=(N, R),
        in_specs=[
            pl.BlockSpec(memory_space=pl.ANY),                        # x (HBM)
            pl.BlockSpec((cin_p, cmid_p), lambda n, r: (0, 0)),       # w1
            pl.BlockSpec((1, cmid_p), lambda n, r: (0, 0)),           # b1
            pl.BlockSpec((k * k * cmid_p, cout_p), lambda n, r: (0, 0)),  # w2
            pl.BlockSpec((1, cout_p), lambda n, r: (0, 0)),           # b2
        ],
        out_specs=pl.BlockSpec((tr * W, cout_p), lambda n, r: (n * R + r, 0)),
        scratch_shapes=[
            pltpu.VMEM((2 * win_rows, W, cin_p), x.dtype),            # window x2
            pltpu.SemaphoreType.DMA((2, 3)),                          # per slot/part
            pltpu.VMEM((win_rows, W + 2, cmid_p), jnp.bfloat16),      # padded mid
            pltpu.VMEM((tr * W, k * k * cmid_p), jnp.bfloat16),       # im2col tile
        ],
        compiler_params=pltpu.CompilerParams(
            dimension_semantics=("parallel", "arbitrary"),
            vmem_limit_bytes=_vmem_limit()),
        cost_estimate=pl.CostEstimate(flops=flops, transcendentals=0,
                                      bytes_accessed=bytes_accessed),
    )(x_flat, w1, b1, w2, b2)
    return out.reshape(N, H, W, cout_p)


# ----------------------------------------------------------------------------
# Host-side glue: parameter folding/padding, padding rules, block forward
# ----------------------------------------------------------------------------
def init_layer_params(key, p: ConvLayerParam):
    """Deterministic synthetic init mirroring the PyTorch __init__ shapes."""
    kw, kb, kg, kbeta, km, kv = jax.random.split(key, 6)
    fan_out = p.out_channels * p.kernel * p.kernel
    std = (2.0 / fan_out) ** 0.5  # kaiming_normal_(mode='fan_out')
    w = jax.random.normal(
        kw, (p.out_channels, p.in_channels, p.kernel, p.kernel), jnp.float32) * std
    if p.bn:
        eps = 1e-5
        gamma = 1.0 + 0.1 * jax.random.normal(kg, (p.out_channels,), jnp.float32)
        beta = 0.1 * jax.random.normal(kbeta, (p.out_channels,), jnp.float32)
        rmean = 0.05 * jax.random.normal(km, (p.out_channels,), jnp.float32)
        rvar = jnp.abs(1.0 + 0.1 * jax.random.normal(kv, (p.out_channels,),
                                                     jnp.float32))
        scale = gamma / jnp.sqrt(rvar + eps)     # eval-mode BN fold
        bias = beta - rmean * scale
    else:
        bound = 1.0 / (p.in_channels * p.kernel * p.kernel) ** 0.5
        b = jax.random.uniform(kb, (p.out_channels,), jnp.float32, -bound, bound)
        scale = jnp.ones((p.out_channels,), jnp.float32)
        bias = b
    return w, scale, bias


def _fold_and_pad_weights(p: ConvLayerParam, w, scale, bias, cin_p, cout_p):
    """Fold BN scale into the conv weight, lay out as a (k*k*Cin_p, Cout_p)
    tap-major matmul operand, pad channels to lane multiples, cast bf16."""
    w_f = w * scale[:, None, None, None]                 # (Cout, Cin, kh, kw)
    w_t = jnp.transpose(w_f, (2, 3, 1, 0))               # (kh, kw, Cin, Cout)
    w_pad = jnp.pad(w_t, ((0, 0), (0, 0),
                          (0, cin_p - p.in_channels),
                          (0, cout_p - p.out_channels)))
    w2d = w_pad.reshape(p.kernel * p.kernel * cin_p, cout_p).astype(jnp.bfloat16)
    b_pad = (jnp.pad(bias, (0, cout_p - p.out_channels))
             .reshape(1, cout_p).astype(jnp.float32))
    return w2d, b_pad


def _same_padding(k):
    pt = (k - 1) // 2
    return pt, (k - 1) - pt            # Conv2dDynamicSamePadding, stride 1


def _im2col(x_nhwc, k, stride, pad):
    """Fallback (non-fused layers only): materialized im2col patches."""
    N, H, W, C = x_nhwc.shape
    xp = jnp.pad(x_nhwc, ((0, 0), (pad[0], pad[1]), (pad[2], pad[3]), (0, 0)))
    Hp, Wp = xp.shape[1], xp.shape[2]
    Ho = (Hp - k) // stride + 1
    Wo = (Wp - k) // stride + 1
    cols = []
    for i in range(k):
        for j in range(k):
            cols.append(xp[:, i:i + (Ho - 1) * stride + 1:stride,
                           j:j + (Wo - 1) * stride + 1:stride, :])
    return jnp.concatenate(cols, axis=-1), Ho, Wo


def yolo_conv_block(x_nchw, params: List[ConvLayerParam], layer_weights,
                    use_skip_connection=True):
    N, C0, H, W = x_nchw.shape
    cin0_p = _round_up(C0, LANE)
    # NCHW f32 -> NHWC bf16, channels padded to a lane multiple (lane-dense).
    x = jnp.transpose(x_nchw, (0, 2, 3, 1)).astype(jnp.bfloat16)
    x = jnp.pad(x, ((0, 0), (0, 0), (0, 0), (0, cin0_p - C0)))

    n_layers = len(params)
    skip_idx = n_layers - 2

    p1 = params[-2] if n_layers >= 2 else None
    p2 = params[-1] if n_layers >= 2 else None
    fuse_tail = (
        n_layers >= 2
        and p1.kernel == 1 and p1.stride == 1
        and p2.kernel == 3 and p2.stride == 1
        and p2.in_channels == p1.out_channels
        and (not use_skip_connection or p2.out_channels == p1.in_channels)
        and W % 8 == 0)

    def run_generic(x_cur, p, wsb, skip2d=None):
        w, scale, bias = wsb
        cin_p = _round_up(p.in_channels, LANE)
        cout_p = _round_up(p.out_channels, LANE)
        assert x_cur.shape[-1] == cin_p, "channel chain mismatch"
        w2d, b = _fold_and_pad_weights(p, w, scale, bias, cin_p, cout_p)
        N_, H_, W_, _ = x_cur.shape
        k, s = p.kernel, p.stride
        if s == 1 and k == 1:
            a = x_cur.reshape(N_ * H_ * W_, cin_p)
            y = fused_matmul(a, w2d, b, skip2d=skip2d, use_act=p.use_activation)
            return y.reshape(N_, H_, W_, cout_p)
        # TODO(synk): non-fused kxk / stride>1 layers still materialize a
        #             host-side im2col (darknet residual blocks never hit this).
        if s > 1:
            pad = (1, 0, 1, 0)          # ZeroPad2d((left=1, right=0, top=1, bottom=0))
        else:
            pt, pb = _same_padding(k)
            pad = (pt, pb, pt, pb)
        patches, Ho, Wo = _im2col(x_cur, k, s, pad)
        a = patches.reshape(N_ * Ho * Wo, k * k * cin_p)
        y = fused_matmul(a, w2d, b, skip2d=skip2d, use_act=p.use_activation)
        return y.reshape(N_, Ho, Wo, cout_p)

    if fuse_tail:
        for idx in range(n_layers - 2):
            x = run_generic(x, params[idx], layer_weights[idx])
        cin_p = _round_up(p1.in_channels, LANE)
        cmid_p = _round_up(p1.out_channels, LANE)
        cout_p = _round_up(p2.out_channels, LANE)
        assert x.shape[-1] == cin_p, "channel chain mismatch"
        w1m, b1 = _fold_and_pad_weights(p1, *layer_weights[-2], cin_p, cmid_p)
        w2m, b2 = _fold_and_pad_weights(p2, *layer_weights[-1], cmid_p, cout_p)
        x = fused_residual_pair(x, w1m, b1, w2m, b2, k=3,
                                act1=p1.use_activation,
                                act2=p2.use_activation,
                                add_skip=use_skip_connection)
        out_c = p2.out_channels
    else:
        skip = None
        for idx, (p, wsb) in enumerate(zip(params, layer_weights)):
            if idx == skip_idx:
                skip = x
            is_last = idx == n_layers - 1
            skip2d = None
            if is_last and use_skip_connection and skip is not None:
                skip2d = skip.reshape(-1, skip.shape[-1])
            x = run_generic(x, p, wsb, skip2d=skip2d)
        out_c = params[-1].out_channels

    # Strip the channel padding, back to NCHW f32.
    x = x[..., :out_c].astype(jnp.float32)
    return jnp.transpose(x, (0, 3, 1, 2))


# ----------------------------------------------------------------------------
# Pure-JAX reference (mirrors the kernels' bf16 rounding points)
# ----------------------------------------------------------------------------
def reference_block(x_nchw, params, layer_weights, use_skip_connection=True):
    x = jnp.transpose(x_nchw, (0, 2, 3, 1)).astype(jnp.bfloat16).astype(jnp.float32)
    skip_idx = len(params) - 2
    skip = None
    for idx, (p, (w, scale, bias)) in enumerate(zip(params, layer_weights)):
        if idx == skip_idx:
            skip = x
        w_f = (w * scale[:, None, None, None]).astype(jnp.bfloat16).astype(jnp.float32)
        w_hwio = jnp.transpose(w_f, (2, 3, 1, 0))
        if p.stride > 1:
            pad = ((1, 0), (1, 0))
        else:
            pt = (p.kernel - 1) // 2
            pb = p.kernel - 1 - pt
            pad = ((pt, pb), (pt, pb))
        y = jax.lax.conv_general_dilated(
            x, w_hwio, window_strides=(p.stride, p.stride), padding=pad,
            dimension_numbers=("NHWC", "HWIO", "NHWC"))
        y = y + bias[None, None, None, :]
        if p.use_activation:
            y = _leaky(y)
        is_last = idx == len(params) - 1
        if is_last and use_skip_connection and skip is not None:
            y = y + skip
        x = y.astype(jnp.bfloat16).astype(jnp.float32)
    return jnp.transpose(x, (0, 3, 1, 2))


if __name__ == "__main__":
    key = jax.random.PRNGKey(0)
    kx, kp = jax.random.split(key)

    # Small shapes consistent with a darknet53 residual block.
    N, C, H, W = 2, 8, 16, 16
    x = jax.random.normal(kx, (N, C, H, W), jnp.float32)

    params = [
        ConvLayerParam(C, C // 2, 1, 1, True, True),   # 1x1 squeeze
        ConvLayerParam(C // 2, C, 3, 1, True, True),   # 3x3 expand
    ]
    layer_keys = jax.random.split(kp, len(params))
    layer_weights = [init_layer_params(k_, p) for k_, p in zip(layer_keys, params)]

    fwd = jax.jit(lambda inp: yolo_conv_block(inp, params, layer_weights,
                                              use_skip_connection=True))
    out = jax.block_until_ready(fwd(x))
    assert out.shape == (N, C, H, W) and out.dtype == jnp.float32
    assert bool(jnp.all(jnp.isfinite(out)))

    ref = reference_block(x, params, layer_weights, use_skip_connection=True)
    max_err = float(jnp.max(jnp.abs(out - ref)))
    assert max_err < 3e-2, f"mismatch vs reference: {max_err}"
    print("KERNEL_OK")
</pallas_src>

<mosaic_0001>
module attributes {stable_mosaic.version = 11 : i64} {
  func.func @kernel(%arg0: i32, %arg1: i32, %arg2: memref<32x16x128xbf16, #tpu.memory_space<any>>, %arg3: memref<128x128xbf16, #tpu.memory_space<vmem>>, %arg4: memref<1x128xf32, #tpu.memory_space<vmem>>, %arg5: memref<1152x128xbf16, #tpu.memory_space<vmem>>, %arg6: memref<1x128xf32, #tpu.memory_space<vmem>>, %arg7: memref<256x128xbf16, #tpu.memory_space<vmem>>, %arg8: memref<36x16x128xbf16, #tpu.memory_space<vmem>>, %arg9: memref<2x3x!tpu.dma_semaphore, #tpu.memory_space<semaphore_mem>>, %arg10: memref<18x18x128xbf16, #tpu.memory_space<vmem>>, %arg11: memref<256x1152xbf16, #tpu.memory_space<vmem>>) attributes {dimension_semantics = [#tpu.dimension_semantics<parallel>, #tpu.dimension_semantics<arbitrary>], iteration_bounds = array<i64: 2, 1>, scalar_prefetch = 0 : i64, scratch_operands = 4 : i64, tpu.core_type = #tpu.core_type<tc>, window_params = [{}, {pipeline_mode = #tpu.pipeline_mode<synchronous>, transform_indices = @transform_1, window_bounds = array<i64: 128, 128>}, {pipeline_mode = #tpu.pipeline_mode<synchronous>, transform_indices = @transform_2, window_bounds = array<i64: 1, 128>}, {pipeline_mode = #tpu.pipeline_mode<synchronous>, transform_indices = @transform_3, window_bounds = array<i64: 1152, 128>}, {pipeline_mode = #tpu.pipeline_mode<synchronous>, transform_indices = @transform_4, window_bounds = array<i64: 1, 128>}, {transform_indices = @transform_5, window_bounds = array<i64: 256, 128>}]} {
    %c0_i32 = arith.constant 0 : i32
    %0 = arith.cmpi eq, %arg1, %c0_i32 : i32
    %1 = arith.extui %0 : i1 to i32
    %c0_i32_0 = arith.constant 0 : i32
    %2 = arith.cmpi ne, %1, %c0_i32_0 : i32
    scf.if %2 {
      %c1_i32_84 = arith.constant 1 : i32
      %96 = arith.muli %arg0, %c1_i32_84 : i32
      %c1_i32_85 = arith.constant 1 : i32
      %97 = arith.andi %96, %c1_i32_85 : i32
      %c16_i32_86 = arith.constant 16 : i32
      %98 = arith.muli %arg0, %c16_i32_86 : i32
      %c18_i32_87 = arith.constant 18 : i32
      %99 = arith.muli %97, %c18_i32_87 : i32
      %c1_i32_88 = arith.constant 1 : i32
      %100 = arith.addi %99, %c1_i32_88 : i32
      %c0_i32_89 = arith.constant 0 : i32
      %c0_i32_90 = arith.constant 0 : i32
      %c0_i32_91 = arith.constant 0 : i32
      %101 = tpu.memref_slice %arg2[%98, %c0_i32_90, %c0_i32_91] : memref<32x16x128xbf16, #tpu.memory_space<any>> -> memref<16x16x128xbf16, #tpu.memory_space<any>>
      %c0_i32_92 = arith.constant 0 : i32
      %c0_i32_93 = arith.constant 0 : i32
      %102 = tpu.memref_slice %arg8[%100, %c0_i32_92, %c0_i32_93] : memref<36x16x128xbf16, #tpu.memory_space<vmem>> -> memref<16x16x128xbf16, #tpu.memory_space<vmem>>
      %103 = tpu.memref_slice %arg9[%97, %c0_i32_89] : memref<2x3x!tpu.dma_semaphore, #tpu.memory_space<semaphore_mem>> -> memref<1x1x!tpu.dma_semaphore, #tpu.memory_space<semaphore_mem>>
      %104 = tpu.memref_squeeze %103 : memref<1x1x!tpu.dma_semaphore, #tpu.memory_space<semaphore_mem>> -> memref<!tpu.dma_semaphore, #tpu.memory_space<semaphore_mem>>
      tpu.enqueue_dma source(%101 : memref<16x16x128xbf16, #tpu.memory_space<any>>) target(%102 : memref<16x16x128xbf16, #tpu.memory_space<vmem>>) target_semaphore(%104 : memref<!tpu.dma_semaphore, #tpu.memory_space<semaphore_mem>>)
    } else {
    }
    %c1_i32 = arith.constant 1 : i32
    %3 = arith.addi %arg1, %c1_i32 : i32
    %c1_i32_1 = arith.constant 1 : i32
    %4 = arith.cmpi slt, %3, %c1_i32_1 : i32
    %5 = arith.extui %4 : i1 to i32
    %c0_i32_2 = arith.constant 0 : i32
    %6 = arith.cmpi ne, %5, %c0_i32_2 : i32
    scf.if %6 {
      %c1_i32_84 = arith.constant 1 : i32
      %96 = arith.addi %arg1, %c1_i32_84 : i32
      %c1_i32_85 = arith.constant 1 : i32
      %97 = arith.muli %arg0, %c1_i32_85 : i32
      %98 = arith.addi %97, %96 : i32
      %c1_i32_86 = arith.constant 1 : i32
      %99 = arith.andi %98, %c1_i32_86 : i32
      %c16_i32_87 = arith.constant 16 : i32
      %100 = arith.muli %arg0, %c16_i32_87 : i32
      %c16_i32_88 = arith.constant 16 : i32
      %101 = arith.muli %96, %c16_i32_88 : i32
      %102 = arith.addi %100, %101 : i32
      %c18_i32_89 = arith.constant 18 : i32
      %103 = arith.muli %99, %c18_i32_89 : i32
      %c1_i32_90 = arith.constant 1 : i32
      %104 = arith.addi %103, %c1_i32_90 : i32
      %c0_i32_91 = arith.constant 0 : i32
      %c0_i32_92 = arith.constant 0 : i32
      %c0_i32_93 = arith.constant 0 : i32
      %105 = tpu.memref_slice %arg2[%102, %c0_i32_92, %c0_i32_93] : memref<32x16x128xbf16, #tpu.memory_space<any>> -> memref<16x16x128xbf16, #tpu.memory_space<any>>
      %c0_i32_94 = arith.constant 0 : i32
      %c0_i32_95 = arith.constant 0 : i32
      %106 = tpu.memref_slice %arg8[%104, %c0_i32_94, %c0_i32_95] : memref<36x16x128xbf16, #tpu.memory_space<vmem>> -> memref<16x16x128xbf16, #tpu.memory_space<vmem>>
      %107 = tpu.memref_slice %arg9[%99, %c0_i32_91] : memref<2x3x!tpu.dma_semaphore, #tpu.memory_space<semaphore_mem>> -> memref<1x1x!tpu.dma_semaphore, #tpu.memory_space<semaphore_mem>>
      %108 = tpu.memref_squeeze %107 : memref<1x1x!tpu.dma_semaphore, #tpu.memory_space<semaphore_mem>> -> memref<!tpu.dma_semaphore, #tpu.memory_space<semaphore_mem>>
      tpu.enqueue_dma source(%105 : memref<16x16x128xbf16, #tpu.memory_space<any>>) target(%106 : memref<16x16x128xbf16, #tpu.memory_space<vmem>>) target_semaphore(%108 : memref<!tpu.dma_semaphore, #tpu.memory_space<semaphore_mem>>)
      %c1_i32_96 = arith.constant 1 : i32
      %109 = arith.subi %102, %c1_i32_96 : i32
      %c18_i32_97 = arith.constant 18 : i32
      %110 = arith.muli %99, %c18_i32_97 : i32
      %c1_i32_98 = arith.constant 1 : i32
      %c0_i32_99 = arith.constant 0 : i32
      %c0_i32_100 = arith.constant 0 : i32
      %111 = tpu.memref_slice %arg2[%109, %c0_i32_99, %c0_i32_100] : memref<32x16x128xbf16, #tpu.memory_space<any>> -> memref<1x16x128xbf16, #tpu.memory_space<any>>
      %c0_i32_101 = arith.constant 0 : i32
      %c0_i32_102 = arith.constant 0 : i32
      %112 = tpu.memref_slice %arg8[%110, %c0_i32_101, %c0_i32_102] : memref<36x16x128xbf16, #tpu.memory_space<vmem>> -> memref<1x16x128xbf16, #tpu.memory_space<vmem>>
      %113 = tpu.memref_slice %arg9[%99, %c1_i32_98] : memref<2x3x!tpu.dma_semaphore, #tpu.memory_space<semaphore_mem>> -> memref<1x1x!tpu.dma_semaphore, #tpu.memory_space<semaphore_mem>>
      %114 = tpu.memref_squeeze %113 : memref<1x1x!tpu.dma_semaphore, #tpu.memory_space<semaphore_mem>> -> memref<!tpu.dma_semaphore, #tpu.memory_space<semaphore_mem>>
      tpu.enqueue_dma source(%111 : memref<1x16x128xbf16, #tpu.memory_space<any>>) target(%112 : memref<1x16x128xbf16, #tpu.memory_space<vmem>>) target_semaphore(%114 : memref<!tpu.dma_semaphore, #tpu.memory_space<semaphore_mem>>)
      %c0_i32_103 = arith.constant 0 : i32
      %115 = arith.cmpi slt, %96, %c0_i32_103 : i32
      %116 = arith.extui %115 : i1 to i32
      %c0_i32_104 = arith.constant 0 : i32
      %117 = arith.cmpi ne, %116, %c0_i32_104 : i32
      scf.if %117 {
        %c16_i32_105 = arith.constant 16 : i32
        %118 = arith.addi %102, %c16_i32_105 : i32
        %c18_i32_106 = arith.constant 18 : i32
        %119 = arith.muli %99, %c18_i32_106 : i32
        %c16_i32_107 = arith.constant 16 : i32
        %120 = arith.addi %119, %c16_i32_107 : i32
        %c1_i32_108 = arith.constant 1 : i32
        %121 = arith.addi %120, %c1_i32_108 : i32
        %c2_i32 = arith.constant 2 : i32
        %c0_i32_109 = arith.constant 0 : i32
        %c0_i32_110 = arith.constant 0 : i32
        %122 = tpu.memref_slice %arg2[%118, %c0_i32_109, %c0_i32_110] : memref<32x16x128xbf16, #tpu.memory_space<any>> -> memref<1x16x128xbf16, #tpu.memory_space<any>>
        %c0_i32_111 = arith.constant 0 : i32
        %c0_i32_112 = arith.constant 0 : i32
        %123 = tpu.memref_slice %arg8[%121, %c0_i32_111, %c0_i32_112] : memref<36x16x128xbf16, #tpu.memory_space<vmem>> -> memref<1x16x128xbf16, #tpu.memory_space<vmem>>
        %124 = tpu.memref_slice %arg9[%99, %c2_i32] : memref<2x3x!tpu.dma_semaphore, #tpu.memory_space<semaphore_mem>> -> memref<1x1x!tpu.dma_semaphore, #tpu.memory_space<semaphore_mem>>
        %125 = tpu.memref_squeeze %124 : memref<1x1x!tpu.dma_semaphore, #tpu.memory_space<semaphore_mem>> -> memref<!tpu.dma_semaphore, #tpu.memory_space<semaphore_mem>>
        tpu.enqueue_dma source(%122 : memref<1x16x128xbf16, #tpu.memory_space<any>>) target(%123 : memref<1x16x128xbf16, #tpu.memory_space<vmem>>) target_semaphore(%125 : memref<!tpu.dma_semaphore, #tpu.memory_space<semaphore_mem>>)
      } else {
      }
    } else {
    }
    %c1_i32_3 = arith.constant 1 : i32
    %7 = arith.muli %arg0, %c1_i32_3 : i32
    %8 = arith.addi %7, %arg1 : i32
    %c1_i32_4 = arith.constant 1 : i32
    %9 = arith.andi %8, %c1_i32_4 : i32
    %c16_i32 = arith.constant 16 : i32
    %10 = arith.muli %arg0, %c16_i32 : i32
    %c16_i32_5 = arith.constant 16 : i32
    %11 = arith.muli %arg1, %c16_i32_5 : i32
    %12 = arith.addi %10, %11 : i32
    %c18_i32 = arith.constant 18 : i32
    %13 = arith.muli %9, %c18_i32 : i32
    %c1_i32_6 = arith.constant 1 : i32
    %14 = arith.addi %13, %c1_i32_6 : i32
    %c0_i32_7 = arith.constant 0 : i32
    %c0_i32_8 = arith.constant 0 : i32
    %c0_i32_9 = arith.constant 0 : i32
    %15 = tpu.memref_slice %arg2[%12, %c0_i32_8, %c0_i32_9] : memref<32x16x128xbf16, #tpu.memory_space<any>> -> memref<16x16x128xbf16, #tpu.memory_space<any>>
    %c0_i32_10 = arith.constant 0 : i32
    %c0_i32_11 = arith.constant 0 : i32
    %16 = tpu.memref_slice %arg8[%14, %c0_i32_10, %c0_i32_11] : memref<36x16x128xbf16, #tpu.memory_space<vmem>> -> memref<16x16x128xbf16, #tpu.memory_space<vmem>>
    %17 = tpu.memref_slice %arg9[%9, %c0_i32_7] : memref<2x3x!tpu.dma_semaphore, #tpu.memory_space<semaphore_mem>> -> memref<1x1x!tpu.dma_semaphore, #tpu.memory_space<semaphore_mem>>
    %18 = tpu.memref_squeeze %17 : memref<1x1x!tpu.dma_semaphore, #tpu.memory_space<semaphore_mem>> -> memref<!tpu.dma_semaphore, #tpu.memory_space<semaphore_mem>>
    tpu.wait_dma2 semaphore(%18 : memref<!tpu.dma_semaphore, #tpu.memory_space<semaphore_mem>>) src(%15 : memref<16x16x128xbf16, #tpu.memory_space<any>>) dst(%16 : memref<16x16x128xbf16, #tpu.memory_space<vmem>>)
    %c0_i32_12 = arith.constant 0 : i32
    %19 = arith.cmpi sgt, %arg1, %c0_i32_12 : i32
    %20 = arith.extui %19 : i1 to i32
    %c0_i32_13 = arith.constant 0 : i32
    %21 = arith.cmpi ne, %20, %c0_i32_13 : i32
    scf.if %21 {
      %c1_i32_84 = arith.constant 1 : i32
      %96 = arith.subi %12, %c1_i32_84 : i32
      %c18_i32_85 = arith.constant 18 : i32
      %97 = arith.muli %9, %c18_i32_85 : i32
      %c1_i32_86 = arith.constant 1 : i32
      %c0_i32_87 = arith.constant 0 : i32
      %c0_i32_88 = arith.constant 0 : i32
      %98 = tpu.memref_slice %arg2[%96, %c0_i32_87, %c0_i32_88] : memref<32x16x128xbf16, #tpu.memory_space<any>> -> memref<1x16x128xbf16, #tpu.memory_space<any>>
      %c0_i32_89 = arith.constant 0 : i32
      %c0_i32_90 = arith.constant 0 : i32
      %99 = tpu.memref_slice %arg8[%97, %c0_i32_89, %c0_i32_90] : memref<36x16x128xbf16, #tpu.memory_space<vmem>> -> memref<1x16x128xbf16, #tpu.memory_space<vmem>>
      %100 = tpu.memref_slice %arg9[%9, %c1_i32_86] : memref<2x3x!tpu.dma_semaphore, #tpu.memory_space<semaphore_mem>> -> memref<1x1x!tpu.dma_semaphore, #tpu.memory_space<semaphore_mem>>
      %101 = tpu.memref_squeeze %100 : memref<1x1x!tpu.dma_semaphore, #tpu.memory_space<semaphore_mem>> -> memref<!tpu.dma_semaphore, #tpu.memory_space<semaphore_mem>>
      tpu.wait_dma2 semaphore(%101 : memref<!tpu.dma_semaphore, #tpu.memory_space<semaphore_mem>>) src(%98 : memref<1x16x128xbf16, #tpu.memory_space<any>>) dst(%99 : memref<1x16x128xbf16, #tpu.memory_space<vmem>>)
    } else {
    }
    %c0_i32_14 = arith.constant 0 : i32
    %22 = arith.cmpi slt, %arg1, %c0_i32_14 : i32
    %23 = arith.extui %22 : i1 to i32
    %c0_i32_15 = arith.constant 0 : i32
    %24 = arith.cmpi ne, %23, %c0_i32_15 : i32
    scf.if %24 {
      %c16_i32_84 = arith.constant 16 : i32
      %96 = arith.addi %12, %c16_i32_84 : i32
      %c18_i32_85 = arith.constant 18 : i32
      %97 = arith.muli %9, %c18_i32_85 : i32
      %c16_i32_86 = arith.constant 16 : i32
      %98 = arith.addi %97, %c16_i32_86 : i32
      %c1_i32_87 = arith.constant 1 : i32
      %99 = arith.addi %98, %c1_i32_87 : i32
      %c2_i32 = arith.constant 2 : i32
      %c0_i32_88 = arith.constant 0 : i32
      %c0_i32_89 = arith.constant 0 : i32
      %100 = tpu.memref_slice %arg2[%96, %c0_i32_88, %c0_i32_89] : memref<32x16x128xbf16, #tpu.memory_space<any>> -> memref<1x16x128xbf16, #tpu.memory_space<any>>
      %c0_i32_90 = arith.constant 0 : i32
      %c0_i32_91 = arith.constant 0 : i32
      %101 = tpu.memref_slice %arg8[%99, %c0_i32_90, %c0_i32_91] : memref<36x16x128xbf16, #tpu.memory_space<vmem>> -> memref<1x16x128xbf16, #tpu.memory_space<vmem>>
      %102 = tpu.memref_slice %arg9[%9, %c2_i32] : memref<2x3x!tpu.dma_semaphore, #tpu.memory_space<semaphore_mem>> -> memref<1x1x!tpu.dma_semaphore, #tpu.memory_space<semaphore_mem>>
      %103 = tpu.memref_squeeze %102 : memref<1x1x!tpu.dma_semaphore, #tpu.memory_space<semaphore_mem>> -> memref<!tpu.dma_semaphore, #tpu.memory_space<semaphore_mem>>
      tpu.wait_dma2 semaphore(%103 : memref<!tpu.dma_semaphore, #tpu.memory_space<semaphore_mem>>) src(%100 : memref<1x16x128xbf16, #tpu.memory_space<any>>) dst(%101 : memref<1x16x128xbf16, #tpu.memory_space<vmem>>)
    } else {
    }
    %c18_i32_16 = arith.constant 18 : i32
    %25 = arith.muli %9, %c18_i32_16 : i32
    %26 = arith.index_cast %25 : i32 to index
    %c0 = arith.constant 0 : index
    %c0_17 = arith.constant 0 : index
    %27 = vector.load %arg8[%26, %c0, %c0_17] : memref<36x16x128xbf16, #tpu.memory_space<vmem>>, vector<18x16x128xbf16>
    %28 = vector.shape_cast %27 : vector<18x16x128xbf16> to vector<288x128xbf16>
    %c0_18 = arith.constant 0 : index
    %c0_19 = arith.constant 0 : index
    %29 = vector.load %arg3[%c0_18, %c0_19] : memref<128x128xbf16, #tpu.memory_space<vmem>>, vector<128x128xbf16>
    %cst = arith.constant dense<0.000000e+00> : vector<288x128xf32>
    %30 = tpu.matmul %28, %29, %cst {dimension_numbers = #tpu.dot_dimension_numbers<[1], [0], [0], [1], [0, 0, 1, 1], [], []>} : vector<288x128xbf16>, vector<128x128xbf16>, vector<288x128xf32> -> vector<288x128xf32>
    %c0_20 = arith.constant 0 : index
    %c0_21 = arith.constant 0 : index
    %31 = vector.load %arg4[%c0_20, %c0_21] : memref<1x128xf32, #tpu.memory_space<vmem>>, vector<1x128xf32>
    %32 = vector.broadcast %31 : vector<1x128xf32> to vector<288x128xf32>
    %33 = arith.addf %30, %32 : vector<288x128xf32>
    %cst_22 = arith.constant 0.000000e+00 : f32
    %34 = vector.broadcast %cst_22 : f32 to vector<288x128xf32>
    %35 = arith.cmpf ogt, %33, %34 : vector<288x128xf32>
    %cst_23 = arith.constant 0.00999999977 : f32
    %36 = vector.broadcast %cst_23 : f32 to vector<288x128xf32>
    %37 = arith.mulf %36, %33 : vector<288x128xf32>
    %38 = arith.select %35, %33, %37 : vector<288x128xi1>, vector<288x128xf32>
    %39 = arith.truncf %38 : vector<288x128xf32> to vector<288x128xbf16>
    %40 = vector.shape_cast %39 : vector<288x128xbf16> to vector<18x16x128xbf16>
    %c0_24 = arith.constant 0 : index
    %c1 = arith.constant 1 : index
    %c0_25 = arith.constant 0 : index
    %41 = vector.load %arg10[%c0_24, %c1, %c0_25] : memref<18x18x128xbf16, #tpu.memory_space<vmem>>, vector<18x16x128xbf16>
    tpu.vector_store %arg10[%c0_24, %c1, %c0_25], %40 {strides = array<i32>} : memref<18x18x128xbf16, #tpu.memory_space<vmem>>, vector<18x16x128xbf16>,
    %cst_26 = arith.constant 0.000000e+00 : bf16
    %42 = vector.broadcast %cst_26 : bf16 to vector<18x1x128xbf16>
    %c0_27 = arith.constant 0 : index
    %c0_28 = arith.constant 0 : index
    %c0_29 = arith.constant 0 : index
    %43 = vector.load %arg10[%c0_27, %c0_28, %c0_29] : memref<18x18x128xbf16, #tpu.memory_space<vmem>>, vector<18x1x128xbf16>
    tpu.vector_store %arg10[%c0_27, %c0_28, %c0_29], %42 {strides = array<i32>} : memref<18x18x128xbf16, #tpu.memory_space<vmem>>, vector<18x1x128xbf16>,
    %c0_30 = arith.constant 0 : index
    %c17 = arith.constant 17 : index
    %c0_31 = arith.constant 0 : index
    %44 = vector.load %arg10[%c0_30, %c17, %c0_31] : memref<18x18x128xbf16, #tpu.memory_space<vmem>>, vector<18x1x128xbf16>
    tpu.vector_store %arg10[%c0_30, %c17, %c0_31], %42 {strides = array<i32>} : memref<18x18x128xbf16, #tpu.memory_space<vmem>>, vector<18x1x128xbf16>,
    %cst_32 = arith.constant 0.000000e+00 : bf16
    %45 = vector.broadcast %cst_32 : bf16 to vector<1x18x128xbf16>
    %c0_i32_33 = arith.constant 0 : i32
    %46 = arith.cmpi eq, %arg1, %c0_i32_33 : i32
    %47 = arith.extui %46 : i1 to i32
    %c0_i32_34 = arith.constant 0 : i32
    %48 = arith.cmpi ne, %47, %c0_i32_34 : i32
    scf.if %48 {
      %c0_84 = arith.constant 0 : index
      %c0_85 = arith.constant 0 : index
      %c0_86 = arith.constant 0 : index
      %96 = vector.load %arg10[%c0_84, %c0_85, %c0_86] : memref<18x18x128xbf16, #tpu.memory_space<vmem>>, vector<1x18x128xbf16>
      tpu.vector_store %arg10[%c0_84, %c0_85, %c0_86], %45 {strides = array<i32>} : memref<18x18x128xbf16, #tpu.memory_space<vmem>>, vector<1x18x128xbf16>,
    } else {
    }
    %c0_i32_35 = arith.constant 0 : i32
    %49 = arith.cmpi eq, %arg1, %c0_i32_35 : i32
    %50 = arith.extui %49 : i1 to i32
    %c0_i32_36 = arith.constant 0 : i32
    %51 = arith.cmpi ne, %50, %c0_i32_36 : i32
    scf.if %51 {
      %c17_84 = arith.constant 17 : index
      %c0_85 = arith.constant 0 : index
      %c0_86 = arith.constant 0 : index
      %96 = vector.load %arg10[%c17_84, %c0_85, %c0_86] : memref<18x18x128xbf16, #tpu.memory_space<vmem>>, vector<1x18x128xbf16>
      tpu.vector_store %arg10[%c17_84, %c0_85, %c0_86], %45 {strides = array<i32>} : memref<18x18x128xbf16, #tpu.memory_space<vmem>>, vector<1x18x128xbf16>,
    } else {
    }
    %c0_37 = arith.constant 0 : index
    %c0_38 = arith.constant 0 : index
    %c0_39 = arith.constant 0 : index
    %52 = vector.load %arg10[%c0_37, %c0_38, %c0_39] : memref<18x18x128xbf16, #tpu.memory_space<vmem>>, vector<16x16x128xbf16>
    %53 = vector.shape_cast %52 : vector<16x16x128xbf16> to vector<256x128xbf16>
    %c0_40 = arith.constant 0 : index
    %c0_41 = arith.constant 0 : index
    %54 = vector.load %arg11[%c0_40, %c0_41] : memref<256x1152xbf16, #tpu.memory_space<vmem>>, vector<256x128xbf16>
    tpu.vector_store %arg11[%c0_40, %c0_41], %53 {strides = array<i32>} : memref<256x1152xbf16, #tpu.memory_space<vmem>>, vector<256x128xbf16>,
    %c0_42 = arith.constant 0 : index
    %c1_43 = arith.constant 1 : index
    %c0_44 = arith.constant 0 : index
    %55 = vector.load %arg10[%c0_42, %c1_43, %c0_44] : memref<18x18x128xbf16, #tpu.memory_space<vmem>>, vector<16x16x128xbf16>
    %56 = vector.shape_cast %55 : vector<16x16x128xbf16> to vector<256x128xbf16>
    %c0_45 = arith.constant 0 : index
    %c128 = arith.constant 128 : index
    %57 = vector.load %arg11[%c0_45, %c128] : memref<256x1152xbf16, #tpu.memory_space<vmem>>, vector<256x128xbf16>
    tpu.vector_store %arg11[%c0_45, %c128], %56 {strides = array<i32>} : memref<256x1152xbf16, #tpu.memory_space<vmem>>, vector<256x128xbf16>,
    %c0_46 = arith.constant 0 : index
    %c2 = arith.constant 2 : index
    %c0_47 = arith.constant 0 : index
    %58 = vector.load %arg10[%c0_46, %c2, %c0_47] : memref<18x18x128xbf16, #tpu.memory_space<vmem>>, vector<16x16x128xbf16>
    %59 = vector.shape_cast %58 : vector<16x16x128xbf16> to vector<256x128xbf16>
    %c0_48 = arith.constant 0 : index
    %c256 = arith.constant 256 : index
    %60 = vector.load %arg11[%c0_48, %c256] : memref<256x1152xbf16, #tpu.memory_space<vmem>>, vector<256x128xbf16>
    tpu.vector_store %arg11[%c0_48, %c256], %59 {strides = array<i32>} : memref<256x1152xbf16, #tpu.memory_space<vmem>>, vector<256x128xbf16>,
    %c1_49 = arith.constant 1 : index
    %c0_50 = arith.constant 0 : index
    %c0_51 = arith.constant 0 : index
    %61 = vector.load %arg10[%c1_49, %c0_50, %c0_51] : memref<18x18x128xbf16, #tpu.memory_space<vmem>>, vector<16x16x128xbf16>
    %62 = vector.shape_cast %61 : vector<16x16x128xbf16> to vector<256x128xbf16>
    %c0_52 = arith.constant 0 : index
    %c384 = arith.constant 384 : index
    %63 = vector.load %arg11[%c0_52, %c384] : memref<256x1152xbf16, #tpu.memory_space<vmem>>, vector<256x128xbf16>
    tpu.vector_store %arg11[%c0_52, %c384], %62 {strides = array<i32>} : memref<256x1152xbf16, #tpu.memory_space<vmem>>, vector<256x128xbf16>,
    %c1_53 = arith.constant 1 : index
    %c1_54 = arith.constant 1 : index
    %c0_55 = arith.constant 0 : index
    %64 = vector.load %arg10[%c1_53, %c1_54, %c0_55] : memref<18x18x128xbf16, #tpu.memory_space<vmem>>, vector<16x16x128xbf16>
    %65 = vector.shape_cast %64 : vector<16x16x128xbf16> to vector<256x128xbf16>
    %c0_56 = arith.constant 0 : index
    %c512 = arith.constant 512 : index
    %66 = vector.load %arg11[%c0_56, %c512] : memref<256x1152xbf16, #tpu.memory_space<vmem>>, vector<256x128xbf16>
    tpu.vector_store %arg11[%c0_56, %c512], %65 {strides = array<i32>} : memref<256x1152xbf16, #tpu.memory_space<vmem>>, vector<256x128xbf16>,
    %c1_57 = arith.constant 1 : index
    %c2_58 = arith.constant 2 : index
    %c0_59 = arith.constant 0 : index
    %67 = vector.load %arg10[%c1_57, %c2_58, %c0_59] : memref<18x18x128xbf16, #tpu.memory_space<vmem>>, vector<16x16x128xbf16>
    %68 = vector.shape_cast %67 : vector<16x16x128xbf16> to vector<256x128xbf16>
    %c0_60 = arith.constant 0 : index
    %c640 = arith.constant 640 : index
    %69 = vector.load %arg11[%c0_60, %c640] : memref<256x1152xbf16, #tpu.memory_space<vmem>>, vector<256x128xbf16>
    tpu.vector_store %arg11[%c0_60, %c640], %68 {strides = array<i32>} : memref<256x1152xbf16, #tpu.memory_space<vmem>>, vector<256x128xbf16>,
    %c2_61 = arith.constant 2 : index
    %c0_62 = arith.constant 0 : index
    %c0_63 = arith.constant 0 : index
    %70 = vector.load %arg10[%c2_61, %c0_62, %c0_63] : memref<18x18x128xbf16, #tpu.memory_space<vmem>>, vector<16x16x128xbf16>
    %71 = vector.shape_cast %70 : vector<16x16x128xbf16> to vector<256x128xbf16>
    %c0_64 = arith.constant 0 : index
    %c768 = arith.constant 768 : index
    %72 = vector.load %arg11[%c0_64, %c768] : memref<256x1152xbf16, #tpu.memory_space<vmem>>, vector<256x128xbf16>
    tpu.vector_store %arg11[%c0_64, %c768], %71 {strides = array<i32>} : memref<256x1152xbf16, #tpu.memory_space<vmem>>, vector<256x128xbf16>,
    %c2_65 = arith.constant 2 : index
    %c1_66 = arith.constant 1 : index
    %c0_67 = arith.constant 0 : index
    %73 = vector.load %arg10[%c2_65, %c1_66, %c0_67] : memref<18x18x128xbf16, #tpu.memory_space<vmem>>, vector<16x16x128xbf16>
    %74 = vector.shape_cast %73 : vector<16x16x128xbf16> to vector<256x128xbf16>
    %c0_68 = arith.constant 0 : index
    %c896 = arith.constant 896 : index
    %75 = vector.load %arg11[%c0_68, %c896] : memref<256x1152xbf16, #tpu.memory_space<vmem>>, vector<256x128xbf16>
    tpu.vector_store %arg11[%c0_68, %c896], %74 {strides = array<i32>} : memref<256x1152xbf16, #tpu.memory_space<vmem>>, vector<256x128xbf16>,
    %c2_69 = arith.constant 2 : index
    %c2_70 = arith.constant 2 : index
    %c0_71 = arith.constant 0 : index
    %76 = vector.load %arg10[%c2_69, %c2_70, %c0_71] : memref<18x18x128xbf16, #tpu.memory_space<vmem>>, vector<16x16x128xbf16>
    %77 = vector.shape_cast %76 : vector<16x16x128xbf16> to vector<256x128xbf16>
    %c0_72 = arith.constant 0 : index
    %c1024 = arith.constant 1024 : index
    %78 = vector.load %arg11[%c0_72, %c1024] : memref<256x1152xbf16, #tpu.memory_space<vmem>>, vector<256x128xbf16>
    tpu.vector_store %arg11[%c0_72, %c1024], %77 {strides = array<i32>} : memref<256x1152xbf16, #tpu.memory_space<vmem>>, vector<256x128xbf16>,
    %c0_73 = arith.constant 0 : index
    %c0_74 = arith.constant 0 : index
    %79 = vector.load %arg11[%c0_73, %c0_74] : memref<256x1152xbf16, #tpu.memory_space<vmem>>, vector<256x1152xbf16>
    %c0_75 = arith.constant 0 : index
    %c0_76 = arith.constant 0 : index
    %80 = vector.load %arg5[%c0_75, %c0_76] : memref<1152x128xbf16, #tpu.memory_space<vmem>>, vector<1152x128xbf16>
    %cst_77 = arith.constant dense<0.000000e+00> : vector<256x128xf32>
    %81 = tpu.matmul %79, %80, %cst_77 {dimension_numbers = #tpu.dot_dimension_numbers<[1], [0], [0], [1], [0, 0, 1, 1], [], []>} : vector<256x1152xbf16>, vector<1152x128xbf16>, vector<256x128xf32> -> vector<256x128xf32>
    %c0_78 = arith.constant 0 : index
    %c0_79 = arith.constant 0 : index
    %82 = vector.load %arg6[%c0_78, %c0_79] : memref<1x128xf32, #tpu.memory_space<vmem>>, vector<1x128xf32>
    %83 = vector.broadcast %82 : vector<1x128xf32> to vector<256x128xf32>
    %84 = arith.addf %81, %83 : vector<256x128xf32>
    %cst_80 = arith.constant 0.000000e+00 : f32
    %85 = vector.broadcast %cst_80 : f32 to vector<256x128xf32>
    %86 = arith.cmpf ogt, %84, %85 : vector<256x128xf32>
    %cst_81 = arith.constant 0.00999999977 : f32
    %87 = vector.broadcast %cst_81 : f32 to vector<256x128xf32>
    %88 = arith.mulf %87, %84 : vector<256x128xf32>
    %89 = arith.select %86, %84, %88 : vector<256x128xi1>, vector<256x128xf32>
    %90 = vector.extract_strided_slice %27 {offsets = [1, 0, 0], sizes = [16, 16, 128], strides = [1, 1, 1]} : vector<18x16x128xbf16> to vector<16x16x128xbf16>
    %91 = vector.shape_cast %90 : vector<16x16x128xbf16> to vector<256x128xbf16>
    %92 = arith.extf %91 : vector<256x128xbf16> to vector<256x128xf32>
    %93 = arith.addf %89, %92 : vector<256x128xf32>
    %94 = arith.truncf %93 : vector<256x128xf32> to vector<256x128xbf16>
    %c0_82 = arith.constant 0 : index
    %c0_83 = arith.constant 0 : index
    %95 = vector.load %arg7[%c0_82, %c0_83] : memref<256x128xbf16, #tpu.memory_space<vmem>>, vector<256x128xbf16>
    tpu.vector_store %arg7[%c0_82, %c0_83], %94 {strides = array<i32>} : memref<256x128xbf16, #tpu.memory_space<vmem>>, vector<256x128xbf16>,
    return
  }
  func.func @transform_1(%arg0: i32, %arg1: i32) -> (i32, i32) {
    %c0_i32 = arith.constant 0 : i32
    %c0_i32_0 = arith.constant 0 : i32
    %c0_i32_1 = arith.constant 0 : i32
    return %c0_i32, %c0_i32_0 : i32, i32
  }
  func.func @transform_2(%arg0: i32, %arg1: i32) -> (i32, i32) {
    %c0_i32 = arith.constant 0 : i32
    %c0_i32_0 = arith.constant 0 : i32
    %c0_i32_1 = arith.constant 0 : i32
    return %c0_i32, %c0_i32_0 : i32, i32
  }
  func.func @transform_3(%arg0: i32, %arg1: i32) -> (i32, i32) {
    %c0_i32 = arith.constant 0 : i32
    %c0_i32_0 = arith.constant 0 : i32
    %c0_i32_1 = arith.constant 0 : i32
    return %c0_i32, %c0_i32_0 : i32, i32
  }
  func.func @transform_4(%arg0: i32, %arg1: i32) -> (i32, i32) {
    %c0_i32 = arith.constant 0 : i32
    %c0_i32_0 = arith.constant 0 : i32
    %c0_i32_1 = arith.constant 0 : i32
    return %c0_i32, %c0_i32_0 : i32, i32
  }
  func.func @transform_5(%arg0: i32, %arg1: i32) -> (i32, i32) {
    %c1_i32 = arith.constant 1 : i32
    %0 = arith.muli %arg0, %c1_i32 : i32
    %1 = arith.addi %0, %arg1 : i32
    %c0_i32 = arith.constant 0 : i32
    %c0_i32_0 = arith.constant 0 : i32
    return %1, %c0_i32 : i32, i32
  }
}

</mosaic_0001>

<llo_original>
// kernel: _lambda_.1
$region0: #{_lambda_.1}
  #allocation0 [shape = 'u32[]', space=smem, size = 0x4, offset = 0x4, fixed_abs, tag = 'smem constant byte address 0x4 - core index']
  #allocation1 [shape = 'u32[144,128]{1,0:T(1,128)}', space=vmem, size = 0x12000, scoped, tag = 'internal scratch']
  #allocation2 [shape = 'bf16[36,16,128]{2,1,0:T(8,128)(2,1)}', space=vmem, size = 0x24000, scoped, tag = 'scratch operand']
  #allocation3 [shape = 's32[6]{0}', space=sflag, size = 0x18, scoped, tag = 'scratch operand']
  #allocation4 [shape = 'bf16[18,18,128]{2,1,0:T(8,128)(2,1)}', space=vmem, size = 0x1b000, scoped, tag = 'scratch operand']
  #allocation5 [shape = 'bf16[256,1152]{1,0:T(8,128)(2,1)}', space=vmem, size = 0x90000, scoped, tag = 'scratch operand']
  #allocation6 [shape = 's32[]', space=sflag, size = 0x4, offset = 0, fixed_abs, tag = 'sflag constant byte address 0x0 - dummy sync flag']
  #allocation7 [shape = 's32[]', space=sflag, size = 0x4, offset = 0, fixed_abs, tag = 'sflag constant byte address 0x0 - dummy sync flag']
  #allocation8 [shape = 's32[]', space=sflag, size = 0x4, offset = 0, fixed_abs, tag = 'sflag constant byte address 0x0 - dummy sync flag']
  #allocation9 [shape = 's32[]', space=sflag, size = 0x4, offset = 0, fixed_abs, tag = 'sflag constant byte address 0x0 - dummy sync flag']
  %s0 = inlined_call_operand.vmem [shape: bf16[32,16,128], index: 0, kind: input, shape index: {}]
  %s1 = inlined_call_operand.vmem [shape: bf16[128,128], index: 1, kind: input, shape index: {}]
  %s2 = inlined_call_operand.vmem [shape: f32[1,128], index: 2, kind: input, shape index: {}]
  %s3 = inlined_call_operand.vmem [shape: bf16[1152,128], index: 3, kind: input, shape index: {}]
  %s4 = inlined_call_operand.vmem [shape: f32[1,128], index: 4, kind: input, shape index: {}]
  %s5 = inlined_call_operand.vmem [shape: bf16[512,128], index: 5, kind: output, shape index: {}]
  %s6 = sld [smem:[#allocation0]]
  $region209: #{_lambda_.1} parent=0
    _
  %s8 = ssub.s32 1, %s6
  %s9 = scalar_select 0, %s8, %s6
  loop: start=0, step=1, limit=4
  $region2: #{_lambda_.1} parent=0 // loop_pre_header
    _
  $region3: #{_lambda_.1} parent=0 // loop_header
    %s11 = sphi 0, %s15
    %p12 = scmp.ge.s32.totalorder %s11, 4
    %s18 = sphi 0, %s30
    %s19 = sphi 0, %s26
    %s20 = sphi 0, %s18
    %s21 = sphi 0, %s19
    %s22 = sphi 0, %s20
    %s23 = sphi 0, %s21
    %s31 = sphi 0, %s31
    %s33 = sphi 0, %s31
    %s34 = sphi 0, %s33
    %s48 = sphi 0, %s34
    %s52 = sphi 0, %s52
    %s54 = sphi 0, %s52
    %s55 = sphi 0, %s54
    %s69 = sphi 0, %s55
    %s73 = sphi 0, %s73
    %s75 = sphi 0, %s73
    %s76 = sphi 0, %s75
    %s90 = sphi 0, %s76
    %s94 = sphi 0, %s94
    %s96 = sphi 0, %s94
    %s97 = sphi 0, %s96
    %s111 = sphi 0, %s97
    %s119 = sphi 0, %s121
    %s122 = sphi 0, %s119
    %s123 = sphi 0, %s122
    %s139 = sphi 0, %s123
  $region4: #{_lambda_.1} parent=0 // loop_header_branch
    %14 = sbr.rel (%p12) target = $region8
  $region5: #{_lambda_.1} parent=0 // loop_body
    %s16 = ssub.s32 %s11, 1
    %s17 = ssub.s32 %s11, 2
    %s24 = sadd.s32 1, %s19
    %p25 = scmp.ge.s32.totalorder %s24, 1
    %s26 = scalar_select %p25, 0, %s24
    %s27 = sadd.s32 1, %s18
    %s28 = scalar_select %p25, %s27, %s18
    %p29 = scmp.ge.s32.totalorder %s28, 2
    %s30 = scalar_select %p29, 0, %s28
    %s32 = sadd.s32 %s31, 1
    %p35 = scmp.eq.s32.totalorder %s11, 1
    %p36 = scmp.ne.s32.totalorder %s31, %s33
    %p37 = scmp.eq.s32.totalorder %s11, 0
    %p38 = por %p36, %p37
    %p39 = scmp.ne.s32.totalorder %s31, %s33
    %p40 = scmp.eq.s32.totalorder %s16, 1
    %p41 = por %p39, %p40
    %p42 = scmp.ne.s32.totalorder %s33, %s34
    %p43 = scmp.eq.s32.totalorder %s16, 0
    %p44 = por %p42, %p43
    %p45 = scmp.ne.s32.totalorder %s33, %s34
    %p46 = scmp.eq.s32.totalorder %s17, 1
    %p47 = por %p45, %p46
    %p49 = scmp.ne.s32.totalorder %s34, %s48
    %p50 = scmp.eq.s32.totalorder %s17, 0
    %p51 = por %p49, %p50
    %s53 = sadd.s32 %s52, 1
    %p56 = scmp.eq.s32.totalorder %s11, 1
    %p57 = scmp.ne.s32.totalorder %s52, %s54
    %p58 = scmp.eq.s32.totalorder %s11, 0
    %p59 = por %p57, %p58
    %p60 = scmp.ne.s32.totalorder %s52, %s54
    %p61 = scmp.eq.s32.totalorder %s16, 1
    %p62 = por %p60, %p61
    %p63 = scmp.ne.s32.totalorder %s54, %s55
    %p64 = scmp.eq.s32.totalorder %s16, 0
    %p65 = por %p63, %p64
    %p66 = scmp.ne.s32.totalorder %s54, %s55
    %p67 = scmp.eq.s32.totalorder %s17, 1
    %p68 = por %p66, %p67
    %p70 = scmp.ne.s32.totalorder %s55, %s69
    %p71 = scmp.eq.s32.totalorder %s17, 0
    %p72 = por %p70, %p71
    %s74 = sadd.s32 %s73, 1
    %p77 = scmp.eq.s32.totalorder %s11, 1
    %p78 = scmp.ne.s32.totalorder %s73, %s75
    %p79 = scmp.eq.s32.totalorder %s11, 0
    %p80 = por %p78, %p79
    %p81 = scmp.ne.s32.totalorder %s73, %s75
    %p82 = scmp.eq.s32.totalorder %s16, 1
    %p83 = por %p81, %p82
    %p84 = scmp.ne.s32.totalorder %s75, %s76
    %p85 = scmp.eq.s32.totalorder %s16, 0
    %p86 = por %p84, %p85
    %p87 = scmp.ne.s32.totalorder %s75, %s76
    %p88 = scmp.eq.s32.totalorder %s17, 1
    %p89 = por %p87, %p88
    %p91 = scmp.ne.s32.totalorder %s76, %s90
    %p92 = scmp.eq.s32.totalorder %s17, 0
    %p93 = por %p91, %p92
    %s95 = sadd.s32 %s94, 1
    %p98 = scmp.eq.s32.totalorder %s11, 1
    %p99 = scmp.ne.s32.totalorder %s94, %s96
    %p100 = scmp.eq.s32.totalorder %s11, 0
    %p101 = por %p99, %p100
    %p102 = scmp.ne.s32.totalorder %s94, %s96
    %p103 = scmp.eq.s32.totalorder %s16, 1
    %p104 = por %p102, %p103
    %p105 = scmp.ne.s32.totalorder %s96, %s97
    %p106 = scmp.eq.s32.totalorder %s16, 0
    %p107 = por %p105, %p106
    %p108 = scmp.ne.s32.totalorder %s96, %s97
    %p109 = scmp.eq.s32.totalorder %s17, 1
    %p110 = por %p108, %p109
    %p112 = scmp.ne.s32.totalorder %s97, %s111
    %p113 = scmp.eq.s32.totalorder %s17, 0
    %p114 = por %p112, %p113
    %s115 = sadd.s32 %s18, %s19
    %s116 = sadd.s32 %s30, %s26
    %s117 = ssub.s32 %s115, %s116
    %p118 = scmp.eq.s32.totalorder %s117, 0
    %s120 = sadd.s32 %s119, 1
    %s121 = scalar_select %p118, %s119, %s120
    %p124 = pneg %p118
    %p125 = scmp.eq.s32.totalorder %s11, 1
    %p126 = por %p124, %p125
    %p127 = scmp.ne.s32.totalorder %s119, %s122
    %p128 = scmp.eq.s32.totalorder %s11, 0
    %p129 = por %p127, %p128
    %p130 = scmp.ne.s32.totalorder %s119, %s122
    %p131 = scmp.eq.s32.totalorder %s16, 1
    %p132 = por %p130, %p131
    %p133 = scmp.ne.s32.totalorder %s122, %s123
    %p134 = scmp.eq.s32.totalorder %s16, 0
    %p135 = por %p133, %p134
    %p136 = scmp.ne.s32.totalorder %s122, %s123
    %p137 = scmp.eq.s32.totalorder %s17, 1
    %p138 = por %p136, %p137
    %p140 = scmp.ne.s32.totalorder %s123, %s139
    %p141 = scmp.eq.s32.totalorder %s17, 0
    %p142 = por %p140, %p141
    %p143 = scmp.le.s32.totalorder 1, %s11
    %p144 = scmp.lt.s32.totalorder %s11, 3
    %p145 = pnand %p143, %p144
    %p146 = pneg %p145
    // Predicated region
    $region9: #{_lambda_.1} parent=5 // pred_check
      _
    $region10: #{_lambda_.1} parent=5 // pred_check_branch
      %148 = sbr.rel (%p145) target = $region12
    $region11: #{_lambda_.1} parent=5 // pred_region
      %s149 = ssub.s32 %s11, 1
      // Predicated region
      $region13: #{_lambda_.1} parent=11 // pred_check
        %p150 = pneg %p44
      $region14: #{_lambda_.1} parent=11 // pred_check_branch
        %152 = sbr.rel (%p150) target = $region16
      $region15: #{_lambda_.1} parent=11 // pred_region
        _
      $region16: #{_lambda_.1} parent=11 // pred_fallthru
        _
      // Predicated region
      $region17: #{_lambda_.1} parent=11 // pred_check
        %p153 = pneg %p65
      $region18: #{_lambda_.1} parent=11 // pred_check_branch
        %155 = sbr.rel (%p153) target = $region20
      $region19: #{_lambda_.1} parent=11 // pred_region
        _
      $region20: #{_lambda_.1} parent=11 // pred_fallthru
        _
      // Predicated region
      $region21: #{_lambda_.1} parent=11 // pred_check
        %p156 = pneg %p86
      $region22: #{_lambda_.1} parent=11 // pred_check_branch
        %158 = sbr.rel (%p156) target = $region24
      $region23: #{_lambda_.1} parent=11 // pred_region
        _
      $region24: #{_lambda_.1} parent=11 // pred_fallthru
        _
      // Predicated region
      $region25: #{_lambda_.1} parent=11 // pred_check
        %p159 = pneg %p107
      $region26: #{_lambda_.1} parent=11 // pred_check_branch
        %161 = sbr.rel (%p159) target = $region28
      $region27: #{_lambda_.1} parent=11 // pred_region
        _
      $region28: #{_lambda_.1} parent=11 // pred_fallthru
        _
    $region12: #{_lambda_.1} parent=5 // pred_fallthru
      _
    %p162 = scmp.lt.s32.totalorder %s11, 2
    // Predicated region
    $region29: #{_lambda_.1} parent=5 // pred_check
      %p163 = pneg %p162
    $region30: #{_lambda_.1} parent=5 // pred_check_branch
      %165 = sbr.rel (%p163) target = $region32
    $region31: #{_lambda_.1} parent=5 // pred_region
      _
    $region32: #{_lambda_.1} parent=5 // pred_fallthru
      _
    %p166 = scmp.le.s32.totalorder 1, %s11
    %p167 = scmp.lt.s32.totalorder %s11, 3
    %p168 = pnand %p166, %p167
    %p169 = pneg %p168
    // Predicated region
    $region33: #{_lambda_.1} parent=5 // pred_check
      _
    $region34: #{_lambda_.1} parent=5 // pred_check_branch
      %171 = sbr.rel (%p168) target = $region36
    $region35: #{_lambda_.1} parent=5 // pred_region
      %s172 = ssub.s32 %s11, 1
      %p173 = pneg %p44
      %p174 = pneg %p41
      %p175 = pneg %p65
      %p176 = pneg %p62
      %p177 = pneg %p86
      %p178 = pneg %p83
      %p179 = pneg %p107
      %p180 = pneg %p104
      %p181 = pneg %p135
      %p182 = pneg %p132
      %s183 = sadd.s32 %s20, %s21
      %s184 = smul.u32 32, %s183
      %p185 = scmp.lt.s32.totalorder %s184, 63
      %s186 = scalar_select %p185, %s184, 63
      %s187 = smul.addr %s186, 4
      %s188 = scalar_lea.vmem %s5, %s187
      %s189 = sadd.s32 %s20, %s21
      %s190 = smul.u32 32, %s189
      %p191 = scmp.lt.s32.totalorder %s190, 63
      %s192 = scalar_select %p191, %s190, 63
      %s193 = smul.addr %s192, 4
      %s194 = scalar_lea.vmem %s5, %s193
      %s195 = sadd.s32 %s20, %s21
      %s196 = smul.u32 32, %s195
      %p198 = scmp.eq.s32.totalorder %s21, 0
      // Predicated region
      $region37: #{_lambda_.1} parent=35 // pred_check
        %p199 = pneg %p198
      $region38: #{_lambda_.1} parent=35 // pred_check_branch
        %201 = sbr.rel (%p199) target = $region40
      $region39: #{_lambda_.1} parent=35 // pred_region
        %s202 = sand.u32 %s20, 1
        %s203 = smul.u32 %s20, 16
        %s204 = smul.u32 %s202, 18
        %s205 = sadd.s32 %s204, 1
        %s206 = smul.u32 %s203, 2
        %s207 = smul.addr %s206, 4
        %s208 = scalar_lea.vmem %s0, %s207
        %s209 = smul.u32 %s205, 2
        %s210 = smul.addr %s209, 4
        %s211 = scalar_lea.vmem [#allocation2], %s210
        %s212 = smul.u32 %s202, 3
        %s213 = scalar_lea.sflag [#allocation3], %s212
        %p215 = scmp.lt.u32.totalorder 128, 8
        %p216 = pneg %p215
        // Predicated region
        $region41: #{_lambda_.1} parent=39 // pred_check
          _
        $region42: #{_lambda_.1} parent=39 // pred_check_branch
          %218 = sbr.rel (%p215) target = $region44
        $region43: #{_lambda_.1} parent=39 // pred_region
          %s234 = sand.u32 128, 7
          %p235 = scmp.eq.s32.totalorder %s234, 0
          // Predicated region
          $region56: #{_lambda_.1} parent=43 // pred_check
            %p236 = pneg %p235
          $region57: #{_lambda_.1} parent=43 // pred_check_branch
            %238 = sbr.rel (%p236) target = $region59
          $region58: #{_lambda_.1} parent=43 // pred_region
            loop: start=0, step=1, limit=1
            $region60: #{_lambda_.1} parent=58 // loop_pre_header
              _
            $region61: #{_lambda_.1} parent=58 // loop_header
              %s240 = sphi 0, %s244
              %p241 = scmp.ge.s32.totalorder %s240, 1
              %s245 = sphi %s208, %s208
              %s246 = sphi %s211, %s211
            $region62: #{_lambda_.1} parent=58 // loop_header_branch
              %243 = sbr.rel (%p241) target = $region66
            $region63: #{_lambda_.1} parent=58 // loop_body
              %v247 = vld [vmem:[%s245] sm:$0xff]
              %248 = vst [vmem:[%s246] sm:$0xff] %v247
              %v249 = vld [vmem:[%s245 + $0x8] sm:$0xff]
              %250 = vst [vmem:[%s246 + $0x8] sm:$0xff] %v249
              %v251 = vld [vmem:[%s245 + $0x10] sm:$0xff]
              %252 = vst [vmem:[%s246 + $0x10] sm:$0xff] %v251
              %v253 = vld [vmem:[%s245 + $0x18] sm:$0xff]
              %254 = vst [vmem:[%s246 + $0x18] sm:$0xff] %v253
              %v255 = vld [vmem:[%s245 + $0x20] sm:$0xff]
              %256 = vst [vmem:[%s246 + $0x20] sm:$0xff] %v255
              %v257 = vld [vmem:[%s245 + $0x28] sm:$0xff]
              %258 = vst [vmem:[%s246 + $0x28] sm:$0xff] %v257
              %v259 = vld [vmem:[%s245 + $0x30] sm:$0xff]
              %260 = vst [vmem:[%s246 + $0x30] sm:$0xff] %v259
              %v261 = vld [vmem:[%s245 + $0x38] sm:$0xff]
              %262 = vst [vmem:[%s246 + $0x38] sm:$0xff] %v261
              %v263 = vld [vmem:[%s245 + $0x40] sm:$0xff]
              %264 = vst [vmem:[%s246 + $0x40] sm:$0xff] %v263
              %v265 = vld [vmem:[%s245 + $0x48] sm:$0xff]
              %266 = vst [vmem:[%s246 + $0x48] sm:$0xff] %v265
              %v267 = vld [vmem:[%s245 + $0x50] sm:$0xff]
              %268 = vst [vmem:[%s246 + $0x50] sm:$0xff] %v267
              %v269 = vld [vmem:[%s245 + $0x58] sm:$0xff]
              %270 = vst [vmem:[%s246 + $0x58] sm:$0xff] %v269
              %v271 = vld [vmem:[%s245 + $0x60] sm:$0xff]
              %272 = vst [vmem:[%s246 + $0x60] sm:$0xff] %v271
              %v273 = vld [vmem:[%s245 + $0x68] sm:$0xff]
              %274 = vst [vmem:[%s246 + $0x68] sm:$0xff] %v273
              %v275 = vld [vmem:[%s245 + $0x70] sm:$0xff]
              %276 = vst [vmem:[%s246 + $0x70] sm:$0xff] %v275
              %v277 = vld [vmem:[%s245 + $0x78] sm:$0xff]
              %278 = vst [vmem:[%s246 + $0x78] sm:$0xff] %v277
            $region64: #{_lambda_.1} parent=58 // loop_footer
              %s244 = sadd.s32 1, %s240
            $region65: #{_lambda_.1} parent=58 // loop_footer_branch
              %239 = sbr.rel target = $region61
            $region66: #{_lambda_.1} parent=58 // loop_exit
              _
          $region59: #{_lambda_.1} parent=43 // pred_fallthru
            _
          %p279 = pneg %p235
          // Predicated region
          $region67: #{_lambda_.1} parent=43 // pred_check
            _
          $region68: #{_lambda_.1} parent=43 // pred_check_branch
            %281 = sbr.rel (%p235) target = $region70
          $region69: #{_lambda_.1} parent=43 // pred_region
            %s282 = sand.u32 128, 7
          $region70: #{_lambda_.1} parent=43 // pred_fallthru
            _
        $region44: #{_lambda_.1} parent=39 // pred_fallthru
          _
        // Predicated region
        $region45: #{_lambda_.1} parent=39 // pred_check
          %p219 = pneg %p215
        $region46: #{_lambda_.1} parent=39 // pred_check_branch
          %221 = sbr.rel (%p219) target = $region48
        $region47: #{_lambda_.1} parent=39 // pred_region
          %s222 = sshll.u32 1, 128
          %s223 = ssub.s32 %s222, 1
          loop: start=0, step=1, limit=1
          $region49: #{_lambda_.1} parent=47 // loop_pre_header
            _
          $region50: #{_lambda_.1} parent=47 // loop_header
            %s225 = sphi 0, %s229
            %p226 = scmp.ge.s32.totalorder %s225, 1
            %s230 = sphi %s208, %s208
            %s231 = sphi %s211, %s211
          $region51: #{_lambda_.1} parent=47 // loop_header_branch
            %228 = sbr.rel (%p226) target = $region55
          $region52: #{_lambda_.1} parent=47 // loop_body
            %v232 = vld [vmem:[%s230] sm:%s223]
            %233 = vst [vmem:[%s231] sm:%s223] %v232
          $region53: #{_lambda_.1} parent=47 // loop_footer
            %s229 = sadd.s32 1, %s225
          $region54: #{_lambda_.1} parent=47 // loop_footer_branch
            %224 = sbr.rel target = $region50
          $region55: #{_lambda_.1} parent=47 // loop_exit
            _
        $region48: #{_lambda_.1} parent=39 // pred_fallthru
          _
        // Predicated region
        $region71: #{_lambda_.1} parent=39 // pred_check
          _
        $region72: #{_lambda_.1} parent=39 // pred_check_branch
          %285 = sbr.rel (0) target = $region74
        $region73: #{_lambda_.1} parent=39 // pred_region
          %286 = vsyncadd %s213, 2048
        $region74: #{_lambda_.1} parent=39 // pred_fallthru
          _
      $region40: #{_lambda_.1} parent=35 // pred_fallthru
        _
      %s287 = sadd.s32 %s21, 1
      %p288 = scmp.lt.s32.totalorder %s287, 1
      // Predicated region
      $region75: #{_lambda_.1} parent=35 // pred_check
        %p289 = pneg %p288
      $region76: #{_lambda_.1} parent=35 // pred_check_branch
        %291 = sbr.rel (%p289) target = $region78
      $region77: #{_lambda_.1} parent=35 // pred_region
        %s292 = sadd.s32 %s20, %s287
        %s293 = sand.u32 %s292, 1
        %s294 = smul.u32 %s20, 16
        %s295 = smul.u32 %s287, 16
        %s296 = sadd.s32 %s294, %s295
        %s297 = smul.u32 %s293, 18
        %s298 = sadd.s32 %s297, 1
        %s299 = smul.u32 %s296, 2
        %s300 = smul.addr %s299, 4
        %s301 = scalar_lea.vmem %s0, %s300
        %s302 = smul.u32 %s298, 2
        %s303 = smul.addr %s302, 4
        %s304 = scalar_lea.vmem [#allocation2], %s303
        %s305 = smul.u32 %s293, 3
        %s306 = scalar_lea.sflag [#allocation3], %s305
        %p308 = scmp.lt.u32.totalorder 128, 8
        %p309 = pneg %p308
        // Predicated region
        $region79: #{_lambda_.1} parent=77 // pred_check
          _
        $region80: #{_lambda_.1} parent=77 // pred_check_branch
          %311 = sbr.rel (%p308) target = $region82
        $region81: #{_lambda_.1} parent=77 // pred_region
          %s327 = sand.u32 128, 7
          %p328 = scmp.eq.s32.totalorder %s327, 0
          // Predicated region
          $region94: #{_lambda_.1} parent=81 // pred_check
            %p329 = pneg %p328
          $region95: #{_lambda_.1} parent=81 // pred_check_branch
            %331 = sbr.rel (%p329) target = $region97
          $region96: #{_lambda_.1} parent=81 // pred_region
            loop: start=0, step=1, limit=1
            $region98: #{_lambda_.1} parent=96 // loop_pre_header
              _
            $region99: #{_lambda_.1} parent=96 // loop_header
              %s333 = sphi 0, %s337
              %p334 = scmp.ge.s32.totalorder %s333, 1
              %s338 = sphi %s301, %s301
              %s339 = sphi %s304, %s304
            $region100: #{_lambda_.1} parent=96 // loop_header_branch
              %336 = sbr.rel (%p334) target = $region104
            $region101: #{_lambda_.1} parent=96 // loop_body
              %v340 = vld [vmem:[%s338] sm:$0xff]
              %341 = vst [vmem:[%s339] sm:$0xff] %v340
              %v342 = vld [vmem:[%s338 + $0x8] sm:$0xff]
              %343 = vst [vmem:[%s339 + $0x8] sm:$0xff] %v342
              %v344 = vld [vmem:[%s338 + $0x10] sm:$0xff]
              %345 = vst [vmem:[%s339 + $0x10] sm:$0xff] %v344
              %v346 = vld [vmem:[%s338 + $0x18] sm:$0xff]
              %347 = vst [vmem:[%s339 + $0x18] sm:$0xff] %v346
              %v348 = vld [vmem:[%s338 + $0x20] sm:$0xff]
              %349 = vst [vmem:[%s339 + $0x20] sm:$0xff] %v348
              %v350 = vld [vmem:[%s338 + $0x28] sm:$0xff]
              %351 = vst [vmem:[%s339 + $0x28] sm:$0xff] %v350
              %v352 = vld [vmem:[%s338 + $0x30] sm:$0xff]
              %353 = vst [vmem:[%s339 + $0x30] sm:$0xff] %v352
              %v354 = vld [vmem:[%s338 + $0x38] sm:$0xff]
              %355 = vst [vmem:[%s339 + $0x38] sm:$0xff] %v354
              %v356 = vld [vmem:[%s338 + $0x40] sm:$0xff]
              %357 = vst [vmem:[%s339 + $0x40] sm:$0xff] %v356
              %v358 = vld [vmem:[%s338 + $0x48] sm:$0xff]
              %359 = vst [vmem:[%s339 + $0x48] sm:$0xff] %v358
              %v360 = vld [vmem:[%s338 + $0x50] sm:$0xff]
              %361 = vst [vmem:[%s339 + $0x50] sm:$0xff] %v360
              %v362 = vld [vmem:[%s338 + $0x58] sm:$0xff]
              %363 = vst [vmem:[%s339 + $0x58] sm:$0xff] %v362
              %v364 = vld [vmem:[%s338 + $0x60] sm:$0xff]
              %365 = vst [vmem:[%s339 + $0x60] sm:$0xff] %v364
              %v366 = vld [vmem:[%s338 + $0x68] sm:$0xff]
              %367 = vst [vmem:[%s339 + $0x68] sm:$0xff] %v366
              %v368 = vld [vmem:[%s338 + $0x70] sm:$0xff]
              %369 = vst [vmem:[%s339 + $0x70] sm:$0xff] %v368
              %v370 = vld [vmem:[%s338 + $0x78] sm:$0xff]
              %371 = vst [vmem:[%s339 + $0x78] sm:$0xff] %v370
            $region102: #{_lambda_.1} parent=96 // loop_footer
              %s337 = sadd.s32 1, %s333
            $region103: #{_lambda_.1} parent=96 // loop_footer_branch
              %332 = sbr.rel target = $region99
            $region104: #{_lambda_.1} parent=96 // loop_exit
              _
          $region97: #{_lambda_.1} parent=81 // pred_fallthru
            _
          %p372 = pneg %p328
          // Predicated region
          $region105: #{_lambda_.1} parent=81 // pred_check
            _
          $region106: #{_lambda_.1} parent=81 // pred_check_branch
            %374 = sbr.rel (%p328) target = $region108
          $region107: #{_lambda_.1} parent=81 // pred_region
            %s375 = sand.u32 128, 7
          $region108: #{_lambda_.1} parent=81 // pred_fallthru
            _
        $region82: #{_lambda_.1} parent=77 // pred_fallthru
          _
        // Predicated region
        $region83: #{_lambda_.1} parent=77 // pred_check
          %p312 = pneg %p308
        $region84: #{_lambda_.1} parent=77 // pred_check_branch
          %314 = sbr.rel (%p312) target = $region86
        $region85: #{_lambda_.1} parent=77 // pred_region
          %s315 = sshll.u32 1, 128
          %s316 = ssub.s32 %s315, 1
          loop: start=0, step=1, limit=1
          $region87: #{_lambda_.1} parent=85 // loop_pre_header
            _
          $region88: #{_lambda_.1} parent=85 // loop_header
            %s318 = sphi 0, %s322
            %p319 = scmp.ge.s32.totalorder %s318, 1
            %s323 = sphi %s301, %s301
            %s324 = sphi %s304, %s304
          $region89: #{_lambda_.1} parent=85 // loop_header_branch
            %321 = sbr.rel (%p319) target = $region93
          $region90: #{_lambda_.1} parent=85 // loop_body
            %v325 = vld [vmem:[%s323] sm:%s316]
            %326 = vst [vmem:[%s324] sm:%s316] %v325
          $region91: #{_lambda_.1} parent=85 // loop_footer
            %s322 = sadd.s32 1, %s318
          $region92: #{_lambda_.1} parent=85 // loop_footer_branch
            %317 = sbr.rel target = $region88
          $region93: #{_lambda_.1} parent=85 // loop_exit
            _
        $region86: #{_lambda_.1} parent=77 // pred_fallthru
          _
        // Predicated region
        $region109: #{_lambda_.1} parent=77 // pred_check
          _
        $region110: #{_lambda_.1} parent=77 // pred_check_branch
          %378 = sbr.rel (0) target = $region112
        $region111: #{_lambda_.1} parent=77 // pred_region
          %379 = vsyncadd %s306, 2048
        $region112: #{_lambda_.1} parent=77 // pred_fallthru
          _
        %s380 = ssub.s32 %s296, 1
        %s381 = smul.u32 %s380, 2
        %s382 = smul.addr %s381, 4
        %s383 = scalar_lea.vmem %s0, %s382
        %s384 = smul.u32 %s297, 2
        %s385 = smul.addr %s384, 4
        %s386 = scalar_lea.vmem [#allocation2], %s385
        %s387 = sadd.s32 1, %s305
        %s388 = scalar_lea.sflag [#allocation3], %s387
        %p390 = scmp.lt.u32.totalorder 8, 8
        %p391 = pneg %p390
        // Predicated region
        $region113: #{_lambda_.1} parent=77 // pred_check
          _
        $region114: #{_lambda_.1} parent=77 // pred_check_branch
          %393 = sbr.rel (%p390) target = $region116
        $region115: #{_lambda_.1} parent=77 // pred_region
          %s409 = sand.u32 8, 7
          %p410 = scmp.eq.s32.totalorder %s409, 0
          // Predicated region
          $region128: #{_lambda_.1} parent=115 // pred_check
            %p411 = pneg %p410
          $region129: #{_lambda_.1} parent=115 // pred_check_branch
            %413 = sbr.rel (%p411) target = $region131
          $region130: #{_lambda_.1} parent=115 // pred_region
            loop: start=0, step=1, limit=1
            $region132: #{_lambda_.1} parent=130 // loop_pre_header
              _
            $region133: #{_lambda_.1} parent=130 // loop_header
              %s415 = sphi 0, %s419
              %p416 = scmp.ge.s32.totalorder %s415, 1
              %s420 = sphi %s383, %s383
              %s421 = sphi %s386, %s386
            $region134: #{_lambda_.1} parent=130 // loop_header_branch
              %418 = sbr.rel (%p416) target = $region138
            $region135: #{_lambda_.1} parent=130 // loop_body
              %v422 = vld [vmem:[%s420] sm:$0xff]
              %423 = vst [vmem:[%s421] sm:$0xff] %v422
            $region136: #{_lambda_.1} parent=130 // loop_footer
              %s419 = sadd.s32 1, %s415
            $region137: #{_lambda_.1} parent=130 // loop_footer_branch
              %414 = sbr.rel target = $region133
            $region138: #{_lambda_.1} parent=130 // loop_exit
              _
          $region131: #{_lambda_.1} parent=115 // pred_fallthru
            _
          %p424 = pneg %p410
          // Predicated region
          $region139: #{_lambda_.1} parent=115 // pred_check
            _
          $region140: #{_lambda_.1} parent=115 // pred_check_branch
            %426 = sbr.rel (%p410) target = $region142
          $region141: #{_lambda_.1} parent=115 // pred_region
            %s427 = sand.u32 8, 7
          $region142: #{_lambda_.1} parent=115 // pred_fallthru
            _
        $region116: #{_lambda_.1} parent=77 // pred_fallthru
          _
        // Predicated region
        $region117: #{_lambda_.1} parent=77 // pred_check
          %p394 = pneg %p390
        $region118: #{_lambda_.1} parent=77 // pred_check_branch
          %396 = sbr.rel (%p394) target = $region120
        $region119: #{_lambda_.1} parent=77 // pred_region
          %s397 = sshll.u32 1, 8
          %s398 = ssub.s32 %s397, 1
          loop: start=0, step=1, limit=1
          $region121: #{_lambda_.1} parent=119 // loop_pre_header
            _
          $region122: #{_lambda_.1} parent=119 // loop_header
            %s400 = sphi 0, %s404
            %p401 = scmp.ge.s32.totalorder %s400, 1
            %s405 = sphi %s383, %s383
            %s406 = sphi %s386, %s386
          $region123: #{_lambda_.1} parent=119 // loop_header_branch
            %403 = sbr.rel (%p401) target = $region127
          $region124: #{_lambda_.1} parent=119 // loop_body
            %v407 = vld [vmem:[%s405] sm:%s398]
            %408 = vst [vmem:[%s406] sm:%s398] %v407
          $region125: #{_lambda_.1} parent=119 // loop_footer
            %s404 = sadd.s32 1, %s400
          $region126: #{_lambda_.1} parent=119 // loop_footer_branch
            %399 = sbr.rel target = $region122
          $region127: #{_lambda_.1} parent=119 // loop_exit
            _
        $region120: #{_lambda_.1} parent=77 // pred_fallthru
          _
        // Predicated region
        $region143: #{_lambda_.1} parent=77 // pred_check
          _
        $region144: #{_lambda_.1} parent=77 // pred_check_branch
          %430 = sbr.rel (0) target = $region146
        $region145: #{_lambda_.1} parent=77 // pred_region
          %431 = vsyncadd %s388, 128
        $region146: #{_lambda_.1} parent=77 // pred_fallthru
          _
        %p432 = scmp.lt.s32.totalorder %s287, 0
        // Predicated region
        $region147: #{_lambda_.1} parent=77 // pred_check
          %p433 = pneg %p432
        $region148: #{_lambda_.1} parent=77 // pred_check_branch
          %435 = sbr.rel (%p433) target = $region150
        $region149: #{_lambda_.1} parent=77 // pred_region
          %s436 = sadd.s32 %s296, 16
          %s437 = sadd.s32 %s297, 17
          %s438 = smul.u32 %s436, 2
          %s439 = smul.addr %s438, 4
          %s440 = scalar_lea.vmem %s0, %s439
          %s441 = smul.u32 %s437, 2
          %s442 = smul.addr %s441, 4
          %s443 = scalar_lea.vmem [#allocation2], %s442
          %s444 = sadd.s32 2, %s305
          %s445 = scalar_lea.sflag [#allocation3], %s444
          %p447 = scmp.lt.u32.totalorder 8, 8
          %p448 = pneg %p447
          // Predicated region
          $region151: #{_lambda_.1} parent=149 // pred_check
            _
          $region152: #{_lambda_.1} parent=149 // pred_check_branch
            %450 = sbr.rel (%p447) target = $region154
          $region153: #{_lambda_.1} parent=149 // pred_region
            %s466 = sand.u32 8, 7
            %p467 = scmp.eq.s32.totalorder %s466, 0
            // Predicated region
            $region166: #{_lambda_.1} parent=153 // pred_check
              %p468 = pneg %p467
            $region167: #{_lambda_.1} parent=153 // pred_check_branch
              %470 = sbr.rel (%p468) target = $region169
            $region168: #{_lambda_.1} parent=153 // pred_region
              loop: start=0, step=1, limit=1
              $region170: #{_lambda_.1} parent=168 // loop_pre_header
                _
              $region171: #{_lambda_.1} parent=168 // loop_header
                %s472 = sphi 0, %s476
                %p473 = scmp.ge.s32.totalorder %s472, 1
                %s477 = sphi %s440, %s440
                %s478 = sphi %s443, %s443
              $region172: #{_lambda_.1} parent=168 // loop_header_branch
                %475 = sbr.rel (%p473) target = $region176
              $region173: #{_lambda_.1} parent=168 // loop_body
                %v479 = vld [vmem:[%s477] sm:$0xff]
                %480 = vst [vmem:[%s478] sm:$0xff] %v479
              $region174: #{_lambda_.1} parent=168 // loop_footer
                %s476 = sadd.s32 1, %s472
              $region175: #{_lambda_.1} parent=168 // loop_footer_branch
                %471 = sbr.rel target = $region171
              $region176: #{_lambda_.1} parent=168 // loop_exit
                _
            $region169: #{_lambda_.1} parent=153 // pred_fallthru
              _
            %p481 = pneg %p467
            // Predicated region
            $region177: #{_lambda_.1} parent=153 // pred_check
              _
            $region178: #{_lambda_.1} parent=153 // pred_check_branch
              %483 = sbr.rel (%p467) target = $region180
            $region179: #{_lambda_.1} parent=153 // pred_region
              %s484 = sand.u32 8, 7
            $region180: #{_lambda_.1} parent=153 // pred_fallthru
              _
          $region154: #{_lambda_.1} parent=149 // pred_fallthru
            _
          // Predicated region
          $region155: #{_lambda_.1} parent=149 // pred_check
            %p451 = pneg %p447
          $region156: #{_lambda_.1} parent=149 // pred_check_branch
            %453 = sbr.rel (%p451) target = $region158
          $region157: #{_lambda_.1} parent=149 // pred_region
            %s454 = sshll.u32 1, 8
            %s455 = ssub.s32 %s454, 1
            loop: start=0, step=1, limit=1
            $region159: #{_lambda_.1} parent=157 // loop_pre_header
              _
            $region160: #{_lambda_.1} parent=157 // loop_header
              %s457 = sphi 0, %s461
              %p458 = scmp.ge.s32.totalorder %s457, 1
              %s462 = sphi %s440, %s440
              %s463 = sphi %s443, %s443
            $region161: #{_lambda_.1} parent=157 // loop_header_branch
              %460 = sbr.rel (%p458) target = $region165
            $region162: #{_lambda_.1} parent=157 // loop_body
              %v464 = vld [vmem:[%s462] sm:%s455]
              %465 = vst [vmem:[%s463] sm:%s455] %v464
            $region163: #{_lambda_.1} parent=157 // loop_footer
              %s461 = sadd.s32 1, %s457
            $region164: #{_lambda_.1} parent=157 // loop_footer_branch
              %456 = sbr.rel target = $region160
            $region165: #{_lambda_.1} parent=157 // loop_exit
              _
          $region158: #{_lambda_.1} parent=149 // pred_fallthru
            _
          // Predicated region
          $region181: #{_lambda_.1} parent=149 // pred_check
            _
          $region182: #{_lambda_.1} parent=149 // pred_check_branch
            %487 = sbr.rel (0) target = $region184
          $region183: #{_lambda_.1} parent=149 // pred_region
            %488 = vsyncadd %s445, 128
          $region184: #{_lambda_.1} parent=149 // pred_fallthru
            _
        $region150: #{_lambda_.1} parent=77 // pred_fallthru
          _
      $region78: #{_lambda_.1} parent=35 // pred_fallthru
        _
      %s489 = sadd.s32 %s20, %s21
      %s490 = sand.u32 %s489, 1
      %s491 = smul.u32 %s490, 18
      %s492 = smul.u32 %s490, 3
      %s493 = scalar_lea.sflag [#allocation3], %s492
      %s494 = smul.u32 4, 16
      %s495 = smul.u32 %s494, 2
      %s496 = smul.u32 %s495, 1
      %s497 = sshll.u32 %s496, 4
      %498 = dma.done %s493, %s497
      %p499 = scmp.gt.s32.totalorder %s21, 0
      // Predicated region
      $region185: #{_lambda_.1} parent=35 // pred_check
        %p500 = pneg %p499
      $region186: #{_lambda_.1} parent=35 // pred_check_branch
        %502 = sbr.rel (%p500) target = $region188
      $region187: #{_lambda_.1} parent=35 // pred_region
        %s503 = sadd.s32 1, %s492
        %s504 = scalar_lea.sflag [#allocation3], %s503
        %s505 = smul.u32 4, 1
        %s506 = smul.u32 %s505, 2
        %s507 = smul.u32 %s506, 1
        %s508 = sshll.u32 %s507, 4
        %509 = dma.done %s504, %s508
      $region188: #{_lambda_.1} parent=35 // pred_fallthru
        _
      %p510 = scmp.lt.s32.totalorder %s21, 0
      // Predicated region
      $region189: #{_lambda_.1} parent=35 // pred_check
        %p511 = pneg %p510
      $region190: #{_lambda_.1} parent=35 // pred_check_branch
        %513 = sbr.rel (%p511) target = $region192
      $region191: #{_lambda_.1} parent=35 // pred_region
        %s514 = sadd.s32 2, %s492
        %s515 = scalar_lea.sflag [#allocation3], %s514
        %s516 = smul.u32 4, 1
        %s517 = smul.u32 %s516, 2
        %s518 = smul.u32 %s517, 1
        %s519 = sshll.u32 %s518, 4
        %520 = dma.done %s515, %s519
      $region192: #{_lambda_.1} parent=35 // pred_fallthru
        _
      %s521 = smul.u32 %s491, 2
      %s522 = smul.addr %s521, 4
      %s523 = scalar_lea.vmem [#allocation2], %s522
      %v524 = vld [vmem:[%s523] sm:$0xf]
      %v525 = vld [vmem:[%s523 + $0x4] sm:$0xf]
      %v526 = vld [vmem:[%s523 + $0x8] sm:$0xf]
      %v527 = vld [vmem:[%s523 + $0xc] sm:$0xf]
      %v528 = vld [vmem:[%s523 + $0x10] sm:$0xf]
      %v529 = vld [vmem:[%s523 + $0x14] sm:$0xf]
      %v530 = vld [vmem:[%s523 + $0x18] sm:$0xf]
      %v531 = vld [vmem:[%s523 + $0x1c] sm:$0xf]
      %v532 = vld [vmem:[%s523 + $0x20] sm:$0xf]
      %v533 = vld [vmem:[%s523 + $0x24] sm:$0xf]
      %v534 = vld [vmem:[%s523 + $0x28] sm:$0xf]
      %v535 = vld [vmem:[%s523 + $0x2c] sm:$0xf]
      %v536 = vld [vmem:[%s523 + $0x30] sm:$0xf]
      %v537 = vld [vmem:[%s523 + $0x34] sm:$0xf]
      %v538 = vld [vmem:[%s523 + $0x38] sm:$0xf]
      %v539 = vld [vmem:[%s523 + $0x3c] sm:$0xf]
      %v540 = vld [vmem:[%s523 + $0x40] sm:$0xf]
      %v541 = vld [vmem:[%s523 + $0x44] sm:$0xf]
      %v542 = vld [vmem:[%s523 + $0x48] sm:$0xf]
      %v543 = vld [vmem:[%s523 + $0x4c] sm:$0xf]
      %v544 = vld [vmem:[%s523 + $0x50] sm:$0xf]
      %v545 = vld [vmem:[%s523 + $0x54] sm:$0xf]
      %v546 = vld [vmem:[%s523 + $0x58] sm:$0xf]
      %v547 = vld [vmem:[%s523 + $0x5c] sm:$0xf]
      %v548 = vld [vmem:[%s523 + $0x60] sm:$0xf]
      %v549 = vld [vmem:[%s523 + $0x64] sm:$0xf]
      %v550 = vld [vmem:[%s523 + $0x68] sm:$0xf]
      %v551 = vld [vmem:[%s523 + $0x6c] sm:$0xf]
      %v552 = vld [vmem:[%s523 + $0x70] sm:$0xf]
      %v553 = vld [vmem:[%s523 + $0x74] sm:$0xf]
      %v554 = vld [vmem:[%s523 + $0x78] sm:$0xf]
      %v555 = vld [vmem:[%s523 + $0x7c] sm:$0xf]
      %v556 = vld [vmem:[%s523 + $0x80] sm:$0xf]
      %v557 = vld [vmem:[%s523 + $0x84] sm:$0xf]
      %v558 = vld [vmem:[%s523 + $0x88] sm:$0xf]
      %v559 = vld [vmem:[%s523 + $0x8c] sm:$0xf]
      %v560 = vld [vmem:[%s1] sm:$0xf]
      %v561 = vld [vmem:[%s1 + $0x4] sm:$0xf]
      %v562 = vld [vmem:[%s1 + $0x8] sm:$0xf]
      %v563 = vld [vmem:[%s1 + $0xc] sm:$0xf]
      %v564 = vld [vmem:[%s1 + $0x10] sm:$0xf]
      %v565 = vld [vmem:[%s1 + $0x14] sm:$0xf]
      %v566 = vld [vmem:[%s1 + $0x18] sm:$0xf]
      %v567 = vld [vmem:[%s1 + $0x1c] sm:$0xf]
      %v568 = vld [vmem:[%s1 + $0x20] sm:$0xf]
      %v569 = vld [vmem:[%s1 + $0x24] sm:$0xf]
      %v570 = vld [vmem:[%s1 + $0x28] sm:$0xf]
      %v571 = vld [vmem:[%s1 + $0x2c] sm:$0xf]
      %v572 = vld [vmem:[%s1 + $0x30] sm:$0xf]
      %v573 = vld [vmem:[%s1 + $0x34] sm:$0xf]
      %v574 = vld [vmem:[%s1 + $0x38] sm:$0xf]
      %v575 = vld [vmem:[%s1 + $0x3c] sm:$0xf]
      %v576 = vld [vmem:[%s2] sm:$0x1]
      %v578 = vlaneseq
      %v579 = vshrl.u32 %v578, 7
      %v580 = vsub.s32 0, %v579
      %v581 = vrot.slane %v576, %v580
      %v619 = vunpack.c.l.b16 %v524
      %v620 = vunpack.c.l.b16 %v525
      %v621 = vunpack.c.l.b16 %v526
      %v622 = vunpack.c.l.b16 %v527
      %v623 = vunpack.c.l.b16 %v528
      %v624 = vunpack.c.l.b16 %v529
      %v625 = vunpack.c.l.b16 %v530
      %v626 = vunpack.c.l.b16 %v531
      %v627 = vunpack.c.l.b16 %v532
      %v628 = vunpack.c.l.b16 %v533
      %v629 = vunpack.c.l.b16 %v534
      %v630 = vunpack.c.l.b16 %v535
      %v631 = vunpack.c.l.b16 %v536
      %v632 = vunpack.c.l.b16 %v537
      %v633 = vunpack.c.l.b16 %v538
      %v634 = vunpack.c.l.b16 %v539
      %v635 = vunpack.c.l.b16 %v540
      %v636 = vunpack.c.l.b16 %v541
      %v637 = vunpack.c.l.b16 %v542
      %v638 = vunpack.c.l.b16 %v543
      %v639 = vunpack.c.l.b16 %v544
      %v640 = vunpack.c.l.b16 %v545
      %v641 = vunpack.c.l.b16 %v546
      %v642 = vunpack.c.l.b16 %v547
      %v643 = vunpack.c.l.b16 %v548
      %v644 = vunpack.c.l.b16 %v549
      %v645 = vunpack.c.l.b16 %v550
      %v646 = vunpack.c.l.b16 %v551
      %v647 = vunpack.c.l.b16 %v552
      %v648 = vunpack.c.l.b16 %v553
      %v649 = vunpack.c.l.b16 %v554
      %v650 = vunpack.c.l.b16 %v555
      %v651 = vunpack.c.l.b16 %v556
      %v652 = vunpack.c.l.b16 %v557
      %v653 = vunpack.c.l.b16 %v558
      %v654 = vunpack.c.l.b16 %v559
      %v655 = vpack.c.b16 %v620, %v619
      %v656 = vpack.c.b16 %v622, %v621
      %v657 = vpack.c.b16 %v624, %v623
      %v658 = vpack.c.b16 %v626, %v625
      %v659 = vpack.c.b16 %v628, %v627
      %v660 = vpack.c.b16 %v630, %v629
      %v661 = vpack.c.b16 %v632, %v631
      %v662 = vpack.c.b16 %v634, %v633
      %v663 = vpack.c.b16 %v636, %v635
      %v664 = vpack.c.b16 %v638, %v637
      %v665 = vpack.c.b16 %v640, %v639
      %v666 = vpack.c.b16 %v642, %v641
      %v667 = vpack.c.b16 %v644, %v643
      %v668 = vpack.c.b16 %v646, %v645
      %v669 = vpack.c.b16 %v648, %v647
      %v670 = vpack.c.b16 %v650, %v649
      %v671 = vpack.c.b16 %v652, %v651
      %v672 = vpack.c.b16 %v654, %v653
      %v707 = vunpack.c.l.b16 %v560
      %v708 = vunpack.c.l.b16 %v561
      %v709 = vunpack.c.l.b16 %v562
      %v710 = vunpack.c.l.b16 %v563
      %v711 = vunpack.c.l.b16 %v564
      %v712 = vunpack.c.l.b16 %v565
      %v713 = vunpack.c.l.b16 %v566
      %v714 = vunpack.c.l.b16 %v567
      %v715 = vunpack.c.l.b16 %v568
      %v716 = vunpack.c.l.b16 %v569
      %v717 = vunpack.c.l.b16 %v570
      %v718 = vunpack.c.l.b16 %v571
      %v719 = vunpack.c.l.b16 %v572
      %v720 = vunpack.c.l.b16 %v573
      %v721 = vunpack.c.l.b16 %v574
      %v722 = vunpack.c.l.b16 %v575
      %v723 = vpack.c.b16 %v708, %v707
      %v724 = vpack.c.b16 %v710, %v709
      %v725 = vpack.c.b16 %v712, %v711
      %v726 = vpack.c.b16 %v714, %v713
      %v727 = vpack.c.b16 %v716, %v715
      %v728 = vpack.c.b16 %v718, %v717
      %v729 = vpack.c.b16 %v720, %v719
      %v730 = vpack.c.b16 %v722, %v721
      %739 = vmatprep.subr.bf16.mxu0 0
      %740 = vmatpush1.bf16.msra.mxu0 %v730
      %741 = vmatprep.subr.bf16.mxu0 0
      %742 = vmatpush1.bf16.msra.mxu0 %v729
      %743 = vmatprep.subr.bf16.mxu0 0
      %744 = vmatpush1.bf16.msra.mxu0 %v728
      %745 = vmatprep.subr.bf16.mxu0 0
      %746 = vmatpush1.bf16.msra.mxu0 %v727
      %747 = vmatprep.subr.bf16.mxu0 0
      %748 = vmatpush1.bf16.msra.mxu0 %v726
      %749 = vmatprep.subr.bf16.mxu0 0
      %750 = vmatpush1.bf16.msra.mxu0 %v725
      %751 = vmatprep.subr.bf16.mxu0 0
      %752 = vmatpush1.bf16.msra.mxu0 %v724
      %753 = vmatprep.subr.bf16.mxu0 0
      %754 = vmatpush1.bf16.msra.mxu0 %v723
      %755 = vmatprep.subr.bf16.mxu0 0
      %756 = vmatpush2.bf16.msra.mxu0 0
      %757 = vmatprep.subr.bf16.mxu0 0
      %758 = vmatpush2.bf16.msra.mxu0 0
      %759 = vmatprep.subr.bf16.mxu0 0
      %760 = vmatpush2.bf16.msra.mxu0 0
      %761 = vmatprep.subr.bf16.mxu0 0
      %762 = vmatpush2.bf16.msra.mxu0 0
      %763 = vmatprep.subr.bf16.mxu0 0
      %764 = vmatpush2.bf16.msra.mxu0 0
      %765 = vmatprep.subr.bf16.mxu0 0
      %766 = vmatpush2.bf16.msra.mxu0 0
      %767 = vmatprep.subr.bf16.mxu0 0
      %768 = vmatpush2.bf16.msra.mxu0 0
      %769 = vmatprep.subr.bf16.mxu0 0
      %770 = vmatpush2.bf16.msra.mxu0 0
      %771 = vmatprep.mubr.bf16.mxu0 0
      %772 = vmatmul.mubr.bf16.gmra.mxu0 %v655
      %v773 = vpop.f32.mrf.mxu0
      %v774 = vadd.f32 %v581, %v773
      %v775 = vpop.f32.mrf.mxu0
      %v776 = vpop.f32.mrf.mxu0
      %v777 = vadd.f32 %v581, %v776
      %v778 = vpop.f32.mrf.mxu0
      %779 = vmatprep.mubr.bf16.mxu0 0
      %780 = vmatmul.mubr.bf16.gmra.mxu0 %v656
      %v781 = vpop.f32.mrf.mxu0
      %v782 = vadd.f32 %v581, %v781
      %v783 = vpop.f32.mrf.mxu0
      %v784 = vpop.f32.mrf.mxu0
      %v785 = vadd.f32 %v581, %v784
      %v786 = vpop.f32.mrf.mxu0
      %787 = vmatprep.mubr.bf16.mxu0 0
      %788 = vmatmul.mubr.bf16.gmra.mxu0 %v657
      %v789 = vpop.f32.mrf.mxu0
      %v790 = vadd.f32 %v581, %v789
      %v791 = vpop.f32.mrf.mxu0
      %v792 = vpop.f32.mrf.mxu0
      %v793 = vadd.f32 %v581, %v792
      %v794 = vpop.f32.mrf.mxu0
      %795 = vmatprep.mubr.bf16.mxu0 0
      %796 = vmatmul.mubr.bf16.gmra.mxu0 %v658
      %v797 = vpop.f32.mrf.mxu0
      %v798 = vadd.f32 %v581, %v797
      %v799 = vpop.f32.mrf.mxu0
      %v800 = vpop.f32.mrf.mxu0
      %v801 = vadd.f32 %v581, %v800
      %v802 = vpop.f32.mrf.mxu0
      %803 = vmatprep.mubr.bf16.mxu0 0
      %804 = vmatmul.mubr.bf16.gmra.mxu0 %v659
      %v805 = vpop.f32.mrf.mxu0
      %v806 = vadd.f32 %v581, %v805
      %v807 = vpop.f32.mrf.mxu0
      %v808 = vpop.f32.mrf.mxu0
      %v809 = vadd.f32 %v581, %v808
      %v810 = vpop.f32.mrf.mxu0
      %811 = vmatprep.mubr.bf16.mxu0 0
      %812 = vmatmul.mubr.bf16.gmra.mxu0 %v660
      %v813 = vpop.f32.mrf.mxu0
      %v814 = vadd.f32 %v581, %v813
      %v815 = vpop.f32.mrf.mxu0
      %v816 = vpop.f32.mrf.mxu0
      %v817 = vadd.f32 %v581, %v816
      %v818 = vpop.f32.mrf.mxu0
      %819 = vmatprep.mubr.bf16.mxu0 0
      %820 = vmatmul.mubr.bf16.gmra.mxu0 %v661
      %v821 = vpop.f32.mrf.mxu0
      %v822 = vadd.f32 %v581, %v821
      %v823 = vpop.f32.mrf.mxu0
      %v824 = vpop.f32.mrf.mxu0
      %v825 = vadd.f32 %v581, %v824
      %v826 = vpop.f32.mrf.mxu0
      %827 = vmatprep.mubr.bf16.mxu0 0
      %828 = vmatmul.mubr.bf16.gmra.mxu0 %v662
      %v829 = vpop.f32.mrf.mxu0
      %v830 = vadd.f32 %v581, %v829
      %v831 = vpop.f32.mrf.mxu0
      %v832 = vpop.f32.mrf.mxu0
      %v833 = vadd.f32 %v581, %v832
      %v834 = vpop.f32.mrf.mxu0
      %835 = vmatprep.mubr.bf16.mxu0 0
      %836 = vmatmul.mubr.bf16.gmra.mxu0 %v663
      %v837 = vpop.f32.mrf.mxu0
      %v838 = vadd.f32 %v581, %v837
      %v839 = vpop.f32.mrf.mxu0
      %v840 = vpop.f32.mrf.mxu0
      %v841 = vadd.f32 %v581, %v840
      %v842 = vpop.f32.mrf.mxu0
      %843 = vmatprep.mubr.bf16.mxu0 0
      %844 = vmatmul.mubr.bf16.gmra.mxu0 %v664
      %v845 = vpop.f32.mrf.mxu0
      %v846 = vadd.f32 %v581, %v845
      %v847 = vpop.f32.mrf.mxu0
      %v848 = vpop.f32.mrf.mxu0
      %v849 = vadd.f32 %v581, %v848
      %v850 = vpop.f32.mrf.mxu0
      %851 = vmatprep.mubr.bf16.mxu0 0
      %852 = vmatmul.mubr.bf16.gmra.mxu0 %v665
      %v853 = vpop.f32.mrf.mxu0
      %v854 = vadd.f32 %v581, %v853
      %v855 = vpop.f32.mrf.mxu0
      %v856 = vpop.f32.mrf.mxu0
      %v857 = vadd.f32 %v581, %v856
      %v858 = vpop.f32.mrf.mxu0
      %859 = vmatprep.mubr.bf16.mxu0 0
      %860 = vmatmul.mubr.bf16.gmra.mxu0 %v666
      %v861 = vpop.f32.mrf.mxu0
      %v862 = vadd.f32 %v581, %v861
      %v863 = vpop.f32.mrf.mxu0
      %v864 = vpop.f32.mrf.mxu0
      %v865 = vadd.f32 %v581, %v864
      %v866 = vpop.f32.mrf.mxu0
      %867 = vmatprep.mubr.bf16.mxu0 0
      %868 = vmatmul.mubr.bf16.gmra.mxu0 %v667
      %v869 = vpop.f32.mrf.mxu0
      %v870 = vadd.f32 %v581, %v869
      %v871 = vpop.f32.mrf.mxu0
      %v872 = vpop.f32.mrf.mxu0
      %v873 = vadd.f32 %v581, %v872
      %v874 = vpop.f32.mrf.mxu0
      %875 = vmatprep.mubr.bf16.mxu0 0
      %876 = vmatmul.mubr.bf16.gmra.mxu0 %v668
      %v877 = vpop.f32.mrf.mxu0
      %v878 = vadd.f32 %v581, %v877
      %v879 = vpop.f32.mrf.mxu0
      %v880 = vpop.f32.mrf.mxu0
      %v881 = vadd.f32 %v581, %v880
      %v882 = vpop.f32.mrf.mxu0
      %883 = vmatprep.mubr.bf16.mxu0 0
      %884 = vmatmul.mubr.bf16.gmra.mxu0 %v669
      %v885 = vpop.f32.mrf.mxu0
      %v886 = vadd.f32 %v581, %v885
      %v887 = vpop.f32.mrf.mxu0
      %v888 = vpop.f32.mrf.mxu0
      %v889 = vadd.f32 %v581, %v888
      %v890 = vpop.f32.mrf.mxu0
      %891 = vmatprep.mubr.bf16.mxu0 0
      %892 = vmatmul.mubr.bf16.gmra.mxu0 %v670
      %v893 = vpop.f32.mrf.mxu0
      %v894 = vadd.f32 %v581, %v893
      %v895 = vpop.f32.mrf.mxu0
      %v896 = vpop.f32.mrf.mxu0
      %v897 = vadd.f32 %v581, %v896
      %v898 = vpop.f32.mrf.mxu0
      %899 = vmatprep.mubr.bf16.mxu0 0
      %900 = vmatmul.mubr.bf16.gmra.mxu0 %v671
      %v901 = vpop.f32.mrf.mxu0
      %v902 = vadd.f32 %v581, %v901
      %v903 = vpop.f32.mrf.mxu0
      %v904 = vpop.f32.mrf.mxu0
      %v905 = vadd.f32 %v581, %v904
      %v906 = vpop.f32.mrf.mxu0
      %907 = vmatprep.mubr.bf16.mxu0 0
      %908 = vmatmul.mubr.bf16.gmra.mxu0 %v672
      %v909 = vpop.f32.mrf.mxu0
      %v910 = vadd.f32 %v581, %v909
      %v911 = vpop.f32.mrf.mxu0
      %v912 = vpop.f32.mrf.mxu0
      %v913 = vadd.f32 %v581, %v912
      %v914 = vpop.f32.mrf.mxu0
      %915 = vdwg.mxu0
      %vm916 = vcmp.gt.f32.partialorder %v774, 0.0
      %vm917 = vcmp.gt.f32.partialorder %v777, 0.0
      %vm918 = vcmp.gt.f32.partialorder %v782, 0.0
      %vm919 = vcmp.gt.f32.partialorder %v785, 0.0
      %vm920 = vcmp.gt.f32.partialorder %v790, 0.0
      %vm921 = vcmp.gt.f32.partialorder %v793, 0.0
      %vm922 = vcmp.gt.f32.partialorder %v798, 0.0
      %vm923 = vcmp.gt.f32.partialorder %v801, 0.0
      %vm924 = vcmp.gt.f32.partialorder %v806, 0.0
      %vm925 = vcmp.gt.f32.partialorder %v809, 0.0
      %vm926 = vcmp.gt.f32.partialorder %v814, 0.0
      %vm927 = vcmp.gt.f32.partialorder %v817, 0.0
      %vm928 = vcmp.gt.f32.partialorder %v822, 0.0
      %vm929 = vcmp.gt.f32.partialorder %v825, 0.0
      %vm930 = vcmp.gt.f32.partialorder %v830, 0.0
      %vm931 = vcmp.gt.f32.partialorder %v833, 0.0
      %vm932 = vcmp.gt.f32.partialorder %v838, 0.0
      %vm933 = vcmp.gt.f32.partialorder %v841, 0.0
      %vm934 = vcmp.gt.f32.partialorder %v846, 0.0
      %vm935 = vcmp.gt.f32.partialorder %v849, 0.0
      %vm936 = vcmp.gt.f32.partialorder %v854, 0.0
      %vm937 = vcmp.gt.f32.partialorder %v857, 0.0
      %vm938 = vcmp.gt.f32.partialorder %v862, 0.0
      %vm939 = vcmp.gt.f32.partialorder %v865, 0.0
      %vm940 = vcmp.gt.f32.partialorder %v870, 0.0
      %vm941 = vcmp.gt.f32.partialorder %v873, 0.0
      %vm942 = vcmp.gt.f32.partialorder %v878, 0.0
      %vm943 = vcmp.gt.f32.partialorder %v881, 0.0
      %vm944 = vcmp.gt.f32.partialorder %v886, 0.0
      %vm945 = vcmp.gt.f32.partialorder %v889, 0.0
      %vm946 = vcmp.gt.f32.partialorder %v894, 0.0
      %vm947 = vcmp.gt.f32.partialorder %v897, 0.0
      %vm948 = vcmp.gt.f32.partialorder %v902, 0.0
      %vm949 = vcmp.gt.f32.partialorder %v905, 0.0
      %vm950 = vcmp.gt.f32.partialorder %v910, 0.0
      %vm951 = vcmp.gt.f32.partialorder %v913, 0.0
      %v952 = vmul.f32 %v774, 0.01
      %v953 = vmul.f32 %v777, 0.01
      %v954 = vmul.f32 %v782, 0.01
      %v955 = vmul.f32 %v785, 0.01
      %v956 = vmul.f32 %v790, 0.01
      %v957 = vmul.f32 %v793, 0.01
      %v958 = vmul.f32 %v798, 0.01
      %v959 = vmul.f32 %v801, 0.01
      %v960 = vmul.f32 %v806, 0.01
      %v961 = vmul.f32 %v809, 0.01
      %v962 = vmul.f32 %v814, 0.01
      %v963 = vmul.f32 %v817, 0.01
      %v964 = vmul.f32 %v822, 0.01
      %v965 = vmul.f32 %v825, 0.01
      %v966 = vmul.f32 %v830, 0.01
      %v967 = vmul.f32 %v833, 0.01
      %v968 = vmul.f32 %v838, 0.01
      %v969 = vmul.f32 %v841, 0.01
      %v970 = vmul.f32 %v846, 0.01
      %v971 = vmul.f32 %v849, 0.01
      %v972 = vmul.f32 %v854, 0.01
      %v973 = vmul.f32 %v857, 0.01
      %v974 = vmul.f32 %v862, 0.01
      %v975 = vmul.f32 %v865, 0.01
      %v976 = vmul.f32 %v870, 0.01
      %v977 = vmul.f32 %v873, 0.01
      %v978 = vmul.f32 %v878, 0.01
      %v979 = vmul.f32 %v881, 0.01
      %v980 = vmul.f32 %v886, 0.01
      %v981 = vmul.f32 %v889, 0.01
      %v982 = vmul.f32 %v894, 0.01
      %v983 = vmul.f32 %v897, 0.01
      %v984 = vmul.f32 %v902, 0.01
      %v985 = vmul.f32 %v905, 0.01
      %v986 = vmul.f32 %v910, 0.01
      %v987 = vmul.f32 %v913, 0.01
      %v988 = vsel %vm916, %v774, %v952
      %v989 = vsel %vm917, %v777, %v953
      %v990 = vsel %vm918, %v782, %v954
      %v991 = vsel %vm919, %v785, %v955
      %v992 = vsel %vm920, %v790, %v956
      %v993 = vsel %vm921, %v793, %v957
      %v994 = vsel %vm922, %v798, %v958
      %v995 = vsel %vm923, %v801, %v959
      %v996 = vsel %vm924, %v806, %v960
      %v997 = vsel %vm925, %v809, %v961
      %v998 = vsel %vm926, %v814, %v962
      %v999 = vsel %vm927, %v817, %v963
      %v1000 = vsel %vm928, %v822, %v964
      %v1001 = vsel %vm929, %v825, %v965
      %v1002 = vsel %vm930, %v830, %v966
      %v1003 = vsel %vm931, %v833, %v967
      %v1004 = vsel %vm932, %v838, %v968
      %v1005 = vsel %vm933, %v841, %v969
      %v1006 = vsel %vm934, %v846, %v970
      %v1007 = vsel %vm935, %v849, %v971
      %v1008 = vsel %vm936, %v854, %v972
      %v1009 = vsel %vm937, %v857, %v973
      %v1010 = vsel %vm938, %v862, %v974
      %v1011 = vsel %vm939, %v865, %v975
      %v1012 = vsel %vm940, %v870, %v976
      %v1013 = vsel %vm941, %v873, %v977
      %v1014 = vsel %vm942, %v878, %v978
      %v1015 = vsel %vm943, %v881, %v979
      %v1016 = vsel %vm944, %v886, %v980
      %v1017 = vsel %vm945, %v889, %v981
      %v1018 = vsel %vm946, %v894, %v982
      %v1019 = vsel %vm947, %v897, %v983
      %v1020 = vsel %vm948, %v902, %v984
      %v1021 = vsel %vm949, %v905, %v985
      %v1022 = vsel %vm950, %v910, %v986
      %v1023 = vsel %vm951, %v913, %v987
      %v1024 = vpack.c.bf16 %v989, %v988
      %v1025 = vpack.c.bf16 %v991, %v990
      %v1026 = vpack.c.bf16 %v993, %v992
      %v1027 = vpack.c.bf16 %v995, %v994
      %v1028 = vpack.c.bf16 %v997, %v996
      %v1029 = vpack.c.bf16 %v999, %v998
      %v1030 = vpack.c.bf16 %v1001, %v1000
      %v1031 = vpack.c.bf16 %v1003, %v1002
      %v1032 = vpack.c.bf16 %v1005, %v1004
      %v1033 = vpack.c.bf16 %v1007, %v1006
      %v1034 = vpack.c.bf16 %v1009, %v1008
      %v1035 = vpack.c.bf16 %v1011, %v1010
      %v1036 = vpack.c.bf16 %v1013, %v1012
      %v1037 = vpack.c.bf16 %v1015, %v1014
      %v1038 = vpack.c.bf16 %v1017, %v1016
      %v1039 = vpack.c.bf16 %v1019, %v1018
      %v1040 = vpack.c.bf16 %v1021, %v1020
      %v1041 = vpack.c.bf16 %v1023, %v1022
      %v1060 = vunpack.c.l.b16 %v1024
      %v1061 = vunpack.c.h.b16 %v1024
      %v1062 = vunpack.c.l.b16 %v1025
      %v1063 = vunpack.c.h.b16 %v1025
      %v1064 = vunpack.c.l.b16 %v1026
      %v1065 = vunpack.c.h.b16 %v1026
      %v1066 = vunpack.c.l.b16 %v1027
      %v1067 = vunpack.c.h.b16 %v1027
      %v1068 = vunpack.c.l.b16 %v1028
      %v1069 = vunpack.c.h.b16 %v1028
      %v1070 = vunpack.c.l.b16 %v1029
      %v1071 = vunpack.c.h.b16 %v1029
      %v1072 = vunpack.c.l.b16 %v1030
      %v1073 = vunpack.c.h.b16 %v1030
      %v1074 = vunpack.c.l.b16 %v1031
      %v1075 = vunpack.c.h.b16 %v1031
      %v1076 = vunpack.c.l.b16 %v1032
      %v1077 = vunpack.c.h.b16 %v1032
      %v1078 = vunpack.c.l.b16 %v1033
      %v1079 = vunpack.c.h.b16 %v1033
      %v1080 = vunpack.c.l.b16 %v1034
      %v1081 = vunpack.c.h.b16 %v1034
      %v1082 = vunpack.c.l.b16 %v1035
      %v1083 = vunpack.c.h.b16 %v1035
      %v1084 = vunpack.c.l.b16 %v1036
      %v1085 = vunpack.c.h.b16 %v1036
      %v1086 = vunpack.c.l.b16 %v1037
      %v1087 = vunpack.c.h.b16 %v1037
      %v1088 = vunpack.c.l.b16 %v1038
      %v1089 = vunpack.c.h.b16 %v1038
      %v1090 = vunpack.c.l.b16 %v1039
      %v1091 = vunpack.c.h.b16 %v1039
      %v1092 = vunpack.c.l.b16 %v1040
      %v1093 = vunpack.c.h.b16 %v1040
      %v1094 = vunpack.c.l.b16 %v1041
      %v1095 = vunpack.c.h.b16 %v1041
      %v1096 = vpack.c.b16 %v1060, %v1060
      %v1097 = vpack.c.b16 %v1061, %v1061
      %v1098 = vpack.c.b16 %v1062, %v1062
      %v1099 = vpack.c.b16 %v1063, %v1063
      %v1100 = vpack.c.b16 %v1064, %v1064
      %v1101 = vpack.c.b16 %v1065, %v1065
      %v1102 = vpack.c.b16 %v1066, %v1066
      %v1103 = vpack.c.b16 %v1067, %v1067
      %v1104 = vpack.c.b16 %v1068, %v1068
      %v1105 = vpack.c.b16 %v1069, %v1069
      %v1106 = vpack.c.b16 %v1070, %v1070
      %v1107 = vpack.c.b16 %v1071, %v1071
      %v1108 = vpack.c.b16 %v1072, %v1072
      %v1109 = vpack.c.b16 %v1073, %v1073
      %v1110 = vpack.c.b16 %v1074, %v1074
      %v1111 = vpack.c.b16 %v1075, %v1075
      %v1112 = vpack.c.b16 %v1076, %v1076
      %v1113 = vpack.c.b16 %v1077, %v1077
      %v1114 = vpack.c.b16 %v1078, %v1078
      %v1115 = vpack.c.b16 %v1079, %v1079
      %v1116 = vpack.c.b16 %v1080, %v1080
      %v1117 = vpack.c.b16 %v1081, %v1081
      %v1118 = vpack.c.b16 %v1082, %v1082
      %v1119 = vpack.c.b16 %v1083, %v1083
      %v1120 = vpack.c.b16 %v1084, %v1084
      %v1121 = vpack.c.b16 %v1085, %v1085
      %v1122 = vpack.c.b16 %v1086, %v1086
      %v1123 = vpack.c.b16 %v1087, %v1087
      %v1124 = vpack.c.b16 %v1088, %v1088
      %v1125 = vpack.c.b16 %v1089, %v1089
      %v1126 = vpack.c.b16 %v1090, %v1090
      %v1127 = vpack.c.b16 %v1091, %v1091
      %v1128 = vpack.c.b16 %v1092, %v1092
      %v1129 = vpack.c.b16 %v1093, %v1093
      %v1130 = vpack.c.b16 %v1094, %v1094
      %v1131 = vpack.c.b16 %v1095, %v1095
      %vm1132 = vsmask.f32 256
      %vm1133 = vsmask.f32 4368
      %vm1134 = vmor %vm1132, %vm1133
      %v1136 = vshrl.u32 %v1096, 16
      %v1138 = vrot.slane %v1136, 7
      %v1139 = vshll.u32 %v1096, 16
      %v1141 = vor.u32 %v1138, %v1139
      %v1142 = vrot.slane %v1138, 4
      %v1144 = vshrl.u32 %v1097, 16
      %v1146 = vrot.slane %v1144, 7
      %v1147 = vshll.u32 %v1097, 16
      %v1149 = vor.u32 %v1146, %v1147
      %v1150 = vsel %vm1134, %v1142, %v1149
      %v1151 = vrot.slane %v1146, 4
      %v1153 = vshrl.u32 %v1098, 16
      %v1155 = vrot.slane %v1153, 7
      %v1156 = vshll.u32 %v1098, 16
      %v1158 = vor.u32 %v1155, %v1156
      %v1159 = vrot.slane %v1155, 4
      %v1161 = vshrl.u32 %v1099, 16
      %v1163 = vrot.slane %v1161, 7
      %v1164 = vshll.u32 %v1099, 16
      %v1166 = vor.u32 %v1163, %v1164
      %v1167 = vsel %vm1134, %v1159, %v1166
      %v1168 = vrot.slane %v1163, 4
      %v1170 = vshrl.u32 %v1100, 16
      %v1172 = vrot.slane %v1170, 7
      %v1173 = vshll.u32 %v1100, 16
      %v1175 = vor.u32 %v1172, %v1173
      %v1176 = vrot.slane %v1172, 4
      %v1178 = vshrl.u32 %v1101, 16
      %v1180 = vrot.slane %v1178, 7
      %v1181 = vshll.u32 %v1101, 16
      %v1183 = vor.u32 %v1180, %v1181
      %v1184 = vsel %vm1134, %v1176, %v1183
      %v1185 = vrot.slane %v1180, 4
      %v1187 = vshrl.u32 %v1102, 16
      %v1189 = vrot.slane %v1187, 7
      %v1190 = vshll.u32 %v1102, 16
      %v1192 = vor.u32 %v1189, %v1190
      %v1193 = vrot.slane %v1189, 4
      %v1195 = vshrl.u32 %v1103, 16
      %v1197 = vrot.slane %v1195, 7
      %v1198 = vshll.u32 %v1103, 16
      %v1200 = vor.u32 %v1197, %v1198
      %v1201 = vsel %vm1134, %v1193, %v1200
      %v1202 = vrot.slane %v1197, 4
      %v1204 = vshrl.u32 %v1104, 16
      %v1206 = vrot.slane %v1204, 7
      %v1207 = vshll.u32 %v1104, 16
      %v1209 = vor.u32 %v1206, %v1207
      %v1210 = vrot.slane %v1206, 4
      %v1212 = vshrl.u32 %v1105, 16
      %v1214 = vrot.slane %v1212, 7
      %v1215 = vshll.u32 %v1105, 16
      %v1217 = vor.u32 %v1214, %v1215
      %v1218 = vsel %vm1134, %v1210, %v1217
      %v1219 = vrot.slane %v1214, 4
      %v1221 = vshrl.u32 %v1106, 16
      %v1223 = vrot.slane %v1221, 7
      %v1224 = vshll.u32 %v1106, 16
      %v1226 = vor.u32 %v1223, %v1224
      %v1227 = vrot.slane %v1223, 4
      %v1229 = vshrl.u32 %v1107, 16
      %v1231 = vrot.slane %v1229, 7
      %v1232 = vshll.u32 %v1107, 16
      %v1234 = vor.u32 %v1231, %v1232
      %v1235 = vsel %vm1134, %v1227, %v1234
      %v1236 = vrot.slane %v1231, 4
      %v1238 = vshrl.u32 %v1108, 16
      %v1240 = vrot.slane %v1238, 7
      %v1241 = vshll.u32 %v1108, 16
      %v1243 = vor.u32 %v1240, %v1241
      %v1244 = vrot.slane %v1240, 4
      %v1246 = vshrl.u32 %v1109, 16
      %v1248 = vrot.slane %v1246, 7
      %v1249 = vshll.u32 %v1109, 16
      %v1251 = vor.u32 %v1248, %v1249
      %v1252 = vsel %vm1134, %v1244, %v1251
      %v1253 = vrot.slane %v1248, 4
      %v1255 = vshrl.u32 %v1110, 16
      %v1257 = vrot.slane %v1255, 7
      %v1258 = vshll.u32 %v1110, 16
      %v1260 = vor.u32 %v1257, %v1258
      %v1261 = vrot.slane %v1257, 4
      %v1263 = vshrl.u32 %v1111, 16
      %v1265 = vrot.slane %v1263, 7
      %v1266 = vshll.u32 %v1111, 16
      %v1268 = vor.u32 %v1265, %v1266
      %v1269 = vsel %vm1134, %v1261, %v1268
      %v1270 = vrot.slane %v1265, 4
      %v1272 = vshrl.u32 %v1112, 16
      %v1274 = vrot.slane %v1272, 7
      %v1275 = vshll.u32 %v1112, 16
      %v1277 = vor.u32 %v1274, %v1275
      %v1278 = vrot.slane %v1274, 4
      %v1280 = vshrl.u32 %v1113, 16
      %v1282 = vrot.slane %v1280, 7
      %v1283 = vshll.u32 %v1113, 16
      %v1285 = vor.u32 %v1282, %v1283
      %v1286 = vsel %vm1134, %v1278, %v1285
      %v1287 = vrot.slane %v1282, 4
      %v1289 = vshrl.u32 %v1114, 16
      %v1291 = vrot.slane %v1289, 7
      %v1292 = vshll.u32 %v1114, 16
      %v1294 = vor.u32 %v1291, %v1292
      %v1295 = vrot.slane %v1291, 4
      %v1297 = vshrl.u32 %v1115, 16
      %v1299 = vrot.slane %v1297, 7
      %v1300 = vshll.u32 %v1115, 16
      %v1302 = vor.u32 %v1299, %v1300
      %v1303 = vsel %vm1134, %v1295, %v1302
      %v1304 = vrot.slane %v1299, 4
      %v1306 = vshrl.u32 %v1116, 16
      %v1308 = vrot.slane %v1306, 7
      %v1309 = vshll.u32 %v1116, 16
      %v1311 = vor.u32 %v1308, %v1309
      %v1312 = vrot.slane %v1308, 4
      %v1314 = vshrl.u32 %v1117, 16
      %v1316 = vrot.slane %v1314, 7
      %v1317 = vshll.u32 %v1117, 16
      %v1319 = vor.u32 %v1316, %v1317
      %v1320 = vsel %vm1134, %v1312, %v1319
      %v1321 = vrot.slane %v1316, 4
      %v1323 = vshrl.u32 %v1118, 16
      %v1325 = vrot.slane %v1323, 7
      %v1326 = vshll.u32 %v1118, 16
      %v1328 = vor.u32 %v1325, %v1326
      %v1329 = vrot.slane %v1325, 4
      %v1331 = vshrl.u32 %v1119, 16
      %v1333 = vrot.slane %v1331, 7
      %v1334 = vshll.u32 %v1119, 16
      %v1336 = vor.u32 %v1333, %v1334
      %v1337 = vsel %vm1134, %v1329, %v1336
      %v1338 = vrot.slane %v1333, 4
      %v1340 = vshrl.u32 %v1120, 16
      %v1342 = vrot.slane %v1340, 7
      %v1343 = vshll.u32 %v1120, 16
      %v1345 = vor.u32 %v1342, %v1343
      %v1346 = vrot.slane %v1342, 4
      %v1348 = vshrl.u32 %v1121, 16
      %v1350 = vrot.slane %v1348, 7
      %v1351 = vshll.u32 %v1121, 16
      %v1353 = vor.u32 %v1350, %v1351
      %v1354 = vsel %vm1134, %v1346, %v1353
      %v1355 = vrot.slane %v1350, 4
      %v1357 = vshrl.u32 %v1122, 16
      %v1359 = vrot.slane %v1357, 7
      %v1360 = vshll.u32 %v1122, 16
      %v1362 = vor.u32 %v1359, %v1360
      %v1363 = vrot.slane %v1359, 4
      %v1365 = vshrl.u32 %v1123, 16
      %v1367 = vrot.slane %v1365, 7
      %v1368 = vshll.u32 %v1123, 16
      %v1370 = vor.u32 %v1367, %v1368
      %v1371 = vsel %vm1134, %v1363, %v1370
      %v1372 = vrot.slane %v1367, 4
      %v1374 = vshrl.u32 %v1124, 16
      %v1376 = vrot.slane %v1374, 7
      %v1377 = vshll.u32 %v1124, 16
      %v1379 = vor.u32 %v1376, %v1377
      %v1380 = vrot.slane %v1376, 4
      %v1382 = vshrl.u32 %v1125, 16
      %v1384 = vrot.slane %v1382, 7
      %v1385 = vshll.u32 %v1125, 16
      %v1387 = vor.u32 %v1384, %v1385
      %v1388 = vsel %vm1134, %v1380, %v1387
      %v1389 = vrot.slane %v1384, 4
      %v1391 = vshrl.u32 %v1126, 16
      %v1393 = vrot.slane %v1391, 7
      %v1394 = vshll.u32 %v1126, 16
      %v1396 = vor.u32 %v1393, %v1394
      %v1397 = vrot.slane %v1393, 4
      %v1399 = vshrl.u32 %v1127, 16
      %v1401 = vrot.slane %v1399, 7
      %v1402 = vshll.u32 %v1127, 16
      %v1404 = vor.u32 %v1401, %v1402
      %v1405 = vsel %vm1134, %v1397, %v1404
      %v1406 = vrot.slane %v1401, 4
      %v1408 = vshrl.u32 %v1128, 16
      %v1410 = vrot.slane %v1408, 7
      %v1411 = vshll.u32 %v1128, 16
      %v1413 = vor.u32 %v1410, %v1411
      %v1414 = vrot.slane %v1410, 4
      %v1416 = vshrl.u32 %v1129, 16
      %v1418 = vrot.slane %v1416, 7
      %v1419 = vshll.u32 %v1129, 16
      %v1421 = vor.u32 %v1418, %v1419
      %v1422 = vsel %vm1134, %v1414, %v1421
      %v1423 = vrot.slane %v1418, 4
      %v1425 = vshrl.u32 %v1130, 16
      %v1427 = vrot.slane %v1425, 7
      %v1428 = vshll.u32 %v1130, 16
      %v1430 = vor.u32 %v1427, %v1428
      %v1431 = vrot.slane %v1427, 4
      %v1433 = vshrl.u32 %v1131, 16
      %v1435 = vrot.slane %v1433, 7
      %v1436 = vshll.u32 %v1131, 16
      %v1438 = vor.u32 %v1435, %v1436
      %v1439 = vsel %vm1134, %v1431, %v1438
      %v1440 = vrot.slane %v1435, 4
      %vm1495 = vcmask 1043456
      %vm1496 = vsmask.f32 7938
      %vm1497 = vmand %vm1495, %vm1496
      %v1498 = vld [vmem:[#allocation4] sm:$0xf]
      %v1499 = vsel %vm1497, %v1141, %v1498
      %1500 = vst [vmem:[#allocation4] sm:$0xf] %v1499
      %1501 = vst [vmem:[#allocation4 + $0x4] sm:$0xf] %v1150
      %vm1502 = vcmask 1040384
      %vm1503 = vmand %vm1502, %vm1132
      %v1504 = vld [vmem:[#allocation4 + $0x8] sm:$0x1]
      %v1505 = vsel %vm1503, %v1151, %v1504
      %1506 = vst [vmem:[#allocation4 + $0x8] sm:$0x1] %v1505
      %v1507 = vld [vmem:[#allocation4 + $0xc] sm:$0xf]
      %v1508 = vsel %vm1497, %v1158, %v1507
      %1509 = vst [vmem:[#allocation4 + $0xc] sm:$0xf] %v1508
      %1510 = vst [vmem:[#allocation4 + $0x10] sm:$0xf] %v1167
      %v1511 = vld [vmem:[#allocation4 + $0x14] sm:$0x1]
      %v1512 = vsel %vm1503, %v1168, %v1511
      %1513 = vst [vmem:[#allocation4 + $0x14] sm:$0x1] %v1512
      %v1514 = vld [vmem:[#allocation4 + $0x18] sm:$0xf]
      %v1515 = vsel %vm1497, %v1175, %v1514
      %1516 = vst [vmem:[#allocation4 + $0x18] sm:$0xf] %v1515
      %1517 = vst [vmem:[#allocation4 + $0x1c] sm:$0xf] %v1184
      %v1518 = vld [vmem:[#allocation4 + $0x20] sm:$0x1]
      %v1519 = vsel %vm1503, %v1185, %v1518
      %1520 = vst [vmem:[#allocation4 + $0x20] sm:$0x1] %v1519
      %v1521 = vld [vmem:[#allocation4 + $0x24] sm:$0xf]
      %v1522 = vsel %vm1497, %v1192, %v1521
      %1523 = vst [vmem:[#allocation4 + $0x24] sm:$0xf] %v1522
      %1524 = vst [vmem:[#allocation4 + $0x28] sm:$0xf] %v1201
      %v1525 = vld [vmem:[#allocation4 + $0x2c] sm:$0x1]
      %v1526 = vsel %vm1503, %v1202, %v1525
      %1527 = vst [vmem:[#allocation4 + $0x2c] sm:$0x1] %v1526
      %v1528 = vld [vmem:[#allocation4 + $0x30] sm:$0xf]
      %v1529 = vsel %vm1497, %v1209, %v1528
      %1530 = vst [vmem:[#allocation4 + $0x30] sm:$0xf] %v1529
      %1531 = vst [vmem:[#allocation4 + $0x34] sm:$0xf] %v1218
      %v1532 = vld [vmem:[#allocation4 + $0x38] sm:$0x1]
      %v1533 = vsel %vm1503, %v1219, %v1532
      %1534 = vst [vmem:[#allocation4 + $0x38] sm:$0x1] %v1533
      %v1535 = vld [vmem:[#allocation4 + $0x3c] sm:$0xf]
      %v1536 = vsel %vm1497, %v1226, %v1535
      %1537 = vst [vmem:[#allocation4 + $0x3c] sm:$0xf] %v1536
      %1538 = vst [vmem:[#allocation4 + $0x40] sm:$0xf] %v1235
      %v1539 = vld [vmem:[#allocation4 + $0x44] sm:$0x1]
      %v1540 = vsel %vm1503, %v1236, %v1539
      %1541 = vst [vmem:[#allocation4 + $0x44] sm:$0x1] %v1540
      %v1542 = vld [vmem:[#allocation4 + $0x48] sm:$0xf]
      %v1543 = vsel %vm1497, %v1243, %v1542
      %1544 = vst [vmem:[#allocation4 + $0x48] sm:$0xf] %v1543
      %1545 = vst [vmem:[#allocation4 + $0x4c] sm:$0xf] %v1252
      %v1546 = vld [vmem:[#allocation4 + $0x50] sm:$0x1]
      %v1547 = vsel %vm1503, %v1253, %v1546
      %1548 = vst [vmem:[#allocation4 + $0x50] sm:$0x1] %v1547
      %v1549 = vld [vmem:[#allocation4 + $0x54] sm:$0xf]
      %v1550 = vsel %vm1497, %v1260, %v1549
      %1551 = vst [vmem:[#allocation4 + $0x54] sm:$0xf] %v1550
      %1552 = vst [vmem:[#allocation4 + $0x58] sm:$0xf] %v1269
      %v1553 = vld [vmem:[#allocation4 + $0x5c] sm:$0x1]
      %v1554 = vsel %vm1503, %v1270, %v1553
      %1555 = vst [vmem:[#allocation4 + $0x5c] sm:$0x1] %v1554
      %v1556 = vld [vmem:[#allocation4 + $0x60] sm:$0xf]
      %v1557 = vsel %vm1497, %v1277, %v1556
      %1558 = vst [vmem:[#allocation4 + $0x60] sm:$0xf] %v1557
      %1559 = vst [vmem:[#allocation4 + $0x64] sm:$0xf] %v1286
      %v1560 = vld [vmem:[#allocation4 + $0x68] sm:$0x1]
      %v1561 = vsel %vm1503, %v1287, %v1560
      %1562 = vst [vmem:[#allocation4 + $0x68] sm:$0x1] %v1561
      %v1563 = vld [vmem:[#allocation4 + $0x6c] sm:$0xf]
      %v1564 = vsel %vm1497, %v1294, %v1563
      %1565 = vst [vmem:[#allocation4 + $0x6c] sm:$0xf] %v1564
      %1566 = vst [vmem:[#allocation4 + $0x70] sm:$0xf] %v1303
      %v1567 = vld [vmem:[#allocation4 + $0x74] sm:$0x1]
      %v1568 = vsel %vm1503, %v1304, %v1567
      %1569 = vst [vmem:[#allocation4 + $0x74] sm:$0x1] %v1568
      %v1570 = vld [vmem:[#allocation4 + $0x78] sm:$0xf]
      %v1571 = vsel %vm1497, %v1311, %v1570
      %1572 = vst [vmem:[#allocation4 + $0x78] sm:$0xf] %v1571
      %1573 = vst [vmem:[#allocation4 + $0x7c] sm:$0xf] %v1320
      %v1574 = vld [vmem:[#allocation4 + $0x80] sm:$0x1]
      %v1575 = vsel %vm1503, %v1321, %v1574
      %1576 = vst [vmem:[#allocation4 + $0x80] sm:$0x1] %v1575
      %v1577 = vld [vmem:[#allocation4 + $0x84] sm:$0xf]
      %v1578 = vsel %vm1497, %v1328, %v1577
      %1579 = vst [vmem:[#allocation4 + $0x84] sm:$0xf] %v1578
      %1580 = vst [vmem:[#allocation4 + $0x88] sm:$0xf] %v1337
      %v1581 = vld [vmem:[#allocation4 + $0x8c] sm:$0x1]
      %v1582 = vsel %vm1503, %v1338, %v1581
      %1583 = vst [vmem:[#allocation4 + $0x8c] sm:$0x1] %v1582
      %v1584 = vld [vmem:[#allocation4 + $0x90] sm:$0xf]
      %v1585 = vsel %vm1497, %v1345, %v1584
      %1586 = vst [vmem:[#allocation4 + $0x90] sm:$0xf] %v1585
      %1587 = vst [vmem:[#allocation4 + $0x94] sm:$0xf] %v1354
      %v1588 = vld [vmem:[#allocation4 + $0x98] sm:$0x1]
      %v1589 = vsel %vm1503, %v1355, %v1588
      %1590 = vst [vmem:[#allocation4 + $0x98] sm:$0x1] %v1589
      %v1591 = vld [vmem:[#allocation4 + $0x9c] sm:$0xf]
      %v1592 = vsel %vm1497, %v1362, %v1591
      %1593 = vst [vmem:[#allocation4 + $0x9c] sm:$0xf] %v1592
      %1594 = vst [vmem:[#allocation4 + $0xa0] sm:$0xf] %v1371
      %v1595 = vld [vmem:[#allocation4 + $0xa4] sm:$0x1]
      %v1596 = vsel %vm1503, %v1372, %v1595
      %1597 = vst [vmem:[#allocation4 + $0xa4] sm:$0x1] %v1596
      %v1598 = vld [vmem:[#allocation4 + $0xa8] sm:$0xf]
      %v1599 = vsel %vm1497, %v1379, %v1598
      %1600 = vst [vmem:[#allocation4 + $0xa8] sm:$0xf] %v1599
      %1601 = vst [vmem:[#allocation4 + $0xac] sm:$0xf] %v1388
      %v1602 = vld [vmem:[#allocation4 + $0xb0] sm:$0x1]
      %v1603 = vsel %vm1503, %v1389, %v1602
      %1604 = vst [vmem:[#allocation4 + $0xb0] sm:$0x1] %v1603
      %v1605 = vld [vmem:[#allocation4 + $0xb4] sm:$0xf]
      %v1606 = vsel %vm1497, %v1396, %v1605
      %1607 = vst [vmem:[#allocation4 + $0xb4] sm:$0xf] %v1606
      %1608 = vst [vmem:[#allocation4 + $0xb8] sm:$0xf] %v1405
      %v1609 = vld [vmem:[#allocation4 + $0xbc] sm:$0x1]
      %v1610 = vsel %vm1503, %v1406, %v1609
      %1611 = vst [vmem:[#allocation4 + $0xbc] sm:$0x1] %v1610
      %v1612 = vld [vmem:[#allocation4 + $0xc0] sm:$0xf]
      %v1613 = vsel %vm1497, %v1413, %v1612
      %1614 = vst [vmem:[#allocation4 + $0xc0] sm:$0xf] %v1613
      %1615 = vst [vmem:[#allocation4 + $0xc4] sm:$0xf] %v1422
      %v1616 = vld [vmem:[#allocation4 + $0xc8] sm:$0x1]
      %v1617 = vsel %vm1503, %v1423, %v1616
      %1618 = vst [vmem:[#allocation4 + $0xc8] sm:$0x1] %v1617
      %v1619 = vld [vmem:[#allocation4 + $0xcc] sm:$0xf]
      %v1620 = vsel %vm1497, %v1430, %v1619
      %1621 = vst [vmem:[#allocation4 + $0xcc] sm:$0xf] %v1620
      %1622 = vst [vmem:[#allocation4 + $0xd0] sm:$0xf] %v1439
      %v1623 = vld [vmem:[#allocation4 + $0xd4] sm:$0x1]
      %v1624 = vsel %vm1503, %v1440, %v1623
      %1625 = vst [vmem:[#allocation4 + $0xd4] sm:$0x1] %v1624
      %v1626 = vld [vmem:[#allocation4] sm:$0x1]
      %v1627 = vsel %vm1503, 0, %v1626
      %1628 = vst [vmem:[#allocation4] sm:$0x1] %v1627
      %v1629 = vld [vmem:[#allocation4 + $0xc] sm:$0x1]
      %v1630 = vsel %vm1503, 0, %v1629
      %1631 = vst [vmem:[#allocation4 + $0xc] sm:$0x1] %v1630
      %v1632 = vld [vmem:[#allocation4 + $0x18] sm:$0x1]
      %v1633 = vsel %vm1503, 0, %v1632
      %1634 = vst [vmem:[#allocation4 + $0x18] sm:$0x1] %v1633
      %v1635 = vld [vmem:[#allocation4 + $0x24] sm:$0x1]
      %v1636 = vsel %vm1503, 0, %v1635
      %1637 = vst [vmem:[#allocation4 + $0x24] sm:$0x1] %v1636
      %v1638 = vld [vmem:[#allocation4 + $0x30] sm:$0x1]
      %v1639 = vsel %vm1503, 0, %v1638
      %1640 = vst [vmem:[#allocation4 + $0x30] sm:$0x1] %v1639
      %v1641 = vld [vmem:[#allocation4 + $0x3c] sm:$0x1]
      %v1642 = vsel %vm1503, 0, %v1641
      %1643 = vst [vmem:[#allocation4 + $0x3c] sm:$0x1] %v1642
      %v1644 = vld [vmem:[#allocation4 + $0x48] sm:$0x1]
      %v1645 = vsel %vm1503, 0, %v1644
      %1646 = vst [vmem:[#allocation4 + $0x48] sm:$0x1] %v1645
      %v1647 = vld [vmem:[#allocation4 + $0x54] sm:$0x1]
      %v1648 = vsel %vm1503, 0, %v1647
      %1649 = vst [vmem:[#allocation4 + $0x54] sm:$0x1] %v1648
      %v1650 = vld [vmem:[#allocation4 + $0x60] sm:$0x1]
      %v1651 = vsel %vm1503, 0, %v1650
      %1652 = vst [vmem:[#allocation4 + $0x60] sm:$0x1] %v1651
      %v1653 = vld [vmem:[#allocation4 + $0x6c] sm:$0x1]
      %v1654 = vsel %vm1503, 0, %v1653
      %1655 = vst [vmem:[#allocation4 + $0x6c] sm:$0x1] %v1654
      %v1656 = vld [vmem:[#allocation4 + $0x78] sm:$0x1]
      %v1657 = vsel %vm1503, 0, %v1656
      %1658 = vst [vmem:[#allocation4 + $0x78] sm:$0x1] %v1657
      %v1659 = vld [vmem:[#allocation4 + $0x84] sm:$0x1]
      %v1660 = vsel %vm1503, 0, %v1659
      %1661 = vst [vmem:[#allocation4 + $0x84] sm:$0x1] %v1660
      %v1662 = vld [vmem:[#allocation4 + $0x90] sm:$0x1]
      %v1663 = vsel %vm1503, 0, %v1662
      %1664 = vst [vmem:[#allocation4 + $0x90] sm:$0x1] %v1663
      %v1665 = vld [vmem:[#allocation4 + $0x9c] sm:$0x1]
      %v1666 = vsel %vm1503, 0, %v1665
      %1667 = vst [vmem:[#allocation4 + $0x9c] sm:$0x1] %v1666
      %v1668 = vld [vmem:[#allocation4 + $0xa8] sm:$0x1]
      %v1669 = vsel %vm1503, 0, %v1668
      %1670 = vst [vmem:[#allocation4 + $0xa8] sm:$0x1] %v1669
      %v1671 = vld [vmem:[#allocation4 + $0xb4] sm:$0x1]
      %v1672 = vsel %vm1503, 0, %v1671
      %1673 = vst [vmem:[#allocation4 + $0xb4] sm:$0x1] %v1672
      %v1674 = vld [vmem:[#allocation4 + $0xc0] sm:$0x1]
      %v1675 = vsel %vm1503, 0, %v1674
      %1676 = vst [vmem:[#allocation4 + $0xc0] sm:$0x1] %v1675
      %v1677 = vld [vmem:[#allocation4 + $0xcc] sm:$0x1]
      %v1678 = vsel %vm1503, 0, %v1677
      %1679 = vst [vmem:[#allocation4 + $0xcc] sm:$0x1] %v1678
      %vm1680 = vmand %vm1502, %vm1496
      %v1681 = vld [vmem:[#allocation4 + $0x8] sm:$0x1]
      %v1682 = vsel %vm1680, 0, %v1681
      %1683 = vst [vmem:[#allocation4 + $0x8] sm:$0x1] %v1682
      %v1684 = vld [vmem:[#allocation4 + $0x14] sm:$0x1]
      %v1685 = vsel %vm1680, 0, %v1684
      %1686 = vst [vmem:[#allocation4 + $0x14] sm:$0x1] %v1685
      %v1687 = vld [vmem:[#allocation4 + $0x20] sm:$0x1]
      %v1688 = vsel %vm1680, 0, %v1687
      %1689 = vst [vmem:[#allocation4 + $0x20] sm:$0x1] %v1688
      %v1690 = vld [vmem:[#allocation4 + $0x2c] sm:$0x1]
      %v1691 = vsel %vm1680, 0, %v1690
      %1692 = vst [vmem:[#allocation4 + $0x2c] sm:$0x1] %v1691
      %v1693 = vld [vmem:[#allocation4 + $0x38] sm:$0x1]
      %v1694 = vsel %vm1680, 0, %v1693
      %1695 = vst [vmem:[#allocation4 + $0x38] sm:$0x1] %v1694
      %v1696 = vld [vmem:[#allocation4 + $0x44] sm:$0x1]
      %v1697 = vsel %vm1680, 0, %v1696
      %1698 = vst [vmem:[#allocation4 + $0x44] sm:$0x1] %v1697
      %v1699 = vld [vmem:[#allocation4 + $0x50] sm:$0x1]
      %v1700 = vsel %vm1680, 0, %v1699
      %1701 = vst [vmem:[#allocation4 + $0x50] sm:$0x1] %v1700
      %v1702 = vld [vmem:[#allocation4 + $0x5c] sm:$0x1]
      %v1703 = vsel %vm1680, 0, %v1702
      %1704 = vst [vmem:[#allocation4 + $0x5c] sm:$0x1] %v1703
      %v1705 = vld [vmem:[#allocation4 + $0x68] sm:$0x1]
      %v1706 = vsel %vm1680, 0, %v1705
      %1707 = vst [vmem:[#allocation4 + $0x68] sm:$0x1] %v1706
      %v1708 = vld [vmem:[#allocation4 + $0x74] sm:$0x1]
      %v1709 = vsel %vm1680, 0, %v1708
      %1710 = vst [vmem:[#allocation4 + $0x74] sm:$0x1] %v1709
      %v1711 = vld [vmem:[#allocation4 + $0x80] sm:$0x1]
      %v1712 = vsel %vm1680, 0, %v1711
      %1713 = vst [vmem:[#allocation4 + $0x80] sm:$0x1] %v1712
      %v1714 = vld [vmem:[#allocation4 + $0x8c] sm:$0x1]
      %v1715 = vsel %vm1680, 0, %v1714
      %1716 = vst [vmem:[#allocation4 + $0x8c] sm:$0x1] %v1715
      %v1717 = vld [vmem:[#allocation4 + $0x98] sm:$0x1]
      %v1718 = vsel %vm1680, 0, %v1717
      %1719 = vst [vmem:[#allocation4 + $0x98] sm:$0x1] %v1718
      %v1720 = vld [vmem:[#allocation4 + $0xa4] sm:$0x1]
      %v1721 = vsel %vm1680, 0, %v1720
      %1722 = vst [vmem:[#allocation4 + $0xa4] sm:$0x1] %v1721
      %v1723 = vld [vmem:[#allocation4 + $0xb0] sm:$0x1]
      %v1724 = vsel %vm1680, 0, %v1723
      %1725 = vst [vmem:[#allocation4 + $0xb0] sm:$0x1] %v1724
      %v1726 = vld [vmem:[#allocation4 + $0xbc] sm:$0x1]
      %v1727 = vsel %vm1680, 0, %v1726
      %1728 = vst [vmem:[#allocation4 + $0xbc] sm:$0x1] %v1727
      %v1729 = vld [vmem:[#allocation4 + $0xc8] sm:$0x1]
      %v1730 = vsel %vm1680, 0, %v1729
      %1731 = vst [vmem:[#allocation4 + $0xc8] sm:$0x1] %v1730
      %v1732 = vld [vmem:[#allocation4 + $0xd4] sm:$0x1]
      %v1733 = vsel %vm1680, 0, %v1732
      %1734 = vst [vmem:[#allocation4 + $0xd4] sm:$0x1] %v1733
      // Predicated region
      $region193: #{_lambda_.1} parent=35 // pred_check
        %p1735 = pneg %p198
      $region194: #{_lambda_.1} parent=35 // pred_check_branch
        %1737 = sbr.rel (%p1735) target = $region196
      $region195: #{_lambda_.1} parent=35 // pred_region
        %1738 = vst [vmem:[#allocation4] sm:$0xf] 0
        %1739 = vst [vmem:[#allocation4 + $0x4] sm:$0xf] 0
        %1740 = vst [vmem:[#allocation4 + $0x8] sm:$0x1] 0
        %s1741 = scalar_lea.vmem [#allocation4], 204
        %1742 = vst [vmem:[%s1741] sm:$0xf] 0
        %1743 = vst [vmem:[%s1741 + $0x4] sm:$0xf] 0
        %1744 = vst [vmem:[%s1741 + $0x8] sm:$0x1] 0
      $region196: #{_lambda_.1} parent=35 // pred_fallthru
        _
      %v1745 = vld [vmem:[#allocation4] sm:$0xf]
      %v1746 = vld [vmem:[#allocation4 + $0x4] sm:$0xf]
      %v1747 = vld [vmem:[#allocation4 + $0xc] sm:$0xf]
      %v1748 = vld [vmem:[#allocation4 + $0x10] sm:$0xf]
      %v1749 = vld [vmem:[#allocation4 + $0x18] sm:$0xf]
      %v1750 = vld [vmem:[#allocation4 + $0x1c] sm:$0xf]
      %v1751 = vld [vmem:[#allocation4 + $0x24] sm:$0xf]
      %v1752 = vld [vmem:[#allocation4 + $0x28] sm:$0xf]
      %v1753 = vld [vmem:[#allocation4 + $0x30] sm:$0xf]
      %v1754 = vld [vmem:[#allocation4 + $0x34] sm:$0xf]
      %v1755 = vld [vmem:[#allocation4 + $0x3c] sm:$0xf]
      %v1756 = vld [vmem:[#allocation4 + $0x40] sm:$0xf]
      %v1757 = vld [vmem:[#allocation4 + $0x48] sm:$0xf]
      %v1758 = vld [vmem:[#allocation4 + $0x4c] sm:$0xf]
      %v1759 = vld [vmem:[#allocation4 + $0x54] sm:$0xf]
      %v1760 = vld [vmem:[#allocation4 + $0x58] sm:$0xf]
      %v1761 = vld [vmem:[#allocation4 + $0x60] sm:$0xf]
      %v1762 = vld [vmem:[#allocation4 + $0x64] sm:$0xf]
      %v1763 = vld [vmem:[#allocation4 + $0x6c] sm:$0xf]
      %v1764 = vld [vmem:[#allocation4 + $0x70] sm:$0xf]
      %v1765 = vld [vmem:[#allocation4 + $0x78] sm:$0xf]
      %v1766 = vld [vmem:[#allocation4 + $0x7c] sm:$0xf]
      %v1767 = vld [vmem:[#allocation4 + $0x84] sm:$0xf]
      %v1768 = vld [vmem:[#allocation4 + $0x88] sm:$0xf]
      %v1769 = vld [vmem:[#allocation4 + $0x90] sm:$0xf]
      %v1770 = vld [vmem:[#allocation4 + $0x94] sm:$0xf]
      %v1771 = vld [vmem:[#allocation4 + $0x9c] sm:$0xf]
      %v1772 = vld [vmem:[#allocation4 + $0xa0] sm:$0xf]
      %v1773 = vld [vmem:[#allocation4 + $0xa8] sm:$0xf]
      %v1774 = vld [vmem:[#allocation4 + $0xac] sm:$0xf]
      %v1775 = vld [vmem:[#allocation4 + $0xb4] sm:$0xf]
      %v1776 = vld [vmem:[#allocation4 + $0xb8] sm:$0xf]
      %1777 = vst [vmem:[#allocation5] sm:$0xf] %v1745
      %1778 = vst [vmem:[#allocation5 + $0x24] sm:$0xf] %v1746
      %1779 = vst [vmem:[#allocation5 + $0x48] sm:$0xf] %v1747
      %1780 = vst [vmem:[#allocation5 + $0x6c] sm:$0xf] %v1748
      %1781 = vst [vmem:[#allocation5 + $0x90] sm:$0xf] %v1749
      %1782 = vst [vmem:[#allocation5 + $0xb4] sm:$0xf] %v1750
      %1783 = vst [vmem:[#allocation5 + $0xd8] sm:$0xf] %v1751
      %1784 = vst [vmem:[#allocation5 + $0xfc] sm:$0xf] %v1752
      %1785 = vst [vmem:[#allocation5 + $0x120] sm:$0xf] %v1753
      %1786 = vst [vmem:[#allocation5 + $0x144] sm:$0xf] %v1754
      %1787 = vst [vmem:[#allocation5 + $0x168] sm:$0xf] %v1755
      %1788 = vst [vmem:[#allocation5 + $0x18c] sm:$0xf] %v1756
      %1789 = vst [vmem:[#allocation5 + $0x1b0] sm:$0xf] %v1757
      %1790 = vst [vmem:[#allocation5 + $0x1d4] sm:$0xf] %v1758
      %1791 = vst [vmem:[#allocation5 + $0x1f8] sm:$0xf] %v1759
      %1792 = vst [vmem:[#allocation5 + $0x21c] sm:$0xf] %v1760
      %1793 = vst [vmem:[#allocation5 + $0x240] sm:$0xf] %v1761
      %1794 = vst [vmem:[#allocation5 + $0x264] sm:$0xf] %v1762
      %1795 = vst [vmem:[#allocation5 + $0x288] sm:$0xf] %v1763
      %1796 = vst [vmem:[#allocation5 + $0x2ac] sm:$0xf] %v1764
      %1797 = vst [vmem:[#allocation5 + $0x2d0] sm:$0xf] %v1765
      %1798 = vst [vmem:[#allocation5 + $0x2f4] sm:$0xf] %v1766
      %1799 = vst [vmem:[#allocation5 + $0x318] sm:$0xf] %v1767
      %1800 = vst [vmem:[#allocation5 + $0x33c] sm:$0xf] %v1768
      %1801 = vst [vmem:[#allocation5 + $0x360] sm:$0xf] %v1769
      %1802 = vst [vmem:[#allocation5 + $0x384] sm:$0xf] %v1770
      %1803 = vst [vmem:[#allocation5 + $0x3a8] sm:$0xf] %v1771
      %1804 = vst [vmem:[#allocation5 + $0x3cc] sm:$0xf] %v1772
      %1805 = vst [vmem:[#allocation5 + $0x3f0] sm:$0xf] %v1773
      %1806 = vst [vmem:[#allocation5 + $0x414] sm:$0xf] %v1774
      %1807 = vst [vmem:[#allocation5 + $0x438] sm:$0xf] %v1775
      %1808 = vst [vmem:[#allocation5 + $0x45c] sm:$0xf] %v1776
      %v1809 = vld [vmem:[#allocation4] sm:$0xf]
      %v1810 = vld [vmem:[#allocation4 + $0x4] sm:$0xf]
      %v1811 = vld [vmem:[#allocation4 + $0x8] sm:$0x1]
      %v1812 = vld [vmem:[#allocation4 + $0xc] sm:$0xf]
      %v1813 = vld [vmem:[#allocation4 + $0x10] sm:$0xf]
      %v1814 = vld [vmem:[#allocation4 + $0x14] sm:$0x1]
      %v1815 = vld [vmem:[#allocation4 + $0x18] sm:$0xf]
      %v1816 = vld [vmem:[#allocation4 + $0x1c] sm:$0xf]
      %v1817 = vld [vmem:[#allocation4 + $0x20] sm:$0x1]
      %v1818 = vld [vmem:[#allocation4 + $0x24] sm:$0xf]
      %v1819 = vld [vmem:[#allocation4 + $0x28] sm:$0xf]
      %v1820 = vld [vmem:[#allocation4 + $0x2c] sm:$0x1]
      %v1821 = vld [vmem:[#allocation4 + $0x30] sm:$0xf]
      %v1822 = vld [vmem:[#allocation4 + $0x34] sm:$0xf]
      %v1823 = vld [vmem:[#allocation4 + $0x38] sm:$0x1]
      %v1824 = vld [vmem:[#allocation4 + $0x3c] sm:$0xf]
      %v1825 = vld [vmem:[#allocation4 + $0x40] sm:$0xf]
      %v1826 = vld [vmem:[#allocation4 + $0x44] sm:$0x1]
      %v1827 = vld [vmem:[#allocation4 + $0x48] sm:$0xf]
      %v1828 = vld [vmem:[#allocation4 + $0x4c] sm:$0xf]
      %v1829 = vld [vmem:[#allocation4 + $0x50] sm:$0x1]
      %v1830 = vld [vmem:[#allocation4 + $0x54] sm:$0xf]
      %v1831 = vld [vmem:[#allocation4 + $0x58] sm:$0xf]
      %v1832 = vld [vmem:[#allocation4 + $0x5c] sm:$0x1]
      %v1833 = vld [vmem:[#allocation4 + $0x60] sm:$0xf]
      %v1834 = vld [vmem:[#allocation4 + $0x64] sm:$0xf]
      %v1835 = vld [vmem:[#allocation4 + $0x68] sm:$0x1]
      %v1836 = vld [vmem:[#allocation4 + $0x6c] sm:$0xf]
      %v1837 = vld [vmem:[#allocation4 + $0x70] sm:$0xf]
      %v1838 = vld [vmem:[#allocation4 + $0x74] sm:$0x1]
      %v1839 = vld [vmem:[#allocation4 + $0x78] sm:$0xf]
      %v1840 = vld [vmem:[#allocation4 + $0x7c] sm:$0xf]
      %v1841 = vld [vmem:[#allocation4 + $0x80] sm:$0x1]
      %v1842 = vld [vmem:[#allocation4 + $0x84] sm:$0xf]
      %v1843 = vld [vmem:[#allocation4 + $0x88] sm:$0xf]
      %v1844 = vld [vmem:[#allocation4 + $0x8c] sm:$0x1]
      %v1845 = vld [vmem:[#allocation4 + $0x90] sm:$0xf]
      %v1846 = vld [vmem:[#allocation4 + $0x94] sm:$0xf]
      %v1847 = vld [vmem:[#allocation4 + $0x98] sm:$0x1]
      %v1848 = vld [vmem:[#allocation4 + $0x9c] sm:$0xf]
      %v1849 = vld [vmem:[#allocation4 + $0xa0] sm:$0xf]
      %v1850 = vld [vmem:[#allocation4 + $0xa4] sm:$0x1]
      %v1851 = vld [vmem:[#allocation4 + $0xa8] sm:$0xf]
      %v1852 = vld [vmem:[#allocation4 + $0xac] sm:$0xf]
      %v1853 = vld [vmem:[#allocation4 + $0xb0] sm:$0x1]
      %v1854 = vld [vmem:[#allocation4 + $0xb4] sm:$0xf]
      %v1855 = vld [vmem:[#allocation4 + $0xb8] sm:$0xf]
      %v1856 = vld [vmem:[#allocation4 + $0xbc] sm:$0x1]
      %vm1857 = vsmask.f32 3328
      %vm1858 = vsmask.f32 7440
      %vm1859 = vmor %vm1857, %vm1858
      %v1861 = vshrl.u32 %v1809, 16
      %v1863 = vrot.slane %v1861, 4
      %v1864 = vshll.u32 %v1809, 16
      %v1866 = vrot.slane %v1864, 5
      %v1867 = vor.u32 %v1863, %v1866
      %v1868 = vrot.slane %v1867, 4
      %v1870 = vshll.u32 %v1810, 16
      %v1872 = vrot.slane %v1870, 5
      %v1873 = vsel %vm1859, %v1868, %v1872
      %v1874 = vshrl.u32 %v1810, 16
      %v1876 = vrot.slane %v1874, 4
      %v1877 = vor.u32 %v1876, %v1872
      %v1878 = vrot.slane %v1877, 4
      %v1880 = vshll.u32 %v1811, 16
      %v1882 = vrot.slane %v1880, 5
      %v1883 = vsel %vm1859, %v1878, %v1882
      %v1885 = vshrl.u32 %v1812, 16
      %v1887 = vrot.slane %v1885, 4
      %v1888 = vshll.u32 %v1812, 16
      %v1890 = vrot.slane %v1888, 5
      %v1891 = vor.u32 %v1887, %v1890
      %v1892 = vrot.slane %v1891, 4
      %v1894 = vshll.u32 %v1813, 16
      %v1896 = vrot.slane %v1894, 5
      %v1897 = vsel %vm1859, %v1892, %v1896
      %v1898 = vshrl.u32 %v1813, 16
      %v1900 = vrot.slane %v1898, 4
      %v1901 = vor.u32 %v1900, %v1896
      %v1902 = vrot.slane %v1901, 4
      %v1904 = vshll.u32 %v1814, 16
      %v1906 = vrot.slane %v1904, 5
      %v1907 = vsel %vm1859, %v1902, %v1906
      %v1909 = vshrl.u32 %v1815, 16
      %v1911 = vrot.slane %v1909, 4
      %v1912 = vshll.u32 %v1815, 16
      %v1914 = vrot.slane %v1912, 5
      %v1915 = vor.u32 %v1911, %v1914
      %v1916 = vrot.slane %v1915, 4
      %v1918 = vshll.u32 %v1816, 16
      %v1920 = vrot.slane %v1918, 5
      %v1921 = vsel %vm1859, %v1916, %v1920
      %v1922 = vshrl.u32 %v1816, 16
      %v1924 = vrot.slane %v1922, 4
      %v1925 = vor.u32 %v1924, %v1920
      %v1926 = vrot.slane %v1925, 4
      %v1928 = vshll.u32 %v1817, 16
      %v1930 = vrot.slane %v1928, 5
      %v1931 = vsel %vm1859, %v1926, %v1930
      %v1933 = vshrl.u32 %v1818, 16
      %v1935 = vrot.slane %v1933, 4
      %v1936 = vshll.u32 %v1818, 16
      %v1938 = vrot.slane %v1936, 5
      %v1939 = vor.u32 %v1935, %v1938
      %v1940 = vrot.slane %v1939, 4
      %v1942 = vshll.u32 %v1819, 16
      %v1944 = vrot.slane %v1942, 5
      %v1945 = vsel %vm1859, %v1940, %v1944
      %v1946 = vshrl.u32 %v1819, 16
      %v1948 = vrot.slane %v1946, 4
      %v1949 = vor.u32 %v1948, %v1944
      %v1950 = vrot.slane %v1949, 4
      %v1952 = vshll.u32 %v1820, 16
      %v1954 = vrot.slane %v1952, 5
      %v1955 = vsel %vm1859, %v1950, %v1954
      %v1957 = vshrl.u32 %v1821, 16
      %v1959 = vrot.slane %v1957, 4
      %v1960 = vshll.u32 %v1821, 16
      %v1962 = vrot.slane %v1960, 5
      %v1963 = vor.u32 %v1959, %v1962
      %v1964 = vrot.slane %v1963, 4
      %v1966 = vshll.u32 %v1822, 16
      %v1968 = vrot.slane %v1966, 5
      %v1969 = vsel %vm1859, %v1964, %v1968
      %v1970 = vshrl.u32 %v1822, 16
      %v1972 = vrot.slane %v1970, 4
      %v1973 = vor.u32 %v1972, %v1968
      %v1974 = vrot.slane %v1973, 4
      %v1976 = vshll.u32 %v1823, 16
      %v1978 = vrot.slane %v1976, 5
      %v1979 = vsel %vm1859, %v1974, %v1978
      %v1981 = vshrl.u32 %v1824, 16
      %v1983 = vrot.slane %v1981, 4
      %v1984 = vshll.u32 %v1824, 16
      %v1986 = vrot.slane %v1984, 5
      %v1987 = vor.u32 %v1983, %v1986
      %v1988 = vrot.slane %v1987, 4
      %v1990 = vshll.u32 %v1825, 16
      %v1992 = vrot.slane %v1990, 5
      %v1993 = vsel %vm1859, %v1988, %v1992
      %v1994 = vshrl.u32 %v1825, 16
      %v1996 = vrot.slane %v1994, 4
      %v1997 = vor.u32 %v1996, %v1992
      %v1998 = vrot.slane %v1997, 4
      %v2000 = vshll.u32 %v1826, 16
      %v2002 = vrot.slane %v2000, 5
      %v2003 = vsel %vm1859, %v1998, %v2002
      %v2005 = vshrl.u32 %v1827, 16
      %v2007 = vrot.slane %v2005, 4
      %v2008 = vshll.u32 %v1827, 16
      %v2010 = vrot.slane %v2008, 5
      %v2011 = vor.u32 %v2007, %v2010
      %v2012 = vrot.slane %v2011, 4
      %v2014 = vshll.u32 %v1828, 16
      %v2016 = vrot.slane %v2014, 5
      %v2017 = vsel %vm1859, %v2012, %v2016
      %v2018 = vshrl.u32 %v1828, 16
      %v2020 = vrot.slane %v2018, 4
      %v2021 = vor.u32 %v2020, %v2016
      %v2022 = vrot.slane %v2021, 4
      %v2024 = vshll.u32 %v1829, 16
      %v2026 = vrot.slane %v2024, 5
      %v2027 = vsel %vm1859, %v2022, %v2026
      %v2029 = vshrl.u32 %v1830, 16
      %v2031 = vrot.slane %v2029, 4
      %v2032 = vshll.u32 %v1830, 16
      %v2034 = vrot.slane %v2032, 5
      %v2035 = vor.u32 %v2031, %v2034
      %v2036 = vrot.slane %v2035, 4
      %v2038 = vshll.u32 %v1831, 16
      %v2040 = vrot.slane %v2038, 5
      %v2041 = vsel %vm1859, %v2036, %v2040
      %v2042 = vshrl.u32 %v1831, 16
      %v2044 = vrot.slane %v2042, 4
      %v2045 = vor.u32 %v2044, %v2040
      %v2046 = vrot.slane %v2045, 4
      %v2048 = vshll.u32 %v1832, 16
      %v2050 = vrot.slane %v2048, 5
      %v2051 = vsel %vm1859, %v2046, %v2050
      %v2053 = vshrl.u32 %v1833, 16
      %v2055 = vrot.slane %v2053, 4
      %v2056 = vshll.u32 %v1833, 16
      %v2058 = vrot.slane %v2056, 5
      %v2059 = vor.u32 %v2055, %v2058
      %v2060 = vrot.slane %v2059, 4
      %v2062 = vshll.u32 %v1834, 16
      %v2064 = vrot.slane %v2062, 5
      %v2065 = vsel %vm1859, %v2060, %v2064
      %v2066 = vshrl.u32 %v1834, 16
      %v2068 = vrot.slane %v2066, 4
      %v2069 = vor.u32 %v2068, %v2064
      %v2070 = vrot.slane %v2069, 4
      %v2072 = vshll.u32 %v1835, 16
      %v2074 = vrot.slane %v2072, 5
      %v2075 = vsel %vm1859, %v2070, %v2074
      %v2077 = vshrl.u32 %v1836, 16
      %v2079 = vrot.slane %v2077, 4
      %v2080 = vshll.u32 %v1836, 16
      %v2082 = vrot.slane %v2080, 5
      %v2083 = vor.u32 %v2079, %v2082
      %v2084 = vrot.slane %v2083, 4
      %v2086 = vshll.u32 %v1837, 16
      %v2088 = vrot.slane %v2086, 5
      %v2089 = vsel %vm1859, %v2084, %v2088
      %v2090 = vshrl.u32 %v1837, 16
      %v2092 = vrot.slane %v2090, 4
      %v2093 = vor.u32 %v2092, %v2088
      %v2094 = vrot.slane %v2093, 4
      %v2096 = vshll.u32 %v1838, 16
      %v2098 = vrot.slane %v2096, 5
      %v2099 = vsel %vm1859, %v2094, %v2098
      %v2101 = vshrl.u32 %v1839, 16
      %v2103 = vrot.slane %v2101, 4
      %v2104 = vshll.u32 %v1839, 16
      %v2106 = vrot.slane %v2104, 5
      %v2107 = vor.u32 %v2103, %v2106
      %v2108 = vrot.slane %v2107, 4
      %v2110 = vshll.u32 %v1840, 16
      %v2112 = vrot.slane %v2110, 5
      %v2113 = vsel %vm1859, %v2108, %v2112
      %v2114 = vshrl.u32 %v1840, 16
      %v2116 = vrot.slane %v2114, 4
      %v2117 = vor.u32 %v2116, %v2112
      %v2118 = vrot.slane %v2117, 4
      %v2120 = vshll.u32 %v1841, 16
      %v2122 = vrot.slane %v2120, 5
      %v2123 = vsel %vm1859, %v2118, %v2122
      %v2125 = vshrl.u32 %v1842, 16
      %v2127 = vrot.slane %v2125, 4
      %v2128 = vshll.u32 %v1842, 16
      %v2130 = vrot.slane %v2128, 5
      %v2131 = vor.u32 %v2127, %v2130
      %v2132 = vrot.slane %v2131, 4
      %v2134 = vshll.u32 %v1843, 16
      %v2136 = vrot.slane %v2134, 5
      %v2137 = vsel %vm1859, %v2132, %v2136
      %v2138 = vshrl.u32 %v1843, 16
      %v2140 = vrot.slane %v2138, 4
      %v2141 = vor.u32 %v2140, %v2136
      %v2142 = vrot.slane %v2141, 4
      %v2144 = vshll.u32 %v1844, 16
      %v2146 = vrot.slane %v2144, 5
      %v2147 = vsel %vm1859, %v2142, %v2146
      %v2149 = vshrl.u32 %v1845, 16
      %v2151 = vrot.slane %v2149, 4
      %v2152 = vshll.u32 %v1845, 16
      %v2154 = vrot.slane %v2152, 5
      %v2155 = vor.u32 %v2151, %v2154
      %v2156 = vrot.slane %v2155, 4
      %v2158 = vshll.u32 %v1846, 16
      %v2160 = vrot.slane %v2158, 5
      %v2161 = vsel %vm1859, %v2156, %v2160
      %v2162 = vshrl.u32 %v1846, 16
      %v2164 = vrot.slane %v2162, 4
      %v2165 = vor.u32 %v2164, %v2160
      %v2166 = vrot.slane %v2165, 4
      %v2168 = vshll.u32 %v1847, 16
      %v2170 = vrot.slane %v2168, 5
      %v2171 = vsel %vm1859, %v2166, %v2170
      %v2173 = vshrl.u32 %v1848, 16
      %v2175 = vrot.slane %v2173, 4
      %v2176 = vshll.u32 %v1848, 16
      %v2178 = vrot.slane %v2176, 5
      %v2179 = vor.u32 %v2175, %v2178
      %v2180 = vrot.slane %v2179, 4
      %v2182 = vshll.u32 %v1849, 16
      %v2184 = vrot.slane %v2182, 5
      %v2185 = vsel %vm1859, %v2180, %v2184
      %v2186 = vshrl.u32 %v1849, 16
      %v2188 = vrot.slane %v2186, 4
      %v2189 = vor.u32 %v2188, %v2184
      %v2190 = vrot.slane %v2189, 4
      %v2192 = vshll.u32 %v1850, 16
      %v2194 = vrot.slane %v2192, 5
      %v2195 = vsel %vm1859, %v2190, %v2194
      %v2197 = vshrl.u32 %v1851, 16
      %v2199 = vrot.slane %v2197, 4
      %v2200 = vshll.u32 %v1851, 16
      %v2202 = vrot.slane %v2200, 5
      %v2203 = vor.u32 %v2199, %v2202
      %v2204 = vrot.slane %v2203, 4
      %v2206 = vshll.u32 %v1852, 16
      %v2208 = vrot.slane %v2206, 5
      %v2209 = vsel %vm1859, %v2204, %v2208
      %v2210 = vshrl.u32 %v1852, 16
      %v2212 = vrot.slane %v2210, 4
      %v2213 = vor.u32 %v2212, %v2208
      %v2214 = vrot.slane %v2213, 4
      %v2216 = vshll.u32 %v1853, 16
      %v2218 = vrot.slane %v2216, 5
      %v2219 = vsel %vm1859, %v2214, %v2218
      %v2221 = vshrl.u32 %v1854, 16
      %v2223 = vrot.slane %v2221, 4
      %v2224 = vshll.u32 %v1854, 16
      %v2226 = vrot.slane %v2224, 5
      %v2227 = vor.u32 %v2223, %v2226
      %v2228 = vrot.slane %v2227, 4
      %v2230 = vshll.u32 %v1855, 16
      %v2232 = vrot.slane %v2230, 5
      %v2233 = vsel %vm1859, %v2228, %v2232
      %v2234 = vshrl.u32 %v1855, 16
      %v2236 = vrot.slane %v2234, 4
      %v2237 = vor.u32 %v2236, %v2232
      %v2238 = vrot.slane %v2237, 4
      %v2240 = vshll.u32 %v1856, 16
      %v2242 = vrot.slane %v2240, 5
      %v2243 = vsel %vm1859, %v2238, %v2242
      %2276 = vst [vmem:[#allocation5 + $0x4] sm:$0xf] %v1873
      %2277 = vst [vmem:[#allocation5 + $0x28] sm:$0xf] %v1883
      %2278 = vst [vmem:[#allocation5 + $0x4c] sm:$0xf] %v1897
      %2279 = vst [vmem:[#allocation5 + $0x70] sm:$0xf] %v1907
      %2280 = vst [vmem:[#allocation5 + $0x94] sm:$0xf] %v1921
      %2281 = vst [vmem:[#allocation5 + $0xb8] sm:$0xf] %v1931
      %2282 = vst [vmem:[#allocation5 + $0xdc] sm:$0xf] %v1945
      %2283 = vst [vmem:[#allocation5 + $0x100] sm:$0xf] %v1955
      %2284 = vst [vmem:[#allocation5 + $0x124] sm:$0xf] %v1969
      %2285 = vst [vmem:[#allocation5 + $0x148] sm:$0xf] %v1979
      %2286 = vst [vmem:[#allocation5 + $0x16c] sm:$0xf] %v1993
      %2287 = vst [vmem:[#allocation5 + $0x190] sm:$0xf] %v2003
      %2288 = vst [vmem:[#allocation5 + $0x1b4] sm:$0xf] %v2017
      %2289 = vst [vmem:[#allocation5 + $0x1d8] sm:$0xf] %v2027
      %2290 = vst [vmem:[#allocation5 + $0x1fc] sm:$0xf] %v2041
      %2291 = vst [vmem:[#allocation5 + $0x220] sm:$0xf] %v2051
      %2292 = vst [vmem:[#allocation5 + $0x244] sm:$0xf] %v2065
      %2293 = vst [vmem:[#allocation5 + $0x268] sm:$0xf] %v2075
      %2294 = vst [vmem:[#allocation5 + $0x28c] sm:$0xf] %v2089
      %2295 = vst [vmem:[#allocation5 + $0x2b0] sm:$0xf] %v2099
      %2296 = vst [vmem:[#allocation5 + $0x2d4] sm:$0xf] %v2113
      %2297 = vst [vmem:[#allocation5 + $0x2f8] sm:$0xf] %v2123
      %2298 = vst [vmem:[#allocation5 + $0x31c] sm:$0xf] %v2137
      %2299 = vst [vmem:[#allocation5 + $0x340] sm:$0xf] %v2147
      %2300 = vst [vmem:[#allocation5 + $0x364] sm:$0xf] %v2161
      %2301 = vst [vmem:[#allocation5 + $0x388] sm:$0xf] %v2171
      %2302 = vst [vmem:[#allocation5 + $0x3ac] sm:$0xf] %v2185
      %2303 = vst [vmem:[#allocation5 + $0x3d0] sm:$0xf] %v2195
      %2304 = vst [vmem:[#allocation5 + $0x3f4] sm:$0xf] %v2209
      %2305 = vst [vmem:[#allocation5 + $0x418] sm:$0xf] %v2219
      %2306 = vst [vmem:[#allocation5 + $0x43c] sm:$0xf] %v2233
      %2307 = vst [vmem:[#allocation5 + $0x460] sm:$0xf] %v2243
      %v2308 = vld [vmem:[#allocation4] sm:$0xe]
      %v2309 = vld [vmem:[#allocation4 + $0x4] sm:$0xf]
      %v2310 = vld [vmem:[#allocation4 + $0x8] sm:$0x1]
      %v2311 = vld [vmem:[#allocation4 + $0xc] sm:$0xe]
      %v2312 = vld [vmem:[#allocation4 + $0x10] sm:$0xf]
      %v2313 = vld [vmem:[#allocation4 + $0x14] sm:$0x1]
      %v2314 = vld [vmem:[#allocation4 + $0x18] sm:$0xe]
      %v2315 = vld [vmem:[#allocation4 + $0x1c] sm:$0xf]
      %v2316 = vld [vmem:[#allocation4 + $0x20] sm:$0x1]
      %v2317 = vld [vmem:[#allocation4 + $0x24] sm:$0xe]
      %v2318 = vld [vmem:[#allocation4 + $0x28] sm:$0xf]
      %v2319 = vld [vmem:[#allocation4 + $0x2c] sm:$0x1]
      %v2320 = vld [vmem:[#allocation4 + $0x30] sm:$0xe]
      %v2321 = vld [vmem:[#allocation4 + $0x34] sm:$0xf]
      %v2322 = vld [vmem:[#allocation4 + $0x38] sm:$0x1]
      %v2323 = vld [vmem:[#allocation4 + $0x3c] sm:$0xe]
      %v2324 = vld [vmem:[#allocation4 + $0x40] sm:$0xf]
      %v2325 = vld [vmem:[#allocation4 + $0x44] sm:$0x1]
      %v2326 = vld [vmem:[#allocation4 + $0x48] sm:$0xe]
      %v2327 = vld [vmem:[#allocation4 + $0x4c] sm:$0xf]
      %v2328 = vld [vmem:[#allocation4 + $0x50] sm:$0x1]
      %v2329 = vld [vmem:[#allocation4 + $0x54] sm:$0xe]
      %v2330 = vld [vmem:[#allocation4 + $0x58] sm:$0xf]
      %v2331 = vld [vmem:[#allocation4 + $0x5c] sm:$0x1]
      %v2332 = vld [vmem:[#allocation4 + $0x60] sm:$0xe]
      %v2333 = vld [vmem:[#allocation4 + $0x64] sm:$0xf]
      %v2334 = vld [vmem:[#allocation4 + $0x68] sm:$0x1]
      %v2335 = vld [vmem:[#allocation4 + $0x6c] sm:$0xe]
      %v2336 = vld [vmem:[#allocation4 + $0x70] sm:$0xf]
      %v2337 = vld [vmem:[#allocation4 + $0x74] sm:$0x1]
      %v2338 = vld [vmem:[#allocation4 + $0x78] sm:$0xe]
      %v2339 = vld [vmem:[#allocation4 + $0x7c] sm:$0xf]
      %v2340 = vld [vmem:[#allocation4 + $0x80] sm:$0x1]
      %v2341 = vld [vmem:[#allocation4 + $0x84] sm:$0xe]
      %v2342 = vld [vmem:[#allocation4 + $0x88] sm:$0xf]
      %v2343 = vld [vmem:[#allocation4 + $0x8c] sm:$0x1]
      %v2344 = vld [vmem:[#allocation4 + $0x90] sm:$0xe]
      %v2345 = vld [vmem:[#allocation4 + $0x94] sm:$0xf]
      %v2346 = vld [vmem:[#allocation4 + $0x98] sm:$0x1]
      %v2347 = vld [vmem:[#allocation4 + $0x9c] sm:$0xe]
      %v2348 = vld [vmem:[#allocation4 + $0xa0] sm:$0xf]
      %v2349 = vld [vmem:[#allocation4 + $0xa4] sm:$0x1]
      %v2350 = vld [vmem:[#allocation4 + $0xa8] sm:$0xe]
      %v2351 = vld [vmem:[#allocation4 + $0xac] sm:$0xf]
      %v2352 = vld [vmem:[#allocation4 + $0xb0] sm:$0x1]
      %v2353 = vld [vmem:[#allocation4 + $0xb4] sm:$0xe]
      %v2354 = vld [vmem:[#allocation4 + $0xb8] sm:$0xf]
      %v2355 = vld [vmem:[#allocation4 + $0xbc] sm:$0x1]
      %vm2404 = vcmask 1042432
      %vm2405 = vcmask 1046532
      %vm2406 = vmor %vm2404, %vm2405
      %v2407 = vrot.slane %v2308, 5
      %v2408 = vrot.slane %v2407, 4
      %v2409 = vrot.slane %v2309, 5
      %v2410 = vsel %vm2406, %v2408, %v2409
      %v2411 = vrot.slane %v2409, 4
      %v2412 = vrot.slane %v2310, 5
      %v2413 = vsel %vm2406, %v2411, %v2412
      %v2414 = vrot.slane %v2311, 5
      %v2415 = vrot.slane %v2414, 4
      %v2416 = vrot.slane %v2312, 5
      %v2417 = vsel %vm2406, %v2415, %v2416
      %v2418 = vrot.slane %v2416, 4
      %v2419 = vrot.slane %v2313, 5
      %v2420 = vsel %vm2406, %v2418, %v2419
      %v2421 = vrot.slane %v2314, 5
      %v2422 = vrot.slane %v2421, 4
      %v2423 = vrot.slane %v2315, 5
      %v2424 = vsel %vm2406, %v2422, %v2423
      %v2425 = vrot.slane %v2423, 4
      %v2426 = vrot.slane %v2316, 5
      %v2427 = vsel %vm2406, %v2425, %v2426
      %v2428 = vrot.slane %v2317, 5
      %v2429 = vrot.slane %v2428, 4
      %v2430 = vrot.slane %v2318, 5
      %v2431 = vsel %vm2406, %v2429, %v2430
      %v2432 = vrot.slane %v2430, 4
      %v2433 = vrot.slane %v2319, 5
      %v2434 = vsel %vm2406, %v2432, %v2433
      %v2435 = vrot.slane %v2320, 5
      %v2436 = vrot.slane %v2435, 4
      %v2437 = vrot.slane %v2321, 5
      %v2438 = vsel %vm2406, %v2436, %v2437
      %v2439 = vrot.slane %v2437, 4
      %v2440 = vrot.slane %v2322, 5
      %v2441 = vsel %vm2406, %v2439, %v2440
      %v2442 = vrot.slane %v2323, 5
      %v2443 = vrot.slane %v2442, 4
      %v2444 = vrot.slane %v2324, 5
      %v2445 = vsel %vm2406, %v2443, %v2444
      %v2446 = vrot.slane %v2444, 4
      %v2447 = vrot.slane %v2325, 5
      %v2448 = vsel %vm2406, %v2446, %v2447
      %v2449 = vrot.slane %v2326, 5
      %v2450 = vrot.slane %v2449, 4
      %v2451 = vrot.slane %v2327, 5
      %v2452 = vsel %vm2406, %v2450, %v2451
      %v2453 = vrot.slane %v2451, 4
      %v2454 = vrot.slane %v2328, 5
      %v2455 = vsel %vm2406, %v2453, %v2454
      %v2456 = vrot.slane %v2329, 5
      %v2457 = vrot.slane %v2456, 4
      %v2458 = vrot.slane %v2330, 5
      %v2459 = vsel %vm2406, %v2457, %v2458
      %v2460 = vrot.slane %v2458, 4
      %v2461 = vrot.slane %v2331, 5
      %v2462 = vsel %vm2406, %v2460, %v2461
      %v2463 = vrot.slane %v2332, 5
      %v2464 = vrot.slane %v2463, 4
      %v2465 = vrot.slane %v2333, 5
      %v2466 = vsel %vm2406, %v2464, %v2465
      %v2467 = vrot.slane %v2465, 4
      %v2468 = vrot.slane %v2334, 5
      %v2469 = vsel %vm2406, %v2467, %v2468
      %v2470 = vrot.slane %v2335, 5
      %v2471 = vrot.slane %v2470, 4
      %v2472 = vrot.slane %v2336, 5
      %v2473 = vsel %vm2406, %v2471, %v2472
      %v2474 = vrot.slane %v2472, 4
      %v2475 = vrot.slane %v2337, 5
      %v2476 = vsel %vm2406, %v2474, %v2475
      %v2477 = vrot.slane %v2338, 5
      %v2478 = vrot.slane %v2477, 4
      %v2479 = vrot.slane %v2339, 5
      %v2480 = vsel %vm2406, %v2478, %v2479
      %v2481 = vrot.slane %v2479, 4
      %v2482 = vrot.slane %v2340, 5
      %v2483 = vsel %vm2406, %v2481, %v2482
      %v2484 = vrot.slane %v2341, 5
      %v2485 = vrot.slane %v2484, 4
      %v2486 = vrot.slane %v2342, 5
      %v2487 = vsel %vm2406, %v2485, %v2486
      %v2488 = vrot.slane %v2486, 4
      %v2489 = vrot.slane %v2343, 5
      %v2490 = vsel %vm2406, %v2488, %v2489
      %v2491 = vrot.slane %v2344, 5
      %v2492 = vrot.slane %v2491, 4
      %v2493 = vrot.slane %v2345, 5
      %v2494 = vsel %vm2406, %v2492, %v2493
      %v2495 = vrot.slane %v2493, 4
      %v2496 = vrot.slane %v2346, 5
      %v2497 = vsel %vm2406, %v2495, %v2496
      %v2498 = vrot.slane %v2347, 5
      %v2499 = vrot.slane %v2498, 4
      %v2500 = vrot.slane %v2348, 5
      %v2501 = vsel %vm2406, %v2499, %v2500
      %v2502 = vrot.slane %v2500, 4
      %v2503 = vrot.slane %v2349, 5
      %v2504 = vsel %vm2406, %v2502, %v2503
      %v2505 = vrot.slane %v2350, 5
      %v2506 = vrot.slane %v2505, 4
      %v2507 = vrot.slane %v2351, 5
      %v2508 = vsel %vm2406, %v2506, %v2507
      %v2509 = vrot.slane %v2507, 4
      %v2510 = vrot.slane %v2352, 5
      %v2511 = vsel %vm2406, %v2509, %v2510
      %v2512 = vrot.slane %v2353, 5
      %v2513 = vrot.slane %v2512, 4
      %v2514 = vrot.slane %v2354, 5
      %v2515 = vsel %vm2406, %v2513, %v2514
      %v2516 = vrot.slane %v2514, 4
      %v2517 = vrot.slane %v2355, 5
      %v2518 = vsel %vm2406, %v2516, %v2517
      %2551 = vst [vmem:[#allocation5 + $0x8] sm:$0xf] %v2410
      %2552 = vst [vmem:[#allocation5 + $0x2c] sm:$0xf] %v2413
      %2553 = vst [vmem:[#allocation5 + $0x50] sm:$0xf] %v2417
      %2554 = vst [vmem:[#allocation5 + $0x74] sm:$0xf] %v2420
      %2555 = vst [vmem:[#allocation5 + $0x98] sm:$0xf] %v2424
      %2556 = vst [vmem:[#allocation5 + $0xbc] sm:$0xf] %v2427
      %2557 = vst [vmem:[#allocation5 + $0xe0] sm:$0xf] %v2431
      %2558 = vst [vmem:[#allocation5 + $0x104] sm:$0xf] %v2434
      %2559 = vst [vmem:[#allocation5 + $0x128] sm:$0xf] %v2438
      %2560 = vst [vmem:[#allocation5 + $0x14c] sm:$0xf] %v2441
      %2561 = vst [vmem:[#allocation5 + $0x170] sm:$0xf] %v2445
      %2562 = vst [vmem:[#allocation5 + $0x194] sm:$0xf] %v2448
      %2563 = vst [vmem:[#allocation5 + $0x1b8] sm:$0xf] %v2452
      %2564 = vst [vmem:[#allocation5 + $0x1dc] sm:$0xf] %v2455
      %2565 = vst [vmem:[#allocation5 + $0x200] sm:$0xf] %v2459
      %2566 = vst [vmem:[#allocation5 + $0x224] sm:$0xf] %v2462
      %2567 = vst [vmem:[#allocation5 + $0x248] sm:$0xf] %v2466
      %2568 = vst [vmem:[#allocation5 + $0x26c] sm:$0xf] %v2469
      %2569 = vst [vmem:[#allocation5 + $0x290] sm:$0xf] %v2473
      %2570 = vst [vmem:[#allocation5 + $0x2b4] sm:$0xf] %v2476
      %2571 = vst [vmem:[#allocation5 + $0x2d8] sm:$0xf] %v2480
      %2572 = vst [vmem:[#allocation5 + $0x2fc] sm:$0xf] %v2483
      %2573 = vst [vmem:[#allocation5 + $0x320] sm:$0xf] %v2487
      %2574 = vst [vmem:[#allocation5 + $0x344] sm:$0xf] %v2490
      %2575 = vst [vmem:[#allocation5 + $0x368] sm:$0xf] %v2494
      %2576 = vst [vmem:[#allocation5 + $0x38c] sm:$0xf] %v2497
      %2577 = vst [vmem:[#allocation5 + $0x3b0] sm:$0xf] %v2501
      %2578 = vst [vmem:[#allocation5 + $0x3d4] sm:$0xf] %v2504
      %2579 = vst [vmem:[#allocation5 + $0x3f8] sm:$0xf] %v2508
      %2580 = vst [vmem:[#allocation5 + $0x41c] sm:$0xf] %v2511
      %2581 = vst [vmem:[#allocation5 + $0x440] sm:$0xf] %v2515
      %2582 = vst [vmem:[#allocation5 + $0x464] sm:$0xf] %v2518
      %s2583 = scalar_lea.vmem [#allocation4], 12
      %v2584 = vld [vmem:[%s2583] sm:$0xf]
      %v2585 = vld [vmem:[%s2583 + $0x4] sm:$0xf]
      %v2586 = vld [vmem:[%s2583 + $0xc] sm:$0xf]
      %v2587 = vld [vmem:[%s2583 + $0x10] sm:$0xf]
      %v2588 = vld [vmem:[%s2583 + $0x18] sm:$0xf]
      %v2589 = vld [vmem:[%s2583 + $0x1c] sm:$0xf]
      %v2590 = vld [vmem:[%s2583 + $0x24] sm:$0xf]
      %v2591 = vld [vmem:[%s2583 + $0x28] sm:$0xf]
      %v2592 = vld [vmem:[%s2583 + $0x30] sm:$0xf]
      %v2593 = vld [vmem:[%s2583 + $0x34] sm:$0xf]
      %v2594 = vld [vmem:[%s2583 + $0x3c] sm:$0xf]
      %v2595 = vld [vmem:[%s2583 + $0x40] sm:$0xf]
      %v2596 = vld [vmem:[%s2583 + $0x48] sm:$0xf]
      %v2597 = vld [vmem:[%s2583 + $0x4c] sm:$0xf]
      %v2598 = vld [vmem:[%s2583 + $0x54] sm:$0xf]
      %v2599 = vld [vmem:[%s2583 + $0x58] sm:$0xf]
      %v2600 = vld [vmem:[%s2583 + $0x60] sm:$0xf]
      %v2601 = vld [vmem:[%s2583 + $0x64] sm:$0xf]
      %v2602 = vld [vmem:[%s2583 + $0x6c] sm:$0xf]
      %v2603 = vld [vmem:[%s2583 + $0x70] sm:$0xf]
      %v2604 = vld [vmem:[%s2583 + $0x78] sm:$0xf]
      %v2605 = vld [vmem:[%s2583 + $0x7c] sm:$0xf]
      %v2606 = vld [vmem:[%s2583 + $0x84] sm:$0xf]
      %v2607 = vld [vmem:[%s2583 + $0x88] sm:$0xf]
      %v2608 = vld [vmem:[%s2583 + $0x90] sm:$0xf]
      %v2609 = vld [vmem:[%s2583 + $0x94] sm:$0xf]
      %v2610 = vld [vmem:[%s2583 + $0x9c] sm:$0xf]
      %v2611 = vld [vmem:[%s2583 + $0xa0] sm:$0xf]
      %v2612 = vld [vmem:[%s2583 + $0xa8] sm:$0xf]
      %v2613 = vld [vmem:[%s2583 + $0xac] sm:$0xf]
      %v2614 = vld [vmem:[%s2583 + $0xb4] sm:$0xf]
      %v2615 = vld [vmem:[%s2583 + $0xb8] sm:$0xf]
      %2616 = vst [vmem:[#allocation5 + $0xc] sm:$0xf] %v2584
      %2617 = vst [vmem:[#allocation5 + $0x30] sm:$0xf] %v2585
      %2618 = vst [vmem:[#allocation5 + $0x54] sm:$0xf] %v2586
      %2619 = vst [vmem:[#allocation5 + $0x78] sm:$0xf] %v2587
      %2620 = vst [vmem:[#allocation5 + $0x9c] sm:$0xf] %v2588
      %2621 = vst [vmem:[#allocation5 + $0xc0] sm:$0xf] %v2589
      %2622 = vst [vmem:[#allocation5 + $0xe4] sm:$0xf] %v2590
      %2623 = vst [vmem:[#allocation5 + $0x108] sm:$0xf] %v2591
      %2624 = vst [vmem:[#allocation5 + $0x12c] sm:$0xf] %v2592
      %2625 = vst [vmem:[#allocation5 + $0x150] sm:$0xf] %v2593
      %2626 = vst [vmem:[#allocation5 + $0x174] sm:$0xf] %v2594
      %2627 = vst [vmem:[#allocation5 + $0x198] sm:$0xf] %v2595
      %2628 = vst [vmem:[#allocation5 + $0x1bc] sm:$0xf] %v2596
      %2629 = vst [vmem:[#allocation5 + $0x1e0] sm:$0xf] %v2597
      %2630 = vst [vmem:[#allocation5 + $0x204] sm:$0xf] %v2598
      %2631 = vst [vmem:[#allocation5 + $0x228] sm:$0xf] %v2599
      %2632 = vst [vmem:[#allocation5 + $0x24c] sm:$0xf] %v2600
      %2633 = vst [vmem:[#allocation5 + $0x270] sm:$0xf] %v2601
      %2634 = vst [vmem:[#allocation5 + $0x294] sm:$0xf] %v2602
      %2635 = vst [vmem:[#allocation5 + $0x2b8] sm:$0xf] %v2603
      %2636 = vst [vmem:[#allocation5 + $0x2dc] sm:$0xf] %v2604
      %2637 = vst [vmem:[#allocation5 + $0x300] sm:$0xf] %v2605
      %2638 = vst [vmem:[#allocation5 + $0x324] sm:$0xf] %v2606
      %2639 = vst [vmem:[#allocation5 + $0x348] sm:$0xf] %v2607
      %2640 = vst [vmem:[#allocation5 + $0x36c] sm:$0xf] %v2608
      %2641 = vst [vmem:[#allocation5 + $0x390] sm:$0xf] %v2609
      %2642 = vst [vmem:[#allocation5 + $0x3b4] sm:$0xf] %v2610
      %2643 = vst [vmem:[#allocation5 + $0x3d8] sm:$0xf] %v2611
      %2644 = vst [vmem:[#allocation5 + $0x3fc] sm:$0xf] %v2612
      %2645 = vst [vmem:[#allocation5 + $0x420] sm:$0xf] %v2613
      %2646 = vst [vmem:[#allocation5 + $0x444] sm:$0xf] %v2614
      %2647 = vst [vmem:[#allocation5 + $0x468] sm:$0xf] %v2615
      %v2648 = vld [vmem:[%s2583] sm:$0xf]
      %v2649 = vld [vmem:[%s2583 + $0x4] sm:$0xf]
      %v2650 = vld [vmem:[%s2583 + $0x8] sm:$0x1]
      %v2651 = vld [vmem:[%s2583 + $0xc] sm:$0xf]
      %v2652 = vld [vmem:[%s2583 + $0x10] sm:$0xf]
      %v2653 = vld [vmem:[%s2583 + $0x14] sm:$0x1]
      %v2654 = vld [vmem:[%s2583 + $0x18] sm:$0xf]
      %v2655 = vld [vmem:[%s2583 + $0x1c] sm:$0xf]
      %v2656 = vld [vmem:[%s2583 + $0x20] sm:$0x1]
      %v2657 = vld [vmem:[%s2583 + $0x24] sm:$0xf]
      %v2658 = vld [vmem:[%s2583 + $0x28] sm:$0xf]
      %v2659 = vld [vmem:[%s2583 + $0x2c] sm:$0x1]
      %v2660 = vld [vmem:[%s2583 + $0x30] sm:$0xf]
      %v2661 = vld [vmem:[%s2583 + $0x34] sm:$0xf]
      %v2662 = vld [vmem:[%s2583 + $0x38] sm:$0x1]
      %v2663 = vld [vmem:[%s2583 + $0x3c] sm:$0xf]
      %v2664 = vld [vmem:[%s2583 + $0x40] sm:$0xf]
      %v2665 = vld [vmem:[%s2583 + $0x44] sm:$0x1]
      %v2666 = vld [vmem:[%s2583 + $0x48] sm:$0xf]
      %v2667 = vld [vmem:[%s2583 + $0x4c] sm:$0xf]
      %v2668 = vld [vmem:[%s2583 + $0x50] sm:$0x1]
      %v2669 = vld [vmem:[%s2583 + $0x54] sm:$0xf]
      %v2670 = vld [vmem:[%s2583 + $0x58] sm:$0xf]
      %v2671 = vld [vmem:[%s2583 + $0x5c] sm:$0x1]
      %v2672 = vld [vmem:[%s2583 + $0x60] sm:$0xf]
      %v2673 = vld [vmem:[%s2583 + $0x64] sm:$0xf]
      %v2674 = vld [vmem:[%s2583 + $0x68] sm:$0x1]
      %v2675 = vld [vmem:[%s2583 + $0x6c] sm:$0xf]
      %v2676 = vld [vmem:[%s2583 + $0x70] sm:$0xf]
      %v2677 = vld [vmem:[%s2583 + $0x74] sm:$0x1]
      %v2678 = vld [vmem:[%s2583 + $0x78] sm:$0xf]
      %v2679 = vld [vmem:[%s2583 + $0x7c] sm:$0xf]
      %v2680 = vld [vmem:[%s2583 + $0x80] sm:$0x1]
      %v2681 = vld [vmem:[%s2583 + $0x84] sm:$0xf]
      %v2682 = vld [vmem:[%s2583 + $0x88] sm:$0xf]
      %v2683 = vld [vmem:[%s2583 + $0x8c] sm:$0x1]
      %v2684 = vld [vmem:[%s2583 + $0x90] sm:$0xf]
      %v2685 = vld [vmem:[%s2583 + $0x94] sm:$0xf]
      %v2686 = vld [vmem:[%s2583 + $0x98] sm:$0x1]
      %v2687 = vld [vmem:[%s2583 + $0x9c] sm:$0xf]
      %v2688 = vld [vmem:[%s2583 + $0xa0] sm:$0xf]
      %v2689 = vld [vmem:[%s2583 + $0xa4] sm:$0x1]
      %v2690 = vld [vmem:[%s2583 + $0xa8] sm:$0xf]
      %v2691 = vld [vmem:[%s2583 + $0xac] sm:$0xf]
      %v2692 = vld [vmem:[%s2583 + $0xb0] sm:$0x1]
      %v2693 = vld [vmem:[%s2583 + $0xb4] sm:$0xf]
      %v2694 = vld [vmem:[%s2583 + $0xb8] sm:$0xf]
      %v2695 = vld [vmem:[%s2583 + $0xbc] sm:$0x1]
      %v2697 = vshrl.u32 %v2648, 16
      %v2699 = vrot.slane %v2697, 4
      %v2700 = vshll.u32 %v2648, 16
      %v2702 = vrot.slane %v2700, 5
      %v2703 = vor.u32 %v2699, %v2702
      %v2704 = vrot.slane %v2703, 4
      %v2706 = vshll.u32 %v2649, 16
      %v2708 = vrot.slane %v2706, 5
      %v2709 = vsel %vm1859, %v2704, %v2708
      %v2710 = vshrl.u32 %v2649, 16
      %v2712 = vrot.slane %v2710, 4
      %v2713 = vor.u32 %v2712, %v2708
      %v2714 = vrot.slane %v2713, 4
      %v2716 = vshll.u32 %v2650, 16
      %v2718 = vrot.slane %v2716, 5
      %v2719 = vsel %vm1859, %v2714, %v2718
      %v2721 = vshrl.u32 %v2651, 16
      %v2723 = vrot.slane %v2721, 4
      %v2724 = vshll.u32 %v2651, 16
      %v2726 = vrot.slane %v2724, 5
      %v2727 = vor.u32 %v2723, %v2726
      %v2728 = vrot.slane %v2727, 4
      %v2730 = vshll.u32 %v2652, 16
      %v2732 = vrot.slane %v2730, 5
      %v2733 = vsel %vm1859, %v2728, %v2732
      %v2734 = vshrl.u32 %v2652, 16
      %v2736 = vrot.slane %v2734, 4
      %v2737 = vor.u32 %v2736, %v2732
      %v2738 = vrot.slane %v2737, 4
      %v2740 = vshll.u32 %v2653, 16
      %v2742 = vrot.slane %v2740, 5
      %v2743 = vsel %vm1859, %v2738, %v2742
      %v2745 = vshrl.u32 %v2654, 16
      %v2747 = vrot.slane %v2745, 4
      %v2748 = vshll.u32 %v2654, 16
      %v2750 = vrot.slane %v2748, 5
      %v2751 = vor.u32 %v2747, %v2750
      %v2752 = vrot.slane %v2751, 4
      %v2754 = vshll.u32 %v2655, 16
      %v2756 = vrot.slane %v2754, 5
      %v2757 = vsel %vm1859, %v2752, %v2756
      %v2758 = vshrl.u32 %v2655, 16
      %v2760 = vrot.slane %v2758, 4
      %v2761 = vor.u32 %v2760, %v2756
      %v2762 = vrot.slane %v2761, 4
      %v2764 = vshll.u32 %v2656, 16
      %v2766 = vrot.slane %v2764, 5
      %v2767 = vsel %vm1859, %v2762, %v2766
      %v2769 = vshrl.u32 %v2657, 16
      %v2771 = vrot.slane %v2769, 4
      %v2772 = vshll.u32 %v2657, 16
      %v2774 = vrot.slane %v2772, 5
      %v2775 = vor.u32 %v2771, %v2774
      %v2776 = vrot.slane %v2775, 4
      %v2778 = vshll.u32 %v2658, 16
      %v2780 = vrot.slane %v2778, 5
      %v2781 = vsel %vm1859, %v2776, %v2780
      %v2782 = vshrl.u32 %v2658, 16
      %v2784 = vrot.slane %v2782, 4
      %v2785 = vor.u32 %v2784, %v2780
      %v2786 = vrot.slane %v2785, 4
      %v2788 = vshll.u32 %v2659, 16
      %v2790 = vrot.slane %v2788, 5
      %v2791 = vsel %vm1859, %v2786, %v2790
      %v2793 = vshrl.u32 %v2660, 16
      %v2795 = vrot.slane %v2793, 4
      %v2796 = vshll.u32 %v2660, 16
      %v2798 = vrot.slane %v2796, 5
      %v2799 = vor.u32 %v2795, %v2798
      %v2800 = vrot.slane %v2799, 4
      %v2802 = vshll.u32 %v2661, 16
      %v2804 = vrot.slane %v2802, 5
      %v2805 = vsel %vm1859, %v2800, %v2804
      %v2806 = vshrl.u32 %v2661, 16
      %v2808 = vrot.slane %v2806, 4
      %v2809 = vor.u32 %v2808, %v2804
      %v2810 = vrot.slane %v2809, 4
      %v2812 = vshll.u32 %v2662, 16
      %v2814 = vrot.slane %v2812, 5
      %v2815 = vsel %vm1859, %v2810, %v2814
      %v2817 = vshrl.u32 %v2663, 16
      %v2819 = vrot.slane %v2817, 4
      %v2820 = vshll.u32 %v2663, 16
      %v2822 = vrot.slane %v2820, 5
      %v2823 = vor.u32 %v2819, %v2822
      %v2824 = vrot.slane %v2823, 4
      %v2826 = vshll.u32 %v2664, 16
      %v2828 = vrot.slane %v2826, 5
      %v2829 = vsel %vm1859, %v2824, %v2828
      %v2830 = vshrl.u32 %v2664, 16
      %v2832 = vrot.slane %v2830, 4
      %v2833 = vor.u32 %v2832, %v2828
      %v2834 = vrot.slane %v2833, 4
      %v2836 = vshll.u32 %v2665, 16
      %v2838 = vrot.slane %v2836, 5
      %v2839 = vsel %vm1859, %v2834, %v2838
      %v2841 = vshrl.u32 %v2666, 16
      %v2843 = vrot.slane %v2841, 4
      %v2844 = vshll.u32 %v2666, 16
      %v2846 = vrot.slane %v2844, 5
      %v2847 = vor.u32 %v2843, %v2846
      %v2848 = vrot.slane %v2847, 4
      %v2850 = vshll.u32 %v2667, 16
      %v2852 = vrot.slane %v2850, 5
      %v2853 = vsel %vm1859, %v2848, %v2852
      %v2854 = vshrl.u32 %v2667, 16
      %v2856 = vrot.slane %v2854, 4
      %v2857 = vor.u32 %v2856, %v2852
      %v2858 = vrot.slane %v2857, 4
      %v2860 = vshll.u32 %v2668, 16
      %v2862 = vrot.slane %v2860, 5
      %v2863 = vsel %vm1859, %v2858, %v2862
      %v2865 = vshrl.u32 %v2669, 16
      %v2867 = vrot.slane %v2865, 4
      %v2868 = vshll.u32 %v2669, 16
      %v2870 = vrot.slane %v2868, 5
      %v2871 = vor.u32 %v2867, %v2870
      %v2872 = vrot.slane %v2871, 4
      %v2874 = vshll.u32 %v2670, 16
      %v2876 = vrot.slane %v2874, 5
      %v2877 = vsel %vm1859, %v2872, %v2876
      %v2878 = vshrl.u32 %v2670, 16
      %v2880 = vrot.slane %v2878, 4
      %v2881 = vor.u32 %v2880, %v2876
      %v2882 = vrot.slane %v2881, 4
      %v2884 = vshll.u32 %v2671, 16
      %v2886 = vrot.slane %v2884, 5
      %v2887 = vsel %vm1859, %v2882, %v2886
      %v2889 = vshrl.u32 %v2672, 16
      %v2891 = vrot.slane %v2889, 4
      %v2892 = vshll.u32 %v2672, 16
      %v2894 = vrot.slane %v2892, 5
      %v2895 = vor.u32 %v2891, %v2894
      %v2896 = vrot.slane %v2895, 4
      %v2898 = vshll.u32 %v2673, 16
      %v2900 = vrot.slane %v2898, 5
      %v2901 = vsel %vm1859, %v2896, %v2900
      %v2902 = vshrl.u32 %v2673, 16
      %v2904 = vrot.slane %v2902, 4
      %v2905 = vor.u32 %v2904, %v2900
      %v2906 = vrot.slane %v2905, 4
      %v2908 = vshll.u32 %v2674, 16
      %v2910 = vrot.slane %v2908, 5
      %v2911 = vsel %vm1859, %v2906, %v2910
      %v2913 = vshrl.u32 %v2675, 16
      %v2915 = vrot.slane %v2913, 4
      %v2916 = vshll.u32 %v2675, 16
      %v2918 = vrot.slane %v2916, 5
      %v2919 = vor.u32 %v2915, %v2918
      %v2920 = vrot.slane %v2919, 4
      %v2922 = vshll.u32 %v2676, 16
      %v2924 = vrot.slane %v2922, 5
      %v2925 = vsel %vm1859, %v2920, %v2924
      %v2926 = vshrl.u32 %v2676, 16
      %v2928 = vrot.slane %v2926, 4
      %v2929 = vor.u32 %v2928, %v2924
      %v2930 = vrot.slane %v2929, 4
      %v2932 = vshll.u32 %v2677, 16
      %v2934 = vrot.slane %v2932, 5
      %v2935 = vsel %vm1859, %v2930, %v2934
      %v2937 = vshrl.u32 %v2678, 16
      %v2939 = vrot.slane %v2937, 4
      %v2940 = vshll.u32 %v2678, 16
      %v2942 = vrot.slane %v2940, 5
      %v2943 = vor.u32 %v2939, %v2942
      %v2944 = vrot.slane %v2943, 4
      %v2946 = vshll.u32 %v2679, 16
      %v2948 = vrot.slane %v2946, 5
      %v2949 = vsel %vm1859, %v2944, %v2948
      %v2950 = vshrl.u32 %v2679, 16
      %v2952 = vrot.slane %v2950, 4
      %v2953 = vor.u32 %v2952, %v2948
      %v2954 = vrot.slane %v2953, 4
      %v2956 = vshll.u32 %v2680, 16
      %v2958 = vrot.slane %v2956, 5
      %v2959 = vsel %vm1859, %v2954, %v2958
      %v2961 = vshrl.u32 %v2681, 16
      %v2963 = vrot.slane %v2961, 4
      %v2964 = vshll.u32 %v2681, 16
      %v2966 = vrot.slane %v2964, 5
      %v2967 = vor.u32 %v2963, %v2966
      %v2968 = vrot.slane %v2967, 4
      %v2970 = vshll.u32 %v2682, 16
      %v2972 = vrot.slane %v2970, 5
      %v2973 = vsel %vm1859, %v2968, %v2972
      %v2974 = vshrl.u32 %v2682, 16
      %v2976 = vrot.slane %v2974, 4
      %v2977 = vor.u32 %v2976, %v2972
      %v2978 = vrot.slane %v2977, 4
      %v2980 = vshll.u32 %v2683, 16
      %v2982 = vrot.slane %v2980, 5
      %v2983 = vsel %vm1859, %v2978, %v2982
      %v2985 = vshrl.u32 %v2684, 16
      %v2987 = vrot.slane %v2985, 4
      %v2988 = vshll.u32 %v2684, 16
      %v2990 = vrot.slane %v2988, 5
      %v2991 = vor.u32 %v2987, %v2990
      %v2992 = vrot.slane %v2991, 4
      %v2994 = vshll.u32 %v2685, 16
      %v2996 = vrot.slane %v2994, 5
      %v2997 = vsel %vm1859, %v2992, %v2996
      %v2998 = vshrl.u32 %v2685, 16
      %v3000 = vrot.slane %v2998, 4
      %v3001 = vor.u32 %v3000, %v2996
      %v3002 = vrot.slane %v3001, 4
      %v3004 = vshll.u32 %v2686, 16
      %v3006 = vrot.slane %v3004, 5
      %v3007 = vsel %vm1859, %v3002, %v3006
      %v3009 = vshrl.u32 %v2687, 16
      %v3011 = vrot.slane %v3009, 4
      %v3012 = vshll.u32 %v2687, 16
      %v3014 = vrot.slane %v3012, 5
      %v3015 = vor.u32 %v3011, %v3014
      %v3016 = vrot.slane %v3015, 4
      %v3018 = vshll.u32 %v2688, 16
      %v3020 = vrot.slane %v3018, 5
      %v3021 = vsel %vm1859, %v3016, %v3020
      %v3022 = vshrl.u32 %v2688, 16
      %v3024 = vrot.slane %v3022, 4
      %v3025 = vor.u32 %v3024, %v3020
      %v3026 = vrot.slane %v3025, 4
      %v3028 = vshll.u32 %v2689, 16
      %v3030 = vrot.slane %v3028, 5
      %v3031 = vsel %vm1859, %v3026, %v3030
      %v3033 = vshrl.u32 %v2690, 16
      %v3035 = vrot.slane %v3033, 4
      %v3036 = vshll.u32 %v2690, 16
      %v3038 = vrot.slane %v3036, 5
      %v3039 = vor.u32 %v3035, %v3038
      %v3040 = vrot.slane %v3039, 4
      %v3042 = vshll.u32 %v2691, 16
      %v3044 = vrot.slane %v3042, 5
      %v3045 = vsel %vm1859, %v3040, %v3044
      %v3046 = vshrl.u32 %v2691, 16
      %v3048 = vrot.slane %v3046, 4
      %v3049 = vor.u32 %v3048, %v3044
      %v3050 = vrot.slane %v3049, 4
      %v3052 = vshll.u32 %v2692, 16
      %v3054 = vrot.slane %v3052, 5
      %v3055 = vsel %vm1859, %v3050, %v3054
      %v3057 = vshrl.u32 %v2693, 16
      %v3059 = vrot.slane %v3057, 4
      %v3060 = vshll.u32 %v2693, 16
      %v3062 = vrot.slane %v3060, 5
      %v3063 = vor.u32 %v3059, %v3062
      %v3064 = vrot.slane %v3063, 4
      %v3066 = vshll.u32 %v2694, 16
      %v3068 = vrot.slane %v3066, 5
      %v3069 = vsel %vm1859, %v3064, %v3068
      %v3070 = vshrl.u32 %v2694, 16
      %v3072 = vrot.slane %v3070, 4
      %v3073 = vor.u32 %v3072, %v3068
      %v3074 = vrot.slane %v3073, 4
      %v3076 = vshll.u32 %v2695, 16
      %v3078 = vrot.slane %v3076, 5
      %v3079 = vsel %vm1859, %v3074, %v3078
      %3112 = vst [vmem:[#allocation5 + $0x10] sm:$0xf] %v2709
      %3113 = vst [vmem:[#allocation5 + $0x34] sm:$0xf] %v2719
      %3114 = vst [vmem:[#allocation5 + $0x58] sm:$0xf] %v2733
      %3115 = vst [vmem:[#allocation5 + $0x7c] sm:$0xf] %v2743
      %3116 = vst [vmem:[#allocation5 + $0xa0] sm:$0xf] %v2757
      %3117 = vst [vmem:[#allocation5 + $0xc4] sm:$0xf] %v2767
      %3118 = vst [vmem:[#allocation5 + $0xe8] sm:$0xf] %v2781
      %3119 = vst [vmem:[#allocation5 + $0x10c] sm:$0xf] %v2791
      %3120 = vst [vmem:[#allocation5 + $0x130] sm:$0xf] %v2805
      %3121 = vst [vmem:[#allocation5 + $0x154] sm:$0xf] %v2815
      %3122 = vst [vmem:[#allocation5 + $0x178] sm:$0xf] %v2829
      %3123 = vst [vmem:[#allocation5 + $0x19c] sm:$0xf] %v2839
      %3124 = vst [vmem:[#allocation5 + $0x1c0] sm:$0xf] %v2853
      %3125 = vst [vmem:[#allocation5 + $0x1e4] sm:$0xf] %v2863
      %3126 = vst [vmem:[#allocation5 + $0x208] sm:$0xf] %v2877
      %3127 = vst [vmem:[#allocation5 + $0x22c] sm:$0xf] %v2887
      %3128 = vst [vmem:[#allocation5 + $0x250] sm:$0xf] %v2901
      %3129 = vst [vmem:[#allocation5 + $0x274] sm:$0xf] %v2911
      %3130 = vst [vmem:[#allocation5 + $0x298] sm:$0xf] %v2925
      %3131 = vst [vmem:[#allocation5 + $0x2bc] sm:$0xf] %v2935
      %3132 = vst [vmem:[#allocation5 + $0x2e0] sm:$0xf] %v2949
      %3133 = vst [vmem:[#allocation5 + $0x304] sm:$0xf] %v2959
      %3134 = vst [vmem:[#allocation5 + $0x328] sm:$0xf] %v2973
      %3135 = vst [vmem:[#allocation5 + $0x34c] sm:$0xf] %v2983
      %3136 = vst [vmem:[#allocation5 + $0x370] sm:$0xf] %v2997
      %3137 = vst [vmem:[#allocation5 + $0x394] sm:$0xf] %v3007
      %3138 = vst [vmem:[#allocation5 + $0x3b8] sm:$0xf] %v3021
      %3139 = vst [vmem:[#allocation5 + $0x3dc] sm:$0xf] %v3031
      %3140 = vst [vmem:[#allocation5 + $0x400] sm:$0xf] %v3045
      %3141 = vst [vmem:[#allocation5 + $0x424] sm:$0xf] %v3055
      %3142 = vst [vmem:[#allocation5 + $0x448] sm:$0xf] %v3069
      %3143 = vst [vmem:[#allocation5 + $0x46c] sm:$0xf] %v3079
      %v3144 = vld [vmem:[%s2583] sm:$0xe]
      %v3145 = vld [vmem:[%s2583 + $0x4] sm:$0xf]
      %v3146 = vld [vmem:[%s2583 + $0x8] sm:$0x1]
      %v3147 = vld [vmem:[%s2583 + $0xc] sm:$0xe]
      %v3148 = vld [vmem:[%s2583 + $0x10] sm:$0xf]
      %v3149 = vld [vmem:[%s2583 + $0x14] sm:$0x1]
      %v3150 = vld [vmem:[%s2583 + $0x18] sm:$0xe]
      %v3151 = vld [vmem:[%s2583 + $0x1c] sm:$0xf]
      %v3152 = vld [vmem:[%s2583 + $0x20] sm:$0x1]
      %v3153 = vld [vmem:[%s2583 + $0x24] sm:$0xe]
      %v3154 = vld [vmem:[%s2583 + $0x28] sm:$0xf]
      %v3155 = vld [vmem:[%s2583 + $0x2c] sm:$0x1]
      %v3156 = vld [vmem:[%s2583 + $0x30] sm:$0xe]
      %v3157 = vld [vmem:[%s2583 + $0x34] sm:$0xf]
      %v3158 = vld [vmem:[%s2583 + $0x38] sm:$0x1]
      %v3159 = vld [vmem:[%s2583 + $0x3c] sm:$0xe]
      %v3160 = vld [vmem:[%s2583 + $0x40] sm:$0xf]
      %v3161 = vld [vmem:[%s2583 + $0x44] sm:$0x1]
      %v3162 = vld [vmem:[%s2583 + $0x48] sm:$0xe]
      %v3163 = vld [vmem:[%s2583 + $0x4c] sm:$0xf]
      %v3164 = vld [vmem:[%s2583 + $0x50] sm:$0x1]
      %v3165 = vld [vmem:[%s2583 + $0x54] sm:$0xe]
      %v3166 = vld [vmem:[%s2583 + $0x58] sm:$0xf]
      %v3167 = vld [vmem:[%s2583 + $0x5c] sm:$0x1]
      %v3168 = vld [vmem:[%s2583 + $0x60] sm:$0xe]
      %v3169 = vld [vmem:[%s2583 + $0x64] sm:$0xf]
      %v3170 = vld [vmem:[%s2583 + $0x68] sm:$0x1]
      %v3171 = vld [vmem:[%s2583 + $0x6c] sm:$0xe]
      %v3172 = vld [vmem:[%s2583 + $0x70] sm:$0xf]
      %v3173 = vld [vmem:[%s2583 + $0x74] sm:$0x1]
      %v3174 = vld [vmem:[%s2583 + $0x78] sm:$0xe]
      %v3175 = vld [vmem:[%s2583 + $0x7c] sm:$0xf]
      %v3176 = vld [vmem:[%s2583 + $0x80] sm:$0x1]
      %v3177 = vld [vmem:[%s2583 + $0x84] sm:$0xe]
      %v3178 = vld [vmem:[%s2583 + $0x88] sm:$0xf]
      %v3179 = vld [vmem:[%s2583 + $0x8c] sm:$0x1]
      %v3180 = vld [vmem:[%s2583 + $0x90] sm:$0xe]
      %v3181 = vld [vmem:[%s2583 + $0x94] sm:$0xf]
      %v3182 = vld [vmem:[%s2583 + $0x98] sm:$0x1]
      %v3183 = vld [vmem:[%s2583 + $0x9c] sm:$0xe]
      %v3184 = vld [vmem:[%s2583 + $0xa0] sm:$0xf]
      %v3185 = vld [vmem:[%s2583 + $0xa4] sm:$0x1]
      %v3186 = vld [vmem:[%s2583 + $0xa8] sm:$0xe]
      %v3187 = vld [vmem:[%s2583 + $0xac] sm:$0xf]
      %v3188 = vld [vmem:[%s2583 + $0xb0] sm:$0x1]
      %v3189 = vld [vmem:[%s2583 + $0xb4] sm:$0xe]
      %v3190 = vld [vmem:[%s2583 + $0xb8] sm:$0xf]
      %v3191 = vld [vmem:[%s2583 + $0xbc] sm:$0x1]
      %v3240 = vrot.slane %v3144, 5
      %v3241 = vrot.slane %v3240, 4
      %v3242 = vrot.slane %v3145, 5
      %v3243 = vsel %vm2406, %v3241, %v3242
      %v3244 = vrot.slane %v3242, 4
      %v3245 = vrot.slane %v3146, 5
      %v3246 = vsel %vm2406, %v3244, %v3245
      %v3247 = vrot.slane %v3147, 5
      %v3248 = vrot.slane %v3247, 4
      %v3249 = vrot.slane %v3148, 5
      %v3250 = vsel %vm2406, %v3248, %v3249
      %v3251 = vrot.slane %v3249, 4
      %v3252 = vrot.slane %v3149, 5
      %v3253 = vsel %vm2406, %v3251, %v3252
      %v3254 = vrot.slane %v3150, 5
      %v3255 = vrot.slane %v3254, 4
      %v3256 = vrot.slane %v3151, 5
      %v3257 = vsel %vm2406, %v3255, %v3256
      %v3258 = vrot.slane %v3256, 4
      %v3259 = vrot.slane %v3152, 5
      %v3260 = vsel %vm2406, %v3258, %v3259
      %v3261 = vrot.slane %v3153, 5
      %v3262 = vrot.slane %v3261, 4
      %v3263 = vrot.slane %v3154, 5
      %v3264 = vsel %vm2406, %v3262, %v3263
      %v3265 = vrot.slane %v3263, 4
      %v3266 = vrot.slane %v3155, 5
      %v3267 = vsel %vm2406, %v3265, %v3266
      %v3268 = vrot.slane %v3156, 5
      %v3269 = vrot.slane %v3268, 4
      %v3270 = vrot.slane %v3157, 5
      %v3271 = vsel %vm2406, %v3269, %v3270
      %v3272 = vrot.slane %v3270, 4
      %v3273 = vrot.slane %v3158, 5
      %v3274 = vsel %vm2406, %v3272, %v3273
      %v3275 = vrot.slane %v3159, 5
      %v3276 = vrot.slane %v3275, 4
      %v3277 = vrot.slane %v3160, 5
      %v3278 = vsel %vm2406, %v3276, %v3277
      %v3279 = vrot.slane %v3277, 4
      %v3280 = vrot.slane %v3161, 5
      %v3281 = vsel %vm2406, %v3279, %v3280
      %v3282 = vrot.slane %v3162, 5
      %v3283 = vrot.slane %v3282, 4
      %v3284 = vrot.slane %v3163, 5
      %v3285 = vsel %vm2406, %v3283, %v3284
      %v3286 = vrot.slane %v3284, 4
      %v3287 = vrot.slane %v3164, 5
      %v3288 = vsel %vm2406, %v3286, %v3287
      %v3289 = vrot.slane %v3165, 5
      %v3290 = vrot.slane %v3289, 4
      %v3291 = vrot.slane %v3166, 5
      %v3292 = vsel %vm2406, %v3290, %v3291
      %v3293 = vrot.slane %v3291, 4
      %v3294 = vrot.slane %v3167, 5
      %v3295 = vsel %vm2406, %v3293, %v3294
      %v3296 = vrot.slane %v3168, 5
      %v3297 = vrot.slane %v3296, 4
      %v3298 = vrot.slane %v3169, 5
      %v3299 = vsel %vm2406, %v3297, %v3298
      %v3300 = vrot.slane %v3298, 4
      %v3301 = vrot.slane %v3170, 5
      %v3302 = vsel %vm2406, %v3300, %v3301
      %v3303 = vrot.slane %v3171, 5
      %v3304 = vrot.slane %v3303, 4
      %v3305 = vrot.slane %v3172, 5
      %v3306 = vsel %vm2406, %v3304, %v3305
      %v3307 = vrot.slane %v3305, 4
      %v3308 = vrot.slane %v3173, 5
      %v3309 = vsel %vm2406, %v3307, %v3308
      %v3310 = vrot.slane %v3174, 5
      %v3311 = vrot.slane %v3310, 4
      %v3312 = vrot.slane %v3175, 5
      %v3313 = vsel %vm2406, %v3311, %v3312
      %v3314 = vrot.slane %v3312, 4
      %v3315 = vrot.slane %v3176, 5
      %v3316 = vsel %vm2406, %v3314, %v3315
      %v3317 = vrot.slane %v3177, 5
      %v3318 = vrot.slane %v3317, 4
      %v3319 = vrot.slane %v3178, 5
      %v3320 = vsel %vm2406, %v3318, %v3319
      %v3321 = vrot.slane %v3319, 4
      %v3322 = vrot.slane %v3179, 5
      %v3323 = vsel %vm2406, %v3321, %v3322
      %v3324 = vrot.slane %v3180, 5
      %v3325 = vrot.slane %v3324, 4
      %v3326 = vrot.slane %v3181, 5
      %v3327 = vsel %vm2406, %v3325, %v3326
      %v3328 = vrot.slane %v3326, 4
      %v3329 = vrot.slane %v3182, 5
      %v3330 = vsel %vm2406, %v3328, %v3329
      %v3331 = vrot.slane %v3183, 5
      %v3332 = vrot.slane %v3331, 4
      %v3333 = vrot.slane %v3184, 5
      %v3334 = vsel %vm2406, %v3332, %v3333
      %v3335 = vrot.slane %v3333, 4
      %v3336 = vrot.slane %v3185, 5
      %v3337 = vsel %vm2406, %v3335, %v3336
      %v3338 = vrot.slane %v3186, 5
      %v3339 = vrot.slane %v3338, 4
      %v3340 = vrot.slane %v3187, 5
      %v3341 = vsel %vm2406, %v3339, %v3340
      %v3342 = vrot.slane %v3340, 4
      %v3343 = vrot.slane %v3188, 5
      %v3344 = vsel %vm2406, %v3342, %v3343
      %v3345 = vrot.slane %v3189, 5
      %v3346 = vrot.slane %v3345, 4
      %v3347 = vrot.slane %v3190, 5
      %v3348 = vsel %vm2406, %v3346, %v3347
      %v3349 = vrot.slane %v3347, 4
      %v3350 = vrot.slane %v3191, 5
      %v3351 = vsel %vm2406, %v3349, %v3350
      %3384 = vst [vmem:[#allocation5 + $0x14] sm:$0xf] %v3243
      %3385 = vst [vmem:[#allocation5 + $0x38] sm:$0xf] %v3246
      %3386 = vst [vmem:[#allocation5 + $0x5c] sm:$0xf] %v3250
      %3387 = vst [vmem:[#allocation5 + $0x80] sm:$0xf] %v3253
      %3388 = vst [vmem:[#allocation5 + $0xa4] sm:$0xf] %v3257
      %3389 = vst [vmem:[#allocation5 + $0xc8] sm:$0xf] %v3260
      %3390 = vst [vmem:[#allocation5 + $0xec] sm:$0xf] %v3264
      %3391 = vst [vmem:[#allocation5 + $0x110] sm:$0xf] %v3267
      %3392 = vst [vmem:[#allocation5 + $0x134] sm:$0xf] %v3271
      %3393 = vst [vmem:[#allocation5 + $0x158] sm:$0xf] %v3274
      %3394 = vst [vmem:[#allocation5 + $0x17c] sm:$0xf] %v3278
      %3395 = vst [vmem:[#allocation5 + $0x1a0] sm:$0xf] %v3281
      %3396 = vst [vmem:[#allocation5 + $0x1c4] sm:$0xf] %v3285
      %3397 = vst [vmem:[#allocation5 + $0x1e8] sm:$0xf] %v3288
      %3398 = vst [vmem:[#allocation5 + $0x20c] sm:$0xf] %v3292
      %3399 = vst [vmem:[#allocation5 + $0x230] sm:$0xf] %v3295
      %3400 = vst [vmem:[#allocation5 + $0x254] sm:$0xf] %v3299
      %3401 = vst [vmem:[#allocation5 + $0x278] sm:$0xf] %v3302
      %3402 = vst [vmem:[#allocation5 + $0x29c] sm:$0xf] %v3306
      %3403 = vst [vmem:[#allocation5 + $0x2c0] sm:$0xf] %v3309
      %3404 = vst [vmem:[#allocation5 + $0x2e4] sm:$0xf] %v3313
      %3405 = vst [vmem:[#allocation5 + $0x308] sm:$0xf] %v3316
      %3406 = vst [vmem:[#allocation5 + $0x32c] sm:$0xf] %v3320
      %3407 = vst [vmem:[#allocation5 + $0x350] sm:$0xf] %v3323
      %3408 = vst [vmem:[#allocation5 + $0x374] sm:$0xf] %v3327
      %3409 = vst [vmem:[#allocation5 + $0x398] sm:$0xf] %v3330
      %3410 = vst [vmem:[#allocation5 + $0x3bc] sm:$0xf] %v3334
      %3411 = vst [vmem:[#allocation5 + $0x3e0] sm:$0xf] %v3337
      %3412 = vst [vmem:[#allocation5 + $0x404] sm:$0xf] %v3341
      %3413 = vst [vmem:[#allocation5 + $0x428] sm:$0xf] %v3344
      %3414 = vst [vmem:[#allocation5 + $0x44c] sm:$0xf] %v3348
      %3415 = vst [vmem:[#allocation5 + $0x470] sm:$0xf] %v3351
      %s3416 = scalar_lea.vmem [#allocation4], 24
      %v3417 = vld [vmem:[%s3416] sm:$0xf]
      %v3418 = vld [vmem:[%s3416 + $0x4] sm:$0xf]
      %v3419 = vld [vmem:[%s3416 + $0xc] sm:$0xf]
      %v3420 = vld [vmem:[%s3416 + $0x10] sm:$0xf]
      %v3421 = vld [vmem:[%s3416 + $0x18] sm:$0xf]
      %v3422 = vld [vmem:[%s3416 + $0x1c] sm:$0xf]
      %v3423 = vld [vmem:[%s3416 + $0x24] sm:$0xf]
      %v3424 = vld [vmem:[%s3416 + $0x28] sm:$0xf]
      %v3425 = vld [vmem:[%s3416 + $0x30] sm:$0xf]
      %v3426 = vld [vmem:[%s3416 + $0x34] sm:$0xf]
      %v3427 = vld [vmem:[%s3416 + $0x3c] sm:$0xf]
      %v3428 = vld [vmem:[%s3416 + $0x40] sm:$0xf]
      %v3429 = vld [vmem:[%s3416 + $0x48] sm:$0xf]
      %v3430 = vld [vmem:[%s3416 + $0x4c] sm:$0xf]
      %v3431 = vld [vmem:[%s3416 + $0x54] sm:$0xf]
      %v3432 = vld [vmem:[%s3416 + $0x58] sm:$0xf]
      %v3433 = vld [vmem:[%s3416 + $0x60] sm:$0xf]
      %v3434 = vld [vmem:[%s3416 + $0x64] sm:$0xf]
      %v3435 = vld [vmem:[%s3416 + $0x6c] sm:$0xf]
      %v3436 = vld [vmem:[%s3416 + $0x70] sm:$0xf]
      %v3437 = vld [vmem:[%s3416 + $0x78] sm:$0xf]
      %v3438 = vld [vmem:[%s3416 + $0x7c] sm:$0xf]
      %v3439 = vld [vmem:[%s3416 + $0x84] sm:$0xf]
      %v3440 = vld [vmem:[%s3416 + $0x88] sm:$0xf]
      %v3441 = vld [vmem:[%s3416 + $0x90] sm:$0xf]
      %v3442 = vld [vmem:[%s3416 + $0x94] sm:$0xf]
      %v3443 = vld [vmem:[%s3416 + $0x9c] sm:$0xf]
      %v3444 = vld [vmem:[%s3416 + $0xa0] sm:$0xf]
      %v3445 = vld [vmem:[%s3416 + $0xa8] sm:$0xf]
      %v3446 = vld [vmem:[%s3416 + $0xac] sm:$0xf]
      %v3447 = vld [vmem:[%s3416 + $0xb4] sm:$0xf]
      %v3448 = vld [vmem:[%s3416 + $0xb8] sm:$0xf]
      %3449 = vst [vmem:[#allocation5 + $0x18] sm:$0xf] %v3417
      %3450 = vst [vmem:[#allocation5 + $0x3c] sm:$0xf] %v3418
      %3451 = vst [vmem:[#allocation5 + $0x60] sm:$0xf] %v3419
      %3452 = vst [vmem:[#allocation5 + $0x84] sm:$0xf] %v3420
      %3453 = vst [vmem:[#allocation5 + $0xa8] sm:$0xf] %v3421
      %3454 = vst [vmem:[#allocation5 + $0xcc] sm:$0xf] %v3422
      %3455 = vst [vmem:[#allocation5 + $0xf0] sm:$0xf] %v3423
      %3456 = vst [vmem:[#allocation5 + $0x114] sm:$0xf] %v3424
      %3457 = vst [vmem:[#allocation5 + $0x138] sm:$0xf] %v3425
      %3458 = vst [vmem:[#allocation5 + $0x15c] sm:$0xf] %v3426
      %3459 = vst [vmem:[#allocation5 + $0x180] sm:$0xf] %v3427
      %3460 = vst [vmem:[#allocation5 + $0x1a4] sm:$0xf] %v3428
      %3461 = vst [vmem:[#allocation5 + $0x1c8] sm:$0xf] %v3429
      %3462 = vst [vmem:[#allocation5 + $0x1ec] sm:$0xf] %v3430
      %3463 = vst [vmem:[#allocation5 + $0x210] sm:$0xf] %v3431
      %3464 = vst [vmem:[#allocation5 + $0x234] sm:$0xf] %v3432
      %3465 = vst [vmem:[#allocation5 + $0x258] sm:$0xf] %v3433
      %3466 = vst [vmem:[#allocation5 + $0x27c] sm:$0xf] %v3434
      %3467 = vst [vmem:[#allocation5 + $0x2a0] sm:$0xf] %v3435
      %3468 = vst [vmem:[#allocation5 + $0x2c4] sm:$0xf] %v3436
      %3469 = vst [vmem:[#allocation5 + $0x2e8] sm:$0xf] %v3437
      %3470 = vst [vmem:[#allocation5 + $0x30c] sm:$0xf] %v3438
      %3471 = vst [vmem:[#allocation5 + $0x330] sm:$0xf] %v3439
      %3472 = vst [vmem:[#allocation5 + $0x354] sm:$0xf] %v3440
      %3473 = vst [vmem:[#allocation5 + $0x378] sm:$0xf] %v3441
      %3474 = vst [vmem:[#allocation5 + $0x39c] sm:$0xf] %v3442
      %3475 = vst [vmem:[#allocation5 + $0x3c0] sm:$0xf] %v3443
      %3476 = vst [vmem:[#allocation5 + $0x3e4] sm:$0xf] %v3444
      %3477 = vst [vmem:[#allocation5 + $0x408] sm:$0xf] %v3445
      %3478 = vst [vmem:[#allocation5 + $0x42c] sm:$0xf] %v3446
      %3479 = vst [vmem:[#allocation5 + $0x450] sm:$0xf] %v3447
      %3480 = vst [vmem:[#allocation5 + $0x474] sm:$0xf] %v3448
      %v3481 = vld [vmem:[%s3416] sm:$0xf]
      %v3482 = vld [vmem:[%s3416 + $0x4] sm:$0xf]
      %v3483 = vld [vmem:[%s3416 + $0x8] sm:$0x1]
      %v3484 = vld [vmem:[%s3416 + $0xc] sm:$0xf]
      %v3485 = vld [vmem:[%s3416 + $0x10] sm:$0xf]
      %v3486 = vld [vmem:[%s3416 + $0x14] sm:$0x1]
      %v3487 = vld [vmem:[%s3416 + $0x18] sm:$0xf]
      %v3488 = vld [vmem:[%s3416 + $0x1c] sm:$0xf]
      %v3489 = vld [vmem:[%s3416 + $0x20] sm:$0x1]
      %v3490 = vld [vmem:[%s3416 + $0x24] sm:$0xf]
      %v3491 = vld [vmem:[%s3416 + $0x28] sm:$0xf]
      %v3492 = vld [vmem:[%s3416 + $0x2c] sm:$0x1]
      %v3493 = vld [vmem:[%s3416 + $0x30] sm:$0xf]
      %v3494 = vld [vmem:[%s3416 + $0x34] sm:$0xf]
      %v3495 = vld [vmem:[%s3416 + $0x38] sm:$0x1]
      %v3496 = vld [vmem:[%s3416 + $0x3c] sm:$0xf]
      %v3497 = vld [vmem:[%s3416 + $0x40] sm:$0xf]
      %v3498 = vld [vmem:[%s3416 + $0x44] sm:$0x1]
      %v3499 = vld [vmem:[%s3416 + $0x48] sm:$0xf]
      %v3500 = vld [vmem:[%s3416 + $0x4c] sm:$0xf]
      %v3501 = vld [vmem:[%s3416 + $0x50] sm:$0x1]
      %v3502 = vld [vmem:[%s3416 + $0x54] sm:$0xf]
      %v3503 = vld [vmem:[%s3416 + $0x58] sm:$0xf]
      %v3504 = vld [vmem:[%s3416 + $0x5c] sm:$0x1]
      %v3505 = vld [vmem:[%s3416 + $0x60] sm:$0xf]
      %v3506 = vld [vmem:[%s3416 + $0x64] sm:$0xf]
      %v3507 = vld [vmem:[%s3416 + $0x68] sm:$0x1]
      %v3508 = vld [vmem:[%s3416 + $0x6c] sm:$0xf]
      %v3509 = vld [vmem:[%s3416 + $0x70] sm:$0xf]
      %v3510 = vld [vmem:[%s3416 + $0x74] sm:$0x1]
      %v3511 = vld [vmem:[%s3416 + $0x78] sm:$0xf]
      %v3512 = vld [vmem:[%s3416 + $0x7c] sm:$0xf]
      %v3513 = vld [vmem:[%s3416 + $0x80] sm:$0x1]
      %v3514 = vld [vmem:[%s3416 + $0x84] sm:$0xf]
      %v3515 = vld [vmem:[%s3416 + $0x88] sm:$0xf]
      %v3516 = vld [vmem:[%s3416 + $0x8c] sm:$0x1]
      %v3517 = vld [vmem:[%s3416 + $0x90] sm:$0xf]
      %v3518 = vld [vmem:[%s3416 + $0x94] sm:$0xf]
      %v3519 = vld [vmem:[%s3416 + $0x98] sm:$0x1]
      %v3520 = vld [vmem:[%s3416 + $0x9c] sm:$0xf]
      %v3521 = vld [vmem:[%s3416 + $0xa0] sm:$0xf]
      %v3522 = vld [vmem:[%s3416 + $0xa4] sm:$0x1]
      %v3523 = vld [vmem:[%s3416 + $0xa8] sm:$0xf]
      %v3524 = vld [vmem:[%s3416 + $0xac] sm:$0xf]
      %v3525 = vld [vmem:[%s3416 + $0xb0] sm:$0x1]
      %v3526 = vld [vmem:[%s3416 + $0xb4] sm:$0xf]
      %v3527 = vld [vmem:[%s3416 + $0xb8] sm:$0xf]
      %v3528 = vld [vmem:[%s3416 + $0xbc] sm:$0x1]
      %v3530 = vshrl.u32 %v3481, 16
      %v3532 = vrot.slane %v3530, 4
      %v3533 = vshll.u32 %v3481, 16
      %v3535 = vrot.slane %v3533, 5
      %v3536 = vor.u32 %v3532, %v3535
      %v3537 = vrot.slane %v3536, 4
      %v3539 = vshll.u32 %v3482, 16
      %v3541 = vrot.slane %v3539, 5
      %v3542 = vsel %vm1859, %v3537, %v3541
      %v3543 = vshrl.u32 %v3482, 16
      %v3545 = vrot.slane %v3543, 4
      %v3546 = vor.u32 %v3545, %v3541
      %v3547 = vrot.slane %v3546, 4
      %v3549 = vshll.u32 %v3483, 16
      %v3551 = vrot.slane %v3549, 5
      %v3552 = vsel %vm1859, %v3547, %v3551
      %v3554 = vshrl.u32 %v3484, 16
      %v3556 = vrot.slane %v3554, 4
      %v3557 = vshll.u32 %v3484, 16
      %v3559 = vrot.slane %v3557, 5
      %v3560 = vor.u32 %v3556, %v3559
      %v3561 = vrot.slane %v3560, 4
      %v3563 = vshll.u32 %v3485, 16
      %v3565 = vrot.slane %v3563, 5
      %v3566 = vsel %vm1859, %v3561, %v3565
      %v3567 = vshrl.u32 %v3485, 16
      %v3569 = vrot.slane %v3567, 4
      %v3570 = vor.u32 %v3569, %v3565
      %v3571 = vrot.slane %v3570, 4
      %v3573 = vshll.u32 %v3486, 16
      %v3575 = vrot.slane %v3573, 5
      %v3576 = vsel %vm1859, %v3571, %v3575
      %v3578 = vshrl.u32 %v3487, 16
      %v3580 = vrot.slane %v3578, 4
      %v3581 = vshll.u32 %v3487, 16
      %v3583 = vrot.slane %v3581, 5
      %v3584 = vor.u32 %v3580, %v3583
      %v3585 = vrot.slane %v3584, 4
      %v3587 = vshll.u32 %v3488, 16
      %v3589 = vrot.slane %v3587, 5
      %v3590 = vsel %vm1859, %v3585, %v3589
      %v3591 = vshrl.u32 %v3488, 16
      %v3593 = vrot.slane %v3591, 4
      %v3594 = vor.u32 %v3593, %v3589
      %v3595 = vrot.slane %v3594, 4
      %v3597 = vshll.u32 %v3489, 16
      %v3599 = vrot.slane %v3597, 5
      %v3600 = vsel %vm1859, %v3595, %v3599
      %v3602 = vshrl.u32 %v3490, 16
      %v3604 = vrot.slane %v3602, 4
      %v3605 = vshll.u32 %v3490, 16
      %v3607 = vrot.slane %v3605, 5
      %v3608 = vor.u32 %v3604, %v3607
      %v3609 = vrot.slane %v3608, 4
      %v3611 = vshll.u32 %v3491, 16
      %v3613 = vrot.slane %v3611, 5
      %v3614 = vsel %vm1859, %v3609, %v3613
      %v3615 = vshrl.u32 %v3491, 16
      %v3617 = vrot.slane %v3615, 4
      %v3618 = vor.u32 %v3617, %v3613
      %v3619 = vrot.slane %v3618, 4
      %v3621 = vshll.u32 %v3492, 16
      %v3623 = vrot.slane %v3621, 5
      %v3624 = vsel %vm1859, %v3619, %v3623
      %v3626 = vshrl.u32 %v3493, 16
      %v3628 = vrot.slane %v3626, 4
      %v3629 = vshll.u32 %v3493, 16
      %v3631 = vrot.slane %v3629, 5
      %v3632 = vor.u32 %v3628, %v3631
      %v3633 = vrot.slane %v3632, 4
      %v3635 = vshll.u32 %v3494, 16
      %v3637 = vrot.slane %v3635, 5
      %v3638 = vsel %vm1859, %v3633, %v3637
      %v3639 = vshrl.u32 %v3494, 16
      %v3641 = vrot.slane %v3639, 4
      %v3642 = vor.u32 %v3641, %v3637
      %v3643 = vrot.slane %v3642, 4
      %v3645 = vshll.u32 %v3495, 16
      %v3647 = vrot.slane %v3645, 5
      %v3648 = vsel %vm1859, %v3643, %v3647
      %v3650 = vshrl.u32 %v3496, 16
      %v3652 = vrot.slane %v3650, 4
      %v3653 = vshll.u32 %v3496, 16
      %v3655 = vrot.slane %v3653, 5
      %v3656 = vor.u32 %v3652, %v3655
      %v3657 = vrot.slane %v3656, 4
      %v3659 = vshll.u32 %v3497, 16
      %v3661 = vrot.slane %v3659, 5
      %v3662 = vsel %vm1859, %v3657, %v3661
      %v3663 = vshrl.u32 %v3497, 16
      %v3665 = vrot.slane %v3663, 4
      %v3666 = vor.u32 %v3665, %v3661
      %v3667 = vrot.slane %v3666, 4
      %v3669 = vshll.u32 %v3498, 16
      %v3671 = vrot.slane %v3669, 5
      %v3672 = vsel %vm1859, %v3667, %v3671
      %v3674 = vshrl.u32 %v3499, 16
      %v3676 = vrot.slane %v3674, 4
      %v3677 = vshll.u32 %v3499, 16
      %v3679 = vrot.slane %v3677, 5
      %v3680 = vor.u32 %v3676, %v3679
      %v3681 = vrot.slane %v3680, 4
      %v3683 = vshll.u32 %v3500, 16
      %v3685 = vrot.slane %v3683, 5
      %v3686 = vsel %vm1859, %v3681, %v3685
      %v3687 = vshrl.u32 %v3500, 16
      %v3689 = vrot.slane %v3687, 4
      %v3690 = vor.u32 %v3689, %v3685
      %v3691 = vrot.slane %v3690, 4
      %v3693 = vshll.u32 %v3501, 16
      %v3695 = vrot.slane %v3693, 5
      %v3696 = vsel %vm1859, %v3691, %v3695
      %v3698 = vshrl.u32 %v3502, 16
      %v3700 = vrot.slane %v3698, 4
      %v3701 = vshll.u32 %v3502, 16
      %v3703 = vrot.slane %v3701, 5
      %v3704 = vor.u32 %v3700, %v3703
      %v3705 = vrot.slane %v3704, 4
      %v3707 = vshll.u32 %v3503, 16
      %v3709 = vrot.slane %v3707, 5
      %v3710 = vsel %vm1859, %v3705, %v3709
      %v3711 = vshrl.u32 %v3503, 16
      %v3713 = vrot.slane %v3711, 4
      %v3714 = vor.u32 %v3713, %v3709
      %v3715 = vrot.slane %v3714, 4
      %v3717 = vshll.u32 %v3504, 16
      %v3719 = vrot.slane %v3717, 5
      %v3720 = vsel %vm1859, %v3715, %v3719
      %v3722 = vshrl.u32 %v3505, 16
      %v3724 = vrot.slane %v3722, 4
      %v3725 = vshll.u32 %v3505, 16
      %v3727 = vrot.slane %v3725, 5
      %v3728 = vor.u32 %v3724, %v3727
      %v3729 = vrot.slane %v3728, 4
      %v3731 = vshll.u32 %v3506, 16
      %v3733 = vrot.slane %v3731, 5
      %v3734 = vsel %vm1859, %v3729, %v3733
      %v3735 = vshrl.u32 %v3506, 16
      %v3737 = vrot.slane %v3735, 4
      %v3738 = vor.u32 %v3737, %v3733
      %v3739 = vrot.slane %v3738, 4
      %v3741 = vshll.u32 %v3507, 16
      %v3743 = vrot.slane %v3741, 5
      %v3744 = vsel %vm1859, %v3739, %v3743
      %v3746 = vshrl.u32 %v3508, 16
      %v3748 = vrot.slane %v3746, 4
      %v3749 = vshll.u32 %v3508, 16
      %v3751 = vrot.slane %v3749, 5
      %v3752 = vor.u32 %v3748, %v3751
      %v3753 = vrot.slane %v3752, 4
      %v3755 = vshll.u32 %v3509, 16
      %v3757 = vrot.slane %v3755, 5
      %v3758 = vsel %vm1859, %v3753, %v3757
      %v3759 = vshrl.u32 %v3509, 16
      %v3761 = vrot.slane %v3759, 4
      %v3762 = vor.u32 %v3761, %v3757
      %v3763 = vrot.slane %v3762, 4
      %v3765 = vshll.u32 %v3510, 16
      %v3767 = vrot.slane %v3765, 5
      %v3768 = vsel %vm1859, %v3763, %v3767
      %v3770 = vshrl.u32 %v3511, 16
      %v3772 = vrot.slane %v3770, 4
      %v3773 = vshll.u32 %v3511, 16
      %v3775 = vrot.slane %v3773, 5
      %v3776 = vor.u32 %v3772, %v3775
      %v3777 = vrot.slane %v3776, 4
      %v3779 = vshll.u32 %v3512, 16
      %v3781 = vrot.slane %v3779, 5
      %v3782 = vsel %vm1859, %v3777, %v3781
      %v3783 = vshrl.u32 %v3512, 16
      %v3785 = vrot.slane %v3783, 4
      %v3786 = vor.u32 %v3785, %v3781
      %v3787 = vrot.slane %v3786, 4
      %v3789 = vshll.u32 %v3513, 16
      %v3791 = vrot.slane %v3789, 5
      %v3792 = vsel %vm1859, %v3787, %v3791
      %v3794 = vshrl.u32 %v3514, 16
      %v3796 = vrot.slane %v3794, 4
      %v3797 = vshll.u32 %v3514, 16
      %v3799 = vrot.slane %v3797, 5
      %v3800 = vor.u32 %v3796, %v3799
      %v3801 = vrot.slane %v3800, 4
      %v3803 = vshll.u32 %v3515, 16
      %v3805 = vrot.slane %v3803, 5
      %v3806 = vsel %vm1859, %v3801, %v3805
      %v3807 = vshrl.u32 %v3515, 16
      %v3809 = vrot.slane %v3807, 4
      %v3810 = vor.u32 %v3809, %v3805
      %v3811 = vrot.slane %v3810, 4
      %v3813 = vshll.u32 %v3516, 16
      %v3815 = vrot.slane %v3813, 5
      %v3816 = vsel %vm1859, %v3811, %v3815
      %v3818 = vshrl.u32 %v3517, 16
      %v3820 = vrot.slane %v3818, 4
      %v3821 = vshll.u32 %v3517, 16
      %v3823 = vrot.slane %v3821, 5
      %v3824 = vor.u32 %v3820, %v3823
      %v3825 = vrot.slane %v3824, 4
      %v3827 = vshll.u32 %v3518, 16
      %v3829 = vrot.slane %v3827, 5
      %v3830 = vsel %vm1859, %v3825, %v3829
      %v3831 = vshrl.u32 %v3518, 16
      %v3833 = vrot.slane %v3831, 4
      %v3834 = vor.u32 %v3833, %v3829
      %v3835 = vrot.slane %v3834, 4
      %v3837 = vshll.u32 %v3519, 16
      %v3839 = vrot.slane %v3837, 5
      %v3840 = vsel %vm1859, %v3835, %v3839
      %v3842 = vshrl.u32 %v3520, 16
      %v3844 = vrot.slane %v3842, 4
      %v3845 = vshll.u32 %v3520, 16
      %v3847 = vrot.slane %v3845, 5
      %v3848 = vor.u32 %v3844, %v3847
      %v3849 = vrot.slane %v3848, 4
      %v3851 = vshll.u32 %v3521, 16
      %v3853 = vrot.slane %v3851, 5
      %v3854 = vsel %vm1859, %v3849, %v3853
      %v3855 = vshrl.u32 %v3521, 16
      %v3857 = vrot.slane %v3855, 4
      %v3858 = vor.u32 %v3857, %v3853
      %v3859 = vrot.slane %v3858, 4
      %v3861 = vshll.u32 %v3522, 16
      %v3863 = vrot.slane %v3861, 5
      %v3864 = vsel %vm1859, %v3859, %v3863
      %v3866 = vshrl.u32 %v3523, 16
      %v3868 = vrot.slane %v3866, 4
      %v3869 = vshll.u32 %v3523, 16
      %v3871 = vrot.slane %v3869, 5
      %v3872 = vor.u32 %v3868, %v3871
      %v3873 = vrot.slane %v3872, 4
      %v3875 = vshll.u32 %v3524, 16
      %v3877 = vrot.slane %v3875, 5
      %v3878 = vsel %vm1859, %v3873, %v3877
      %v3879 = vshrl.u32 %v3524, 16
      %v3881 = vrot.slane %v3879, 4
      %v3882 = vor.u32 %v3881, %v3877
      %v3883 = vrot.slane %v3882, 4
      %v3885 = vshll.u32 %v3525, 16
      %v3887 = vrot.slane %v3885, 5
      %v3888 = vsel %vm1859, %v3883, %v3887
      %v3890 = vshrl.u32 %v3526, 16
      %v3892 = vrot.slane %v3890, 4
      %v3893 = vshll.u32 %v3526, 16
      %v3895 = vrot.slane %v3893, 5
      %v3896 = vor.u32 %v3892, %v3895
      %v3897 = vrot.slane %v3896, 4
      %v3899 = vshll.u32 %v3527, 16
      %v3901 = vrot.slane %v3899, 5
      %v3902 = vsel %vm1859, %v3897, %v3901
      %v3903 = vshrl.u32 %v3527, 16
      %v3905 = vrot.slane %v3903, 4
      %v3906 = vor.u32 %v3905, %v3901
      %v3907 = vrot.slane %v3906, 4
      %v3909 = vshll.u32 %v3528, 16
      %v3911 = vrot.slane %v3909, 5
      %v3912 = vsel %vm1859, %v3907, %v3911
      %3945 = vst [vmem:[#allocation5 + $0x1c] sm:$0xf] %v3542
      %3946 = vst [vmem:[#allocation5 + $0x40] sm:$0xf] %v3552
      %3947 = vst [vmem:[#allocation5 + $0x64] sm:$0xf] %v3566
      %3948 = vst [vmem:[#allocation5 + $0x88] sm:$0xf] %v3576
      %3949 = vst [vmem:[#allocation5 + $0xac] sm:$0xf] %v3590
      %3950 = vst [vmem:[#allocation5 + $0xd0] sm:$0xf] %v3600
      %3951 = vst [vmem:[#allocation5 + $0xf4] sm:$0xf] %v3614
      %3952 = vst [vmem:[#allocation5 + $0x118] sm:$0xf] %v3624
      %3953 = vst [vmem:[#allocation5 + $0x13c] sm:$0xf] %v3638
      %3954 = vst [vmem:[#allocation5 + $0x160] sm:$0xf] %v3648
      %3955 = vst [vmem:[#allocation5 + $0x184] sm:$0xf] %v3662
      %3956 = vst [vmem:[#allocation5 + $0x1a8] sm:$0xf] %v3672
      %3957 = vst [vmem:[#allocation5 + $0x1cc] sm:$0xf] %v3686
      %3958 = vst [vmem:[#allocation5 + $0x1f0] sm:$0xf] %v3696
      %3959 = vst [vmem:[#allocation5 + $0x214] sm:$0xf] %v3710
      %3960 = vst [vmem:[#allocation5 + $0x238] sm:$0xf] %v3720
      %3961 = vst [vmem:[#allocation5 + $0x25c] sm:$0xf] %v3734
      %3962 = vst [vmem:[#allocation5 + $0x280] sm:$0xf] %v3744
      %3963 = vst [vmem:[#allocation5 + $0x2a4] sm:$0xf] %v3758
      %3964 = vst [vmem:[#allocation5 + $0x2c8] sm:$0xf] %v3768
      %3965 = vst [vmem:[#allocation5 + $0x2ec] sm:$0xf] %v3782
      %3966 = vst [vmem:[#allocation5 + $0x310] sm:$0xf] %v3792
      %3967 = vst [vmem:[#allocation5 + $0x334] sm:$0xf] %v3806
      %3968 = vst [vmem:[#allocation5 + $0x358] sm:$0xf] %v3816
      %3969 = vst [vmem:[#allocation5 + $0x37c] sm:$0xf] %v3830
      %3970 = vst [vmem:[#allocation5 + $0x3a0] sm:$0xf] %v3840
      %3971 = vst [vmem:[#allocation5 + $0x3c4] sm:$0xf] %v3854
      %3972 = vst [vmem:[#allocation5 + $0x3e8] sm:$0xf] %v3864
      %3973 = vst [vmem:[#allocation5 + $0x40c] sm:$0xf] %v3878
      %3974 = vst [vmem:[#allocation5 + $0x430] sm:$0xf] %v3888
      %3975 = vst [vmem:[#allocation5 + $0x454] sm:$0xf] %v3902
      %3976 = vst [vmem:[#allocation5 + $0x478] sm:$0xf] %v3912
      %v3977 = vld [vmem:[%s3416] sm:$0xe]
      %v3978 = vld [vmem:[%s3416 + $0x4] sm:$0xf]
      %v3979 = vld [vmem:[%s3416 + $0x8] sm:$0x1]
      %v3980 = vld [vmem:[%s3416 + $0xc] sm:$0xe]
      %v3981 = vld [vmem:[%s3416 + $0x10] sm:$0xf]
      %v3982 = vld [vmem:[%s3416 + $0x14] sm:$0x1]
      %v3983 = vld [vmem:[%s3416 + $0x18] sm:$0xe]
      %v3984 = vld [vmem:[%s3416 + $0x1c] sm:$0xf]
      %v3985 = vld [vmem:[%s3416 + $0x20] sm:$0x1]
      %v3986 = vld [vmem:[%s3416 + $0x24] sm:$0xe]
      %v3987 = vld [vmem:[%s3416 + $0x28] sm:$0xf]
      %v3988 = vld [vmem:[%s3416 + $0x2c] sm:$0x1]
      %v3989 = vld [vmem:[%s3416 + $0x30] sm:$0xe]
      %v3990 = vld [vmem:[%s3416 + $0x34] sm:$0xf]
      %v3991 = vld [vmem:[%s3416 + $0x38] sm:$0x1]
      %v3992 = vld [vmem:[%s3416 + $0x3c] sm:$0xe]
      %v3993 = vld [vmem:[%s3416 + $0x40] sm:$0xf]
      %v3994 = vld [vmem:[%s3416 + $0x44] sm:$0x1]
      %v3995 = vld [vmem:[%s3416 + $0x48] sm:$0xe]
      %v3996 = vld [vmem:[%s3416 + $0x4c] sm:$0xf]
      %v3997 = vld [vmem:[%s3416 + $0x50] sm:$0x1]
      %v3998 = vld [vmem:[%s3416 + $0x54] sm:$0xe]
      %v3999 = vld [vmem:[%s3416 + $0x58] sm:$0xf]
      %v4000 = vld [vmem:[%s3416 + $0x5c] sm:$0x1]
      %v4001 = vld [vmem:[%s3416 + $0x60] sm:$0xe]
      %v4002 = vld [vmem:[%s3416 + $0x64] sm:$0xf]
      %v4003 = vld [vmem:[%s3416 + $0x68] sm:$0x1]
      %v4004 = vld [vmem:[%s3416 + $0x6c] sm:$0xe]
      %v4005 = vld [vmem:[%s3416 + $0x70] sm:$0xf]
      %v4006 = vld [vmem:[%s3416 + $0x74] sm:$0x1]
      %v4007 = vld [vmem:[%s3416 + $0x78] sm:$0xe]
      %v4008 = vld [vmem:[%s3416 + $0x7c] sm:$0xf]
      %v4009 = vld [vmem:[%s3416 + $0x80] sm:$0x1]
      %v4010 = vld [vmem:[%s3416 + $0x84] sm:$0xe]
      %v4011 = vld [vmem:[%s3416 + $0x88] sm:$0xf]
      %v4012 = vld [vmem:[%s3416 + $0x8c] sm:$0x1]
      %v4013 = vld [vmem:[%s3416 + $0x90] sm:$0xe]
      %v4014 = vld [vmem:[%s3416 + $0x94] sm:$0xf]
      %v4015 = vld [vmem:[%s3416 + $0x98] sm:$0x1]
      %v4016 = vld [vmem:[%s3416 + $0x9c] sm:$0xe]
      %v4017 = vld [vmem:[%s3416 + $0xa0] sm:$0xf]
      %v4018 = vld [vmem:[%s3416 + $0xa4] sm:$0x1]
      %v4019 = vld [vmem:[%s3416 + $0xa8] sm:$0xe]
      %v4020 = vld [vmem:[%s3416 + $0xac] sm:$0xf]
      %v4021 = vld [vmem:[%s3416 + $0xb0] sm:$0x1]
      %v4022 = vld [vmem:[%s3416 + $0xb4] sm:$0xe]
      %v4023 = vld [vmem:[%s3416 + $0xb8] sm:$0xf]
      %v4024 = vld [vmem:[%s3416 + $0xbc] sm:$0x1]
      %v4073 = vrot.slane %v3977, 5
      %v4074 = vrot.slane %v4073, 4
      %v4075 = vrot.slane %v3978, 5
      %v4076 = vsel %vm2406, %v4074, %v4075
      %v4077 = vrot.slane %v4075, 4
      %v4078 = vrot.slane %v3979, 5
      %v4079 = vsel %vm2406, %v4077, %v4078
      %v4080 = vrot.slane %v3980, 5
      %v4081 = vrot.slane %v4080, 4
      %v4082 = vrot.slane %v3981, 5
      %v4083 = vsel %vm2406, %v4081, %v4082
      %v4084 = vrot.slane %v4082, 4
      %v4085 = vrot.slane %v3982, 5
      %v4086 = vsel %vm2406, %v4084, %v4085
      %v4087 = vrot.slane %v3983, 5
      %v4088 = vrot.slane %v4087, 4
      %v4089 = vrot.slane %v3984, 5
      %v4090 = vsel %vm2406, %v4088, %v4089
      %v4091 = vrot.slane %v4089, 4
      %v4092 = vrot.slane %v3985, 5
      %v4093 = vsel %vm2406, %v4091, %v4092
      %v4094 = vrot.slane %v3986, 5
      %v4095 = vrot.slane %v4094, 4
      %v4096 = vrot.slane %v3987, 5
      %v4097 = vsel %vm2406, %v4095, %v4096
      %v4098 = vrot.slane %v4096, 4
      %v4099 = vrot.slane %v3988, 5
      %v4100 = vsel %vm2406, %v4098, %v4099
      %v4101 = vrot.slane %v3989, 5
      %v4102 = vrot.slane %v4101, 4
      %v4103 = vrot.slane %v3990, 5
      %v4104 = vsel %vm2406, %v4102, %v4103
      %v4105 = vrot.slane %v4103, 4
      %v4106 = vrot.slane %v3991, 5
      %v4107 = vsel %vm2406, %v4105, %v4106
      %v4108 = vrot.slane %v3992, 5
      %v4109 = vrot.slane %v4108, 4
      %v4110 = vrot.slane %v3993, 5
      %v4111 = vsel %vm2406, %v4109, %v4110
      %v4112 = vrot.slane %v4110, 4
      %v4113 = vrot.slane %v3994, 5
      %v4114 = vsel %vm2406, %v4112, %v4113
      %v4115 = vrot.slane %v3995, 5
      %v4116 = vrot.slane %v4115, 4
      %v4117 = vrot.slane %v3996, 5
      %v4118 = vsel %vm2406, %v4116, %v4117
      %v4119 = vrot.slane %v4117, 4
      %v4120 = vrot.slane %v3997, 5
      %v4121 = vsel %vm2406, %v4119, %v4120
      %v4122 = vrot.slane %v3998, 5
      %v4123 = vrot.slane %v4122, 4
      %v4124 = vrot.slane %v3999, 5
      %v4125 = vsel %vm2406, %v4123, %v4124
      %v4126 = vrot.slane %v4124, 4
      %v4127 = vrot.slane %v4000, 5
      %v4128 = vsel %vm2406, %v4126, %v4127
      %v4129 = vrot.slane %v4001, 5
      %v4130 = vrot.slane %v4129, 4
      %v4131 = vrot.slane %v4002, 5
      %v4132 = vsel %vm2406, %v4130, %v4131
      %v4133 = vrot.slane %v4131, 4
      %v4134 = vrot.slane %v4003, 5
      %v4135 = vsel %vm2406, %v4133, %v4134
      %v4136 = vrot.slane %v4004, 5
      %v4137 = vrot.slane %v4136, 4
      %v4138 = vrot.slane %v4005, 5
      %v4139 = vsel %vm2406, %v4137, %v4138
      %v4140 = vrot.slane %v4138, 4
      %v4141 = vrot.slane %v4006, 5
      %v4142 = vsel %vm2406, %v4140, %v4141
      %v4143 = vrot.slane %v4007, 5
      %v4144 = vrot.slane %v4143, 4
      %v4145 = vrot.slane %v4008, 5
      %v4146 = vsel %vm2406, %v4144, %v4145
      %v4147 = vrot.slane %v4145, 4
      %v4148 = vrot.slane %v4009, 5
      %v4149 = vsel %vm2406, %v4147, %v4148
      %v4150 = vrot.slane %v4010, 5
      %v4151 = vrot.slane %v4150, 4
      %v4152 = vrot.slane %v4011, 5
      %v4153 = vsel %vm2406, %v4151, %v4152
      %v4154 = vrot.slane %v4152, 4
      %v4155 = vrot.slane %v4012, 5
      %v4156 = vsel %vm2406, %v4154, %v4155
      %v4157 = vrot.slane %v4013, 5
      %v4158 = vrot.slane %v4157, 4
      %v4159 = vrot.slane %v4014, 5
      %v4160 = vsel %vm2406, %v4158, %v4159
      %v4161 = vrot.slane %v4159, 4
      %v4162 = vrot.slane %v4015, 5
      %v4163 = vsel %vm2406, %v4161, %v4162
      %v4164 = vrot.slane %v4016, 5
      %v4165 = vrot.slane %v4164, 4
      %v4166 = vrot.slane %v4017, 5
      %v4167 = vsel %vm2406, %v4165, %v4166
      %v4168 = vrot.slane %v4166, 4
      %v4169 = vrot.slane %v4018, 5
      %v4170 = vsel %vm2406, %v4168, %v4169
      %v4171 = vrot.slane %v4019, 5
      %v4172 = vrot.slane %v4171, 4
      %v4173 = vrot.slane %v4020, 5
      %v4174 = vsel %vm2406, %v4172, %v4173
      %v4175 = vrot.slane %v4173, 4
      %v4176 = vrot.slane %v4021, 5
      %v4177 = vsel %vm2406, %v4175, %v4176
      %v4178 = vrot.slane %v4022, 5
      %v4179 = vrot.slane %v4178, 4
      %v4180 = vrot.slane %v4023, 5
      %v4181 = vsel %vm2406, %v4179, %v4180
      %v4182 = vrot.slane %v4180, 4
      %v4183 = vrot.slane %v4024, 5
      %v4184 = vsel %vm2406, %v4182, %v4183
      %4217 = vst [vmem:[#allocation5 + $0x20] sm:$0xf] %v4076
      %4218 = vst [vmem:[#allocation5 + $0x44] sm:$0xf] %v4079
      %4219 = vst [vmem:[#allocation5 + $0x68] sm:$0xf] %v4083
      %4220 = vst [vmem:[#allocation5 + $0x8c] sm:$0xf] %v4086
      %4221 = vst [vmem:[#allocation5 + $0xb0] sm:$0xf] %v4090
      %4222 = vst [vmem:[#allocation5 + $0xd4] sm:$0xf] %v4093
      %4223 = vst [vmem:[#allocation5 + $0xf8] sm:$0xf] %v4097
      %4224 = vst [vmem:[#allocation5 + $0x11c] sm:$0xf] %v4100
      %4225 = vst [vmem:[#allocation5 + $0x140] sm:$0xf] %v4104
      %4226 = vst [vmem:[#allocation5 + $0x164] sm:$0xf] %v4107
      %4227 = vst [vmem:[#allocation5 + $0x188] sm:$0xf] %v4111
      %4228 = vst [vmem:[#allocation5 + $0x1ac] sm:$0xf] %v4114
      %4229 = vst [vmem:[#allocation5 + $0x1d0] sm:$0xf] %v4118
      %4230 = vst [vmem:[#allocation5 + $0x1f4] sm:$0xf] %v4121
      %4231 = vst [vmem:[#allocation5 + $0x218] sm:$0xf] %v4125
      %4232 = vst [vmem:[#allocation5 + $0x23c] sm:$0xf] %v4128
      %4233 = vst [vmem:[#allocation5 + $0x260] sm:$0xf] %v4132
      %4234 = vst [vmem:[#allocation5 + $0x284] sm:$0xf] %v4135
      %4235 = vst [vmem:[#allocation5 + $0x2a8] sm:$0xf] %v4139
      %4236 = vst [vmem:[#allocation5 + $0x2cc] sm:$0xf] %v4142
      %4237 = vst [vmem:[#allocation5 + $0x2f0] sm:$0xf] %v4146
      %4238 = vst [vmem:[#allocation5 + $0x314] sm:$0xf] %v4149
      %4239 = vst [vmem:[#allocation5 + $0x338] sm:$0xf] %v4153
      %4240 = vst [vmem:[#allocation5 + $0x35c] sm:$0xf] %v4156
      %4241 = vst [vmem:[#allocation5 + $0x380] sm:$0xf] %v4160
      %4242 = vst [vmem:[#allocation5 + $0x3a4] sm:$0xf] %v4163
      %4243 = vst [vmem:[#allocation5 + $0x3c8] sm:$0xf] %v4167
      %4244 = vst [vmem:[#allocation5 + $0x3ec] sm:$0xf] %v4170
      %4245 = vst [vmem:[#allocation5 + $0x410] sm:$0xf] %v4174
      %4246 = vst [vmem:[#allocation5 + $0x434] sm:$0xf] %v4177
      %4247 = vst [vmem:[#allocation5 + $0x458] sm:$0xf] %v4181
      %4248 = vst [vmem:[#allocation5 + $0x47c] sm:$0xf] %v4184
      %v4249 = vld [vmem:[#allocation5] sm:$0xff]
      %v4250 = vld [vmem:[#allocation5 + $0x8] sm:$0xff]
      %v4251 = vld [vmem:[#allocation5 + $0x10] sm:$0xff]
      %v4252 = vld [vmem:[#allocation5 + $0x18] sm:$0xff]
      %v4253 = vld [vmem:[#allocation5 + $0x20] sm:$0xf]
      %v4254 = vld [vmem:[#allocation5 + $0x24] sm:$0xff]
      %v4255 = vld [vmem:[#allocation5 + $0x2c] sm:$0xff]
      %v4256 = vld [vmem:[#allocation5 + $0x34] sm:$0xff]
      %v4257 = vld [vmem:[#allocation5 + $0x3c] sm:$0xff]
      %v4258 = vld [vmem:[#allocation5 + $0x44] sm:$0xf]
      %v4259 = vld [vmem:[#allocation5 + $0x48] sm:$0xff]
      %v4260 = vld [vmem:[#allocation5 + $0x50] sm:$0xff]
      %v4261 = vld [vmem:[#allocation5 + $0x58] sm:$0xff]
      %v4262 = vld [vmem:[#allocation5 + $0x60] sm:$0xff]
      %v4263 = vld [vmem:[#allocation5 + $0x68] sm:$0xf]
      %v4264 = vld [vmem:[#allocation5 + $0x6c] sm:$0xff]
      %v4265 = vld [vmem:[#allocation5 + $0x74] sm:$0xff]
      %v4266 = vld [vmem:[#allocation5 + $0x7c] sm:$0xff]
      %v4267 = vld [vmem:[#allocation5 + $0x84] sm:$0xff]
      %v4268 = vld [vmem:[#allocation5 + $0x8c] sm:$0xf]
      %v4269 = vld [vmem:[#allocation5 + $0x90] sm:$0xff]
      %v4270 = vld [vmem:[#allocation5 + $0x98] sm:$0xff]
      %v4271 = vld [vmem:[#allocation5 + $0xa0] sm:$0xff]
      %v4272 = vld [vmem:[#allocation5 + $0xa8] sm:$0xff]
      %v4273 = vld [vmem:[#allocation5 + $0xb0] sm:$0xf]
      %v4274 = vld [vmem:[#allocation5 + $0xb4] sm:$0xff]
      %v4275 = vld [vmem:[#allocation5 + $0xbc] sm:$0xff]
      %v4276 = vld [vmem:[#allocation5 + $0xc4] sm:$0xff]
      %v4277 = vld [vmem:[#allocation5 + $0xcc] sm:$0xff]
      %v4278 = vld [vmem:[#allocation5 + $0xd4] sm:$0xf]
      %v4279 = vld [vmem:[#allocation5 + $0xd8] sm:$0xff]
      %v4280 = vld [vmem:[#allocation5 + $0xe0] sm:$0xff]
      %v4281 = vld [vmem:[#allocation5 + $0xe8] sm:$0xff]
      %v4282 = vld [vmem:[#allocation5 + $0xf0] sm:$0xff]
      %v4283 = vld [vmem:[#allocation5 + $0xf8] sm:$0xf]
      %v4284 = vld [vmem:[#allocation5 + $0xfc] sm:$0xff]
      %v4285 = vld [vmem:[#allocation5 + $0x104] sm:$0xff]
      %v4286 = vld [vmem:[#allocation5 + $0x10c] sm:$0xff]
      %v4287 = vld [vmem:[#allocation5 + $0x114] sm:$0xff]
      %v4288 = vld [vmem:[#allocation5 + $0x11c] sm:$0xf]
      %v4289 = vld [vmem:[#allocation5 + $0x120] sm:$0xff]
      %v4290 = vld [vmem:[#allocation5 + $0x128] sm:$0xff]
      %v4291 = vld [vmem:[#allocation5 + $0x130] sm:$0xff]
      %v4292 = vld [vmem:[#allocation5 + $0x138] sm:$0xff]
      %v4293 = vld [vmem:[#allocation5 + $0x140] sm:$0xf]
      %v4294 = vld [vmem:[#allocation5 + $0x144] sm:$0xff]
      %v4295 = vld [vmem:[#allocation5 + $0x14c] sm:$0xff]
      %v4296 = vld [vmem:[#allocation5 + $0x154] sm:$0xff]
      %v4297 = vld [vmem:[#allocation5 + $0x15c] sm:$0xff]
      %v4298 = vld [vmem:[#allocation5 + $0x164] sm:$0xf]
      %v4299 = vld [vmem:[#allocation5 + $0x168] sm:$0xff]
      %v4300 = vld [vmem:[#allocation5 + $0x170] sm:$0xff]
      %v4301 = vld [vmem:[#allocation5 + $0x178] sm:$0xff]
      %v4302 = vld [vmem:[#allocation5 + $0x180] sm:$0xff]
      %v4303 = vld [vmem:[#allocation5 + $0x188] sm:$0xf]
      %v4304 = vld [vmem:[#allocation5 + $0x18c] sm:$0xff]
      %v4305 = vld [vmem:[#allocation5 + $0x194] sm:$0xff]
      %v4306 = vld [vmem:[#allocation5 + $0x19c] sm:$0xff]
      %v4307 = vld [vmem:[#allocation5 + $0x1a4] sm:$0xff]
      %v4308 = vld [vmem:[#allocation5 + $0x1ac] sm:$0xf]
      %v4309 = vld [vmem:[#allocation5 + $0x1b0] sm:$0xff]
      %v4310 = vld [vmem:[#allocation5 + $0x1b8] sm:$0xff]
      %v4311 = vld [vmem:[#allocation5 + $0x1c0] sm:$0xff]
      %v4312 = vld [vmem:[#allocation5 + $0x1c8] sm:$0xff]
      %v4313 = vld [vmem:[#allocation5 + $0x1d0] sm:$0xf]
      %v4314 = vld [vmem:[#allocation5 + $0x1d4] sm:$0xff]
      %v4315 = vld [vmem:[#allocation5 + $0x1dc] sm:$0xff]
      %v4316 = vld [vmem:[#allocation5 + $0x1e4] sm:$0xff]
      %v4317 = vld [vmem:[#allocation5 + $0x1ec] sm:$0xff]
      %v4318 = vld [vmem:[#allocation5 + $0x1f4] sm:$0xf]
      %v4319 = vld [vmem:[#allocation5 + $0x1f8] sm:$0xff]
      %v4320 = vld [vmem:[#allocation5 + $0x200] sm:$0xff]
      %v4321 = vld [vmem:[#allocation5 + $0x208] sm:$0xff]
      %v4322 = vld [vmem:[#allocation5 + $0x210] sm:$0xff]
      %v4323 = vld [vmem:[#allocation5 + $0x218] sm:$0xf]
      %v4324 = vld [vmem:[#allocation5 + $0x21c] sm:$0xff]
      %v4325 = vld [vmem:[#allocation5 + $0x224] sm:$0xff]
      %v4326 = vld [vmem:[#allocation5 + $0x22c] sm:$0xff]
      %v4327 = vld [vmem:[#allocation5 + $0x234] sm:$0xff]
      %v4328 = vld [vmem:[#allocation5 + $0x23c] sm:$0xf]
      %v4329 = vld [vmem:[#allocation5 + $0x240] sm:$0xff]
      %v4330 = vld [vmem:[#allocation5 + $0x248] sm:$0xff]
      %v4331 = vld [vmem:[#allocation5 + $0x250] sm:$0xff]
      %v4332 = vld [vmem:[#allocation5 + $0x258] sm:$0xff]
      %v4333 = vld [vmem:[#allocation5 + $0x260] sm:$0xf]
      %v4334 = vld [vmem:[#allocation5 + $0x264] sm:$0xff]
      %v4335 = vld [vmem:[#allocation5 + $0x26c] sm:$0xff]
      %v4336 = vld [vmem:[#allocation5 + $0x274] sm:$0xff]
      %v4337 = vld [vmem:[#allocation5 + $0x27c] sm:$0xff]
      %v4338 = vld [vmem:[#allocation5 + $0x284] sm:$0xf]
      %v4339 = vld [vmem:[#allocation5 + $0x288] sm:$0xff]
      %v4340 = vld [vmem:[#allocation5 + $0x290] sm:$0xff]
      %v4341 = vld [vmem:[#allocation5 + $0x298] sm:$0xff]
      %v4342 = vld [vmem:[#allocation5 + $0x2a0] sm:$0xff]
      %v4343 = vld [vmem:[#allocation5 + $0x2a8] sm:$0xf]
      %v4344 = vld [vmem:[#allocation5 + $0x2ac] sm:$0xff]
      %v4345 = vld [vmem:[#allocation5 + $0x2b4] sm:$0xff]
      %v4346 = vld [vmem:[#allocation5 + $0x2bc] sm:$0xff]
      %v4347 = vld [vmem:[#allocation5 + $0x2c4] sm:$0xff]
      %v4348 = vld [vmem:[#allocation5 + $0x2cc] sm:$0xf]
      %v4349 = vld [vmem:[#allocation5 + $0x2d0] sm:$0xff]
      %v4350 = vld [vmem:[#allocation5 + $0x2d8] sm:$0xff]
      %v4351 = vld [vmem:[#allocation5 + $0x2e0] sm:$0xff]
      %v4352 = vld [vmem:[#allocation5 + $0x2e8] sm:$0xff]
      %v4353 = vld [vmem:[#allocation5 + $0x2f0] sm:$0xf]
      %v4354 = vld [vmem:[#allocation5 + $0x2f4] sm:$0xff]
      %v4355 = vld [vmem:[#allocation5 + $0x2fc] sm:$0xff]
      %v4356 = vld [vmem:[#allocation5 + $0x304] sm:$0xff]
      %v4357 = vld [vmem:[#allocation5 + $0x30c] sm:$0xff]
      %v4358 = vld [vmem:[#allocation5 + $0x314] sm:$0xf]
      %v4359 = vld [vmem:[#allocation5 + $0x318] sm:$0xff]
      %v4360 = vld [vmem:[#allocation5 + $0x320] sm:$0xff]
      %v4361 = vld [vmem:[#allocation5 + $0x328] sm:$0xff]
      %v4362 = vld [vmem:[#allocation5 + $0x330] sm:$0xff]
      %v4363 = vld [vmem:[#allocation5 + $0x338] sm:$0xf]
      %v4364 = vld [vmem:[#allocation5 + $0x33c] sm:$0xff]
      %v4365 = vld [vmem:[#allocation5 + $0x344] sm:$0xff]
      %v4366 = vld [vmem:[#allocation5 + $0x34c] sm:$0xff]
      %v4367 = vld [vmem:[#allocation5 + $0x354] sm:$0xff]
      %v4368 = vld [vmem:[#allocation5 + $0x35c] sm:$0xf]
      %v4369 = vld [vmem:[#allocation5 + $0x360] sm:$0xff]
      %v4370 = vld [vmem:[#allocation5 + $0x368] sm:$0xff]
      %v4371 = vld [vmem:[#allocation5 + $0x370] sm:$0xff]
      %v4372 = vld [vmem:[#allocation5 + $0x378] sm:$0xff]
      %v4373 = vld [vmem:[#allocation5 + $0x380] sm:$0xf]
      %v4374 = vld [vmem:[#allocation5 + $0x384] sm:$0xff]
      %v4375 = vld [vmem:[#allocation5 + $0x38c] sm:$0xff]
      %v4376 = vld [vmem:[#allocation5 + $0x394] sm:$0xff]
      %v4377 = vld [vmem:[#allocation5 + $0x39c] sm:$0xff]
      %v4378 = vld [vmem:[#allocation5 + $0x3a4] sm:$0xf]
      %v4379 = vld [vmem:[#allocation5 + $0x3a8] sm:$0xff]
      %v4380 = vld [vmem:[#allocation5 + $0x3b0] sm:$0xff]
      %v4381 = vld [vmem:[#allocation5 + $0x3b8] sm:$0xff]
      %v4382 = vld [vmem:[#allocation5 + $0x3c0] sm:$0xff]
      %v4383 = vld [vmem:[#allocation5 + $0x3c8] sm:$0xf]
      %v4384 = vld [vmem:[#allocation5 + $0x3cc] sm:$0xff]
      %v4385 = vld [vmem:[#allocation5 + $0x3d4] sm:$0xff]
      %v4386 = vld [vmem:[#allocation5 + $0x3dc] sm:$0xff]
      %v4387 = vld [vmem:[#allocation5 + $0x3e4] sm:$0xff]
      %v4388 = vld [vmem:[#allocation5 + $0x3ec] sm:$0xf]
      %v4389 = vld [vmem:[#allocation5 + $0x3f0] sm:$0xff]
      %v4390 = vld [vmem:[#allocation5 + $0x3f8] sm:$0xff]
      %v4391 = vld [vmem:[#allocation5 + $0x400] sm:$0xff]
      %v4392 = vld [vmem:[#allocation5 + $0x408] sm:$0xff]
      %v4393 = vld [vmem:[#allocation5 + $0x410] sm:$0xf]
      %v4394 = vld [vmem:[#allocation5 + $0x414] sm:$0xff]
      %v4395 = vld [vmem:[#allocation5 + $0x41c] sm:$0xff]
      %v4396 = vld [vmem:[#allocation5 + $0x424] sm:$0xff]
      %v4397 = vld [vmem:[#allocation5 + $0x42c] sm:$0xff]
      %v4398 = vld [vmem:[#allocation5 + $0x434] sm:$0xf]
      %v4399 = vld [vmem:[#allocation5 + $0x438] sm:$0xff]
      %v4400 = vld [vmem:[#allocation5 + $0x440] sm:$0xff]
      %v4401 = vld [vmem:[#allocation5 + $0x448] sm:$0xff]
      %v4402 = vld [vmem:[#allocation5 + $0x450] sm:$0xff]
      %v4403 = vld [vmem:[#allocation5 + $0x458] sm:$0xf]
      %v4404 = vld [vmem:[#allocation5 + $0x45c] sm:$0xff]
      %v4405 = vld [vmem:[#allocation5 + $0x464] sm:$0xff]
      %v4406 = vld [vmem:[#allocation5 + $0x46c] sm:$0xff]
      %v4407 = vld [vmem:[#allocation5 + $0x474] sm:$0xff]
      %v4408 = vld [vmem:[#allocation5 + $0x47c] sm:$0xf]
      %v4409 = vld [vmem:[%s3] sm:$0xf]
      %v4410 = vld [vmem:[%s3 + $0x4] sm:$0xf]
      %v4411 = vld [vmem:[%s3 + $0x8] sm:$0xf]
      %v4412 = vld [vmem:[%s3 + $0xc] sm:$0xf]
      %v4413 = vld [vmem:[%s3 + $0x10] sm:$0xf]
      %v4414 = vld [vmem:[%s3 + $0x14] sm:$0xf]
      %v4415 = vld [vmem:[%s3 + $0x18] sm:$0xf]
      %v4416 = vld [vmem:[%s3 + $0x1c] sm:$0xf]
      %v4417 = vld [vmem:[%s3 + $0x20] sm:$0xf]
      %v4418 = vld [vmem:[%s3 + $0x24] sm:$0xf]
      %v4419 = vld [vmem:[%s3 + $0x28] sm:$0xf]
      %v4420 = vld [vmem:[%s3 + $0x2c] sm:$0xf]
      %v4421 = vld [vmem:[%s3 + $0x30] sm:$0xf]
      %v4422 = vld [vmem:[%s3 + $0x34] sm:$0xf]
      %v4423 = vld [vmem:[%s3 + $0x38] sm:$0xf]
      %v4424 = vld [vmem:[%s3 + $0x3c] sm:$0xf]
      %v4425 = vld [vmem:[%s3 + $0x40] sm:$0xf]
      %v4426 = vld [vmem:[%s3 + $0x44] sm:$0xf]
      %v4427 = vld [vmem:[%s3 + $0x48] sm:$0xf]
      %v4428 = vld [vmem:[%s3 + $0x4c] sm:$0xf]
      %v4429 = vld [vmem:[%s3 + $0x50] sm:$0xf]
      %v4430 = vld [vmem:[%s3 + $0x54] sm:$0xf]
      %v4431 = vld [vmem:[%s3 + $0x58] sm:$0xf]
      %v4432 = vld [vmem:[%s3 + $0x5c] sm:$0xf]
      %v4433 = vld [vmem:[%s3 + $0x60] sm:$0xf]
      %v4434 = vld [vmem:[%s3 + $0x64] sm:$0xf]
      %v4435 = vld [vmem:[%s3 + $0x68] sm:$0xf]
      %v4436 = vld [vmem:[%s3 + $0x6c] sm:$0xf]
      %v4437 = vld [vmem:[%s3 + $0x70] sm:$0xf]
      %v4438 = vld [vmem:[%s3 + $0x74] sm:$0xf]
      %v4439 = vld [vmem:[%s3 + $0x78] sm:$0xf]
      %v4440 = vld [vmem:[%s3 + $0x7c] sm:$0xf]
      %v4441 = vld [vmem:[%s3 + $0x80] sm:$0xf]
      %v4442 = vld [vmem:[%s3 + $0x84] sm:$0xf]
      %v4443 = vld [vmem:[%s3 + $0x88] sm:$0xf]
      %v4444 = vld [vmem:[%s3 + $0x8c] sm:$0xf]
      %v4445 = vld [vmem:[%s3 + $0x90] sm:$0xf]
      %v4446 = vld [vmem:[%s3 + $0x94] sm:$0xf]
      %v4447 = vld [vmem:[%s3 + $0x98] sm:$0xf]
      %v4448 = vld [vmem:[%s3 + $0x9c] sm:$0xf]
      %v4449 = vld [vmem:[%s3 + $0xa0] sm:$0xf]
      %v4450 = vld [vmem:[%s3 + $0xa4] sm:$0xf]
      %v4451 = vld [vmem:[%s3 + $0xa8] sm:$0xf]
      %v4452 = vld [vmem:[%s3 + $0xac] sm:$0xf]
      %v4453 = vld [vmem:[%s3 + $0xb0] sm:$0xf]
      %v4454 = vld [vmem:[%s3 + $0xb4] sm:$0xf]
      %v4455 = vld [vmem:[%s3 + $0xb8] sm:$0xf]
      %v4456 = vld [vmem:[%s3 + $0xbc] sm:$0xf]
      %v4457 = vld [vmem:[%s3 + $0xc0] sm:$0xf]
      %v4458 = vld [vmem:[%s3 + $0xc4] sm:$0xf]
      %v4459 = vld [vmem:[%s3 + $0xc8] sm:$0xf]
      %v4460 = vld [vmem:[%s3 + $0xcc] sm:$0xf]
      %v4461 = vld [vmem:[%s3 + $0xd0] sm:$0xf]
      %v4462 = vld [vmem:[%s3 + $0xd4] sm:$0xf]
      %v4463 = vld [vmem:[%s3 + $0xd8] sm:$0xf]
      %v4464 = vld [vmem:[%s3 + $0xdc] sm:$0xf]
      %v4465 = vld [vmem:[%s3 + $0xe0] sm:$0xf]
      %v4466 = vld [vmem:[%s3 + $0xe4] sm:$0xf]
      %v4467 = vld [vmem:[%s3 + $0xe8] sm:$0xf]
      %v4468 = vld [vmem:[%s3 + $0xec] sm:$0xf]
      %v4469 = vld [vmem:[%s3 + $0xf0] sm:$0xf]
      %v4470 = vld [vmem:[%s3 + $0xf4] sm:$0xf]
      %v4471 = vld [vmem:[%s3 + $0xf8] sm:$0xf]
      %v4472 = vld [vmem:[%s3 + $0xfc] sm:$0xf]
      %v4473 = vld [vmem:[%s3 + $0x100] sm:$0xf]
      %v4474 = vld [vmem:[%s3 + $0x104] sm:$0xf]
      %v4475 = vld [vmem:[%s3 + $0x108] sm:$0xf]
      %v4476 = vld [vmem:[%s3 + $0x10c] sm:$0xf]
      %v4477 = vld [vmem:[%s3 + $0x110] sm:$0xf]
      %v4478 = vld [vmem:[%s3 + $0x114] sm:$0xf]
      %v4479 = vld [vmem:[%s3 + $0x118] sm:$0xf]
      %v4480 = vld [vmem:[%s3 + $0x11c] sm:$0xf]
      %v4481 = vld [vmem:[%s3 + $0x120] sm:$0xf]
      %v4482 = vld [vmem:[%s3 + $0x124] sm:$0xf]
      %v4483 = vld [vmem:[%s3 + $0x128] sm:$0xf]
      %v4484 = vld [vmem:[%s3 + $0x12c] sm:$0xf]
      %v4485 = vld [vmem:[%s3 + $0x130] sm:$0xf]
      %v4486 = vld [vmem:[%s3 + $0x134] sm:$0xf]
      %v4487 = vld [vmem:[%s3 + $0x138] sm:$0xf]
      %v4488 = vld [vmem:[%s3 + $0x13c] sm:$0xf]
      %v4489 = vld [vmem:[%s3 + $0x140] sm:$0xf]
      %v4490 = vld [vmem:[%s3 + $0x144] sm:$0xf]
      %v4491 = vld [vmem:[%s3 + $0x148] sm:$0xf]
      %v4492 = vld [vmem:[%s3 + $0x14c] sm:$0xf]
      %v4493 = vld [vmem:[%s3 + $0x150] sm:$0xf]
      %v4494 = vld [vmem:[%s3 + $0x154] sm:$0xf]
      %v4495 = vld [vmem:[%s3 + $0x158] sm:$0xf]
      %v4496 = vld [vmem:[%s3 + $0x15c] sm:$0xf]
      %v4497 = vld [vmem:[%s3 + $0x160] sm:$0xf]
      %v4498 = vld [vmem:[%s3 + $0x164] sm:$0xf]
      %v4499 = vld [vmem:[%s3 + $0x168] sm:$0xf]
      %v4500 = vld [vmem:[%s3 + $0x16c] sm:$0xf]
      %v4501 = vld [vmem:[%s3 + $0x170] sm:$0xf]
      %v4502 = vld [vmem:[%s3 + $0x174] sm:$0xf]
      %v4503 = vld [vmem:[%s3 + $0x178] sm:$0xf]
      %v4504 = vld [vmem:[%s3 + $0x17c] sm:$0xf]
      %v4505 = vld [vmem:[%s3 + $0x180] sm:$0xf]
      %v4506 = vld [vmem:[%s3 + $0x184] sm:$0xf]
      %v4507 = vld [vmem:[%s3 + $0x188] sm:$0xf]
      %v4508 = vld [vmem:[%s3 + $0x18c] sm:$0xf]
      %v4509 = vld [vmem:[%s3 + $0x190] sm:$0xf]
      %v4510 = vld [vmem:[%s3 + $0x194] sm:$0xf]
      %v4511 = vld [vmem:[%s3 + $0x198] sm:$0xf]
      %v4512 = vld [vmem:[%s3 + $0x19c] sm:$0xf]
      %v4513 = vld [vmem:[%s3 + $0x1a0] sm:$0xf]
      %v4514 = vld [vmem:[%s3 + $0x1a4] sm:$0xf]
      %v4515 = vld [vmem:[%s3 + $0x1a8] sm:$0xf]
      %v4516 = vld [vmem:[%s3 + $0x1ac] sm:$0xf]
      %v4517 = vld [vmem:[%s3 + $0x1b0] sm:$0xf]
      %v4518 = vld [vmem:[%s3 + $0x1b4] sm:$0xf]
      %v4519 = vld [vmem:[%s3 + $0x1b8] sm:$0xf]
      %v4520 = vld [vmem:[%s3 + $0x1bc] sm:$0xf]
      %v4521 = vld [vmem:[%s3 + $0x1c0] sm:$0xf]
      %v4522 = vld [vmem:[%s3 + $0x1c4] sm:$0xf]
      %v4523 = vld [vmem:[%s3 + $0x1c8] sm:$0xf]
      %v4524 = vld [vmem:[%s3 + $0x1cc] sm:$0xf]
      %v4525 = vld [vmem:[%s3 + $0x1d0] sm:$0xf]
      %v4526 = vld [vmem:[%s3 + $0x1d4] sm:$0xf]
      %v4527 = vld [vmem:[%s3 + $0x1d8] sm:$0xf]
      %v4528 = vld [vmem:[%s3 + $0x1dc] sm:$0xf]
      %v4529 = vld [vmem:[%s3 + $0x1e0] sm:$0xf]
      %v4530 = vld [vmem:[%s3 + $0x1e4] sm:$0xf]
      %v4531 = vld [vmem:[%s3 + $0x1e8] sm:$0xf]
      %v4532 = vld [vmem:[%s3 + $0x1ec] sm:$0xf]
      %v4533 = vld [vmem:[%s3 + $0x1f0] sm:$0xf]
      %v4534 = vld [vmem:[%s3 + $0x1f4] sm:$0xf]
      %v4535 = vld [vmem:[%s3 + $0x1f8] sm:$0xf]
      %v4536 = vld [vmem:[%s3 + $0x1fc] sm:$0xf]
      %v4537 = vld [vmem:[%s3 + $0x200] sm:$0xf]
      %v4538 = vld [vmem:[%s3 + $0x204] sm:$0xf]
      %v4539 = vld [vmem:[%s3 + $0x208] sm:$0xf]
      %v4540 = vld [vmem:[%s3 + $0x20c] sm:$0xf]
      %v4541 = vld [vmem:[%s3 + $0x210] sm:$0xf]
      %v4542 = vld [vmem:[%s3 + $0x214] sm:$0xf]
      %v4543 = vld [vmem:[%s3 + $0x218] sm:$0xf]
      %v4544 = vld [vmem:[%s3 + $0x21c] sm:$0xf]
      %v4545 = vld [vmem:[%s3 + $0x220] sm:$0xf]
      %v4546 = vld [vmem:[%s3 + $0x224] sm:$0xf]
      %v4547 = vld [vmem:[%s3 + $0x228] sm:$0xf]
      %v4548 = vld [vmem:[%s3 + $0x22c] sm:$0xf]
      %v4549 = vld [vmem:[%s3 + $0x230] sm:$0xf]
      %v4550 = vld [vmem:[%s3 + $0x234] sm:$0xf]
      %v4551 = vld [vmem:[%s3 + $0x238] sm:$0xf]
      %v4552 = vld [vmem:[%s3 + $0x23c] sm:$0xf]
      %v4553 = vld [vmem:[%s4] sm:$0x1]
      %v4555 = vlaneseq
      %v4556 = vshrl.u32 %v4555, 7
      %v4557 = vsub.s32 0, %v4556
      %v4558 = vrot.slane %v4553, %v4557
      %v4720 = vunpack.c.l.b16 %v4249
      %v4721 = vunpack.c.h.b16 %v4249
      %v4722 = vunpack.c.l.b16 %v4250
      %v4723 = vunpack.c.h.b16 %v4250
      %v4724 = vunpack.c.l.b16 %v4251
      %v4725 = vunpack.c.h.b16 %v4251
      %v4726 = vunpack.c.l.b16 %v4252
      %v4727 = vunpack.c.h.b16 %v4252
      %v4728 = vunpack.c.l.b16 %v4253
      %v4729 = vunpack.c.l.b16 %v4254
      %v4730 = vunpack.c.h.b16 %v4254
      %v4731 = vunpack.c.l.b16 %v4255
      %v4732 = vunpack.c.h.b16 %v4255
      %v4733 = vunpack.c.l.b16 %v4256
      %v4734 = vunpack.c.h.b16 %v4256
      %v4735 = vunpack.c.l.b16 %v4257
      %v4736 = vunpack.c.h.b16 %v4257
      %v4737 = vunpack.c.l.b16 %v4258
      %v4738 = vunpack.c.l.b16 %v4259
      %v4739 = vunpack.c.h.b16 %v4259
      %v4740 = vunpack.c.l.b16 %v4260
      %v4741 = vunpack.c.h.b16 %v4260
      %v4742 = vunpack.c.l.b16 %v4261
      %v4743 = vunpack.c.h.b16 %v4261
      %v4744 = vunpack.c.l.b16 %v4262
      %v4745 = vunpack.c.h.b16 %v4262
      %v4746 = vunpack.c.l.b16 %v4263
      %v4747 = vunpack.c.l.b16 %v4264
      %v4748 = vunpack.c.h.b16 %v4264
      %v4749 = vunpack.c.l.b16 %v4265
      %v4750 = vunpack.c.h.b16 %v4265
      %v4751 = vunpack.c.l.b16 %v4266
      %v4752 = vunpack.c.h.b16 %v4266
      %v4753 = vunpack.c.l.b16 %v4267
      %v4754 = vunpack.c.h.b16 %v4267
      %v4755 = vunpack.c.l.b16 %v4268
      %v4756 = vunpack.c.l.b16 %v4269
      %v4757 = vunpack.c.h.b16 %v4269
      %v4758 = vunpack.c.l.b16 %v4270
      %v4759 = vunpack.c.h.b16 %v4270
      %v4760 = vunpack.c.l.b16 %v4271
      %v4761 = vunpack.c.h.b16 %v4271
      %v4762 = vunpack.c.l.b16 %v4272
      %v4763 = vunpack.c.h.b16 %v4272
      %v4764 = vunpack.c.l.b16 %v4273
      %v4765 = vunpack.c.l.b16 %v4274
      %v4766 = vunpack.c.h.b16 %v4274
      %v4767 = vunpack.c.l.b16 %v4275
      %v4768 = vunpack.c.h.b16 %v4275
      %v4769 = vunpack.c.l.b16 %v4276
      %v4770 = vunpack.c.h.b16 %v4276
      %v4771 = vunpack.c.l.b16 %v4277
      %v4772 = vunpack.c.h.b16 %v4277
      %v4773 = vunpack.c.l.b16 %v4278
      %v4774 = vunpack.c.l.b16 %v4279
      %v4775 = vunpack.c.h.b16 %v4279
      %v4776 = vunpack.c.l.b16 %v4280
      %v4777 = vunpack.c.h.b16 %v4280
      %v4778 = vunpack.c.l.b16 %v4281
      %v4779 = vunpack.c.h.b16 %v4281
      %v4780 = vunpack.c.l.b16 %v4282
      %v4781 = vunpack.c.h.b16 %v4282
      %v4782 = vunpack.c.l.b16 %v4283
      %v4783 = vunpack.c.l.b16 %v4284
      %v4784 = vunpack.c.h.b16 %v4284
      %v4785 = vunpack.c.l.b16 %v4285
      %v4786 = vunpack.c.h.b16 %v4285
      %v4787 = vunpack.c.l.b16 %v4286
      %v4788 = vunpack.c.h.b16 %v4286
      %v4789 = vunpack.c.l.b16 %v4287
      %v4790 = vunpack.c.h.b16 %v4287
      %v4791 = vunpack.c.l.b16 %v4288
      %v4792 = vunpack.c.l.b16 %v4289
      %v4793 = vunpack.c.h.b16 %v4289
      %v4794 = vunpack.c.l.b16 %v4290
      %v4795 = vunpack.c.h.b16 %v4290
      %v4796 = vunpack.c.l.b16 %v4291
      %v4797 = vunpack.c.h.b16 %v4291
      %v4798 = vunpack.c.l.b16 %v4292
      %v4799 = vunpack.c.h.b16 %v4292
      %v4800 = vunpack.c.l.b16 %v4293
      %v4801 = vunpack.c.l.b16 %v4294
      %v4802 = vunpack.c.h.b16 %v4294
      %v4803 = vunpack.c.l.b16 %v4295
      %v4804 = vunpack.c.h.b16 %v4295
      %v4805 = vunpack.c.l.b16 %v4296
      %v4806 = vunpack.c.h.b16 %v4296
      %v4807 = vunpack.c.l.b16 %v4297
      %v4808 = vunpack.c.h.b16 %v4297
      %v4809 = vunpack.c.l.b16 %v4298
      %v4810 = vunpack.c.l.b16 %v4299
      %v4811 = vunpack.c.h.b16 %v4299
      %v4812 = vunpack.c.l.b16 %v4300
      %v4813 = vunpack.c.h.b16 %v4300
      %v4814 = vunpack.c.l.b16 %v4301
      %v4815 = vunpack.c.h.b16 %v4301
      %v4816 = vunpack.c.l.b16 %v4302
      %v4817 = vunpack.c.h.b16 %v4302
      %v4818 = vunpack.c.l.b16 %v4303
      %v4819 = vunpack.c.l.b16 %v4304
      %v4820 = vunpack.c.h.b16 %v4304
      %v4821 = vunpack.c.l.b16 %v4305
      %v4822 = vunpack.c.h.b16 %v4305
      %v4823 = vunpack.c.l.b16 %v4306
      %v4824 = vunpack.c.h.b16 %v4306
      %v4825 = vunpack.c.l.b16 %v4307
      %v4826 = vunpack.c.h.b16 %v4307
      %v4827 = vunpack.c.l.b16 %v4308
      %v4828 = vunpack.c.l.b16 %v4309
      %v4829 = vunpack.c.h.b16 %v4309
      %v4830 = vunpack.c.l.b16 %v4310
      %v4831 = vunpack.c.h.b16 %v4310
      %v4832 = vunpack.c.l.b16 %v4311
      %v4833 = vunpack.c.h.b16 %v4311
      %v4834 = vunpack.c.l.b16 %v4312
      %v4835 = vunpack.c.h.b16 %v4312
      %v4836 = vunpack.c.l.b16 %v4313
      %v4837 = vunpack.c.l.b16 %v4314
      %v4838 = vunpack.c.h.b16 %v4314
      %v4839 = vunpack.c.l.b16 %v4315
      %v4840 = vunpack.c.h.b16 %v4315
      %v4841 = vunpack.c.l.b16 %v4316
      %v4842 = vunpack.c.h.b16 %v4316
      %v4843 = vunpack.c.l.b16 %v4317
      %v4844 = vunpack.c.h.b16 %v4317
      %v4845 = vunpack.c.l.b16 %v4318
      %v4846 = vunpack.c.l.b16 %v4319
      %v4847 = vunpack.c.h.b16 %v4319
      %v4848 = vunpack.c.l.b16 %v4320
      %v4849 = vunpack.c.h.b16 %v4320
      %v4850 = vunpack.c.l.b16 %v4321
      %v4851 = vunpack.c.h.b16 %v4321
      %v4852 = vunpack.c.l.b16 %v4322
      %v4853 = vunpack.c.h.b16 %v4322
      %v4854 = vunpack.c.l.b16 %v4323
      %v4855 = vunpack.c.l.b16 %v4324
      %v4856 = vunpack.c.h.b16 %v4324
      %v4857 = vunpack.c.l.b16 %v4325
      %v4858 = vunpack.c.h.b16 %v4325
      %v4859 = vunpack.c.l.b16 %v4326
      %v4860 = vunpack.c.h.b16 %v4326
      %v4861 = vunpack.c.l.b16 %v4327
      %v4862 = vunpack.c.h.b16 %v4327
      %v4863 = vunpack.c.l.b16 %v4328
      %v4864 = vunpack.c.l.b16 %v4329
      %v4865 = vunpack.c.h.b16 %v4329
      %v4866 = vunpack.c.l.b16 %v4330
      %v4867 = vunpack.c.h.b16 %v4330
      %v4868 = vunpack.c.l.b16 %v4331
      %v4869 = vunpack.c.h.b16 %v4331
      %v4870 = vunpack.c.l.b16 %v4332
      %v4871 = vunpack.c.h.b16 %v4332
      %v4872 = vunpack.c.l.b16 %v4333
      %v4873 = vunpack.c.l.b16 %v4334
      %v4874 = vunpack.c.h.b16 %v4334
      %v4875 = vunpack.c.l.b16 %v4335
      %v4876 = vunpack.c.h.b16 %v4335
      %v4877 = vunpack.c.l.b16 %v4336
      %v4878 = vunpack.c.h.b16 %v4336
      %v4879 = vunpack.c.l.b16 %v4337
      %v4880 = vunpack.c.h.b16 %v4337
      %v4881 = vunpack.c.l.b16 %v4338
      %v4882 = vunpack.c.l.b16 %v4339
      %v4883 = vunpack.c.h.b16 %v4339
      %v4884 = vunpack.c.l.b16 %v4340
      %v4885 = vunpack.c.h.b16 %v4340
      %v4886 = vunpack.c.l.b16 %v4341
      %v4887 = vunpack.c.h.b16 %v4341
      %v4888 = vunpack.c.l.b16 %v4342
      %v4889 = vunpack.c.h.b16 %v4342
      %v4890 = vunpack.c.l.b16 %v4343
      %v4891 = vunpack.c.l.b16 %v4344
      %v4892 = vunpack.c.h.b16 %v4344
      %v4893 = vunpack.c.l.b16 %v4345
      %v4894 = vunpack.c.h.b16 %v4345
      %v4895 = vunpack.c.l.b16 %v4346
      %v4896 = vunpack.c.h.b16 %v4346
      %v4897 = vunpack.c.l.b16 %v4347
      %v4898 = vunpack.c.h.b16 %v4347
      %v4899 = vunpack.c.l.b16 %v4348
      %v4900 = vunpack.c.l.b16 %v4349
      %v4901 = vunpack.c.h.b16 %v4349
      %v4902 = vunpack.c.l.b16 %v4350
      %v4903 = vunpack.c.h.b16 %v4350
      %v4904 = vunpack.c.l.b16 %v4351
      %v4905 = vunpack.c.h.b16 %v4351
      %v4906 = vunpack.c.l.b16 %v4352
      %v4907 = vunpack.c.h.b16 %v4352
      %v4908 = vunpack.c.l.b16 %v4353
      %v4909 = vunpack.c.l.b16 %v4354
      %v4910 = vunpack.c.h.b16 %v4354
      %v4911 = vunpack.c.l.b16 %v4355
      %v4912 = vunpack.c.h.b16 %v4355
      %v4913 = vunpack.c.l.b16 %v4356
      %v4914 = vunpack.c.h.b16 %v4356
      %v4915 = vunpack.c.l.b16 %v4357
      %v4916 = vunpack.c.h.b16 %v4357
      %v4917 = vunpack.c.l.b16 %v4358
      %v4918 = vunpack.c.l.b16 %v4359
      %v4919 = vunpack.c.h.b16 %v4359
      %v4920 = vunpack.c.l.b16 %v4360
      %v4921 = vunpack.c.h.b16 %v4360
      %v4922 = vunpack.c.l.b16 %v4361
      %v4923 = vunpack.c.h.b16 %v4361
      %v4924 = vunpack.c.l.b16 %v4362
      %v4925 = vunpack.c.h.b16 %v4362
      %v4926 = vunpack.c.l.b16 %v4363
      %v4927 = vunpack.c.l.b16 %v4364
      %v4928 = vunpack.c.h.b16 %v4364
      %v4929 = vunpack.c.l.b16 %v4365
      %v4930 = vunpack.c.h.b16 %v4365
      %v4931 = vunpack.c.l.b16 %v4366
      %v4932 = vunpack.c.h.b16 %v4366
      %v4933 = vunpack.c.l.b16 %v4367
      %v4934 = vunpack.c.h.b16 %v4367
      %v4935 = vunpack.c.l.b16 %v4368
      %v4936 = vunpack.c.l.b16 %v4369
      %v4937 = vunpack.c.h.b16 %v4369
      %v4938 = vunpack.c.l.b16 %v4370
      %v4939 = vunpack.c.h.b16 %v4370
      %v4940 = vunpack.c.l.b16 %v4371
      %v4941 = vunpack.c.h.b16 %v4371
      %v4942 = vunpack.c.l.b16 %v4372
      %v4943 = vunpack.c.h.b16 %v4372
      %v4944 = vunpack.c.l.b16 %v4373
      %v4945 = vunpack.c.l.b16 %v4374
      %v4946 = vunpack.c.h.b16 %v4374
      %v4947 = vunpack.c.l.b16 %v4375
      %v4948 = vunpack.c.h.b16 %v4375
      %v4949 = vunpack.c.l.b16 %v4376
      %v4950 = vunpack.c.h.b16 %v4376
      %v4951 = vunpack.c.l.b16 %v4377
      %v4952 = vunpack.c.h.b16 %v4377
      %v4953 = vunpack.c.l.b16 %v4378
      %v4954 = vunpack.c.l.b16 %v4379
      %v4955 = vunpack.c.h.b16 %v4379
      %v4956 = vunpack.c.l.b16 %v4380
      %v4957 = vunpack.c.h.b16 %v4380
      %v4958 = vunpack.c.l.b16 %v4381
      %v4959 = vunpack.c.h.b16 %v4381
      %v4960 = vunpack.c.l.b16 %v4382
      %v4961 = vunpack.c.h.b16 %v4382
      %v4962 = vunpack.c.l.b16 %v4383
      %v4963 = vunpack.c.l.b16 %v4384
      %v4964 = vunpack.c.h.b16 %v4384
      %v4965 = vunpack.c.l.b16 %v4385
      %v4966 = vunpack.c.h.b16 %v4385
      %v4967 = vunpack.c.l.b16 %v4386
      %v4968 = vunpack.c.h.b16 %v4386
      %v4969 = vunpack.c.l.b16 %v4387
      %v4970 = vunpack.c.h.b16 %v4387
      %v4971 = vunpack.c.l.b16 %v4388
      %v4972 = vunpack.c.l.b16 %v4389
      %v4973 = vunpack.c.h.b16 %v4389
      %v4974 = vunpack.c.l.b16 %v4390
      %v4975 = vunpack.c.h.b16 %v4390
      %v4976 = vunpack.c.l.b16 %v4391
      %v4977 = vunpack.c.h.b16 %v4391
      %v4978 = vunpack.c.l.b16 %v4392
      %v4979 = vunpack.c.h.b16 %v4392
      %v4980 = vunpack.c.l.b16 %v4393
      %v4981 = vunpack.c.l.b16 %v4394
      %v4982 = vunpack.c.h.b16 %v4394
      %v4983 = vunpack.c.l.b16 %v4395
      %v4984 = vunpack.c.h.b16 %v4395
      %v4985 = vunpack.c.l.b16 %v4396
      %v4986 = vunpack.c.h.b16 %v4396
      %v4987 = vunpack.c.l.b16 %v4397
      %v4988 = vunpack.c.h.b16 %v4397
      %v4989 = vunpack.c.l.b16 %v4398
      %v4990 = vunpack.c.l.b16 %v4399
      %v4991 = vunpack.c.h.b16 %v4399
      %v4992 = vunpack.c.l.b16 %v4400
      %v4993 = vunpack.c.h.b16 %v4400
      %v4994 = vunpack.c.l.b16 %v4401
      %v4995 = vunpack.c.h.b16 %v4401
      %v4996 = vunpack.c.l.b16 %v4402
      %v4997 = vunpack.c.h.b16 %v4402
      %v4998 = vunpack.c.l.b16 %v4403
      %v4999 = vunpack.c.l.b16 %v4404
      %v5000 = vunpack.c.h.b16 %v4404
      %v5001 = vunpack.c.l.b16 %v4405
      %v5002 = vunpack.c.h.b16 %v4405
      %v5003 = vunpack.c.l.b16 %v4406
      %v5004 = vunpack.c.h.b16 %v4406
      %v5005 = vunpack.c.l.b16 %v4407
      %v5006 = vunpack.c.h.b16 %v4407
      %v5007 = vunpack.c.l.b16 %v4408
      %v5008 = vpack.c.b16 %v4729, %v4720
      %v5009 = vpack.c.b16 %v4730, %v4721
      %v5010 = vpack.c.b16 %v4731, %v4722
      %v5011 = vpack.c.b16 %v4732, %v4723
      %v5012 = vpack.c.b16 %v4733, %v4724
      %v5013 = vpack.c.b16 %v4734, %v4725
      %v5014 = vpack.c.b16 %v4735, %v4726
      %v5015 = vpack.c.b16 %v4736, %v4727
      %v5016 = vpack.c.b16 %v4737, %v4728
      %v5017 = vpack.c.b16 %v4747, %v4738
      %v5018 = vpack.c.b16 %v4748, %v4739
      %v5019 = vpack.c.b16 %v4749, %v4740
      %v5020 = vpack.c.b16 %v4750, %v4741
      %v5021 = vpack.c.b16 %v4751, %v4742
      %v5022 = vpack.c.b16 %v4752, %v4743
      %v5023 = vpack.c.b16 %v4753, %v4744
      %v5024 = vpack.c.b16 %v4754, %v4745
      %v5025 = vpack.c.b16 %v4755, %v4746
      %v5026 = vpack.c.b16 %v4765, %v4756
      %v5027 = vpack.c.b16 %v4766, %v4757
      %v5028 = vpack.c.b16 %v4767, %v4758
      %v5029 = vpack.c.b16 %v4768, %v4759
      %v5030 = vpack.c.b16 %v4769, %v4760
      %v5031 = vpack.c.b16 %v4770, %v4761
      %v5032 = vpack.c.b16 %v4771, %v4762
      %v5033 = vpack.c.b16 %v4772, %v4763
      %v5034 = vpack.c.b16 %v4773, %v4764
      %v5035 = vpack.c.b16 %v4783, %v4774
      %v5036 = vpack.c.b16 %v4784, %v4775
      %v5037 = vpack.c.b16 %v4785, %v4776
      %v5038 = vpack.c.b16 %v4786, %v4777
      %v5039 = vpack.c.b16 %v4787, %v4778
      %v5040 = vpack.c.b16 %v4788, %v4779
      %v5041 = vpack.c.b16 %v4789, %v4780
      %v5042 = vpack.c.b16 %v4790, %v4781
      %v5043 = vpack.c.b16 %v4791, %v4782
      %v5044 = vpack.c.b16 %v4801, %v4792
      %v5045 = vpack.c.b16 %v4802, %v4793
      %v5046 = vpack.c.b16 %v4803, %v4794
      %v5047 = vpack.c.b16 %v4804, %v4795
      %v5048 = vpack.c.b16 %v4805, %v4796
      %v5049 = vpack.c.b16 %v4806, %v4797
      %v5050 = vpack.c.b16 %v4807, %v4798
      %v5051 = vpack.c.b16 %v4808, %v4799
      %v5052 = vpack.c.b16 %v4809, %v4800
      %v5053 = vpack.c.b16 %v4819, %v4810
      %v5054 = vpack.c.b16 %v4820, %v4811
      %v5055 = vpack.c.b16 %v4821, %v4812
      %v5056 = vpack.c.b16 %v4822, %v4813
      %v5057 = vpack.c.b16 %v4823, %v4814
      %v5058 = vpack.c.b16 %v4824, %v4815
      %v5059 = vpack.c.b16 %v4825, %v4816
      %v5060 = vpack.c.b16 %v4826, %v4817
      %v5061 = vpack.c.b16 %v4827, %v4818
      %v5062 = vpack.c.b16 %v4837, %v4828
      %v5063 = vpack.c.b16 %v4838, %v4829
      %v5064 = vpack.c.b16 %v4839, %v4830
      %v5065 = vpack.c.b16 %v4840, %v4831
      %v5066 = vpack.c.b16 %v4841, %v4832
      %v5067 = vpack.c.b16 %v4842, %v4833
      %v5068 = vpack.c.b16 %v4843, %v4834
      %v5069 = vpack.c.b16 %v4844, %v4835
      %v5070 = vpack.c.b16 %v4845, %v4836
      %v5071 = vpack.c.b16 %v4855, %v4846
      %v5072 = vpack.c.b16 %v4856, %v4847
      %v5073 = vpack.c.b16 %v4857, %v4848
      %v5074 = vpack.c.b16 %v4858, %v4849
      %v5075 = vpack.c.b16 %v4859, %v4850
      %v5076 = vpack.c.b16 %v4860, %v4851
      %v5077 = vpack.c.b16 %v4861, %v4852
      %v5078 = vpack.c.b16 %v4862, %v4853
      %v5079 = vpack.c.b16 %v4863, %v4854
      %v5080 = vpack.c.b16 %v4873, %v4864
      %v5081 = vpack.c.b16 %v4874, %v4865
      %v5082 = vpack.c.b16 %v4875, %v4866
      %v5083 = vpack.c.b16 %v4876, %v4867
      %v5084 = vpack.c.b16 %v4877, %v4868
      %v5085 = vpack.c.b16 %v4878, %v4869
      %v5086 = vpack.c.b16 %v4879, %v4870
      %v5087 = vpack.c.b16 %v4880, %v4871
      %v5088 = vpack.c.b16 %v4881, %v4872
      %v5089 = vpack.c.b16 %v4891, %v4882
      %v5090 = vpack.c.b16 %v4892, %v4883
      %v5091 = vpack.c.b16 %v4893, %v4884
      %v5092 = vpack.c.b16 %v4894, %v4885
      %v5093 = vpack.c.b16 %v4895, %v4886
      %v5094 = vpack.c.b16 %v4896, %v4887
      %v5095 = vpack.c.b16 %v4897, %v4888
      %v5096 = vpack.c.b16 %v4898, %v4889
      %v5097 = vpack.c.b16 %v4899, %v4890
      %v5098 = vpack.c.b16 %v4909, %v4900
      %v5099 = vpack.c.b16 %v4910, %v4901
      %v5100 = vpack.c.b16 %v4911, %v4902
      %v5101 = vpack.c.b16 %v4912, %v4903
      %v5102 = vpack.c.b16 %v4913, %v4904
      %v5103 = vpack.c.b16 %v4914, %v4905
      %v5104 = vpack.c.b16 %v4915, %v4906
      %v5105 = vpack.c.b16 %v4916, %v4907
      %v5106 = vpack.c.b16 %v4917, %v4908
      %v5107 = vpack.c.b16 %v4927, %v4918
      %v5108 = vpack.c.b16 %v4928, %v4919
      %v5109 = vpack.c.b16 %v4929, %v4920
      %v5110 = vpack.c.b16 %v4930, %v4921
      %v5111 = vpack.c.b16 %v4931, %v4922
      %v5112 = vpack.c.b16 %v4932, %v4923
      %v5113 = vpack.c.b16 %v4933, %v4924
      %v5114 = vpack.c.b16 %v4934, %v4925
      %v5115 = vpack.c.b16 %v4935, %v4926
      %v5116 = vpack.c.b16 %v4945, %v4936
      %v5117 = vpack.c.b16 %v4946, %v4937
      %v5118 = vpack.c.b16 %v4947, %v4938
      %v5119 = vpack.c.b16 %v4948, %v4939
      %v5120 = vpack.c.b16 %v4949, %v4940
      %v5121 = vpack.c.b16 %v4950, %v4941
      %v5122 = vpack.c.b16 %v4951, %v4942
      %v5123 = vpack.c.b16 %v4952, %v4943
      %v5124 = vpack.c.b16 %v4953, %v4944
      %v5125 = vpack.c.b16 %v4963, %v4954
      %v5126 = vpack.c.b16 %v4964, %v4955
      %v5127 = vpack.c.b16 %v4965, %v4956
      %v5128 = vpack.c.b16 %v4966, %v4957
      %v5129 = vpack.c.b16 %v4967, %v4958
      %v5130 = vpack.c.b16 %v4968, %v4959
      %v5131 = vpack.c.b16 %v4969, %v4960
      %v5132 = vpack.c.b16 %v4970, %v4961
      %v5133 = vpack.c.b16 %v4971, %v4962
      %v5134 = vpack.c.b16 %v4981, %v4972
      %v5135 = vpack.c.b16 %v4982, %v4973
      %v5136 = vpack.c.b16 %v4983, %v4974
      %v5137 = vpack.c.b16 %v4984, %v4975
      %v5138 = vpack.c.b16 %v4985, %v4976
      %v5139 = vpack.c.b16 %v4986, %v4977
      %v5140 = vpack.c.b16 %v4987, %v4978
      %v5141 = vpack.c.b16 %v4988, %v4979
      %v5142 = vpack.c.b16 %v4989, %v4980
      %v5143 = vpack.c.b16 %v4999, %v4990
      %v5144 = vpack.c.b16 %v5000, %v4991
      %v5145 = vpack.c.b16 %v5001, %v4992
      %v5146 = vpack.c.b16 %v5002, %v4993
      %v5147 = vpack.c.b16 %v5003, %v4994
      %v5148 = vpack.c.b16 %v5004, %v4995
      %v5149 = vpack.c.b16 %v5005, %v4996
      %v5150 = vpack.c.b16 %v5006, %v4997
      %v5151 = vpack.c.b16 %v5007, %v4998
      %v5440 = vunpack.c.l.b16 %v4409
      %v5441 = vunpack.c.l.b16 %v4410
      %v5442 = vunpack.c.l.b16 %v4411
      %v5443 = vunpack.c.l.b16 %v4412
      %v5444 = vunpack.c.l.b16 %v4413
      %v5445 = vunpack.c.l.b16 %v4414
      %v5446 = vunpack.c.l.b16 %v4415
      %v5447 = vunpack.c.l.b16 %v4416
      %v5448 = vunpack.c.l.b16 %v4417
      %v5449 = vunpack.c.l.b16 %v4418
      %v5450 = vunpack.c.l.b16 %v4419
      %v5451 = vunpack.c.l.b16 %v4420
      %v5452 = vunpack.c.l.b16 %v4421
      %v5453 = vunpack.c.l.b16 %v4422
      %v5454 = vunpack.c.l.b16 %v4423
      %v5455 = vunpack.c.l.b16 %v4424
      %v5456 = vunpack.c.l.b16 %v4425
      %v5457 = vunpack.c.l.b16 %v4426
      %v5458 = vunpack.c.l.b16 %v4427
      %v5459 = vunpack.c.l.b16 %v4428
      %v5460 = vunpack.c.l.b16 %v4429
      %v5461 = vunpack.c.l.b16 %v4430
      %v5462 = vunpack.c.l.b16 %v4431
      %v5463 = vunpack.c.l.b16 %v4432
      %v5464 = vunpack.c.l.b16 %v4433
      %v5465 = vunpack.c.l.b16 %v4434
      %v5466 = vunpack.c.l.b16 %v4435
      %v5467 = vunpack.c.l.b16 %v4436
      %v5468 = vunpack.c.l.b16 %v4437
      %v5469 = vunpack.c.l.b16 %v4438
      %v5470 = vunpack.c.l.b16 %v4439
      %v5471 = vunpack.c.l.b16 %v4440
      %v5472 = vunpack.c.l.b16 %v4441
      %v5473 = vunpack.c.l.b16 %v4442
      %v5474 = vunpack.c.l.b16 %v4443
      %v5475 = vunpack.c.l.b16 %v4444
      %v5476 = vunpack.c.l.b16 %v4445
      %v5477 = vunpack.c.l.b16 %v4446
      %v5478 = vunpack.c.l.b16 %v4447
      %v5479 = vunpack.c.l.b16 %v4448
      %v5480 = vunpack.c.l.b16 %v4449
      %v5481 = vunpack.c.l.b16 %v4450
      %v5482 = vunpack.c.l.b16 %v4451
      %v5483 = vunpack.c.l.b16 %v4452
      %v5484 = vunpack.c.l.b16 %v4453
      %v5485 = vunpack.c.l.b16 %v4454
      %v5486 = vunpack.c.l.b16 %v4455
      %v5487 = vunpack.c.l.b16 %v4456
      %v5488 = vunpack.c.l.b16 %v4457
      %v5489 = vunpack.c.l.b16 %v4458
      %v5490 = vunpack.c.l.b16 %v4459
      %v5491 = vunpack.c.l.b16 %v4460
      %v5492 = vunpack.c.l.b16 %v4461
      %v5493 = vunpack.c.l.b16 %v4462
      %v5494 = vunpack.c.l.b16 %v4463
      %v5495 = vunpack.c.l.b16 %v4464
      %v5496 = vunpack.c.l.b16 %v4465
      %v5497 = vunpack.c.l.b16 %v4466
      %v5498 = vunpack.c.l.b16 %v4467
      %v5499 = vunpack.c.l.b16 %v4468
      %v5500 = vunpack.c.l.b16 %v4469
      %v5501 = vunpack.c.l.b16 %v4470
      %v5502 = vunpack.c.l.b16 %v4471
      %v5503 = vunpack.c.l.b16 %v4472
      %v5504 = vunpack.c.l.b16 %v4473
      %v5505 = vunpack.c.l.b16 %v4474
      %v5506 = vunpack.c.l.b16 %v4475
      %v5507 = vunpack.c.l.b16 %v4476
      %v5508 = vunpack.c.l.b16 %v4477
      %v5509 = vunpack.c.l.b16 %v4478
      %v5510 = vunpack.c.l.b16 %v4479
      %v5511 = vunpack.c.l.b16 %v4480
      %v5512 = vunpack.c.l.b16 %v4481
      %v5513 = vunpack.c.l.b16 %v4482
      %v5514 = vunpack.c.l.b16 %v4483
      %v5515 = vunpack.c.l.b16 %v4484
      %v5516 = vunpack.c.l.b16 %v4485
      %v5517 = vunpack.c.l.b16 %v4486
      %v5518 = vunpack.c.l.b16 %v4487
      %v5519 = vunpack.c.l.b16 %v4488
      %v5520 = vunpack.c.l.b16 %v4489
      %v5521 = vunpack.c.l.b16 %v4490
      %v5522 = vunpack.c.l.b16 %v4491
      %v5523 = vunpack.c.l.b16 %v4492
      %v5524 = vunpack.c.l.b16 %v4493
      %v5525 = vunpack.c.l.b16 %v4494
      %v5526 = vunpack.c.l.b16 %v4495
      %v5527 = vunpack.c.l.b16 %v4496
      %v5528 = vunpack.c.l.b16 %v4497
      %v5529 = vunpack.c.l.b16 %v4498
      %v5530 = vunpack.c.l.b16 %v4499
      %v5531 = vunpack.c.l.b16 %v4500
      %v5532 = vunpack.c.l.b16 %v4501
      %v5533 = vunpack.c.l.b16 %v4502
      %v5534 = vunpack.c.l.b16 %v4503
      %v5535 = vunpack.c.l.b16 %v4504
      %v5536 = vunpack.c.l.b16 %v4505
      %v5537 = vunpack.c.l.b16 %v4506
      %v5538 = vunpack.c.l.b16 %v4507
      %v5539 = vunpack.c.l.b16 %v4508
      %v5540 = vunpack.c.l.b16 %v4509
      %v5541 = vunpack.c.l.b16 %v4510
      %v5542 = vunpack.c.l.b16 %v4511
      %v5543 = vunpack.c.l.b16 %v4512
      %v5544 = vunpack.c.l.b16 %v4513
      %v5545 = vunpack.c.l.b16 %v4514
      %v5546 = vunpack.c.l.b16 %v4515
      %v5547 = vunpack.c.l.b16 %v4516
      %v5548 = vunpack.c.l.b16 %v4517
      %v5549 = vunpack.c.l.b16 %v4518
      %v5550 = vunpack.c.l.b16 %v4519
      %v5551 = vunpack.c.l.b16 %v4520
      %v5552 = vunpack.c.l.b16 %v4521
      %v5553 = vunpack.c.l.b16 %v4522
      %v5554 = vunpack.c.l.b16 %v4523
      %v5555 = vunpack.c.l.b16 %v4524
      %v5556 = vunpack.c.l.b16 %v4525
      %v5557 = vunpack.c.l.b16 %v4526
      %v5558 = vunpack.c.l.b16 %v4527
      %v5559 = vunpack.c.l.b16 %v4528
      %v5560 = vunpack.c.l.b16 %v4529
      %v5561 = vunpack.c.l.b16 %v4530
      %v5562 = vunpack.c.l.b16 %v4531
      %v5563 = vunpack.c.l.b16 %v4532
      %v5564 = vunpack.c.l.b16 %v4533
      %v5565 = vunpack.c.l.b16 %v4534
      %v5566 = vunpack.c.l.b16 %v4535
      %v5567 = vunpack.c.l.b16 %v4536
      %v5568 = vunpack.c.l.b16 %v4537
      %v5569 = vunpack.c.l.b16 %v4538
      %v5570 = vunpack.c.l.b16 %v4539
      %v5571 = vunpack.c.l.b16 %v4540
      %v5572 = vunpack.c.l.b16 %v4541
      %v5573 = vunpack.c.l.b16 %v4542
      %v5574 = vunpack.c.l.b16 %v4543
      %v5575 = vunpack.c.l.b16 %v4544
      %v5576 = vunpack.c.l.b16 %v4545
      %v5577 = vunpack.c.l.b16 %v4546
      %v5578 = vunpack.c.l.b16 %v4547
      %v5579 = vunpack.c.l.b16 %v4548
      %v5580 = vunpack.c.l.b16 %v4549
      %v5581 = vunpack.c.l.b16 %v4550
      %v5582 = vunpack.c.l.b16 %v4551
      %v5583 = vunpack.c.l.b16 %v4552
      %v5584 = vpack.c.b16 %v5441, %v5440
      %v5585 = vpack.c.b16 %v5443, %v5442
      %v5586 = vpack.c.b16 %v5445, %v5444
      %v5587 = vpack.c.b16 %v5447, %v5446
      %v5588 = vpack.c.b16 %v5449, %v5448
      %v5589 = vpack.c.b16 %v5451, %v5450
      %v5590 = vpack.c.b16 %v5453, %v5452
      %v5591 = vpack.c.b16 %v5455, %v5454
      %v5592 = vpack.c.b16 %v5457, %v5456
      %v5593 = vpack.c.b16 %v5459, %v5458
      %v5594 = vpack.c.b16 %v5461, %v5460
      %v5595 = vpack.c.b16 %v5463, %v5462
      %v5596 = vpack.c.b16 %v5465, %v5464
      %v5597 = vpack.c.b16 %v5467, %v5466
      %v5598 = vpack.c.b16 %v5469, %v5468
      %v5599 = vpack.c.b16 %v5471, %v5470
      %v5600 = vpack.c.b16 %v5473, %v5472
      %v5601 = vpack.c.b16 %v5475, %v5474
      %v5602 = vpack.c.b16 %v5477, %v5476
      %v5603 = vpack.c.b16 %v5479, %v5478
      %v5604 = vpack.c.b16 %v5481, %v5480
      %v5605 = vpack.c.b16 %v5483, %v5482
      %v5606 = vpack.c.b16 %v5485, %v5484
      %v5607 = vpack.c.b16 %v5487, %v5486
      %v5608 = vpack.c.b16 %v5489, %v5488
      %v5609 = vpack.c.b16 %v5491, %v5490
      %v5610 = vpack.c.b16 %v5493, %v5492
      %v5611 = vpack.c.b16 %v5495, %v5494
      %v5612 = vpack.c.b16 %v5497, %v5496
      %v5613 = vpack.c.b16 %v5499, %v5498
      %v5614 = vpack.c.b16 %v5501, %v5500
      %v5615 = vpack.c.b16 %v5503, %v5502
      %v5616 = vpack.c.b16 %v5505, %v5504
      %v5617 = vpack.c.b16 %v5507, %v5506
      %v5618 = vpack.c.b16 %v5509, %v5508
      %v5619 = vpack.c.b16 %v5511, %v5510
      %v5620 = vpack.c.b16 %v5513, %v5512
      %v5621 = vpack.c.b16 %v5515, %v5514
      %v5622 = vpack.c.b16 %v5517, %v5516
      %v5623 = vpack.c.b16 %v5519, %v5518
      %v5624 = vpack.c.b16 %v5521, %v5520
      %v5625 = vpack.c.b16 %v5523, %v5522
      %v5626 = vpack.c.b16 %v5525, %v5524
      %v5627 = vpack.c.b16 %v5527, %v5526
      %v5628 = vpack.c.b16 %v5529, %v5528
      %v5629 = vpack.c.b16 %v5531, %v5530
      %v5630 = vpack.c.b16 %v5533, %v5532
      %v5631 = vpack.c.b16 %v5535, %v5534
      %v5632 = vpack.c.b16 %v5537, %v5536
      %v5633 = vpack.c.b16 %v5539, %v5538
      %v5634 = vpack.c.b16 %v5541, %v5540
      %v5635 = vpack.c.b16 %v5543, %v5542
      %v5636 = vpack.c.b16 %v5545, %v5544
      %v5637 = vpack.c.b16 %v5547, %v5546
      %v5638 = vpack.c.b16 %v5549, %v5548
      %v5639 = vpack.c.b16 %v5551, %v5550
      %v5640 = vpack.c.b16 %v5553, %v5552
      %v5641 = vpack.c.b16 %v5555, %v5554
      %v5642 = vpack.c.b16 %v5557, %v5556
      %v5643 = vpack.c.b16 %v5559, %v5558
      %v5644 = vpack.c.b16 %v5561, %v5560
      %v5645 = vpack.c.b16 %v5563, %v5562
      %v5646 = vpack.c.b16 %v5565, %v5564
      %v5647 = vpack.c.b16 %v5567, %v5566
      %v5648 = vpack.c.b16 %v5569, %v5568
      %v5649 = vpack.c.b16 %v5571, %v5570
      %v5650 = vpack.c.b16 %v5573, %v5572
      %v5651 = vpack.c.b16 %v5575, %v5574
      %v5652 = vpack.c.b16 %v5577, %v5576
      %v5653 = vpack.c.b16 %v5579, %v5578
      %v5654 = vpack.c.b16 %v5581, %v5580
      %v5655 = vpack.c.b16 %v5583, %v5582
      %5728 = vmatprep.subr.bf16.mxu0 0
      %5729 = vmatpush1.bf16.msra.mxu0 %v5591
      %5730 = vmatprep.subr.bf16.mxu0 0
      %5731 = vmatpush1.bf16.msra.mxu0 %v5590
      %5732 = vmatprep.subr.bf16.mxu0 0
      %5733 = vmatpush1.bf16.msra.mxu0 %v5589
      %5734 = vmatprep.subr.bf16.mxu0 0
      %5735 = vmatpush1.bf16.msra.mxu0 %v5588
      %5736 = vmatprep.subr.bf16.mxu0 0
      %5737 = vmatpush1.bf16.msra.mxu0 %v5587
      %5738 = vmatprep.subr.bf16.mxu0 0
      %5739 = vmatpush1.bf16.msra.mxu0 %v5586
      %5740 = vmatprep.subr.bf16.mxu0 0
      %5741 = vmatpush1.bf16.msra.mxu0 %v5585
      %5742 = vmatprep.subr.bf16.mxu0 0
      %5743 = vmatpush1.bf16.msra.mxu0 %v5584
      %5744 = vmatprep.subr.bf16.mxu0 0
      %5745 = vmatpush2.bf16.msra.mxu0 %v5599
      %5746 = vmatprep.subr.bf16.mxu0 0
      %5747 = vmatpush2.bf16.msra.mxu0 %v5598
      %5748 = vmatprep.subr.bf16.mxu0 0
      %5749 = vmatpush2.bf16.msra.mxu0 %v5597
      %5750 = vmatprep.subr.bf16.mxu0 0
      %5751 = vmatpush2.bf16.msra.mxu0 %v5596
      %5752 = vmatprep.subr.bf16.mxu0 0
      %5753 = vmatpush2.bf16.msra.mxu0 %v5595
      %5754 = vmatprep.subr.bf16.mxu0 0
      %5755 = vmatpush2.bf16.msra.mxu0 %v5594
      %5756 = vmatprep.subr.bf16.mxu0 0
      %5757 = vmatpush2.bf16.msra.mxu0 %v5593
      %5758 = vmatprep.subr.bf16.mxu0 0
      %5759 = vmatpush2.bf16.msra.mxu0 %v5592
      %5760 = vmatprep.mubr.bf16.mxu0 %v5009
      %5761 = vmatmul.mubr.bf16.gmra.mxu0 %v5008
      %v5762 = vpop.f32.mrf.mxu0
      %v5763 = vadd.f32 %v4558, %v5762
      %v5764 = vpop.f32.mrf.mxu0
      %v5765 = vpop.f32.mrf.mxu0
      %v5766 = vadd.f32 %v4558, %v5765
      %v5767 = vpop.f32.mrf.mxu0
      %5768 = vmatprep.mubr.bf16.mxu0 %v5018
      %5769 = vmatmul.mubr.bf16.gmra.mxu0 %v5017
      %v5770 = vpop.f32.mrf.mxu0
      %v5771 = vadd.f32 %v4558, %v5770
      %v5772 = vpop.f32.mrf.mxu0
      %v5773 = vpop.f32.mrf.mxu0
      %v5774 = vadd.f32 %v4558, %v5773
      %v5775 = vpop.f32.mrf.mxu0
      %5776 = vmatprep.mubr.bf16.mxu0 %v5027
      %5777 = vmatmul.mubr.bf16.gmra.mxu0 %v5026
      %v5778 = vpop.f32.mrf.mxu0
      %v5779 = vadd.f32 %v4558, %v5778
      %v5780 = vpop.f32.mrf.mxu0
      %v5781 = vpop.f32.mrf.mxu0
      %v5782 = vadd.f32 %v4558, %v5781
      %v5783 = vpop.f32.mrf.mxu0
      %5784 = vmatprep.mubr.bf16.mxu0 %v5036
      %5785 = vmatmul.mubr.bf16.gmra.mxu0 %v5035
      %v5786 = vpop.f32.mrf.mxu0
      %v5787 = vadd.f32 %v4558, %v5786
      %v5788 = vpop.f32.mrf.mxu0
      %v5789 = vpop.f32.mrf.mxu0
      %v5790 = vadd.f32 %v4558, %v5789
      %v5791 = vpop.f32.mrf.mxu0
      %5792 = vmatprep.mubr.bf16.mxu0 %v5045
      %5793 = vmatmul.mubr.bf16.gmra.mxu0 %v5044
      %v5794 = vpop.f32.mrf.mxu0
      %v5795 = vadd.f32 %v4558, %v5794
      %v5796 = vpop.f32.mrf.mxu0
      %v5797 = vpop.f32.mrf.mxu0
      %v5798 = vadd.f32 %v4558, %v5797
      %v5799 = vpop.f32.mrf.mxu0
      %5800 = vmatprep.mubr.bf16.mxu0 %v5054
      %5801 = vmatmul.mubr.bf16.gmra.mxu0 %v5053
      %v5802 = vpop.f32.mrf.mxu0
      %v5803 = vadd.f32 %v4558, %v5802
      %v5804 = vpop.f32.mrf.mxu0
      %v5805 = vpop.f32.mrf.mxu0
      %v5806 = vadd.f32 %v4558, %v5805
      %v5807 = vpop.f32.mrf.mxu0
      %5808 = vmatprep.mubr.bf16.mxu0 %v5063
      %5809 = vmatmul.mubr.bf16.gmra.mxu0 %v5062
      %v5810 = vpop.f32.mrf.mxu0
      %v5811 = vadd.f32 %v4558, %v5810
      %v5812 = vpop.f32.mrf.mxu0
      %v5813 = vpop.f32.mrf.mxu0
      %v5814 = vadd.f32 %v4558, %v5813
      %v5815 = vpop.f32.mrf.mxu0
      %5816 = vmatprep.mubr.bf16.mxu0 %v5072
      %5817 = vmatmul.mubr.bf16.gmra.mxu0 %v5071
      %v5818 = vpop.f32.mrf.mxu0
      %v5819 = vadd.f32 %v4558, %v5818
      %v5820 = vpop.f32.mrf.mxu0
      %v5821 = vpop.f32.mrf.mxu0
      %v5822 = vadd.f32 %v4558, %v5821
      %v5823 = vpop.f32.mrf.mxu0
      %5824 = vmatprep.mubr.bf16.mxu0 %v5081
      %5825 = vmatmul.mubr.bf16.gmra.mxu0 %v5080
      %v5826 = vpop.f32.mrf.mxu0
      %v5827 = vadd.f32 %v4558, %v5826
      %v5828 = vpop.f32.mrf.mxu0
      %v5829 = vpop.f32.mrf.mxu0
      %v5830 = vadd.f32 %v4558, %v5829
      %v5831 = vpop.f32.mrf.mxu0
      %5832 = vmatprep.mubr.bf16.mxu0 %v5090
      %5833 = vmatmul.mubr.bf16.gmra.mxu0 %v5089
      %v5834 = vpop.f32.mrf.mxu0
      %v5835 = vadd.f32 %v4558, %v5834
      %v5836 = vpop.f32.mrf.mxu0
      %v5837 = vpop.f32.mrf.mxu0
      %v5838 = vadd.f32 %v4558, %v5837
      %v5839 = vpop.f32.mrf.mxu0
      %5840 = vmatprep.mubr.bf16.mxu0 %v5099
      %5841 = vmatmul.mubr.bf16.gmra.mxu0 %v5098
      %v5842 = vpop.f32.mrf.mxu0
      %v5843 = vadd.f32 %v4558, %v5842
      %v5844 = vpop.f32.mrf.mxu0
      %v5845 = vpop.f32.mrf.mxu0
      %v5846 = vadd.f32 %v4558, %v5845
      %v5847 = vpop.f32.mrf.mxu0
      %5848 = vmatprep.mubr.bf16.mxu0 %v5108
      %5849 = vmatmul.mubr.bf16.gmra.mxu0 %v5107
      %v5850 = vpop.f32.mrf.mxu0
      %v5851 = vadd.f32 %v4558, %v5850
      %v5852 = vpop.f32.mrf.mxu0
      %v5853 = vpop.f32.mrf.mxu0
      %v5854 = vadd.f32 %v4558, %v5853
      %v5855 = vpop.f32.mrf.mxu0
      %5856 = vmatprep.mubr.bf16.mxu0 %v5117
      %5857 = vmatmul.mubr.bf16.gmra.mxu0 %v5116
      %v5858 = vpop.f32.mrf.mxu0
      %v5859 = vadd.f32 %v4558, %v5858
      %v5860 = vpop.f32.mrf.mxu0
      %v5861 = vpop.f32.mrf.mxu0
      %v5862 = vadd.f32 %v4558, %v5861
      %v5863 = vpop.f32.mrf.mxu0
      %5864 = vmatprep.mubr.bf16.mxu0 %v5126
      %5865 = vmatmul.mubr.bf16.gmra.mxu0 %v5125
      %v5866 = vpop.f32.mrf.mxu0
      %v5867 = vadd.f32 %v4558, %v5866
      %v5868 = vpop.f32.mrf.mxu0
      %v5869 = vpop.f32.mrf.mxu0
      %v5870 = vadd.f32 %v4558, %v5869
      %v5871 = vpop.f32.mrf.mxu0
      %5872 = vmatprep.mubr.bf16.mxu0 %v5135
      %5873 = vmatmul.mubr.bf16.gmra.mxu0 %v5134
      %v5874 = vpop.f32.mrf.mxu0
      %v5875 = vadd.f32 %v4558, %v5874
      %v5876 = vpop.f32.mrf.mxu0
      %v5877 = vpop.f32.mrf.mxu0
      %v5878 = vadd.f32 %v4558, %v5877
      %v5879 = vpop.f32.mrf.mxu0
      %5880 = vmatprep.mubr.bf16.mxu0 %v5144
      %5881 = vmatmul.mubr.bf16.gmra.mxu0 %v5143
      %v5882 = vpop.f32.mrf.mxu0
      %v5883 = vadd.f32 %v4558, %v5882
      %v5884 = vpop.f32.mrf.mxu0
      %v5885 = vpop.f32.mrf.mxu0
      %v5886 = vadd.f32 %v4558, %v5885
      %v5887 = vpop.f32.mrf.mxu0
      %5888 = vdwg.mxu0
      %5889 = vmatprep.subr.bf16.mxu0 0
      %5890 = vmatpush1.bf16.msra.mxu0 %v5607
      %5891 = vmatprep.subr.bf16.mxu0 0
      %5892 = vmatpush1.bf16.msra.mxu0 %v5606
      %5893 = vmatprep.subr.bf16.mxu0 0
      %5894 = vmatpush1.bf16.msra.mxu0 %v5605
      %5895 = vmatprep.subr.bf16.mxu0 0
      %5896 = vmatpush1.bf16.msra.mxu0 %v5604
      %5897 = vmatprep.subr.bf16.mxu0 0
      %5898 = vmatpush1.bf16.msra.mxu0 %v5603
      %5899 = vmatprep.subr.bf16.mxu0 0
      %5900 = vmatpush1.bf16.msra.mxu0 %v5602
      %5901 = vmatprep.subr.bf16.mxu0 0
      %5902 = vmatpush1.bf16.msra.mxu0 %v5601
      %5903 = vmatprep.subr.bf16.mxu0 0
      %5904 = vmatpush1.bf16.msra.mxu0 %v5600
      %5905 = vmatprep.subr.bf16.mxu0 0
      %5906 = vmatpush2.bf16.msra.mxu0 %v5615
      %5907 = vmatprep.subr.bf16.mxu0 0
      %5908 = vmatpush2.bf16.msra.mxu0 %v5614
      %5909 = vmatprep.subr.bf16.mxu0 0
      %5910 = vmatpush2.bf16.msra.mxu0 %v5613
      %5911 = vmatprep.subr.bf16.mxu0 0
      %5912 = vmatpush2.bf16.msra.mxu0 %v5612
      %5913 = vmatprep.subr.bf16.mxu0 0
      %5914 = vmatpush2.bf16.msra.mxu0 %v5611
      %5915 = vmatprep.subr.bf16.mxu0 0
      %5916 = vmatpush2.bf16.msra.mxu0 %v5610
      %5917 = vmatprep.subr.bf16.mxu0 0
      %5918 = vmatpush2.bf16.msra.mxu0 %v5609
      %5919 = vmatprep.subr.bf16.mxu0 0
      %5920 = vmatpush2.bf16.msra.mxu0 %v5608
      %5921 = vmatprep.mubr.bf16.mxu0 %v5011
      %5922 = vmatmul.mubr.bf16.gmra.mxu0 %v5010
      %v5923 = vpop.f32.mrf.mxu0
      %v5924 = vadd.f32 %v5763, %v5923
      %v5925 = vpop.f32.mrf.mxu0
      %v5926 = vpop.f32.mrf.mxu0
      %v5927 = vadd.f32 %v5766, %v5926
      %v5928 = vpop.f32.mrf.mxu0
      %5929 = vmatprep.mubr.bf16.mxu0 %v5020
      %5930 = vmatmul.mubr.bf16.gmra.mxu0 %v5019
      %v5931 = vpop.f32.mrf.mxu0
      %v5932 = vadd.f32 %v5771, %v5931
      %v5933 = vpop.f32.mrf.mxu0
      %v5934 = vpop.f32.mrf.mxu0
      %v5935 = vadd.f32 %v5774, %v5934
      %v5936 = vpop.f32.mrf.mxu0
      %5937 = vmatprep.mubr.bf16.mxu0 %v5029
      %5938 = vmatmul.mubr.bf16.gmra.mxu0 %v5028
      %v5939 = vpop.f32.mrf.mxu0
      %v5940 = vadd.f32 %v5779, %v5939
      %v5941 = vpop.f32.mrf.mxu0
      %v5942 = vpop.f32.mrf.mxu0
      %v5943 = vadd.f32 %v5782, %v5942
      %v5944 = vpop.f32.mrf.mxu0
      %5945 = vmatprep.mubr.bf16.mxu0 %v5038
      %5946 = vmatmul.mubr.bf16.gmra.mxu0 %v5037
      %v5947 = vpop.f32.mrf.mxu0
      %v5948 = vadd.f32 %v5787, %v5947
      %v5949 = vpop.f32.mrf.mxu0
      %v5950 = vpop.f32.mrf.mxu0
      %v5951 = vadd.f32 %v5790, %v5950
      %v5952 = vpop.f32.mrf.mxu0
      %5953 = vmatprep.mubr.bf16.mxu0 %v5047
      %5954 = vmatmul.mubr.bf16.gmra.mxu0 %v5046
      %v5955 = vpop.f32.mrf.mxu0
      %v5956 = vadd.f32 %v5795, %v5955
      %v5957 = vpop.f32.mrf.mxu0
      %v5958 = vpop.f32.mrf.mxu0
      %v5959 = vadd.f32 %v5798, %v5958
      %v5960 = vpop.f32.mrf.mxu0
      %5961 = vmatprep.mubr.bf16.mxu0 %v5056
      %5962 = vmatmul.mubr.bf16.gmra.mxu0 %v5055
      %v5963 = vpop.f32.mrf.mxu0
      %v5964 = vadd.f32 %v5803, %v5963
      %v5965 = vpop.f32.mrf.mxu0
      %v5966 = vpop.f32.mrf.mxu0
      %v5967 = vadd.f32 %v5806, %v5966
      %v5968 = vpop.f32.mrf.mxu0
      %5969 = vmatprep.mubr.bf16.mxu0 %v5065
      %5970 = vmatmul.mubr.bf16.gmra.mxu0 %v5064
      %v5971 = vpop.f32.mrf.mxu0
      %v5972 = vadd.f32 %v5811, %v5971
      %v5973 = vpop.f32.mrf.mxu0
      %v5974 = vpop.f32.mrf.mxu0
      %v5975 = vadd.f32 %v5814, %v5974
      %v5976 = vpop.f32.mrf.mxu0
      %5977 = vmatprep.mubr.bf16.mxu0 %v5074
      %5978 = vmatmul.mubr.bf16.gmra.mxu0 %v5073
      %v5979 = vpop.f32.mrf.mxu0
      %v5980 = vadd.f32 %v5819, %v5979
      %v5981 = vpop.f32.mrf.mxu0
      %v5982 = vpop.f32.mrf.mxu0
      %v5983 = vadd.f32 %v5822, %v5982
      %v5984 = vpop.f32.mrf.mxu0
      %5985 = vmatprep.mubr.bf16.mxu0 %v5083
      %5986 = vmatmul.mubr.bf16.gmra.mxu0 %v5082
      %v5987 = vpop.f32.mrf.mxu0
      %v5988 = vadd.f32 %v5827, %v5987
      %v5989 = vpop.f32.mrf.mxu0
      %v5990 = vpop.f32.mrf.mxu0
      %v5991 = vadd.f32 %v5830, %v5990
      %v5992 = vpop.f32.mrf.mxu0
      %5993 = vmatprep.mubr.bf16.mxu0 %v5092
      %5994 = vmatmul.mubr.bf16.gmra.mxu0 %v5091
      %v5995 = vpop.f32.mrf.mxu0
      %v5996 = vadd.f32 %v5835, %v5995
      %v5997 = vpop.f32.mrf.mxu0
      %v5998 = vpop.f32.mrf.mxu0
      %v5999 = vadd.f32 %v5838, %v5998
      %v6000 = vpop.f32.mrf.mxu0
      %6001 = vmatprep.mubr.bf16.mxu0 %v5101
      %6002 = vmatmul.mubr.bf16.gmra.mxu0 %v5100
      %v6003 = vpop.f32.mrf.mxu0
      %v6004 = vadd.f32 %v5843, %v6003
      %v6005 = vpop.f32.mrf.mxu0
      %v6006 = vpop.f32.mrf.mxu0
      %v6007 = vadd.f32 %v5846, %v6006
      %v6008 = vpop.f32.mrf.mxu0
      %6009 = vmatprep.mubr.bf16.mxu0 %v5110
      %6010 = vmatmul.mubr.bf16.gmra.mxu0 %v5109
      %v6011 = vpop.f32.mrf.mxu0
      %v6012 = vadd.f32 %v5851, %v6011
      %v6013 = vpop.f32.mrf.mxu0
      %v6014 = vpop.f32.mrf.mxu0
      %v6015 = vadd.f32 %v5854, %v6014
      %v6016 = vpop.f32.mrf.mxu0
      %6017 = vmatprep.mubr.bf16.mxu0 %v5119
      %6018 = vmatmul.mubr.bf16.gmra.mxu0 %v5118
      %v6019 = vpop.f32.mrf.mxu0
      %v6020 = vadd.f32 %v5859, %v6019
      %v6021 = vpop.f32.mrf.mxu0
      %v6022 = vpop.f32.mrf.mxu0
      %v6023 = vadd.f32 %v5862, %v6022
      %v6024 = vpop.f32.mrf.mxu0
      %6025 = vmatprep.mubr.bf16.mxu0 %v5128
      %6026 = vmatmul.mubr.bf16.gmra.mxu0 %v5127
      %v6027 = vpop.f32.mrf.mxu0
      %v6028 = vadd.f32 %v5867, %v6027
      %v6029 = vpop.f32.mrf.mxu0
      %v6030 = vpop.f32.mrf.mxu0
      %v6031 = vadd.f32 %v5870, %v6030
      %v6032 = vpop.f32.mrf.mxu0
      %6033 = vmatprep.mubr.bf16.mxu0 %v5137
      %6034 = vmatmul.mubr.bf16.gmra.mxu0 %v5136
      %v6035 = vpop.f32.mrf.mxu0
      %v6036 = vadd.f32 %v5875, %v6035
      %v6037 = vpop.f32.mrf.mxu0
      %v6038 = vpop.f32.mrf.mxu0
      %v6039 = vadd.f32 %v5878, %v6038
      %v6040 = vpop.f32.mrf.mxu0
      %6041 = vmatprep.mubr.bf16.mxu0 %v5146
      %6042 = vmatmul.mubr.bf16.gmra.mxu0 %v5145
      %v6043 = vpop.f32.mrf.mxu0
      %v6044 = vadd.f32 %v5883, %v6043
      %v6045 = vpop.f32.mrf.mxu0
      %v6046 = vpop.f32.mrf.mxu0
      %v6047 = vadd.f32 %v5886, %v6046
      %v6048 = vpop.f32.mrf.mxu0
      %6049 = vdwg.mxu0
      %6050 = vmatprep.subr.bf16.mxu0 0
      %6051 = vmatpush1.bf16.msra.mxu0 %v5623
      %6052 = vmatprep.subr.bf16.mxu0 0
      %6053 = vmatpush1.bf16.msra.mxu0 %v5622
      %6054 = vmatprep.subr.bf16.mxu0 0
      %6055 = vmatpush1.bf16.msra.mxu0 %v5621
      %6056 = vmatprep.subr.bf16.mxu0 0
      %6057 = vmatpush1.bf16.msra.mxu0 %v5620
      %6058 = vmatprep.subr.bf16.mxu0 0
      %6059 = vmatpush1.bf16.msra.mxu0 %v5619
      %6060 = vmatprep.subr.bf16.mxu0 0
      %6061 = vmatpush1.bf16.msra.mxu0 %v5618
      %6062 = vmatprep.subr.bf16.mxu0 0
      %6063 = vmatpush1.bf16.msra.mxu0 %v5617
      %6064 = vmatprep.subr.bf16.mxu0 0
      %6065 = vmatpush1.bf16.msra.mxu0 %v5616
      %6066 = vmatprep.subr.bf16.mxu0 0
      %6067 = vmatpush2.bf16.msra.mxu0 %v5631
      %6068 = vmatprep.subr.bf16.mxu0 0
      %6069 = vmatpush2.bf16.msra.mxu0 %v5630
      %6070 = vmatprep.subr.bf16.mxu0 0
      %6071 = vmatpush2.bf16.msra.mxu0 %v5629
      %6072 = vmatprep.subr.bf16.mxu0 0
      %6073 = vmatpush2.bf16.msra.mxu0 %v5628
      %6074 = vmatprep.subr.bf16.mxu0 0
      %6075 = vmatpush2.bf16.msra.mxu0 %v5627
      %6076 = vmatprep.subr.bf16.mxu0 0
      %6077 = vmatpush2.bf16.msra.mxu0 %v5626
      %6078 = vmatprep.subr.bf16.mxu0 0
      %6079 = vmatpush2.bf16.msra.mxu0 %v5625
      %6080 = vmatprep.subr.bf16.mxu0 0
      %6081 = vmatpush2.bf16.msra.mxu0 %v5624
      %6082 = vmatprep.mubr.bf16.mxu0 %v5013
      %6083 = vmatmul.mubr.bf16.gmra.mxu0 %v5012
      %v6084 = vpop.f32.mrf.mxu0
      %v6085 = vadd.f32 %v5924, %v6084
      %v6086 = vpop.f32.mrf.mxu0
      %v6087 = vpop.f32.mrf.mxu0
      %v6088 = vadd.f32 %v5927, %v6087
      %v6089 = vpop.f32.mrf.mxu0
      %6090 = vmatprep.mubr.bf16.mxu0 %v5022
      %6091 = vmatmul.mubr.bf16.gmra.mxu0 %v5021
      %v6092 = vpop.f32.mrf.mxu0
      %v6093 = vadd.f32 %v5932, %v6092
      %v6094 = vpop.f32.mrf.mxu0
      %v6095 = vpop.f32.mrf.mxu0
      %v6096 = vadd.f32 %v5935, %v6095
      %v6097 = vpop.f32.mrf.mxu0
      %6098 = vmatprep.mubr.bf16.mxu0 %v5031
      %6099 = vmatmul.mubr.bf16.gmra.mxu0 %v5030
      %v6100 = vpop.f32.mrf.mxu0
      %v6101 = vadd.f32 %v5940, %v6100
      %v6102 = vpop.f32.mrf.mxu0
      %v6103 = vpop.f32.mrf.mxu0
      %v6104 = vadd.f32 %v5943, %v6103
      %v6105 = vpop.f32.mrf.mxu0
      %6106 = vmatprep.mubr.bf16.mxu0 %v5040
      %6107 = vmatmul.mubr.bf16.gmra.mxu0 %v5039
      %v6108 = vpop.f32.mrf.mxu0
      %v6109 = vadd.f32 %v5948, %v6108
      %v6110 = vpop.f32.mrf.mxu0
      %v6111 = vpop.f32.mrf.mxu0
      %v6112 = vadd.f32 %v5951, %v6111
      %v6113 = vpop.f32.mrf.mxu0
      %6114 = vmatprep.mubr.bf16.mxu0 %v5049
      %6115 = vmatmul.mubr.bf16.gmra.mxu0 %v5048
      %v6116 = vpop.f32.mrf.mxu0
      %v6117 = vadd.f32 %v5956, %v6116
      %v6118 = vpop.f32.mrf.mxu0
      %v6119 = vpop.f32.mrf.mxu0
      %v6120 = vadd.f32 %v5959, %v6119
      %v6121 = vpop.f32.mrf.mxu0
      %6122 = vmatprep.mubr.bf16.mxu0 %v5058
      %6123 = vmatmul.mubr.bf16.gmra.mxu0 %v5057
      %v6124 = vpop.f32.mrf.mxu0
      %v6125 = vadd.f32 %v5964, %v6124
      %v6126 = vpop.f32.mrf.mxu0
      %v6127 = vpop.f32.mrf.mxu0
      %v6128 = vadd.f32 %v5967, %v6127
      %v6129 = vpop.f32.mrf.mxu0
      %6130 = vmatprep.mubr.bf16.mxu0 %v5067
      %6131 = vmatmul.mubr.bf16.gmra.mxu0 %v5066
      %v6132 = vpop.f32.mrf.mxu0
      %v6133 = vadd.f32 %v5972, %v6132
      %v6134 = vpop.f32.mrf.mxu0
      %v6135 = vpop.f32.mrf.mxu0
      %v6136 = vadd.f32 %v5975, %v6135
      %v6137 = vpop.f32.mrf.mxu0
      %6138 = vmatprep.mubr.bf16.mxu0 %v5076
      %6139 = vmatmul.mubr.bf16.gmra.mxu0 %v5075
      %v6140 = vpop.f32.mrf.mxu0
      %v6141 = vadd.f32 %v5980, %v6140
      %v6142 = vpop.f32.mrf.mxu0
      %v6143 = vpop.f32.mrf.mxu0
      %v6144 = vadd.f32 %v5983, %v6143
      %v6145 = vpop.f32.mrf.mxu0
      %6146 = vmatprep.mubr.bf16.mxu0 %v5085
      %6147 = vmatmul.mubr.bf16.gmra.mxu0 %v5084
      %v6148 = vpop.f32.mrf.mxu0
      %v6149 = vadd.f32 %v5988, %v6148
      %v6150 = vpop.f32.mrf.mxu0
      %v6151 = vpop.f32.mrf.mxu0
      %v6152 = vadd.f32 %v5991, %v6151
      %v6153 = vpop.f32.mrf.mxu0
      %6154 = vmatprep.mubr.bf16.mxu0 %v5094
      %6155 = vmatmul.mubr.bf16.gmra.mxu0 %v5093
      %v6156 = vpop.f32.mrf.mxu0
      %v6157 = vadd.f32 %v5996, %v6156
      %v6158 = vpop.f32.mrf.mxu0
      %v6159 = vpop.f32.mrf.mxu0
      %v6160 = vadd.f32 %v5999, %v6159
      %v6161 = vpop.f32.mrf.mxu0
      %6162 = vmatprep.mubr.bf16.mxu0 %v5103
      %6163 = vmatmul.mubr.bf16.gmra.mxu0 %v5102
      %v6164 = vpop.f32.mrf.mxu0
      %v6165 = vadd.f32 %v6004, %v6164
      %v6166 = vpop.f32.mrf.mxu0
      %v6167 = vpop.f32.mrf.mxu0
      %v6168 = vadd.f32 %v6007, %v6167
      %v6169 = vpop.f32.mrf.mxu0
      %6170 = vmatprep.mubr.bf16.mxu0 %v5112
      %6171 = vmatmul.mubr.bf16.gmra.mxu0 %v5111
      %v6172 = vpop.f32.mrf.mxu0
      %v6173 = vadd.f32 %v6012, %v6172
      %v6174 = vpop.f32.mrf.mxu0
      %v6175 = vpop.f32.mrf.mxu0
      %v6176 = vadd.f32 %v6015, %v6175
      %v6177 = vpop.f32.mrf.mxu0
      %6178 = vmatprep.mubr.bf16.mxu0 %v5121
      %6179 = vmatmul.mubr.bf16.gmra.mxu0 %v5120
      %v6180 = vpop.f32.mrf.mxu0
      %v6181 = vadd.f32 %v6020, %v6180
      %v6182 = vpop.f32.mrf.mxu0
      %v6183 = vpop.f32.mrf.mxu0
      %v6184 = vadd.f32 %v6023, %v6183
      %v6185 = vpop.f32.mrf.mxu0
      %6186 = vmatprep.mubr.bf16.mxu0 %v5130
      %6187 = vmatmul.mubr.bf16.gmra.mxu0 %v5129
      %v6188 = vpop.f32.mrf.mxu0
      %v6189 = vadd.f32 %v6028, %v6188
      %v6190 = vpop.f32.mrf.mxu0
      %v6191 = vpop.f32.mrf.mxu0
      %v6192 = vadd.f32 %v6031, %v6191
      %v6193 = vpop.f32.mrf.mxu0
      %6194 = vmatprep.mubr.bf16.mxu0 %v5139
      %6195 = vmatmul.mubr.bf16.gmra.mxu0 %v5138
      %v6196 = vpop.f32.mrf.mxu0
      %v6197 = vadd.f32 %v6036, %v6196
      %v6198 = vpop.f32.mrf.mxu0
      %v6199 = vpop.f32.mrf.mxu0
      %v6200 = vadd.f32 %v6039, %v6199
      %v6201 = vpop.f32.mrf.mxu0
      %6202 = vmatprep.mubr.bf16.mxu0 %v5148
      %6203 = vmatmul.mubr.bf16.gmra.mxu0 %v5147
      %v6204 = vpop.f32.mrf.mxu0
      %v6205 = vadd.f32 %v6044, %v6204
      %v6206 = vpop.f32.mrf.mxu0
      %v6207 = vpop.f32.mrf.mxu0
      %v6208 = vadd.f32 %v6047, %v6207
      %v6209 = vpop.f32.mrf.mxu0
      %6210 = vdwg.mxu0
      %6211 = vmatprep.subr.bf16.mxu0 0
      %6212 = vmatpush1.bf16.msra.mxu0 %v5639
      %6213 = vmatprep.subr.bf16.mxu0 0
      %6214 = vmatpush1.bf16.msra.mxu0 %v5638
      %6215 = vmatprep.subr.bf16.mxu0 0
      %6216 = vmatpush1.bf16.msra.mxu0 %v5637
      %6217 = vmatprep.subr.bf16.mxu0 0
      %6218 = vmatpush1.bf16.msra.mxu0 %v5636
      %6219 = vmatprep.subr.bf16.mxu0 0
      %6220 = vmatpush1.bf16.msra.mxu0 %v5635
      %6221 = vmatprep.subr.bf16.mxu0 0
      %6222 = vmatpush1.bf16.msra.mxu0 %v5634
      %6223 = vmatprep.subr.bf16.mxu0 0
      %6224 = vmatpush1.bf16.msra.mxu0 %v5633
      %6225 = vmatprep.subr.bf16.mxu0 0
      %6226 = vmatpush1.bf16.msra.mxu0 %v5632
      %6227 = vmatprep.subr.bf16.mxu0 0
      %6228 = vmatpush2.bf16.msra.mxu0 %v5647
      %6229 = vmatprep.subr.bf16.mxu0 0
      %6230 = vmatpush2.bf16.msra.mxu0 %v5646
      %6231 = vmatprep.subr.bf16.mxu0 0
      %6232 = vmatpush2.bf16.msra.mxu0 %v5645
      %6233 = vmatprep.subr.bf16.mxu0 0
      %6234 = vmatpush2.bf16.msra.mxu0 %v5644
      %6235 = vmatprep.subr.bf16.mxu0 0
      %6236 = vmatpush2.bf16.msra.mxu0 %v5643
      %6237 = vmatprep.subr.bf16.mxu0 0
      %6238 = vmatpush2.bf16.msra.mxu0 %v5642
      %6239 = vmatprep.subr.bf16.mxu0 0
      %6240 = vmatpush2.bf16.msra.mxu0 %v5641
      %6241 = vmatprep.subr.bf16.mxu0 0
      %6242 = vmatpush2.bf16.msra.mxu0 %v5640
      %6243 = vmatprep.mubr.bf16.mxu0 %v5015
      %6244 = vmatmul.mubr.bf16.gmra.mxu0 %v5014
      %v6245 = vpop.f32.mrf.mxu0
      %v6246 = vadd.f32 %v6085, %v6245
      %v6247 = vpop.f32.mrf.mxu0
      %v6248 = vpop.f32.mrf.mxu0
      %v6249 = vadd.f32 %v6088, %v6248
      %v6250 = vpop.f32.mrf.mxu0
      %6251 = vmatprep.mubr.bf16.mxu0 %v5024
      %6252 = vmatmul.mubr.bf16.gmra.mxu0 %v5023
      %v6253 = vpop.f32.mrf.mxu0
      %v6254 = vadd.f32 %v6093, %v6253
      %v6255 = vpop.f32.mrf.mxu0
      %v6256 = vpop.f32.mrf.mxu0
      %v6257 = vadd.f32 %v6096, %v6256
      %v6258 = vpop.f32.mrf.mxu0
      %6259 = vmatprep.mubr.bf16.mxu0 %v5033
      %6260 = vmatmul.mubr.bf16.gmra.mxu0 %v5032
      %v6261 = vpop.f32.mrf.mxu0
      %v6262 = vadd.f32 %v6101, %v6261
      %v6263 = vpop.f32.mrf.mxu0
      %v6264 = vpop.f32.mrf.mxu0
      %v6265 = vadd.f32 %v6104, %v6264
      %v6266 = vpop.f32.mrf.mxu0
      %6267 = vmatprep.mubr.bf16.mxu0 %v5042
      %6268 = vmatmul.mubr.bf16.gmra.mxu0 %v5041
      %v6269 = vpop.f32.mrf.mxu0
      %v6270 = vadd.f32 %v6109, %v6269
      %v6271 = vpop.f32.mrf.mxu0
      %v6272 = vpop.f32.mrf.mxu0
      %v6273 = vadd.f32 %v6112, %v6272
      %v6274 = vpop.f32.mrf.mxu0
      %6275 = vmatprep.mubr.bf16.mxu0 %v5051
      %6276 = vmatmul.mubr.bf16.gmra.mxu0 %v5050
      %v6277 = vpop.f32.mrf.mxu0
      %v6278 = vadd.f32 %v6117, %v6277
      %v6279 = vpop.f32.mrf.mxu0
      %v6280 = vpop.f32.mrf.mxu0
      %v6281 = vadd.f32 %v6120, %v6280
      %v6282 = vpop.f32.mrf.mxu0
      %6283 = vmatprep.mubr.bf16.mxu0 %v5060
      %6284 = vmatmul.mubr.bf16.gmra.mxu0 %v5059
      %v6285 = vpop.f32.mrf.mxu0
      %v6286 = vadd.f32 %v6125, %v6285
      %v6287 = vpop.f32.mrf.mxu0
      %v6288 = vpop.f32.mrf.mxu0
      %v6289 = vadd.f32 %v6128, %v6288
      %v6290 = vpop.f32.mrf.mxu0
      %6291 = vmatprep.mubr.bf16.mxu0 %v5069
      %6292 = vmatmul.mubr.bf16.gmra.mxu0 %v5068
      %v6293 = vpop.f32.mrf.mxu0
      %v6294 = vadd.f32 %v6133, %v6293
      %v6295 = vpop.f32.mrf.mxu0
      %v6296 = vpop.f32.mrf.mxu0
      %v6297 = vadd.f32 %v6136, %v6296
      %v6298 = vpop.f32.mrf.mxu0
      %6299 = vmatprep.mubr.bf16.mxu0 %v5078
      %6300 = vmatmul.mubr.bf16.gmra.mxu0 %v5077
      %v6301 = vpop.f32.mrf.mxu0
      %v6302 = vadd.f32 %v6141, %v6301
      %v6303 = vpop.f32.mrf.mxu0
      %v6304 = vpop.f32.mrf.mxu0
      %v6305 = vadd.f32 %v6144, %v6304
      %v6306 = vpop.f32.mrf.mxu0
      %6307 = vmatprep.mubr.bf16.mxu0 %v5087
      %6308 = vmatmul.mubr.bf16.gmra.mxu0 %v5086
      %v6309 = vpop.f32.mrf.mxu0
      %v6310 = vadd.f32 %v6149, %v6309
      %v6311 = vpop.f32.mrf.mxu0
      %v6312 = vpop.f32.mrf.mxu0
      %v6313 = vadd.f32 %v6152, %v6312
      %v6314 = vpop.f32.mrf.mxu0
      %6315 = vmatprep.mubr.bf16.mxu0 %v5096
      %6316 = vmatmul.mubr.bf16.gmra.mxu0 %v5095
      %v6317 = vpop.f32.mrf.mxu0
      %v6318 = vadd.f32 %v6157, %v6317
      %v6319 = vpop.f32.mrf.mxu0
      %v6320 = vpop.f32.mrf.mxu0
      %v6321 = vadd.f32 %v6160, %v6320
      %v6322 = vpop.f32.mrf.mxu0
      %6323 = vmatprep.mubr.bf16.mxu0 %v5105
      %6324 = vmatmul.mubr.bf16.gmra.mxu0 %v5104
      %v6325 = vpop.f32.mrf.mxu0
      %v6326 = vadd.f32 %v6165, %v6325
      %v6327 = vpop.f32.mrf.mxu0
      %v6328 = vpop.f32.mrf.mxu0
      %v6329 = vadd.f32 %v6168, %v6328
      %v6330 = vpop.f32.mrf.mxu0
      %6331 = vmatprep.mubr.bf16.mxu0 %v5114
      %6332 = vmatmul.mubr.bf16.gmra.mxu0 %v5113
      %v6333 = vpop.f32.mrf.mxu0
      %v6334 = vadd.f32 %v6173, %v6333
      %v6335 = vpop.f32.mrf.mxu0
      %v6336 = vpop.f32.mrf.mxu0
      %v6337 = vadd.f32 %v6176, %v6336
      %v6338 = vpop.f32.mrf.mxu0
      %6339 = vmatprep.mubr.bf16.mxu0 %v5123
      %6340 = vmatmul.mubr.bf16.gmra.mxu0 %v5122
      %v6341 = vpop.f32.mrf.mxu0
      %v6342 = vadd.f32 %v6181, %v6341
      %v6343 = vpop.f32.mrf.mxu0
      %v6344 = vpop.f32.mrf.mxu0
      %v6345 = vadd.f32 %v6184, %v6344
      %v6346 = vpop.f32.mrf.mxu0
      %6347 = vmatprep.mubr.bf16.mxu0 %v5132
      %6348 = vmatmul.mubr.bf16.gmra.mxu0 %v5131
      %v6349 = vpop.f32.mrf.mxu0
      %v6350 = vadd.f32 %v6189, %v6349
      %v6351 = vpop.f32.mrf.mxu0
      %v6352 = vpop.f32.mrf.mxu0
      %v6353 = vadd.f32 %v6192, %v6352
      %v6354 = vpop.f32.mrf.mxu0
      %6355 = vmatprep.mubr.bf16.mxu0 %v5141
      %6356 = vmatmul.mubr.bf16.gmra.mxu0 %v5140
      %v6357 = vpop.f32.mrf.mxu0
      %v6358 = vadd.f32 %v6197, %v6357
      %v6359 = vpop.f32.mrf.mxu0
      %v6360 = vpop.f32.mrf.mxu0
      %v6361 = vadd.f32 %v6200, %v6360
      %v6362 = vpop.f32.mrf.mxu0
      %6363 = vmatprep.mubr.bf16.mxu0 %v5150
      %6364 = vmatmul.mubr.bf16.gmra.mxu0 %v5149
      %v6365 = vpop.f32.mrf.mxu0
      %v6366 = vadd.f32 %v6205, %v6365
      %v6367 = vpop.f32.mrf.mxu0
      %v6368 = vpop.f32.mrf.mxu0
      %v6369 = vadd.f32 %v6208, %v6368
      %v6370 = vpop.f32.mrf.mxu0
      %6371 = vdwg.mxu0
      %6372 = vmatprep.subr.bf16.mxu0 0
      %6373 = vmatpush1.bf16.msra.mxu0 %v5655
      %6374 = vmatprep.subr.bf16.mxu0 0
      %6375 = vmatpush1.bf16.msra.mxu0 %v5654
      %6376 = vmatprep.subr.bf16.mxu0 0
      %6377 = vmatpush1.bf16.msra.mxu0 %v5653
      %6378 = vmatprep.subr.bf16.mxu0 0
      %6379 = vmatpush1.bf16.msra.mxu0 %v5652
      %6380 = vmatprep.subr.bf16.mxu0 0
      %6381 = vmatpush1.bf16.msra.mxu0 %v5651
      %6382 = vmatprep.subr.bf16.mxu0 0
      %6383 = vmatpush1.bf16.msra.mxu0 %v5650
      %6384 = vmatprep.subr.bf16.mxu0 0
      %6385 = vmatpush1.bf16.msra.mxu0 %v5649
      %6386 = vmatprep.subr.bf16.mxu0 0
      %6387 = vmatpush1.bf16.msra.mxu0 %v5648
      %6388 = vmatprep.subr.bf16.mxu0 0
      %6389 = vmatpush2.bf16.msra.mxu0 0
      %6390 = vmatprep.subr.bf16.mxu0 0
      %6391 = vmatpush2.bf16.msra.mxu0 0
      %6392 = vmatprep.subr.bf16.mxu0 0
      %6393 = vmatpush2.bf16.msra.mxu0 0
      %6394 = vmatprep.subr.bf16.mxu0 0
      %6395 = vmatpush2.bf16.msra.mxu0 0
      %6396 = vmatprep.subr.bf16.mxu0 0
      %6397 = vmatpush2.bf16.msra.mxu0 0
      %6398 = vmatprep.subr.bf16.mxu0 0
      %6399 = vmatpush2.bf16.msra.mxu0 0
      %6400 = vmatprep.subr.bf16.mxu0 0
      %6401 = vmatpush2.bf16.msra.mxu0 0
      %6402 = vmatprep.subr.bf16.mxu0 0
      %6403 = vmatpush2.bf16.msra.mxu0 0
      %6404 = vmatprep.mubr.bf16.mxu0 0
      %6405 = vmatmul.mubr.bf16.gmra.mxu0 %v5016
      %v6406 = vpop.f32.mrf.mxu0
      %v6407 = vadd.f32 %v6246, %v6406
      %v6408 = vpop.f32.mrf.mxu0
      %v6409 = vpop.f32.mrf.mxu0
      %v6410 = vadd.f32 %v6249, %v6409
      %v6411 = vpop.f32.mrf.mxu0
      %6412 = vmatprep.mubr.bf16.mxu0 0
      %6413 = vmatmul.mubr.bf16.gmra.mxu0 %v5025
      %v6414 = vpop.f32.mrf.mxu0
      %v6415 = vadd.f32 %v6254, %v6414
      %v6416 = vpop.f32.mrf.mxu0
      %v6417 = vpop.f32.mrf.mxu0
      %v6418 = vadd.f32 %v6257, %v6417
      %v6419 = vpop.f32.mrf.mxu0
      %6420 = vmatprep.mubr.bf16.mxu0 0
      %6421 = vmatmul.mubr.bf16.gmra.mxu0 %v5034
      %v6422 = vpop.f32.mrf.mxu0
      %v6423 = vadd.f32 %v6262, %v6422
      %v6424 = vpop.f32.mrf.mxu0
      %v6425 = vpop.f32.mrf.mxu0
      %v6426 = vadd.f32 %v6265, %v6425
      %v6427 = vpop.f32.mrf.mxu0
      %6428 = vmatprep.mubr.bf16.mxu0 0
      %6429 = vmatmul.mubr.bf16.gmra.mxu0 %v5043
      %v6430 = vpop.f32.mrf.mxu0
      %v6431 = vadd.f32 %v6270, %v6430
      %v6432 = vpop.f32.mrf.mxu0
      %v6433 = vpop.f32.mrf.mxu0
      %v6434 = vadd.f32 %v6273, %v6433
      %v6435 = vpop.f32.mrf.mxu0
      %6436 = vmatprep.mubr.bf16.mxu0 0
      %6437 = vmatmul.mubr.bf16.gmra.mxu0 %v5052
      %v6438 = vpop.f32.mrf.mxu0
      %v6439 = vadd.f32 %v6278, %v6438
      %v6440 = vpop.f32.mrf.mxu0
      %v6441 = vpop.f32.mrf.mxu0
      %v6442 = vadd.f32 %v6281, %v6441
      %v6443 = vpop.f32.mrf.mxu0
      %6444 = vmatprep.mubr.bf16.mxu0 0
      %6445 = vmatmul.mubr.bf16.gmra.mxu0 %v5061
      %v6446 = vpop.f32.mrf.mxu0
      %v6447 = vadd.f32 %v6286, %v6446
      %v6448 = vpop.f32.mrf.mxu0
      %v6449 = vpop.f32.mrf.mxu0
      %v6450 = vadd.f32 %v6289, %v6449
      %v6451 = vpop.f32.mrf.mxu0
      %6452 = vmatprep.mubr.bf16.mxu0 0
      %6453 = vmatmul.mubr.bf16.gmra.mxu0 %v5070
      %v6454 = vpop.f32.mrf.mxu0
      %v6455 = vadd.f32 %v6294, %v6454
      %v6456 = vpop.f32.mrf.mxu0
      %v6457 = vpop.f32.mrf.mxu0
      %v6458 = vadd.f32 %v6297, %v6457
      %v6459 = vpop.f32.mrf.mxu0
      %6460 = vmatprep.mubr.bf16.mxu0 0
      %6461 = vmatmul.mubr.bf16.gmra.mxu0 %v5079
      %v6462 = vpop.f32.mrf.mxu0
      %v6463 = vadd.f32 %v6302, %v6462
      %v6464 = vpop.f32.mrf.mxu0
      %v6465 = vpop.f32.mrf.mxu0
      %v6466 = vadd.f32 %v6305, %v6465
      %v6467 = vpop.f32.mrf.mxu0
      %6468 = vmatprep.mubr.bf16.mxu0 0
      %6469 = vmatmul.mubr.bf16.gmra.mxu0 %v5088
      %v6470 = vpop.f32.mrf.mxu0
      %v6471 = vadd.f32 %v6310, %v6470
      %v6472 = vpop.f32.mrf.mxu0
      %v6473 = vpop.f32.mrf.mxu0
      %v6474 = vadd.f32 %v6313, %v6473
      %v6475 = vpop.f32.mrf.mxu0
      %6476 = vmatprep.mubr.bf16.mxu0 0
      %6477 = vmatmul.mubr.bf16.gmra.mxu0 %v5097
      %v6478 = vpop.f32.mrf.mxu0
      %v6479 = vadd.f32 %v6318, %v6478
      %v6480 = vpop.f32.mrf.mxu0
      %v6481 = vpop.f32.mrf.mxu0
      %v6482 = vadd.f32 %v6321, %v6481
      %v6483 = vpop.f32.mrf.mxu0
      %6484 = vmatprep.mubr.bf16.mxu0 0
      %6485 = vmatmul.mubr.bf16.gmra.mxu0 %v5106
      %v6486 = vpop.f32.mrf.mxu0
      %v6487 = vadd.f32 %v6326, %v6486
      %v6488 = vpop.f32.mrf.mxu0
      %v6489 = vpop.f32.mrf.mxu0
      %v6490 = vadd.f32 %v6329, %v6489
      %v6491 = vpop.f32.mrf.mxu0
      %6492 = vmatprep.mubr.bf16.mxu0 0
      %6493 = vmatmul.mubr.bf16.gmra.mxu0 %v5115
      %v6494 = vpop.f32.mrf.mxu0
      %v6495 = vadd.f32 %v6334, %v6494
      %v6496 = vpop.f32.mrf.mxu0
      %v6497 = vpop.f32.mrf.mxu0
      %v6498 = vadd.f32 %v6337, %v6497
      %v6499 = vpop.f32.mrf.mxu0
      %6500 = vmatprep.mubr.bf16.mxu0 0
      %6501 = vmatmul.mubr.bf16.gmra.mxu0 %v5124
      %v6502 = vpop.f32.mrf.mxu0
      %v6503 = vadd.f32 %v6342, %v6502
      %v6504 = vpop.f32.mrf.mxu0
      %v6505 = vpop.f32.mrf.mxu0
      %v6506 = vadd.f32 %v6345, %v6505
      %v6507 = vpop.f32.mrf.mxu0
      %6508 = vmatprep.mubr.bf16.mxu0 0
      %6509 = vmatmul.mubr.bf16.gmra.mxu0 %v5133
      %v6510 = vpop.f32.mrf.mxu0
      %v6511 = vadd.f32 %v6350, %v6510
      %v6512 = vpop.f32.mrf.mxu0
      %v6513 = vpop.f32.mrf.mxu0
      %v6514 = vadd.f32 %v6353, %v6513
      %v6515 = vpop.f32.mrf.mxu0
      %6516 = vmatprep.mubr.bf16.mxu0 0
      %6517 = vmatmul.mubr.bf16.gmra.mxu0 %v5142
      %v6518 = vpop.f32.mrf.mxu0
      %v6519 = vadd.f32 %v6358, %v6518
      %v6520 = vpop.f32.mrf.mxu0
      %v6521 = vpop.f32.mrf.mxu0
      %v6522 = vadd.f32 %v6361, %v6521
      %v6523 = vpop.f32.mrf.mxu0
      %6524 = vmatprep.mubr.bf16.mxu0 0
      %6525 = vmatmul.mubr.bf16.gmra.mxu0 %v5151
      %v6526 = vpop.f32.mrf.mxu0
      %v6527 = vadd.f32 %v6366, %v6526
      %v6528 = vpop.f32.mrf.mxu0
      %v6529 = vpop.f32.mrf.mxu0
      %v6530 = vadd.f32 %v6369, %v6529
      %v6531 = vpop.f32.mrf.mxu0
      %6532 = vdwg.mxu0
      %vm6533 = vcmp.gt.f32.partialorder %v6407, 0.0
      %vm6534 = vcmp.gt.f32.partialorder %v6410, 0.0
      %vm6535 = vcmp.gt.f32.partialorder %v6415, 0.0
      %vm6536 = vcmp.gt.f32.partialorder %v6418, 0.0
      %vm6537 = vcmp.gt.f32.partialorder %v6423, 0.0
      %vm6538 = vcmp.gt.f32.partialorder %v6426, 0.0
      %vm6539 = vcmp.gt.f32.partialorder %v6431, 0.0
      %vm6540 = vcmp.gt.f32.partialorder %v6434, 0.0
      %vm6541 = vcmp.gt.f32.partialorder %v6439, 0.0
      %vm6542 = vcmp.gt.f32.partialorder %v6442, 0.0
      %vm6543 = vcmp.gt.f32.partialorder %v6447, 0.0
      %vm6544 = vcmp.gt.f32.partialorder %v6450, 0.0
      %vm6545 = vcmp.gt.f32.partialorder %v6455, 0.0
      %vm6546 = vcmp.gt.f32.partialorder %v6458, 0.0
      %vm6547 = vcmp.gt.f32.partialorder %v6463, 0.0
      %vm6548 = vcmp.gt.f32.partialorder %v6466, 0.0
      %vm6549 = vcmp.gt.f32.partialorder %v6471, 0.0
      %vm6550 = vcmp.gt.f32.partialorder %v6474, 0.0
      %vm6551 = vcmp.gt.f32.partialorder %v6479, 0.0
      %vm6552 = vcmp.gt.f32.partialorder %v6482, 0.0
      %vm6553 = vcmp.gt.f32.partialorder %v6487, 0.0
      %vm6554 = vcmp.gt.f32.partialorder %v6490, 0.0
      %vm6555 = vcmp.gt.f32.partialorder %v6495, 0.0
      %vm6556 = vcmp.gt.f32.partialorder %v6498, 0.0
      %vm6557 = vcmp.gt.f32.partialorder %v6503, 0.0
      %vm6558 = vcmp.gt.f32.partialorder %v6506, 0.0
      %vm6559 = vcmp.gt.f32.partialorder %v6511, 0.0
      %vm6560 = vcmp.gt.f32.partialorder %v6514, 0.0
      %vm6561 = vcmp.gt.f32.partialorder %v6519, 0.0
      %vm6562 = vcmp.gt.f32.partialorder %v6522, 0.0
      %vm6563 = vcmp.gt.f32.partialorder %v6527, 0.0
      %vm6564 = vcmp.gt.f32.partialorder %v6530, 0.0
      %v6565 = vmul.f32 %v6407, 0.01
      %v6566 = vmul.f32 %v6410, 0.01
      %v6567 = vmul.f32 %v6415, 0.01
      %v6568 = vmul.f32 %v6418, 0.01
      %v6569 = vmul.f32 %v6423, 0.01
      %v6570 = vmul.f32 %v6426, 0.01
      %v6571 = vmul.f32 %v6431, 0.01
      %v6572 = vmul.f32 %v6434, 0.01
      %v6573 = vmul.f32 %v6439, 0.01
      %v6574 = vmul.f32 %v6442, 0.01
      %v6575 = vmul.f32 %v6447, 0.01
      %v6576 = vmul.f32 %v6450, 0.01
      %v6577 = vmul.f32 %v6455, 0.01
      %v6578 = vmul.f32 %v6458, 0.01
      %v6579 = vmul.f32 %v6463, 0.01
      %v6580 = vmul.f32 %v6466, 0.01
      %v6581 = vmul.f32 %v6471, 0.01
      %v6582 = vmul.f32 %v6474, 0.01
      %v6583 = vmul.f32 %v6479, 0.01
      %v6584 = vmul.f32 %v6482, 0.01
      %v6585 = vmul.f32 %v6487, 0.01
      %v6586 = vmul.f32 %v6490, 0.01
      %v6587 = vmul.f32 %v6495, 0.01
      %v6588 = vmul.f32 %v6498, 0.01
      %v6589 = vmul.f32 %v6503, 0.01
      %v6590 = vmul.f32 %v6506, 0.01
      %v6591 = vmul.f32 %v6511, 0.01
      %v6592 = vmul.f32 %v6514, 0.01
      %v6593 = vmul.f32 %v6519, 0.01
      %v6594 = vmul.f32 %v6522, 0.01
      %v6595 = vmul.f32 %v6527, 0.01
      %v6596 = vmul.f32 %v6530, 0.01
      %v6597 = vsel %vm6533, %v6407, %v6565
      %v6598 = vsel %vm6534, %v6410, %v6566
      %v6599 = vsel %vm6535, %v6415, %v6567
      %v6600 = vsel %vm6536, %v6418, %v6568
      %v6601 = vsel %vm6537, %v6423, %v6569
      %v6602 = vsel %vm6538, %v6426, %v6570
      %v6603 = vsel %vm6539, %v6431, %v6571
      %v6604 = vsel %vm6540, %v6434, %v6572
      %v6605 = vsel %vm6541, %v6439, %v6573
      %v6606 = vsel %vm6542, %v6442, %v6574
      %v6607 = vsel %vm6543, %v6447, %v6575
      %v6608 = vsel %vm6544, %v6450, %v6576
      %v6609 = vsel %vm6545, %v6455, %v6577
      %v6610 = vsel %vm6546, %v6458, %v6578
      %v6611 = vsel %vm6547, %v6463, %v6579
      %v6612 = vsel %vm6548, %v6466, %v6580
      %v6613 = vsel %vm6549, %v6471, %v6581
      %v6614 = vsel %vm6550, %v6474, %v6582
      %v6615 = vsel %vm6551, %v6479, %v6583
      %v6616 = vsel %vm6552, %v6482, %v6584
      %v6617 = vsel %vm6553, %v6487, %v6585
      %v6618 = vsel %vm6554, %v6490, %v6586
      %v6619 = vsel %vm6555, %v6495, %v6587
      %v6620 = vsel %vm6556, %v6498, %v6588
      %v6621 = vsel %vm6557, %v6503, %v6589
      %v6622 = vsel %vm6558, %v6506, %v6590
      %v6623 = vsel %vm6559, %v6511, %v6591
      %v6624 = vsel %vm6560, %v6514, %v6592
      %v6625 = vsel %vm6561, %v6519, %v6593
      %v6626 = vsel %vm6562, %v6522, %v6594
      %v6627 = vsel %vm6563, %v6527, %v6595
      %v6628 = vsel %vm6564, %v6530, %v6596
      %v6629 = vunpack.c.l.bf16 %v526
      %v6630 = vunpack.c.l.bf16 %v527
      %v6631 = vunpack.c.l.bf16 %v528
      %v6632 = vunpack.c.l.bf16 %v529
      %v6633 = vunpack.c.l.bf16 %v530
      %v6634 = vunpack.c.l.bf16 %v531
      %v6635 = vunpack.c.l.bf16 %v532
      %v6636 = vunpack.c.l.bf16 %v533
      %v6637 = vunpack.c.l.bf16 %v534
      %v6638 = vunpack.c.l.bf16 %v535
      %v6639 = vunpack.c.l.bf16 %v536
      %v6640 = vunpack.c.l.bf16 %v537
      %v6641 = vunpack.c.l.bf16 %v538
      %v6642 = vunpack.c.l.bf16 %v539
      %v6643 = vunpack.c.l.bf16 %v540
      %v6644 = vunpack.c.l.bf16 %v541
      %v6645 = vunpack.c.l.bf16 %v542
      %v6646 = vunpack.c.l.bf16 %v543
      %v6647 = vunpack.c.l.bf16 %v544
      %v6648 = vunpack.c.l.bf16 %v545
      %v6649 = vunpack.c.l.bf16 %v546
      %v6650 = vunpack.c.l.bf16 %v547
      %v6651 = vunpack.c.l.bf16 %v548
      %v6652 = vunpack.c.l.bf16 %v549
      %v6653 = vunpack.c.l.bf16 %v550
      %v6654 = vunpack.c.l.bf16 %v551
      %v6655 = vunpack.c.l.bf16 %v552
      %v6656 = vunpack.c.l.bf16 %v553
      %v6657 = vunpack.c.l.bf16 %v554
      %v6658 = vunpack.c.l.bf16 %v555
      %v6659 = vunpack.c.l.bf16 %v556
      %v6660 = vunpack.c.l.bf16 %v557
      %v6661 = vadd.f32 %v6597, %v6629
      %v6662 = vadd.f32 %v6598, %v6630
      %v6663 = vadd.f32 %v6599, %v6631
      %v6664 = vadd.f32 %v6600, %v6632
      %v6665 = vadd.f32 %v6601, %v6633
      %v6666 = vadd.f32 %v6602, %v6634
      %v6667 = vadd.f32 %v6603, %v6635
      %v6668 = vadd.f32 %v6604, %v6636
      %v6669 = vadd.f32 %v6605, %v6637
      %v6670 = vadd.f32 %v6606, %v6638
      %v6671 = vadd.f32 %v6607, %v6639
      %v6672 = vadd.f32 %v6608, %v6640
      %v6673 = vadd.f32 %v6609, %v6641
      %v6674 = vadd.f32 %v6610, %v6642
      %v6675 = vadd.f32 %v6611, %v6643
      %v6676 = vadd.f32 %v6612, %v6644
      %v6677 = vadd.f32 %v6613, %v6645
      %v6678 = vadd.f32 %v6614, %v6646
      %v6679 = vadd.f32 %v6615, %v6647
      %v6680 = vadd.f32 %v6616, %v6648
      %v6681 = vadd.f32 %v6617, %v6649
      %v6682 = vadd.f32 %v6618, %v6650
      %v6683 = vadd.f32 %v6619, %v6651
      %v6684 = vadd.f32 %v6620, %v6652
      %v6685 = vadd.f32 %v6621, %v6653
      %v6686 = vadd.f32 %v6622, %v6654
      %v6687 = vadd.f32 %v6623, %v6655
      %v6688 = vadd.f32 %v6624, %v6656
      %v6689 = vadd.f32 %v6625, %v6657
      %v6690 = vadd.f32 %v6626, %v6658
      %v6691 = vadd.f32 %v6627, %v6659
      %v6692 = vadd.f32 %v6628, %v6660
      %v6693 = vpack.c.bf16 %v6662, %v6661
      %v6694 = vpack.c.bf16 %v6664, %v6663
      %v6695 = vpack.c.bf16 %v6666, %v6665
      %v6696 = vpack.c.bf16 %v6668, %v6667
      %v6697 = vpack.c.bf16 %v6670, %v6669
      %v6698 = vpack.c.bf16 %v6672, %v6671
      %v6699 = vpack.c.bf16 %v6674, %v6673
      %v6700 = vpack.c.bf16 %v6676, %v6675
      %v6701 = vpack.c.bf16 %v6678, %v6677
      %v6702 = vpack.c.bf16 %v6680, %v6679
      %v6703 = vpack.c.bf16 %v6682, %v6681
      %v6704 = vpack.c.bf16 %v6684, %v6683
      %v6705 = vpack.c.bf16 %v6686, %v6685
      %v6706 = vpack.c.bf16 %v6688, %v6687
      %v6707 = vpack.c.bf16 %v6690, %v6689
      %v6708 = vpack.c.bf16 %v6692, %v6691
      %v6725 = vunpack.c.l.b16 %v6693
      %v6726 = vunpack.c.h.b16 %v6693
      %v6727 = vunpack.c.l.b16 %v6694
      %v6728 = vunpack.c.h.b16 %v6694
      %v6729 = vunpack.c.l.b16 %v6695
      %v6730 = vunpack.c.h.b16 %v6695
      %v6731 = vunpack.c.l.b16 %v6696
      %v6732 = vunpack.c.h.b16 %v6696
      %v6733 = vunpack.c.l.b16 %v6697
      %v6734 = vunpack.c.h.b16 %v6697
      %v6735 = vunpack.c.l.b16 %v6698
      %v6736 = vunpack.c.h.b16 %v6698
      %v6737 = vunpack.c.l.b16 %v6699
      %v6738 = vunpack.c.h.b16 %v6699
      %v6739 = vunpack.c.l.b16 %v6700
      %v6740 = vunpack.c.h.b16 %v6700
      %v6741 = vunpack.c.l.b16 %v6701
      %v6742 = vunpack.c.h.b16 %v6701
      %v6743 = vunpack.c.l.b16 %v6702
      %v6744 = vunpack.c.h.b16 %v6702
      %v6745 = vunpack.c.l.b16 %v6703
      %v6746 = vunpack.c.h.b16 %v6703
      %v6747 = vunpack.c.l.b16 %v6704
      %v6748 = vunpack.c.h.b16 %v6704
      %v6749 = vunpack.c.l.b16 %v6705
      %v6750 = vunpack.c.h.b16 %v6705
      %v6751 = vunpack.c.l.b16 %v6706
      %v6752 = vunpack.c.h.b16 %v6706
      %v6753 = vunpack.c.l.b16 %v6707
      %v6754 = vunpack.c.h.b16 %v6707
      %v6755 = vunpack.c.l.b16 %v6708
      %v6756 = vunpack.c.h.b16 %v6708
      %v6757 = vpack.c.b16 %v6725, %v6725
      %v6758 = vpack.c.b16 %v6726, %v6726
      %v6759 = vpack.c.b16 %v6727, %v6727
      %v6760 = vpack.c.b16 %v6728, %v6728
      %v6761 = vpack.c.b16 %v6729, %v6729
      %v6762 = vpack.c.b16 %v6730, %v6730
      %v6763 = vpack.c.b16 %v6731, %v6731
      %v6764 = vpack.c.b16 %v6732, %v6732
      %v6765 = vpack.c.b16 %v6733, %v6733
      %v6766 = vpack.c.b16 %v6734, %v6734
      %v6767 = vpack.c.b16 %v6735, %v6735
      %v6768 = vpack.c.b16 %v6736, %v6736
      %v6769 = vpack.c.b16 %v6737, %v6737
      %v6770 = vpack.c.b16 %v6738, %v6738
      %v6771 = vpack.c.b16 %v6739, %v6739
      %v6772 = vpack.c.b16 %v6740, %v6740
      %v6773 = vpack.c.b16 %v6741, %v6741
      %v6774 = vpack.c.b16 %v6742, %v6742
      %v6775 = vpack.c.b16 %v6743, %v6743
      %v6776 = vpack.c.b16 %v6744, %v6744
      %v6777 = vpack.c.b16 %v6745, %v6745
      %v6778 = vpack.c.b16 %v6746, %v6746
      %v6779 = vpack.c.b16 %v6747, %v6747
      %v6780 = vpack.c.b16 %v6748, %v6748
      %v6781 = vpack.c.b16 %v6749, %v6749
      %v6782 = vpack.c.b16 %v6750, %v6750
      %v6783 = vpack.c.b16 %v6751, %v6751
      %v6784 = vpack.c.b16 %v6752, %v6752
      %v6785 = vpack.c.b16 %v6753, %v6753
      %v6786 = vpack.c.b16 %v6754, %v6754
      %v6787 = vpack.c.b16 %v6755, %v6755
      %v6788 = vpack.c.b16 %v6756, %v6756
      %6821 = vst [vmem:[%s194] sm:$0xf] %v6757
      %6822 = vst [vmem:[%s194 + $0x4] sm:$0xf] %v6758
      %6823 = vst [vmem:[%s194 + $0x8] sm:$0xf] %v6759
      %6824 = vst [vmem:[%s194 + $0xc] sm:$0xf] %v6760
      %6825 = vst [vmem:[%s194 + $0x10] sm:$0xf] %v6761
      %6826 = vst [vmem:[%s194 + $0x14] sm:$0xf] %v6762
      %6827 = vst [vmem:[%s194 + $0x18] sm:$0xf] %v6763
      %6828 = vst [vmem:[%s194 + $0x1c] sm:$0xf] %v6764
      %6829 = vst [vmem:[%s194 + $0x20] sm:$0xf] %v6765
      %6830 = vst [vmem:[%s194 + $0x24] sm:$0xf] %v6766
      %6831 = vst [vmem:[%s194 + $0x28] sm:$0xf] %v6767
      %6832 = vst [vmem:[%s194 + $0x2c] sm:$0xf] %v6768
      %6833 = vst [vmem:[%s194 + $0x30] sm:$0xf] %v6769
      %6834 = vst [vmem:[%s194 + $0x34] sm:$0xf] %v6770
      %6835 = vst [vmem:[%s194 + $0x38] sm:$0xf] %v6771
      %6836 = vst [vmem:[%s194 + $0x3c] sm:$0xf] %v6772
      %6837 = vst [vmem:[%s194 + $0x40] sm:$0xf] %v6773
      %6838 = vst [vmem:[%s194 + $0x44] sm:$0xf] %v6774
      %6839 = vst [vmem:[%s194 + $0x48] sm:$0xf] %v6775
      %6840 = vst [vmem:[%s194 + $0x4c] sm:$0xf] %v6776
      %6841 = vst [vmem:[%s194 + $0x50] sm:$0xf] %v6777
      %6842 = vst [vmem:[%s194 + $0x54] sm:$0xf] %v6778
      %6843 = vst [vmem:[%s194 + $0x58] sm:$0xf] %v6779
      %6844 = vst [vmem:[%s194 + $0x5c] sm:$0xf] %v6780
      %6845 = vst [vmem:[%s194 + $0x60] sm:$0xf] %v6781
      %6846 = vst [vmem:[%s194 + $0x64] sm:$0xf] %v6782
      %6847 = vst [vmem:[%s194 + $0x68] sm:$0xf] %v6783
      %6848 = vst [vmem:[%s194 + $0x6c] sm:$0xf] %v6784
      %6849 = vst [vmem:[%s194 + $0x70] sm:$0xf] %v6785
      %6850 = vst [vmem:[%s194 + $0x74] sm:$0xf] %v6786
      %6851 = vst [vmem:[%s194 + $0x78] sm:$0xf] %v6787
      %6852 = vst [vmem:[%s194 + $0x7c] sm:$0xf] %v6788
      %s6853 = sadd.s32 %s20, %s21
      %s6854 = smul.u32 32, %s6853
      %p6855 = scmp.lt.s32.totalorder %s6854, 63
      %s6856 = scalar_select %p6855, %s6854, 63
      %s6857 = smul.addr %s6856, 4
      %s6858 = scalar_lea.vmem %s5, %s6857
      // Predicated region
      $region197: #{_lambda_.1} parent=35 // pred_check
        %p6859 = pneg %p132
      $region198: #{_lambda_.1} parent=35 // pred_check_branch
        %6861 = sbr.rel (%p6859) target = $region200
      $region199: #{_lambda_.1} parent=35 // pred_region
        %s6862 = sadd.s32 %s20, %s21
        %s6863 = smul.u32 32, %s6862
      $region200: #{_lambda_.1} parent=35 // pred_fallthru
        _
    $region36: #{_lambda_.1} parent=5 // pred_fallthru
      _
    %p6864 = scmp.le.s32.totalorder 2, %s11
    // Predicated region
    $region201: #{_lambda_.1} parent=5 // pred_check
      %p6865 = pneg %p6864
    $region202: #{_lambda_.1} parent=5 // pred_check_branch
      %6867 = sbr.rel (%p6865) target = $region204
    $region203: #{_lambda_.1} parent=5 // pred_region
      %s6868 = ssub.s32 %s11, 2
      // Predicated region
      $region205: #{_lambda_.1} parent=203 // pred_check
        %p6869 = pneg %p138
      $region206: #{_lambda_.1} parent=203 // pred_check_branch
        %6871 = sbr.rel (%p6869) target = $region208
      $region207: #{_lambda_.1} parent=203 // pred_region
        %s6872 = sadd.s32 %s22, %s23
        %s6873 = smul.u32 32, %s6872
        %p6874 = scmp.lt.s32.totalorder %s6873, 63
        %s6875 = scalar_select %p6874, %s6873, 63
        %s6876 = smul.addr %s6875, 4
        %s6877 = scalar_lea.vmem %s5, %s6876
      $region208: #{_lambda_.1} parent=203 // pred_fallthru
        _
    $region204: #{_lambda_.1} parent=5 // pred_fallthru
      _
  $region6: #{_lambda_.1} parent=0 // loop_footer
    %s15 = sadd.s32 1, %s11
  $region7: #{_lambda_.1} parent=0 // loop_footer_branch
    %10 = sbr.rel target = $region3
  $region8: #{_lambda_.1} parent=0 // loop_exit
    _
  %6878 = vsyncmov [#allocation3]
  %s6879 = vpop.sfrf %6878
  %p6880 = scmp.eq.s32.totalorder %s6879, 0
  %p6881 = pneg %p6880
  %6883 = shalt.err (%p6881)
  %s6884 = scalar_lea.sflag [#allocation3], 1
  %6885 = vsyncmov %s6884
  %s6886 = vpop.sfrf %6885
  %p6887 = scmp.eq.s32.totalorder %s6886, 0
  %p6888 = pneg %p6887
  %6890 = shalt.err (%p6888)
  %s6891 = scalar_lea.sflag [#allocation3], 2
  %6892 = vsyncmov %s6891
  %s6893 = vpop.sfrf %6892
  %p6894 = scmp.eq.s32.totalorder %s6893, 0
  %p6895 = pneg %p6894
  %6897 = shalt.err (%p6895)
  %s6898 = scalar_lea.sflag [#allocation3], 3
  %6899 = vsyncmov %s6898
  %s6900 = vpop.sfrf %6899
  %p6901 = scmp.eq.s32.totalorder %s6900, 0
  %p6902 = pneg %p6901
  %6904 = shalt.err (%p6902)
  %s6905 = scalar_lea.sflag [#allocation3], 4
  %6906 = vsyncmov %s6905
  %s6907 = vpop.sfrf %6906
  %p6908 = scmp.eq.s32.totalorder %s6907, 0
  %p6909 = pneg %p6908
  %6911 = shalt.err (%p6909)
  %s6912 = scalar_lea.sflag [#allocation3], 5
  %6913 = vsyncmov %s6912
  %s6914 = vpop.sfrf %6913
  %p6915 = scmp.eq.s32.totalorder %s6914, 0
  %p6916 = pneg %p6915
  %6918 = shalt.err (%p6916)

</llo_original>
